<compile_context>
chip_gen: v7x
topology: tpu7x:2x2x1
jax: 0.10.0
libtpu: 0.0.40
codegen_flags: <defaults>
</compile_context>

<pallas_src>
import functools
import math

import jax
import jax.numpy as jnp
import numpy as np
from jax.experimental import pallas as pl
from jax.experimental.pallas import tpu as pltpu

_VMEM_LIMIT = 48 * 1024 * 1024  # conservative: fits v7x's 64 MiB physical VMEM


def _round_up(n, m):
    return (n + m - 1) // m * m


def _choose_time_tiling(t, max_t_tile=1024):
    """Return (t_tile, t_rounded); t_tile divides t_rounded, both % 8 == 0."""
    assert max_t_tile % 8 == 0
    tr = _round_up(t, 8)
    if tr <= max_t_tile:
        return tr, tr
    return max_t_tile, _round_up(t, max_t_tile)


# ---------------------------------------------------------------------------
# Fused Pallas kernel: whole coupling layer on one (batch, time-tile) block
# ---------------------------------------------------------------------------
def _coupling_kernel(x0_ref, m_ref, x1_ref, prew_ref, preb_ref, inw_ref,
                     inb_ref, rsw_ref, rsb_ref, postw_ref, postb_ref, out_ref,
                     *, H, K, dr, L, half, P, t_tile, mean_only, reverse, cdt):
    W0 = t_tile + 2 * P
    start = pl.multiple_of(pl.program_id(1) * t_tile, 8)
    x0w = x0_ref[0, pl.ds(start, W0), :]          # (W0, half)  f32, halo'd window
    mw = m_ref[0, pl.ds(start, W0), :]            # (W0, 1)     f32

    # --- pre 1x1 conv:  h = (x0 @ W_pre + b_pre) * mask -------------------
    if half < 16:
        # contraction-sparse: VPU broadcast-FMAs instead of a tiny MXU matmul
        acc = jnp.zeros((W0, H), jnp.float32) + preb_ref[...]
        for c in range(half):
            acc = acc + x0w[:, c:c + 1] * prew_ref[c:c + 1, :].astype(jnp.float32)
        h = acc * mw
    else:
        h = (jnp.dot(x0w.astype(cdt), prew_ref[...],
                     preferred_element_type=jnp.float32) + preb_ref[...]) * mw

    # --- WN stack: shrinking halo'd window, skip accumulated over the core --
    skip = jnp.zeros((t_tile, H), jnp.float32)
    off, W = 0, W0
    for i in range(L):
        dil = dr ** i
        pad = dil * (K - 1) // 2
        Wn = W - 2 * pad
        hc = h.astype(cdt)
        # dilated conv as K accumulated matmuls (no im2col concat temp)
        acc = jnp.dot(hc[0:Wn, :], inw_ref[i * K],
                      preferred_element_type=jnp.float32)
        for k in range(1, K):
            acc = acc + jnp.dot(hc[k * dil:k * dil + Wn, :], inw_ref[i * K + k],
                                preferred_element_type=jnp.float32)
        x_in = acc + inb_ref[i]
        # fused_add_tanh_sigmoid_multiply with g = 0 (gin_channels == 0), f32
        acts = jnp.tanh(x_in[:, :H]) * jax.nn.sigmoid(x_in[:, H:])
        rs = jnp.dot(acts.astype(cdt), rsw_ref[i],
                     preferred_element_type=jnp.float32) + rsb_ref[i]
        off += pad
        cs = P - off                                # core start within new window
        skip = skip + rs[cs:cs + t_tile, H:]        # last layer packed into [H:]
        if i < L - 1:
            h = (h[pad:pad + Wn, :] + rs[:, :H]) * mw[off:off + Wn, :]
        W = Wn

    # --- post 1x1 conv + affine coupling on the core tile -------------------
    m_core = mw[P:P + t_tile, :]
    skip = skip * m_core                            # WN output * mask
    stats = (jnp.dot(skip.astype(cdt), postw_ref[...],
                     preferred_element_type=jnp.float32) + postb_ref[...]) * m_core
    if mean_only:
        m_stat = stats
        logs = jnp.zeros((t_tile, half), jnp.float32)
    else:
        m_stat = stats[:, :half]
        logs = stats[:, half:]
    x1c = x1_ref[0, :, :]
    if reverse:
        x1n = (x1c - m_stat) * jnp.exp(-logs) * m_core
    else:
        x1n = m_stat + x1c * jnp.exp(logs) * m_core
    x0c = x0w[P:P + t_tile, :]
    out_ref[0, :, :] = jnp.concatenate([x0c, x1n, logs], axis=-1).astype(out_ref.dtype)


# ---------------------------------------------------------------------------
# Parameters (shapes / init follow the PyTorch module)
# ---------------------------------------------------------------------------
def _conv1d_params(key, c_out, c_in, k):
    wk, bk = jax.random.split(key)
    bound = 1.0 / math.sqrt(c_in * k)
    w = jax.random.uniform(wk, (c_out, c_in, k), jnp.float32, -bound, bound)
    b = jax.random.uniform(bk, (c_out,), jnp.float32, -bound, bound)
    return w, b


def init_residual_coupling_params(key, channels, hidden_channels, kernel_size,
                                  dilation_rate, n_layers, mean_only=False):
    assert channels % 2 == 0, "channels should be divisible by 2"
    assert kernel_size % 2 == 1
    half = channels // 2
    params = {
        "cfg": dict(channels=channels, hidden_channels=hidden_channels,
                    kernel_size=kernel_size, dilation_rate=dilation_rate,
                    n_layers=n_layers, mean_only=mean_only),
        "pre": _conv1d_params(jax.random.fold_in(key, 0),
                              hidden_channels, half, 1),
        "in": [],
        "res_skip": [],
    }
    for i in range(n_layers):
        params["in"].append(
            _conv1d_params(jax.random.fold_in(key, 100 + i),
                           2 * hidden_channels, hidden_channels, kernel_size))
        rs_out = 2 * hidden_channels if i < n_layers - 1 else hidden_channels
        params["res_skip"].append(
            _conv1d_params(jax.random.fold_in(key, 200 + i),
                           rs_out, hidden_channels, 1))
    # post conv is zero-initialized in the PyTorch module
    post_out = half * (2 - int(mean_only))
    params["post"] = (jnp.zeros((post_out, hidden_channels, 1), jnp.float32),
                      jnp.zeros((post_out,), jnp.float32))
    return params


# ---------------------------------------------------------------------------
# Forward pass (single fused Pallas call)
# ---------------------------------------------------------------------------
def residual_coupling_forward(params, x, x_mask, g=None, reverse=False,
                              compute_dtype=jnp.float32, max_t_tile=1024):
    """x: (B, channels, T), x_mask: (B, 1, T). Returns (x, logdet) or x."""
    if g is not None:
        # TODO(synk): gin_channels > 0 conditioning path (cond_layer) not wired.
        raise NotImplementedError("g conditioning not implemented")
    cfg = params["cfg"]
    channels = cfg["channels"]
    half = channels // 2
    H = cfg["hidden_channels"]
    K = cfg["kernel_size"]
    dr = cfg["dilation_rate"]
    L = cfg["n_layers"]
    mean_only = cfg["mean_only"]
    post_out = half * (2 - int(mean_only))

    P = sum(dr ** i * (K - 1) // 2 for i in range(L))   # total halo per side

    bsz, _, t_len = x.shape
    t_tile, tr = _choose_time_tiling(t_len, max_t_tile)
    n_t = tr // t_tile
    t_pad = tr + 2 * P

    x_cl = jnp.transpose(x, (0, 2, 1)).astype(jnp.float32)       # (B, T, C)
    m_cl = jnp.transpose(x_mask, (0, 2, 1)).astype(jnp.float32)  # (B, T, 1)
    if tr != t_len:  # zero-pad time to the tile grid; mask keeps it inert
        x_cl = jnp.pad(x_cl, ((0, 0), (0, tr - t_len), (0, 0)))
        m_cl = jnp.pad(m_cl, ((0, 0), (0, tr - t_len), (0, 0)))
    x0 = x_cl[..., :half]
    x1 = x_cl[..., half:]
    x0_pad = jnp.pad(x0, ((0, 0), (P, P), (0, 0)))               # (B, Tpad, half)
    m_pad = jnp.pad(m_cl, ((0, 0), (P, P), (0, 0)))              # (B, Tpad, 1)

    cd = compute_dtype
    pre_w, pre_b = params["pre"]
    prew = pre_w[:, :, 0].T.astype(cd)                           # (half, H)
    preb = pre_b[None, :].astype(jnp.float32)                    # (1, H)

    inw = jnp.stack([jnp.transpose(params["in"][i][0], (2, 1, 0))
                     for i in range(L)])                         # (L, K, H, 2H)
    inw = inw.reshape(L * K, H, 2 * H).astype(cd)
    inb = jnp.stack([params["in"][i][1][None, :]
                     for i in range(L)]).astype(jnp.float32)     # (L, 1, 2H)

    rsw_l, rsb_l = [], []
    for i in range(L):
        w, b = params["res_skip"][i]                             # (rs_out, H, 1)
        w_io = w[:, :, 0].T                                      # (H, rs_out)
        if i == L - 1:
            # last layer: all rs_out (=H) channels go to the skip path; pad the
            # res half with zeros so the kernel's uniform [H:] skip slice works.
            w_io = jnp.concatenate([jnp.zeros((H, H), w_io.dtype), w_io], axis=1)
            b = jnp.concatenate([jnp.zeros((H,), b.dtype), b])
        rsw_l.append(w_io)
        rsb_l.append(b[None, :])
    rsw = jnp.stack(rsw_l).astype(cd)                            # (L, H, 2H)
    rsb = jnp.stack(rsb_l).astype(jnp.float32)                   # (L, 1, 2H)

    post_w, post_b = params["post"]
    postw = post_w[:, :, 0].T.astype(cd)                         # (H, post_out)
    postb = post_b[None, :].astype(jnp.float32)                  # (1, post_out)

    # advisory cost estimate
    W0 = t_tile + 2 * P
    flops_t = 2 * W0 * half * H
    transc_t = 0
    W = W0
    for i in range(L):
        pad = dr ** i * (K - 1) // 2
        Wn = W - 2 * pad
        flops_t += 2 * Wn * H * 2 * H * (K + 1)
        transc_t += 3 * Wn * H
        W = Wn
    flops_t += 2 * t_tile * H * post_out
    transc_t += t_tile * half
    itemsz = jnp.dtype(cd).itemsize
    w_bytes = int((prew.size + inw.size + rsw.size + postw.size) * itemsz
                  + (preb.size + inb.size + rsb.size + postb.size) * 4)
    bytes_accessed = int(4 * bsz * (t_pad * (half + 1) + tr * half
                                    + tr * (channels + half)) + w_bytes)

    kern = functools.partial(_coupling_kernel, H=H, K=K, dr=dr, L=L, half=half,
                             P=P, t_tile=t_tile, mean_only=mean_only,
                             reverse=reverse, cdt=cd)
    out = pl.pallas_call(
        kern,
        out_shape=jax.ShapeDtypeStruct((bsz, tr, channels + half), jnp.float32),
        grid=(bsz, n_t),
        in_specs=[
            # halo'd x0 / mask: full-time block, re-DMA'd only when batch changes
            pl.BlockSpec((1, t_pad, half), lambda b, t: (b, 0, 0)),
            pl.BlockSpec((1, t_pad, 1), lambda b, t: (b, 0, 0)),
            pl.BlockSpec((1, t_tile, half), lambda b, t: (b, t, 0)),
            # weights: constant index maps -> resident across the whole grid
            pl.BlockSpec((half, H), lambda b, t: (0, 0)),
            pl.BlockSpec((1, H), lambda b, t: (0, 0)),
            pl.BlockSpec((L * K, H, 2 * H), lambda b, t: (0, 0, 0)),
            pl.BlockSpec((L, 1, 2 * H), lambda b, t: (0, 0, 0)),
            pl.BlockSpec((L, H, 2 * H), lambda b, t: (0, 0, 0)),
            pl.BlockSpec((L, 1, 2 * H), lambda b, t: (0, 0, 0)),
            pl.BlockSpec((H, post_out), lambda b, t: (0, 0)),
            pl.BlockSpec((1, post_out), lambda b, t: (0, 0)),
        ],
        out_specs=pl.BlockSpec((1, t_tile, channels + half),
                               lambda b, t: (b, t, 0)),
        compiler_params=pltpu.CompilerParams(
            dimension_semantics=("parallel", "parallel"),
            vmem_limit_bytes=_VMEM_LIMIT),
        cost_estimate=pl.CostEstimate(flops=int(flops_t * bsz * n_t),
                                      transcendentals=int(transc_t * bsz * n_t),
                                      bytes_accessed=bytes_accessed),
    )(x0_pad, m_pad, x1, prew, preb, inw, inb, rsw, rsb, postw, postb)

    # out layout: [x0 | x1_new | logs] along channels (channels + half lanes)
    x_out = jnp.transpose(out[:, :t_len, :channels], (0, 2, 1))
    if reverse:
        return x_out
    logdet = jnp.sum(out[:, :t_len, channels:], axis=(1, 2))
    return x_out, logdet


# ---------------------------------------------------------------------------
# Pure-jnp reference (mirrors the PyTorch semantics) for self-checking
# ---------------------------------------------------------------------------
def _conv1d_ref(x, w, b, dilation=1, padding=0):
    bsz, c_in, t = x.shape
    c_out, _, k = w.shape
    xp = jnp.pad(x, ((0, 0), (0, 0), (padding, padding)))
    t_out = t + 2 * padding - dilation * (k - 1)
    out = jnp.zeros((bsz, c_out, t_out), jnp.float32)
    for j in range(k):
        xk = xp[:, :, j * dilation:j * dilation + t_out]
        out = out + jnp.einsum("bct,oc->bot", xk, w[:, :, j],
                               precision="highest")
    return out + b[None, :, None]


def residual_coupling_ref(params, x, x_mask, reverse=False):
    cfg = params["cfg"]
    half = cfg["channels"] // 2
    H, K = cfg["hidden_channels"], cfg["kernel_size"]
    dr, n_layers, mean_only = cfg["dilation_rate"], cfg["n_layers"], cfg["mean_only"]
    x0, x1 = x[:, :half], x[:, half:]
    pre_w, pre_b = params["pre"]
    h = _conv1d_ref(x0, pre_w, pre_b) * x_mask
    output = jnp.zeros_like(h)
    for i in range(n_layers):
        dil = dr ** i
        pad = dil * (K - 1) // 2
        in_w, in_b = params["in"][i]
        rs_w, rs_b = params["res_skip"][i]
        x_in = _conv1d_ref(h, in_w, in_b, dilation=dil, padding=pad)
        acts = jnp.tanh(x_in[:, :H]) * jax.nn.sigmoid(x_in[:, H:])
        rs = _conv1d_ref(acts, rs_w, rs_b)
        if i < n_layers - 1:
            h = (h + rs[:, :H]) * x_mask
            output = output + rs[:, H:]
        else:
            output = output + rs
    stats = _conv1d_ref(output * x_mask, *params["post"]) * x_mask
    if not mean_only:
        m, logs = stats[:, :half], stats[:, half:]
    else:
        m, logs = stats, jnp.zeros_like(stats)
    if not reverse:
        x1n = m + x1 * jnp.exp(logs) * x_mask
        return jnp.concatenate([x0, x1n], axis=1), jnp.sum(logs, axis=(1, 2))
    x1n = (x1 - m) * jnp.exp(-logs) * x_mask
    return jnp.concatenate([x0, x1n], axis=1)


if __name__ == "__main__":
    key = jax.random.PRNGKey(0)
    pkey, xkey, ckey = jax.random.split(key, 3)

    # small-but-representative config
    B, channels, hidden, K, dil_rate, n_layers, T = 2, 8, 64, 5, 2, 4, 50
    params = init_residual_coupling_params(pkey, channels, hidden, K,
                                           dil_rate, n_layers)

    x = jax.random.normal(xkey, (B, channels, T), jnp.float32)
    lengths = jnp.array([T, T - 13])
    x_mask = (jnp.arange(T)[None, None, :] < lengths[:, None, None]
              ).astype(jnp.float32)

    # Self-check vs the pure-jnp reference with a non-zero `post` conv so the
    # whole WN path affects the output (the spec-faithful params zero-init it).
    chk = dict(params)
    chk["post"] = _conv1d_params(ckey, (channels // 2) * 2, hidden, 1)
    ref_x, ref_ld = residual_coupling_ref(chk, x, x_mask)
    for max_tile in (1024, 16):   # 16 exercises the multi-tile halo path
        got_x, got_ld = residual_coupling_forward(chk, x, x_mask,
                                                  max_t_tile=max_tile)
        np.testing.assert_allclose(np.asarray(got_x), np.asarray(ref_x),
                                   atol=2e-2, rtol=2e-2)
        np.testing.assert_allclose(np.asarray(got_ld), np.asarray(ref_ld),
                                   atol=2e-2, rtol=2e-2)
    # reverse path
    got_rev = residual_coupling_forward(chk, x, x_mask, reverse=True)
    ref_rev = residual_coupling_ref(chk, x, x_mask, reverse=True)
    np.testing.assert_allclose(np.asarray(got_rev), np.asarray(ref_rev),
                               atol=2e-2, rtol=2e-2)

    # bf16 MXU fast path (v5e/v6e/v7x); f32 accumulation + f32 residual stream.
    out_bf16 = residual_coupling_forward(chk, x, x_mask,
                                         compute_dtype=jnp.bfloat16)
    jax.block_until_ready(out_bf16)

    # Spec-faithful run (post conv zero-initialized, as in the PyTorch module).
    x_out, logdet = residual_coupling_forward(params, x, x_mask)
    jax.block_until_ready((x_out, logdet))
    print("KERNEL_OK")
</pallas_src>

<mosaic_0001>
module attributes {stable_mosaic.version = 11 : i64} {
  func.func @_coupling_kernel(%arg0: i32, %arg1: i32, %arg2: memref<1x116x4xf32, #tpu.memory_space<vmem>>, %arg3: memref<1x116x1xf32, #tpu.memory_space<vmem>>, %arg4: memref<1x56x4xf32, #tpu.memory_space<vmem>>, %arg5: memref<4x64xf32, #tpu.memory_space<vmem>>, %arg6: memref<1x64xf32, #tpu.memory_space<vmem>>, %arg7: memref<20x64x128xf32, #tpu.memory_space<vmem>>, %arg8: memref<4x1x128xf32, #tpu.memory_space<vmem>>, %arg9: memref<4x64x128xf32, #tpu.memory_space<vmem>>, %arg10: memref<4x1x128xf32, #tpu.memory_space<vmem>>, %arg11: memref<64x8xf32, #tpu.memory_space<vmem>>, %arg12: memref<1x8xf32, #tpu.memory_space<vmem>>, %arg13: memref<1x56x12xf32, #tpu.memory_space<vmem>>) attributes {dimension_semantics = [#tpu.dimension_semantics<parallel>, #tpu.dimension_semantics<parallel>], iteration_bounds = array<i64: 2, 1>, scalar_prefetch = 0 : i64, scratch_operands = 0 : i64, tpu.core_type = #tpu.core_type<tc>, window_params = [{transform_indices = @transform_0, window_bounds = array<i64: 1, 116, 4>}, {transform_indices = @transform_1, window_bounds = array<i64: 1, 116, 1>}, {transform_indices = @transform_2, window_bounds = array<i64: 1, 56, 4>}, {pipeline_mode = #tpu.pipeline_mode<synchronous>, transform_indices = @transform_3, window_bounds = array<i64: 4, 64>}, {pipeline_mode = #tpu.pipeline_mode<synchronous>, transform_indices = @transform_4, window_bounds = array<i64: 1, 64>}, {pipeline_mode = #tpu.pipeline_mode<synchronous>, transform_indices = @transform_5, window_bounds = array<i64: 20, 64, 128>}, {pipeline_mode = #tpu.pipeline_mode<synchronous>, transform_indices = @transform_6, window_bounds = array<i64: 4, 1, 128>}, {pipeline_mode = #tpu.pipeline_mode<synchronous>, transform_indices = @transform_7, window_bounds = array<i64: 4, 64, 128>}, {pipeline_mode = #tpu.pipeline_mode<synchronous>, transform_indices = @transform_8, window_bounds = array<i64: 4, 1, 128>}, {pipeline_mode = #tpu.pipeline_mode<synchronous>, transform_indices = @transform_9, window_bounds = array<i64: 64, 8>}, {pipeline_mode = #tpu.pipeline_mode<synchronous>, transform_indices = @transform_10, window_bounds = array<i64: 1, 8>}, {transform_indices = @transform_11, window_bounds = array<i64: 1, 56, 12>}]} {
    %c56_i32 = arith.constant 56 : i32
    %0 = arith.muli %arg1, %c56_i32 : i32
    %1 = tpu.assume_multiple %0, 8 : i32
    %c0 = arith.constant 0 : index
    %2 = arith.index_cast %1 : i32 to index
    %c0_0 = arith.constant 0 : index
    %3 = vector.load %arg2[%c0, %2, %c0_0] : memref<1x116x4xf32, #tpu.memory_space<vmem>>, vector<1x116x4xf32>
    %4 = vector.shape_cast %3 : vector<1x116x4xf32> to vector<116x4xf32>
    %c0_1 = arith.constant 0 : index
    %5 = arith.index_cast %1 : i32 to index
    %c0_2 = arith.constant 0 : index
    %6 = vector.load %arg3[%c0_1, %5, %c0_2] : memref<1x116x1xf32, #tpu.memory_space<vmem>>, vector<1x116x1xf32>
    %7 = vector.shape_cast %6 : vector<1x116x1xf32> to vector<116x1xf32>
    %cst = arith.constant 0.000000e+00 : f32
    %8 = vector.broadcast %cst : f32 to vector<116x64xf32>
    %c0_3 = arith.constant 0 : index
    %c0_4 = arith.constant 0 : index
    %9 = vector.load %arg6[%c0_3, %c0_4] : memref<1x64xf32, #tpu.memory_space<vmem>>, vector<1x64xf32>
    %10 = vector.broadcast %9 : vector<1x64xf32> to vector<116x64xf32>
    %11 = arith.addf %8, %10 : vector<116x64xf32>
    %12 = vector.extract_strided_slice %4 {offsets = [0, 0], sizes = [116, 1], strides = [1, 1]} : vector<116x4xf32> to vector<116x1xf32>
    %c0_5 = arith.constant 0 : index
    %c0_6 = arith.constant 0 : index
    %13 = vector.load %arg5[%c0_5, %c0_6] : memref<4x64xf32, #tpu.memory_space<vmem>>, vector<1x64xf32>
    %14 = vector.broadcast %12 : vector<116x1xf32> to vector<116x64xf32>
    %15 = vector.broadcast %13 : vector<1x64xf32> to vector<116x64xf32>
    %16 = arith.mulf %14, %15 : vector<116x64xf32>
    %17 = arith.addf %11, %16 : vector<116x64xf32>
    %18 = vector.extract_strided_slice %4 {offsets = [0, 1], sizes = [116, 1], strides = [1, 1]} : vector<116x4xf32> to vector<116x1xf32>
    %c1 = arith.constant 1 : index
    %c0_7 = arith.constant 0 : index
    %19 = vector.load %arg5[%c1, %c0_7] : memref<4x64xf32, #tpu.memory_space<vmem>>, vector<1x64xf32>
    %20 = vector.broadcast %18 : vector<116x1xf32> to vector<116x64xf32>
    %21 = vector.broadcast %19 : vector<1x64xf32> to vector<116x64xf32>
    %22 = arith.mulf %20, %21 : vector<116x64xf32>
    %23 = arith.addf %17, %22 : vector<116x64xf32>
    %24 = vector.extract_strided_slice %4 {offsets = [0, 2], sizes = [116, 1], strides = [1, 1]} : vector<116x4xf32> to vector<116x1xf32>
    %c2 = arith.constant 2 : index
    %c0_8 = arith.constant 0 : index
    %25 = vector.load %arg5[%c2, %c0_8] : memref<4x64xf32, #tpu.memory_space<vmem>>, vector<1x64xf32>
    %26 = vector.broadcast %24 : vector<116x1xf32> to vector<116x64xf32>
    %27 = vector.broadcast %25 : vector<1x64xf32> to vector<116x64xf32>
    %28 = arith.mulf %26, %27 : vector<116x64xf32>
    %29 = arith.addf %23, %28 : vector<116x64xf32>
    %30 = vector.extract_strided_slice %4 {offsets = [0, 3], sizes = [116, 1], strides = [1, 1]} : vector<116x4xf32> to vector<116x1xf32>
    %c3 = arith.constant 3 : index
    %c0_9 = arith.constant 0 : index
    %31 = vector.load %arg5[%c3, %c0_9] : memref<4x64xf32, #tpu.memory_space<vmem>>, vector<1x64xf32>
    %32 = vector.broadcast %30 : vector<116x1xf32> to vector<116x64xf32>
    %33 = vector.broadcast %31 : vector<1x64xf32> to vector<116x64xf32>
    %34 = arith.mulf %32, %33 : vector<116x64xf32>
    %35 = arith.addf %29, %34 : vector<116x64xf32>
    %36 = vector.broadcast %7 : vector<116x1xf32> to vector<116x64xf32>
    %37 = arith.mulf %35, %36 : vector<116x64xf32>
    %cst_10 = arith.constant 0.000000e+00 : f32
    %38 = vector.broadcast %cst_10 : f32 to vector<56x64xf32>
    %39 = vector.extract_strided_slice %37 {offsets = [0, 0], sizes = [112, 64], strides = [1, 1]} : vector<116x64xf32> to vector<112x64xf32>
    %c0_11 = arith.constant 0 : index
    %c0_12 = arith.constant 0 : index
    %c0_13 = arith.constant 0 : index
    %40 = vector.load %arg7[%c0_11, %c0_12, %c0_13] : memref<20x64x128xf32, #tpu.memory_space<vmem>>, vector<1x64x128xf32>
    %41 = vector.shape_cast %40 : vector<1x64x128xf32> to vector<64x128xf32>
    %cst_14 = arith.constant dense<0.000000e+00> : vector<112x128xf32>
    %42 = tpu.matmul %39, %41, %cst_14 {dimension_numbers = #tpu.dot_dimension_numbers<[1], [0], [0], [1], [0, 0, 1, 1], [], []>} : vector<112x64xf32>, vector<64x128xf32>, vector<112x128xf32> -> vector<112x128xf32>
    %43 = vector.extract_strided_slice %37 {offsets = [1, 0], sizes = [112, 64], strides = [1, 1]} : vector<116x64xf32> to vector<112x64xf32>
    %c1_15 = arith.constant 1 : index
    %c0_16 = arith.constant 0 : index
    %c0_17 = arith.constant 0 : index
    %44 = vector.load %arg7[%c1_15, %c0_16, %c0_17] : memref<20x64x128xf32, #tpu.memory_space<vmem>>, vector<1x64x128xf32>
    %45 = vector.shape_cast %44 : vector<1x64x128xf32> to vector<64x128xf32>
    %cst_18 = arith.constant dense<0.000000e+00> : vector<112x128xf32>
    %46 = tpu.matmul %43, %45, %cst_18 {dimension_numbers = #tpu.dot_dimension_numbers<[1], [0], [0], [1], [0, 0, 1, 1], [], []>} : vector<112x64xf32>, vector<64x128xf32>, vector<112x128xf32> -> vector<112x128xf32>
    %47 = arith.addf %42, %46 : vector<112x128xf32>
    %48 = vector.extract_strided_slice %37 {offsets = [2, 0], sizes = [112, 64], strides = [1, 1]} : vector<116x64xf32> to vector<112x64xf32>
    %c2_19 = arith.constant 2 : index
    %c0_20 = arith.constant 0 : index
    %c0_21 = arith.constant 0 : index
    %49 = vector.load %arg7[%c2_19, %c0_20, %c0_21] : memref<20x64x128xf32, #tpu.memory_space<vmem>>, vector<1x64x128xf32>
    %50 = vector.shape_cast %49 : vector<1x64x128xf32> to vector<64x128xf32>
    %cst_22 = arith.constant dense<0.000000e+00> : vector<112x128xf32>
    %51 = tpu.matmul %48, %50, %cst_22 {dimension_numbers = #tpu.dot_dimension_numbers<[1], [0], [0], [1], [0, 0, 1, 1], [], []>} : vector<112x64xf32>, vector<64x128xf32>, vector<112x128xf32> -> vector<112x128xf32>
    %52 = arith.addf %47, %51 : vector<112x128xf32>
    %53 = vector.extract_strided_slice %37 {offsets = [3, 0], sizes = [112, 64], strides = [1, 1]} : vector<116x64xf32> to vector<112x64xf32>
    %c3_23 = arith.constant 3 : index
    %c0_24 = arith.constant 0 : index
    %c0_25 = arith.constant 0 : index
    %54 = vector.load %arg7[%c3_23, %c0_24, %c0_25] : memref<20x64x128xf32, #tpu.memory_space<vmem>>, vector<1x64x128xf32>
    %55 = vector.shape_cast %54 : vector<1x64x128xf32> to vector<64x128xf32>
    %cst_26 = arith.constant dense<0.000000e+00> : vector<112x128xf32>
    %56 = tpu.matmul %53, %55, %cst_26 {dimension_numbers = #tpu.dot_dimension_numbers<[1], [0], [0], [1], [0, 0, 1, 1], [], []>} : vector<112x64xf32>, vector<64x128xf32>, vector<112x128xf32> -> vector<112x128xf32>
    %57 = arith.addf %52, %56 : vector<112x128xf32>
    %58 = vector.extract_strided_slice %37 {offsets = [4, 0], sizes = [112, 64], strides = [1, 1]} : vector<116x64xf32> to vector<112x64xf32>
    %c4 = arith.constant 4 : index
    %c0_27 = arith.constant 0 : index
    %c0_28 = arith.constant 0 : index
    %59 = vector.load %arg7[%c4, %c0_27, %c0_28] : memref<20x64x128xf32, #tpu.memory_space<vmem>>, vector<1x64x128xf32>
    %60 = vector.shape_cast %59 : vector<1x64x128xf32> to vector<64x128xf32>
    %cst_29 = arith.constant dense<0.000000e+00> : vector<112x128xf32>
    %61 = tpu.matmul %58, %60, %cst_29 {dimension_numbers = #tpu.dot_dimension_numbers<[1], [0], [0], [1], [0, 0, 1, 1], [], []>} : vector<112x64xf32>, vector<64x128xf32>, vector<112x128xf32> -> vector<112x128xf32>
    %62 = arith.addf %57, %61 : vector<112x128xf32>
    %c0_30 = arith.constant 0 : index
    %c0_31 = arith.constant 0 : index
    %c0_32 = arith.constant 0 : index
    %63 = vector.load %arg8[%c0_30, %c0_31, %c0_32] : memref<4x1x128xf32, #tpu.memory_space<vmem>>, vector<1x1x128xf32>
    %64 = vector.shape_cast %63 : vector<1x1x128xf32> to vector<1x128xf32>
    %65 = vector.broadcast %64 : vector<1x128xf32> to vector<112x128xf32>
    %66 = arith.addf %62, %65 : vector<112x128xf32>
    %67 = vector.extract_strided_slice %66 {offsets = [0, 0], sizes = [112, 64], strides = [1, 1]} : vector<112x128xf32> to vector<112x64xf32>
    %68 = math.tanh %67 : vector<112x64xf32>
    %69 = vector.extract_strided_slice %66 {offsets = [0, 64], sizes = [112, 64], strides = [1, 1]} : vector<112x128xf32> to vector<112x64xf32>
    %70 = arith.negf %69 : vector<112x64xf32>
    %71 = math.exp %70 : vector<112x64xf32>
    %cst_33 = arith.constant 1.000000e+00 : f32
    %72 = vector.broadcast %cst_33 : f32 to vector<112x64xf32>
    %73 = arith.addf %72, %71 : vector<112x64xf32>
    %74 = arith.divf %72, %73 : vector<112x64xf32>
    %75 = arith.mulf %68, %74 : vector<112x64xf32>
    %c0_34 = arith.constant 0 : index
    %c0_35 = arith.constant 0 : index
    %c0_36 = arith.constant 0 : index
    %76 = vector.load %arg9[%c0_34, %c0_35, %c0_36] : memref<4x64x128xf32, #tpu.memory_space<vmem>>, vector<1x64x128xf32>
    %77 = vector.shape_cast %76 : vector<1x64x128xf32> to vector<64x128xf32>
    %cst_37 = arith.constant dense<0.000000e+00> : vector<112x128xf32>
    %78 = tpu.matmul %75, %77, %cst_37 {dimension_numbers = #tpu.dot_dimension_numbers<[1], [0], [0], [1], [0, 0, 1, 1], [], []>} : vector<112x64xf32>, vector<64x128xf32>, vector<112x128xf32> -> vector<112x128xf32>
    %c0_38 = arith.constant 0 : index
    %c0_39 = arith.constant 0 : index
    %c0_40 = arith.constant 0 : index
    %79 = vector.load %arg10[%c0_38, %c0_39, %c0_40] : memref<4x1x128xf32, #tpu.memory_space<vmem>>, vector<1x1x128xf32>
    %80 = vector.shape_cast %79 : vector<1x1x128xf32> to vector<1x128xf32>
    %81 = vector.broadcast %80 : vector<1x128xf32> to vector<112x128xf32>
    %82 = arith.addf %78, %81 : vector<112x128xf32>
    %83 = vector.extract_strided_slice %82 {offsets = [28, 64], sizes = [56, 64], strides = [1, 1]} : vector<112x128xf32> to vector<56x64xf32>
    %84 = arith.addf %38, %83 : vector<56x64xf32>
    %85 = vector.extract_strided_slice %37 {offsets = [2, 0], sizes = [112, 64], strides = [1, 1]} : vector<116x64xf32> to vector<112x64xf32>
    %86 = vector.extract_strided_slice %82 {offsets = [0, 0], sizes = [112, 64], strides = [1, 1]} : vector<112x128xf32> to vector<112x64xf32>
    %87 = arith.addf %85, %86 : vector<112x64xf32>
    %88 = vector.extract_strided_slice %7 {offsets = [2, 0], sizes = [112, 1], strides = [1, 1]} : vector<116x1xf32> to vector<112x1xf32>
    %89 = vector.broadcast %88 : vector<112x1xf32> to vector<112x64xf32>
    %90 = arith.mulf %87, %89 : vector<112x64xf32>
    %91 = vector.extract_strided_slice %90 {offsets = [0, 0], sizes = [104, 64], strides = [1, 1]} : vector<112x64xf32> to vector<104x64xf32>
    %c5 = arith.constant 5 : index
    %c0_41 = arith.constant 0 : index
    %c0_42 = arith.constant 0 : index
    %92 = vector.load %arg7[%c5, %c0_41, %c0_42] : memref<20x64x128xf32, #tpu.memory_space<vmem>>, vector<1x64x128xf32>
    %93 = vector.shape_cast %92 : vector<1x64x128xf32> to vector<64x128xf32>
    %cst_43 = arith.constant dense<0.000000e+00> : vector<104x128xf32>
    %94 = tpu.matmul %91, %93, %cst_43 {dimension_numbers = #tpu.dot_dimension_numbers<[1], [0], [0], [1], [0, 0, 1, 1], [], []>} : vector<104x64xf32>, vector<64x128xf32>, vector<104x128xf32> -> vector<104x128xf32>
    %95 = vector.extract_strided_slice %90 {offsets = [2, 0], sizes = [104, 64], strides = [1, 1]} : vector<112x64xf32> to vector<104x64xf32>
    %c6 = arith.constant 6 : index
    %c0_44 = arith.constant 0 : index
    %c0_45 = arith.constant 0 : index
    %96 = vector.load %arg7[%c6, %c0_44, %c0_45] : memref<20x64x128xf32, #tpu.memory_space<vmem>>, vector<1x64x128xf32>
    %97 = vector.shape_cast %96 : vector<1x64x128xf32> to vector<64x128xf32>
    %cst_46 = arith.constant dense<0.000000e+00> : vector<104x128xf32>
    %98 = tpu.matmul %95, %97, %cst_46 {dimension_numbers = #tpu.dot_dimension_numbers<[1], [0], [0], [1], [0, 0, 1, 1], [], []>} : vector<104x64xf32>, vector<64x128xf32>, vector<104x128xf32> -> vector<104x128xf32>
    %99 = arith.addf %94, %98 : vector<104x128xf32>
    %100 = vector.extract_strided_slice %90 {offsets = [4, 0], sizes = [104, 64], strides = [1, 1]} : vector<112x64xf32> to vector<104x64xf32>
    %c7 = arith.constant 7 : index
    %c0_47 = arith.constant 0 : index
    %c0_48 = arith.constant 0 : index
    %101 = vector.load %arg7[%c7, %c0_47, %c0_48] : memref<20x64x128xf32, #tpu.memory_space<vmem>>, vector<1x64x128xf32>
    %102 = vector.shape_cast %101 : vector<1x64x128xf32> to vector<64x128xf32>
    %cst_49 = arith.constant dense<0.000000e+00> : vector<104x128xf32>
    %103 = tpu.matmul %100, %102, %cst_49 {dimension_numbers = #tpu.dot_dimension_numbers<[1], [0], [0], [1], [0, 0, 1, 1], [], []>} : vector<104x64xf32>, vector<64x128xf32>, vector<104x128xf32> -> vector<104x128xf32>
    %104 = arith.addf %99, %103 : vector<104x128xf32>
    %105 = vector.extract_strided_slice %90 {offsets = [6, 0], sizes = [104, 64], strides = [1, 1]} : vector<112x64xf32> to vector<104x64xf32>
    %c8 = arith.constant 8 : index
    %c0_50 = arith.constant 0 : index
    %c0_51 = arith.constant 0 : index
    %106 = vector.load %arg7[%c8, %c0_50, %c0_51] : memref<20x64x128xf32, #tpu.memory_space<vmem>>, vector<1x64x128xf32>
    %107 = vector.shape_cast %106 : vector<1x64x128xf32> to vector<64x128xf32>
    %cst_52 = arith.constant dense<0.000000e+00> : vector<104x128xf32>
    %108 = tpu.matmul %105, %107, %cst_52 {dimension_numbers = #tpu.dot_dimension_numbers<[1], [0], [0], [1], [0, 0, 1, 1], [], []>} : vector<104x64xf32>, vector<64x128xf32>, vector<104x128xf32> -> vector<104x128xf32>
    %109 = arith.addf %104, %108 : vector<104x128xf32>
    %110 = vector.extract_strided_slice %90 {offsets = [8, 0], sizes = [104, 64], strides = [1, 1]} : vector<112x64xf32> to vector<104x64xf32>
    %c9 = arith.constant 9 : index
    %c0_53 = arith.constant 0 : index
    %c0_54 = arith.constant 0 : index
    %111 = vector.load %arg7[%c9, %c0_53, %c0_54] : memref<20x64x128xf32, #tpu.memory_space<vmem>>, vector<1x64x128xf32>
    %112 = vector.shape_cast %111 : vector<1x64x128xf32> to vector<64x128xf32>
    %cst_55 = arith.constant dense<0.000000e+00> : vector<104x128xf32>
    %113 = tpu.matmul %110, %112, %cst_55 {dimension_numbers = #tpu.dot_dimension_numbers<[1], [0], [0], [1], [0, 0, 1, 1], [], []>} : vector<104x64xf32>, vector<64x128xf32>, vector<104x128xf32> -> vector<104x128xf32>
    %114 = arith.addf %109, %113 : vector<104x128xf32>
    %c1_56 = arith.constant 1 : index
    %c0_57 = arith.constant 0 : index
    %c0_58 = arith.constant 0 : index
    %115 = vector.load %arg8[%c1_56, %c0_57, %c0_58] : memref<4x1x128xf32, #tpu.memory_space<vmem>>, vector<1x1x128xf32>
    %116 = vector.shape_cast %115 : vector<1x1x128xf32> to vector<1x128xf32>
    %117 = vector.broadcast %116 : vector<1x128xf32> to vector<104x128xf32>
    %118 = arith.addf %114, %117 : vector<104x128xf32>
    %119 = vector.extract_strided_slice %118 {offsets = [0, 0], sizes = [104, 64], strides = [1, 1]} : vector<104x128xf32> to vector<104x64xf32>
    %120 = math.tanh %119 : vector<104x64xf32>
    %121 = vector.extract_strided_slice %118 {offsets = [0, 64], sizes = [104, 64], strides = [1, 1]} : vector<104x128xf32> to vector<104x64xf32>
    %122 = arith.negf %121 : vector<104x64xf32>
    %123 = math.exp %122 : vector<104x64xf32>
    %cst_59 = arith.constant 1.000000e+00 : f32
    %124 = vector.broadcast %cst_59 : f32 to vector<104x64xf32>
    %125 = arith.addf %124, %123 : vector<104x64xf32>
    %126 = arith.divf %124, %125 : vector<104x64xf32>
    %127 = arith.mulf %120, %126 : vector<104x64xf32>
    %c1_60 = arith.constant 1 : index
    %c0_61 = arith.constant 0 : index
    %c0_62 = arith.constant 0 : index
    %128 = vector.load %arg9[%c1_60, %c0_61, %c0_62] : memref<4x64x128xf32, #tpu.memory_space<vmem>>, vector<1x64x128xf32>
    %129 = vector.shape_cast %128 : vector<1x64x128xf32> to vector<64x128xf32>
    %cst_63 = arith.constant dense<0.000000e+00> : vector<104x128xf32>
    %130 = tpu.matmul %127, %129, %cst_63 {dimension_numbers = #tpu.dot_dimension_numbers<[1], [0], [0], [1], [0, 0, 1, 1], [], []>} : vector<104x64xf32>, vector<64x128xf32>, vector<104x128xf32> -> vector<104x128xf32>
    %c1_64 = arith.constant 1 : index
    %c0_65 = arith.constant 0 : index
    %c0_66 = arith.constant 0 : index
    %131 = vector.load %arg10[%c1_64, %c0_65, %c0_66] : memref<4x1x128xf32, #tpu.memory_space<vmem>>, vector<1x1x128xf32>
    %132 = vector.shape_cast %131 : vector<1x1x128xf32> to vector<1x128xf32>
    %133 = vector.broadcast %132 : vector<1x128xf32> to vector<104x128xf32>
    %134 = arith.addf %130, %133 : vector<104x128xf32>
    %135 = vector.extract_strided_slice %134 {offsets = [24, 64], sizes = [56, 64], strides = [1, 1]} : vector<104x128xf32> to vector<56x64xf32>
    %136 = arith.addf %84, %135 : vector<56x64xf32>
    %137 = vector.extract_strided_slice %90 {offsets = [4, 0], sizes = [104, 64], strides = [1, 1]} : vector<112x64xf32> to vector<104x64xf32>
    %138 = vector.extract_strided_slice %134 {offsets = [0, 0], sizes = [104, 64], strides = [1, 1]} : vector<104x128xf32> to vector<104x64xf32>
    %139 = arith.addf %137, %138 : vector<104x64xf32>
    %140 = vector.extract_strided_slice %7 {offsets = [6, 0], sizes = [104, 1], strides = [1, 1]} : vector<116x1xf32> to vector<104x1xf32>
    %141 = vector.broadcast %140 : vector<104x1xf32> to vector<104x64xf32>
    %142 = arith.mulf %139, %141 : vector<104x64xf32>
    %143 = vector.extract_strided_slice %142 {offsets = [0, 0], sizes = [88, 64], strides = [1, 1]} : vector<104x64xf32> to vector<88x64xf32>
    %c10 = arith.constant 10 : index
    %c0_67 = arith.constant 0 : index
    %c0_68 = arith.constant 0 : index
    %144 = vector.load %arg7[%c10, %c0_67, %c0_68] : memref<20x64x128xf32, #tpu.memory_space<vmem>>, vector<1x64x128xf32>
    %145 = vector.shape_cast %144 : vector<1x64x128xf32> to vector<64x128xf32>
    %cst_69 = arith.constant dense<0.000000e+00> : vector<88x128xf32>
    %146 = tpu.matmul %143, %145, %cst_69 {dimension_numbers = #tpu.dot_dimension_numbers<[1], [0], [0], [1], [0, 0, 1, 1], [], []>} : vector<88x64xf32>, vector<64x128xf32>, vector<88x128xf32> -> vector<88x128xf32>
    %147 = vector.extract_strided_slice %142 {offsets = [4, 0], sizes = [88, 64], strides = [1, 1]} : vector<104x64xf32> to vector<88x64xf32>
    %c11 = arith.constant 11 : index
    %c0_70 = arith.constant 0 : index
    %c0_71 = arith.constant 0 : index
    %148 = vector.load %arg7[%c11, %c0_70, %c0_71] : memref<20x64x128xf32, #tpu.memory_space<vmem>>, vector<1x64x128xf32>
    %149 = vector.shape_cast %148 : vector<1x64x128xf32> to vector<64x128xf32>
    %cst_72 = arith.constant dense<0.000000e+00> : vector<88x128xf32>
    %150 = tpu.matmul %147, %149, %cst_72 {dimension_numbers = #tpu.dot_dimension_numbers<[1], [0], [0], [1], [0, 0, 1, 1], [], []>} : vector<88x64xf32>, vector<64x128xf32>, vector<88x128xf32> -> vector<88x128xf32>
    %151 = arith.addf %146, %150 : vector<88x128xf32>
    %152 = vector.extract_strided_slice %142 {offsets = [8, 0], sizes = [88, 64], strides = [1, 1]} : vector<104x64xf32> to vector<88x64xf32>
    %c12 = arith.constant 12 : index
    %c0_73 = arith.constant 0 : index
    %c0_74 = arith.constant 0 : index
    %153 = vector.load %arg7[%c12, %c0_73, %c0_74] : memref<20x64x128xf32, #tpu.memory_space<vmem>>, vector<1x64x128xf32>
    %154 = vector.shape_cast %153 : vector<1x64x128xf32> to vector<64x128xf32>
    %cst_75 = arith.constant dense<0.000000e+00> : vector<88x128xf32>
    %155 = tpu.matmul %152, %154, %cst_75 {dimension_numbers = #tpu.dot_dimension_numbers<[1], [0], [0], [1], [0, 0, 1, 1], [], []>} : vector<88x64xf32>, vector<64x128xf32>, vector<88x128xf32> -> vector<88x128xf32>
    %156 = arith.addf %151, %155 : vector<88x128xf32>
    %157 = vector.extract_strided_slice %142 {offsets = [12, 0], sizes = [88, 64], strides = [1, 1]} : vector<104x64xf32> to vector<88x64xf32>
    %c13 = arith.constant 13 : index
    %c0_76 = arith.constant 0 : index
    %c0_77 = arith.constant 0 : index
    %158 = vector.load %arg7[%c13, %c0_76, %c0_77] : memref<20x64x128xf32, #tpu.memory_space<vmem>>, vector<1x64x128xf32>
    %159 = vector.shape_cast %158 : vector<1x64x128xf32> to vector<64x128xf32>
    %cst_78 = arith.constant dense<0.000000e+00> : vector<88x128xf32>
    %160 = tpu.matmul %157, %159, %cst_78 {dimension_numbers = #tpu.dot_dimension_numbers<[1], [0], [0], [1], [0, 0, 1, 1], [], []>} : vector<88x64xf32>, vector<64x128xf32>, vector<88x128xf32> -> vector<88x128xf32>
    %161 = arith.addf %156, %160 : vector<88x128xf32>
    %162 = vector.extract_strided_slice %142 {offsets = [16, 0], sizes = [88, 64], strides = [1, 1]} : vector<104x64xf32> to vector<88x64xf32>
    %c14 = arith.constant 14 : index
    %c0_79 = arith.constant 0 : index
    %c0_80 = arith.constant 0 : index
    %163 = vector.load %arg7[%c14, %c0_79, %c0_80] : memref<20x64x128xf32, #tpu.memory_space<vmem>>, vector<1x64x128xf32>
    %164 = vector.shape_cast %163 : vector<1x64x128xf32> to vector<64x128xf32>
    %cst_81 = arith.constant dense<0.000000e+00> : vector<88x128xf32>
    %165 = tpu.matmul %162, %164, %cst_81 {dimension_numbers = #tpu.dot_dimension_numbers<[1], [0], [0], [1], [0, 0, 1, 1], [], []>} : vector<88x64xf32>, vector<64x128xf32>, vector<88x128xf32> -> vector<88x128xf32>
    %166 = arith.addf %161, %165 : vector<88x128xf32>
    %c2_82 = arith.constant 2 : index
    %c0_83 = arith.constant 0 : index
    %c0_84 = arith.constant 0 : index
    %167 = vector.load %arg8[%c2_82, %c0_83, %c0_84] : memref<4x1x128xf32, #tpu.memory_space<vmem>>, vector<1x1x128xf32>
    %168 = vector.shape_cast %167 : vector<1x1x128xf32> to vector<1x128xf32>
    %169 = vector.broadcast %168 : vector<1x128xf32> to vector<88x128xf32>
    %170 = arith.addf %166, %169 : vector<88x128xf32>
    %171 = vector.extract_strided_slice %170 {offsets = [0, 0], sizes = [88, 64], strides = [1, 1]} : vector<88x128xf32> to vector<88x64xf32>
    %172 = math.tanh %171 : vector<88x64xf32>
    %173 = vector.extract_strided_slice %170 {offsets = [0, 64], sizes = [88, 64], strides = [1, 1]} : vector<88x128xf32> to vector<88x64xf32>
    %174 = arith.negf %173 : vector<88x64xf32>
    %175 = math.exp %174 : vector<88x64xf32>
    %cst_85 = arith.constant 1.000000e+00 : f32
    %176 = vector.broadcast %cst_85 : f32 to vector<88x64xf32>
    %177 = arith.addf %176, %175 : vector<88x64xf32>
    %178 = arith.divf %176, %177 : vector<88x64xf32>
    %179 = arith.mulf %172, %178 : vector<88x64xf32>
    %c2_86 = arith.constant 2 : index
    %c0_87 = arith.constant 0 : index
    %c0_88 = arith.constant 0 : index
    %180 = vector.load %arg9[%c2_86, %c0_87, %c0_88] : memref<4x64x128xf32, #tpu.memory_space<vmem>>, vector<1x64x128xf32>
    %181 = vector.shape_cast %180 : vector<1x64x128xf32> to vector<64x128xf32>
    %cst_89 = arith.constant dense<0.000000e+00> : vector<88x128xf32>
    %182 = tpu.matmul %179, %181, %cst_89 {dimension_numbers = #tpu.dot_dimension_numbers<[1], [0], [0], [1], [0, 0, 1, 1], [], []>} : vector<88x64xf32>, vector<64x128xf32>, vector<88x128xf32> -> vector<88x128xf32>
    %c2_90 = arith.constant 2 : index
    %c0_91 = arith.constant 0 : index
    %c0_92 = arith.constant 0 : index
    %183 = vector.load %arg10[%c2_90, %c0_91, %c0_92] : memref<4x1x128xf32, #tpu.memory_space<vmem>>, vector<1x1x128xf32>
    %184 = vector.shape_cast %183 : vector<1x1x128xf32> to vector<1x128xf32>
    %185 = vector.broadcast %184 : vector<1x128xf32> to vector<88x128xf32>
    %186 = arith.addf %182, %185 : vector<88x128xf32>
    %187 = vector.extract_strided_slice %186 {offsets = [16, 64], sizes = [56, 64], strides = [1, 1]} : vector<88x128xf32> to vector<56x64xf32>
    %188 = arith.addf %136, %187 : vector<56x64xf32>
    %189 = vector.extract_strided_slice %142 {offsets = [8, 0], sizes = [88, 64], strides = [1, 1]} : vector<104x64xf32> to vector<88x64xf32>
    %190 = vector.extract_strided_slice %186 {offsets = [0, 0], sizes = [88, 64], strides = [1, 1]} : vector<88x128xf32> to vector<88x64xf32>
    %191 = arith.addf %189, %190 : vector<88x64xf32>
    %192 = vector.extract_strided_slice %7 {offsets = [14, 0], sizes = [88, 1], strides = [1, 1]} : vector<116x1xf32> to vector<88x1xf32>
    %193 = vector.broadcast %192 : vector<88x1xf32> to vector<88x64xf32>
    %194 = arith.mulf %191, %193 : vector<88x64xf32>
    %195 = vector.extract_strided_slice %194 {offsets = [0, 0], sizes = [56, 64], strides = [1, 1]} : vector<88x64xf32> to vector<56x64xf32>
    %c15 = arith.constant 15 : index
    %c0_93 = arith.constant 0 : index
    %c0_94 = arith.constant 0 : index
    %196 = vector.load %arg7[%c15, %c0_93, %c0_94] : memref<20x64x128xf32, #tpu.memory_space<vmem>>, vector<1x64x128xf32>
    %197 = vector.shape_cast %196 : vector<1x64x128xf32> to vector<64x128xf32>
    %cst_95 = arith.constant dense<0.000000e+00> : vector<56x128xf32>
    %198 = tpu.matmul %195, %197, %cst_95 {dimension_numbers = #tpu.dot_dimension_numbers<[1], [0], [0], [1], [0, 0, 1, 1], [], []>} : vector<56x64xf32>, vector<64x128xf32>, vector<56x128xf32> -> vector<56x128xf32>
    %199 = vector.extract_strided_slice %194 {offsets = [8, 0], sizes = [56, 64], strides = [1, 1]} : vector<88x64xf32> to vector<56x64xf32>
    %c16 = arith.constant 16 : index
    %c0_96 = arith.constant 0 : index
    %c0_97 = arith.constant 0 : index
    %200 = vector.load %arg7[%c16, %c0_96, %c0_97] : memref<20x64x128xf32, #tpu.memory_space<vmem>>, vector<1x64x128xf32>
    %201 = vector.shape_cast %200 : vector<1x64x128xf32> to vector<64x128xf32>
    %cst_98 = arith.constant dense<0.000000e+00> : vector<56x128xf32>
    %202 = tpu.matmul %199, %201, %cst_98 {dimension_numbers = #tpu.dot_dimension_numbers<[1], [0], [0], [1], [0, 0, 1, 1], [], []>} : vector<56x64xf32>, vector<64x128xf32>, vector<56x128xf32> -> vector<56x128xf32>
    %203 = arith.addf %198, %202 : vector<56x128xf32>
    %204 = vector.extract_strided_slice %194 {offsets = [16, 0], sizes = [56, 64], strides = [1, 1]} : vector<88x64xf32> to vector<56x64xf32>
    %c17 = arith.constant 17 : index
    %c0_99 = arith.constant 0 : index
    %c0_100 = arith.constant 0 : index
    %205 = vector.load %arg7[%c17, %c0_99, %c0_100] : memref<20x64x128xf32, #tpu.memory_space<vmem>>, vector<1x64x128xf32>
    %206 = vector.shape_cast %205 : vector<1x64x128xf32> to vector<64x128xf32>
    %cst_101 = arith.constant dense<0.000000e+00> : vector<56x128xf32>
    %207 = tpu.matmul %204, %206, %cst_101 {dimension_numbers = #tpu.dot_dimension_numbers<[1], [0], [0], [1], [0, 0, 1, 1], [], []>} : vector<56x64xf32>, vector<64x128xf32>, vector<56x128xf32> -> vector<56x128xf32>
    %208 = arith.addf %203, %207 : vector<56x128xf32>
    %209 = vector.extract_strided_slice %194 {offsets = [24, 0], sizes = [56, 64], strides = [1, 1]} : vector<88x64xf32> to vector<56x64xf32>
    %c18 = arith.constant 18 : index
    %c0_102 = arith.constant 0 : index
    %c0_103 = arith.constant 0 : index
    %210 = vector.load %arg7[%c18, %c0_102, %c0_103] : memref<20x64x128xf32, #tpu.memory_space<vmem>>, vector<1x64x128xf32>
    %211 = vector.shape_cast %210 : vector<1x64x128xf32> to vector<64x128xf32>
    %cst_104 = arith.constant dense<0.000000e+00> : vector<56x128xf32>
    %212 = tpu.matmul %209, %211, %cst_104 {dimension_numbers = #tpu.dot_dimension_numbers<[1], [0], [0], [1], [0, 0, 1, 1], [], []>} : vector<56x64xf32>, vector<64x128xf32>, vector<56x128xf32> -> vector<56x128xf32>
    %213 = arith.addf %208, %212 : vector<56x128xf32>
    %214 = vector.extract_strided_slice %194 {offsets = [32, 0], sizes = [56, 64], strides = [1, 1]} : vector<88x64xf32> to vector<56x64xf32>
    %c19 = arith.constant 19 : index
    %c0_105 = arith.constant 0 : index
    %c0_106 = arith.constant 0 : index
    %215 = vector.load %arg7[%c19, %c0_105, %c0_106] : memref<20x64x128xf32, #tpu.memory_space<vmem>>, vector<1x64x128xf32>
    %216 = vector.shape_cast %215 : vector<1x64x128xf32> to vector<64x128xf32>
    %cst_107 = arith.constant dense<0.000000e+00> : vector<56x128xf32>
    %217 = tpu.matmul %214, %216, %cst_107 {dimension_numbers = #tpu.dot_dimension_numbers<[1], [0], [0], [1], [0, 0, 1, 1], [], []>} : vector<56x64xf32>, vector<64x128xf32>, vector<56x128xf32> -> vector<56x128xf32>
    %218 = arith.addf %213, %217 : vector<56x128xf32>
    %c3_108 = arith.constant 3 : index
    %c0_109 = arith.constant 0 : index
    %c0_110 = arith.constant 0 : index
    %219 = vector.load %arg8[%c3_108, %c0_109, %c0_110] : memref<4x1x128xf32, #tpu.memory_space<vmem>>, vector<1x1x128xf32>
    %220 = vector.shape_cast %219 : vector<1x1x128xf32> to vector<1x128xf32>
    %221 = vector.broadcast %220 : vector<1x128xf32> to vector<56x128xf32>
    %222 = arith.addf %218, %221 : vector<56x128xf32>
    %223 = vector.extract_strided_slice %222 {offsets = [0, 0], sizes = [56, 64], strides = [1, 1]} : vector<56x128xf32> to vector<56x64xf32>
    %224 = math.tanh %223 : vector<56x64xf32>
    %225 = vector.extract_strided_slice %222 {offsets = [0, 64], sizes = [56, 64], strides = [1, 1]} : vector<56x128xf32> to vector<56x64xf32>
    %226 = arith.negf %225 : vector<56x64xf32>
    %227 = math.exp %226 : vector<56x64xf32>
    %cst_111 = arith.constant 1.000000e+00 : f32
    %228 = vector.broadcast %cst_111 : f32 to vector<56x64xf32>
    %229 = arith.addf %228, %227 : vector<56x64xf32>
    %230 = arith.divf %228, %229 : vector<56x64xf32>
    %231 = arith.mulf %224, %230 : vector<56x64xf32>
    %c3_112 = arith.constant 3 : index
    %c0_113 = arith.constant 0 : index
    %c0_114 = arith.constant 0 : index
    %232 = vector.load %arg9[%c3_112, %c0_113, %c0_114] : memref<4x64x128xf32, #tpu.memory_space<vmem>>, vector<1x64x128xf32>
    %233 = vector.shape_cast %232 : vector<1x64x128xf32> to vector<64x128xf32>
    %cst_115 = arith.constant dense<0.000000e+00> : vector<56x128xf32>
    %234 = tpu.matmul %231, %233, %cst_115 {dimension_numbers = #tpu.dot_dimension_numbers<[1], [0], [0], [1], [0, 0, 1, 1], [], []>} : vector<56x64xf32>, vector<64x128xf32>, vector<56x128xf32> -> vector<56x128xf32>
    %c3_116 = arith.constant 3 : index
    %c0_117 = arith.constant 0 : index
    %c0_118 = arith.constant 0 : index
    %235 = vector.load %arg10[%c3_116, %c0_117, %c0_118] : memref<4x1x128xf32, #tpu.memory_space<vmem>>, vector<1x1x128xf32>
    %236 = vector.shape_cast %235 : vector<1x1x128xf32> to vector<1x128xf32>
    %237 = vector.broadcast %236 : vector<1x128xf32> to vector<56x128xf32>
    %238 = arith.addf %234, %237 : vector<56x128xf32>
    %239 = vector.extract_strided_slice %238 {offsets = [0, 64], sizes = [56, 64], strides = [1, 1]} : vector<56x128xf32> to vector<56x64xf32>
    %240 = arith.addf %188, %239 : vector<56x64xf32>
    %241 = vector.extract_strided_slice %7 {offsets = [30, 0], sizes = [56, 1], strides = [1, 1]} : vector<116x1xf32> to vector<56x1xf32>
    %242 = vector.broadcast %241 : vector<56x1xf32> to vector<56x64xf32>
    %243 = arith.mulf %240, %242 : vector<56x64xf32>
    %c0_119 = arith.constant 0 : index
    %c0_120 = arith.constant 0 : index
    %244 = vector.load %arg11[%c0_119, %c0_120] : memref<64x8xf32, #tpu.memory_space<vmem>>, vector<64x8xf32>
    %cst_121 = arith.constant dense<0.000000e+00> : vector<56x8xf32>
    %245 = tpu.matmul %243, %244, %cst_121 {dimension_numbers = #tpu.dot_dimension_numbers<[1], [0], [0], [1], [0, 0, 1, 1], [], []>} : vector<56x64xf32>, vector<64x8xf32>, vector<56x8xf32> -> vector<56x8xf32>
    %c0_122 = arith.constant 0 : index
    %c0_123 = arith.constant 0 : index
    %246 = vector.load %arg12[%c0_122, %c0_123] : memref<1x8xf32, #tpu.memory_space<vmem>>, vector<1x8xf32>
    %247 = vector.broadcast %246 : vector<1x8xf32> to vector<56x8xf32>
    %248 = arith.addf %245, %247 : vector<56x8xf32>
    %249 = vector.broadcast %241 : vector<56x1xf32> to vector<56x8xf32>
    %250 = arith.mulf %248, %249 : vector<56x8xf32>
    %251 = vector.extract_strided_slice %250 {offsets = [0, 0], sizes = [56, 4], strides = [1, 1]} : vector<56x8xf32> to vector<56x4xf32>
    %252 = vector.extract_strided_slice %250 {offsets = [0, 4], sizes = [56, 4], strides = [1, 1]} : vector<56x8xf32> to vector<56x4xf32>
    %c0_124 = arith.constant 0 : index
    %c0_125 = arith.constant 0 : index
    %c0_126 = arith.constant 0 : index
    %253 = vector.load %arg4[%c0_124, %c0_125, %c0_126] : memref<1x56x4xf32, #tpu.memory_space<vmem>>, vector<1x56x4xf32>
    %254 = vector.shape_cast %253 : vector<1x56x4xf32> to vector<56x4xf32>
    %255 = math.exp %252 : vector<56x4xf32>
    %256 = arith.mulf %254, %255 : vector<56x4xf32>
    %257 = vector.broadcast %241 : vector<56x1xf32> to vector<56x4xf32>
    %258 = arith.mulf %256, %257 : vector<56x4xf32>
    %259 = arith.addf %251, %258 : vector<56x4xf32>
    %260 = vector.extract_strided_slice %4 {offsets = [30, 0], sizes = [56, 4], strides = [1, 1]} : vector<116x4xf32> to vector<56x4xf32>
    %261 = tpu.concatenate %260, %259, %252 in 1 : vector<56x4xf32>, vector<56x4xf32>, vector<56x4xf32> -> vector<56x12xf32>
    %c0_127 = arith.constant 0 : index
    %c0_128 = arith.constant 0 : index
    %c0_129 = arith.constant 0 : index
    %262 = vector.load %arg13[%c0_127, %c0_128, %c0_129] : memref<1x56x12xf32, #tpu.memory_space<vmem>>, vector<1x56x12xf32>
    %263 = vector.shape_cast %262 : vector<1x56x12xf32> to vector<56x12xf32>
    %264 = vector.shape_cast %261 : vector<56x12xf32> to vector<1x56x12xf32>
    tpu.vector_store %arg13[%c0_127, %c0_128, %c0_129], %264 {strides = array<i32>} : memref<1x56x12xf32, #tpu.memory_space<vmem>>, vector<1x56x12xf32>,
    return
  }
  func.func @transform_0(%arg0: i32, %arg1: i32) -> (i32, i32, i32) {
    %c0_i32 = arith.constant 0 : i32
    %c0_i32_0 = arith.constant 0 : i32
    %c0_i32_1 = arith.constant 0 : i32
    return %arg0, %c0_i32, %c0_i32_0 : i32, i32, i32
  }
  func.func @transform_1(%arg0: i32, %arg1: i32) -> (i32, i32, i32) {
    %c0_i32 = arith.constant 0 : i32
    %c0_i32_0 = arith.constant 0 : i32
    %c0_i32_1 = arith.constant 0 : i32
    return %arg0, %c0_i32, %c0_i32_0 : i32, i32, i32
  }
  func.func @transform_2(%arg0: i32, %arg1: i32) -> (i32, i32, i32) {
    %c0_i32 = arith.constant 0 : i32
    %c0_i32_0 = arith.constant 0 : i32
    return %arg0, %arg1, %c0_i32 : i32, i32, i32
  }
  func.func @transform_3(%arg0: i32, %arg1: i32) -> (i32, i32) {
    %c0_i32 = arith.constant 0 : i32
    %c0_i32_0 = arith.constant 0 : i32
    %c0_i32_1 = arith.constant 0 : i32
    return %c0_i32, %c0_i32_0 : i32, i32
  }
  func.func @transform_4(%arg0: i32, %arg1: i32) -> (i32, i32) {
    %c0_i32 = arith.constant 0 : i32
    %c0_i32_0 = arith.constant 0 : i32
    %c0_i32_1 = arith.constant 0 : i32
    return %c0_i32, %c0_i32_0 : i32, i32
  }
  func.func @transform_5(%arg0: i32, %arg1: i32) -> (i32, i32, i32) {
    %c0_i32 = arith.constant 0 : i32
    %c0_i32_0 = arith.constant 0 : i32
    %c0_i32_1 = arith.constant 0 : i32
    %c0_i32_2 = arith.constant 0 : i32
    return %c0_i32, %c0_i32_0, %c0_i32_1 : i32, i32, i32
  }
  func.func @transform_6(%arg0: i32, %arg1: i32) -> (i32, i32, i32) {
    %c0_i32 = arith.constant 0 : i32
    %c0_i32_0 = arith.constant 0 : i32
    %c0_i32_1 = arith.constant 0 : i32
    %c0_i32_2 = arith.constant 0 : i32
    return %c0_i32, %c0_i32_0, %c0_i32_1 : i32, i32, i32
  }
  func.func @transform_7(%arg0: i32, %arg1: i32) -> (i32, i32, i32) {
    %c0_i32 = arith.constant 0 : i32
    %c0_i32_0 = arith.constant 0 : i32
    %c0_i32_1 = arith.constant 0 : i32
    %c0_i32_2 = arith.constant 0 : i32
    return %c0_i32, %c0_i32_0, %c0_i32_1 : i32, i32, i32
  }
  func.func @transform_8(%arg0: i32, %arg1: i32) -> (i32, i32, i32) {
    %c0_i32 = arith.constant 0 : i32
    %c0_i32_0 = arith.constant 0 : i32
    %c0_i32_1 = arith.constant 0 : i32
    %c0_i32_2 = arith.constant 0 : i32
    return %c0_i32, %c0_i32_0, %c0_i32_1 : i32, i32, i32
  }
  func.func @transform_9(%arg0: i32, %arg1: i32) -> (i32, i32) {
    %c0_i32 = arith.constant 0 : i32
    %c0_i32_0 = arith.constant 0 : i32
    %c0_i32_1 = arith.constant 0 : i32
    return %c0_i32, %c0_i32_0 : i32, i32
  }
  func.func @transform_10(%arg0: i32, %arg1: i32) -> (i32, i32) {
    %c0_i32 = arith.constant 0 : i32
    %c0_i32_0 = arith.constant 0 : i32
    %c0_i32_1 = arith.constant 0 : i32
    return %c0_i32, %c0_i32_0 : i32, i32
  }
  func.func @transform_11(%arg0: i32, %arg1: i32) -> (i32, i32, i32) {
    %c0_i32 = arith.constant 0 : i32
    %c0_i32_0 = arith.constant 0 : i32
    return %arg0, %arg1, %c0_i32 : i32, i32, i32
  }
}

</mosaic_0001>

<llo_original>
// kernel: tpu_custom_call.1
$region0: #{tpu_custom_call.1}
  #allocation0 [shape = 'u32[]', space=smem, size = 0x4, offset = 0x4, fixed_abs, tag = 'smem constant byte address 0x4 - core index']
  #allocation1 [shape = 'u32[144,128]{1,0:T(1,128)}', space=vmem, size = 0x12000, scoped, tag = 'internal scratch']
  %s0 = inlined_call_operand.vmem [shape: f32[2,116,4], index: 0, kind: input, shape index: {}]
  %s1 = inlined_call_operand.vmem [shape: f32[2,116,1], index: 1, kind: input, shape index: {}]
  %s2 = inlined_call_operand.vmem [shape: f32[2,56,4], index: 2, kind: input, shape index: {}]
  %s3 = inlined_call_operand.vmem [shape: f32[4,64], index: 3, kind: input, shape index: {}]
  %s4 = inlined_call_operand.vmem [shape: f32[1,64], index: 4, kind: input, shape index: {}]
  %s5 = inlined_call_operand.hbm [shape: f32[20,64,128], index: 5, kind: input, shape index: {}]
  %s6 = inlined_call_operand.vmem [shape: f32[4,1,128], index: 6, kind: input, shape index: {}]
  %s7 = inlined_call_operand.vmem [shape: f32[4,64,128], index: 7, kind: input, shape index: {}]
  %s8 = inlined_call_operand.vmem [shape: f32[4,1,128], index: 8, kind: input, shape index: {}]
  %s9 = inlined_call_operand.vmem [shape: f32[64,8], index: 9, kind: input, shape index: {}]
  %s10 = inlined_call_operand.vmem [shape: f32[1,8], index: 10, kind: input, shape index: {}]
  %s11 = inlined_call_operand.vmem [shape: f32[2,56,12], index: 11, kind: output, shape index: {}]
  %s12 = sld [smem:[#allocation0]]
  $region81: #{tpu_custom_call.1} parent=0
    _
  %s14 = ssub.s32 1, %s12
  %s15 = scalar_select 0, %s14, %s12
  $region1: #{tpu_custom_call.1} parent=0
    #allocation2 [shape = 'u8[655360]{0}', space=vmem, size = 0xa0000, scoped, tag = 'input window, operand 5, single buffered']
    #allocation3 [shape = 's32[2]{0}', space=sflag, size = 0x8, scoped, tag = 'scoped memory for tpu_custom_call.1']
    %16 = vsyncpa [#allocation3], 0
    loop: start=0, step=1, limit=4
    $region2: #{tpu_custom_call.1} parent=1 // loop_pre_header
      _
    $region3: #{tpu_custom_call.1} parent=1 // loop_header
      %s18 = sphi 0, %s22
      %p19 = scmp.ge.s32.totalorder %s18, 4
      %s25 = sphi 0, %s37
      %s26 = sphi 0, %s33
      %s27 = sphi 0, %s25
      %s28 = sphi 0, %s26
      %s29 = sphi 0, %s27
      %s30 = sphi 0, %s28
      %s40 = sphi 0, %s42
      %s43 = sphi 0, %s40
      %s44 = sphi 0, %s43
      %s60 = sphi 0, %s44
      %s66 = sphi 0, %s68
      %s69 = sphi 0, %s66
      %s70 = sphi 0, %s69
      %s86 = sphi 0, %s70
      %s94 = sphi 0, %s96
      %s97 = sphi 0, %s94
      %s98 = sphi 0, %s97
      %s114 = sphi 0, %s98
      %s118 = sphi 0, %s118
      %s120 = sphi 0, %s118
      %s121 = sphi 0, %s120
      %s135 = sphi 0, %s121
      %s139 = sphi 0, %s139
      %s141 = sphi 0, %s139
      %s142 = sphi 0, %s141
      %s156 = sphi 0, %s142
      %s160 = sphi 0, %s160
      %s162 = sphi 0, %s160
      %s163 = sphi 0, %s162
      %s177 = sphi 0, %s163
      %s181 = sphi 0, %s181
      %s183 = sphi 0, %s181
      %s184 = sphi 0, %s183
      %s198 = sphi 0, %s184
      %s202 = sphi 0, %s202
      %s204 = sphi 0, %s202
      %s205 = sphi 0, %s204
      %s219 = sphi 0, %s205
      %s223 = sphi 0, %s223
      %s225 = sphi 0, %s223
      %s226 = sphi 0, %s225
      %s240 = sphi 0, %s226
      %s244 = sphi 0, %s244
      %s246 = sphi 0, %s244
      %s247 = sphi 0, %s246
      %s261 = sphi 0, %s247
      %s265 = sphi 0, %s265
      %s267 = sphi 0, %s265
      %s268 = sphi 0, %s267
      %s282 = sphi 0, %s268
      %s290 = sphi 0, %s292
      %s293 = sphi 0, %s290
      %s294 = sphi 0, %s293
      %s310 = sphi 0, %s294
    $region4: #{tpu_custom_call.1} parent=1 // loop_header_branch
      %21 = sbr.rel (%p19) target = $region8
    $region5: #{tpu_custom_call.1} parent=1 // loop_body
      %s23 = ssub.s32 %s18, 1
      %s24 = ssub.s32 %s18, 2
      %s31 = sadd.s32 1, %s26
      %p32 = scmp.ge.s32.totalorder %s31, 1
      %s33 = scalar_select %p32, 0, %s31
      %s34 = sadd.s32 1, %s25
      %s35 = scalar_select %p32, %s34, %s25
      %p36 = scmp.ge.s32.totalorder %s35, 2
      %s37 = scalar_select %p36, 0, %s35
      %s38 = ssub.s32 %s25, %s37
      %p39 = scmp.eq.s32.totalorder %s38, 0
      %s41 = sadd.s32 %s40, 1
      %s42 = scalar_select %p39, %s40, %s41
      %p45 = pneg %p39
      %p46 = scmp.eq.s32.totalorder %s18, 1
      %p47 = por %p45, %p46
      %p48 = scmp.ne.s32.totalorder %s40, %s43
      %p49 = scmp.eq.s32.totalorder %s18, 0
      %p50 = por %p48, %p49
      %p51 = scmp.ne.s32.totalorder %s40, %s43
      %p52 = scmp.eq.s32.totalorder %s23, 1
      %p53 = por %p51, %p52
      %p54 = scmp.ne.s32.totalorder %s43, %s44
      %p55 = scmp.eq.s32.totalorder %s23, 0
      %p56 = por %p54, %p55
      %p57 = scmp.ne.s32.totalorder %s43, %s44
      %p58 = scmp.eq.s32.totalorder %s24, 1
      %p59 = por %p57, %p58
      %p61 = scmp.ne.s32.totalorder %s44, %s60
      %p62 = scmp.eq.s32.totalorder %s24, 0
      %p63 = por %p61, %p62
      %s64 = ssub.s32 %s25, %s37
      %p65 = scmp.eq.s32.totalorder %s64, 0
      %s67 = sadd.s32 %s66, 1
      %s68 = scalar_select %p65, %s66, %s67
      %p71 = pneg %p65
      %p72 = scmp.eq.s32.totalorder %s18, 1
      %p73 = por %p71, %p72
      %p74 = scmp.ne.s32.totalorder %s66, %s69
      %p75 = scmp.eq.s32.totalorder %s18, 0
      %p76 = por %p74, %p75
      %p77 = scmp.ne.s32.totalorder %s66, %s69
      %p78 = scmp.eq.s32.totalorder %s23, 1
      %p79 = por %p77, %p78
      %p80 = scmp.ne.s32.totalorder %s69, %s70
      %p81 = scmp.eq.s32.totalorder %s23, 0
      %p82 = por %p80, %p81
      %p83 = scmp.ne.s32.totalorder %s69, %s70
      %p84 = scmp.eq.s32.totalorder %s24, 1
      %p85 = por %p83, %p84
      %p87 = scmp.ne.s32.totalorder %s70, %s86
      %p88 = scmp.eq.s32.totalorder %s24, 0
      %p89 = por %p87, %p88
      %s90 = ssub.s32 %s25, %s37
      %s91 = ssub.s32 %s26, %s33
      %s92 = sor.u32 %s90, %s91
      %p93 = scmp.eq.s32.totalorder %s92, 0
      %s95 = sadd.s32 %s94, 1
      %s96 = scalar_select %p93, %s94, %s95
      %p99 = pneg %p93
      %p100 = scmp.eq.s32.totalorder %s18, 1
      %p101 = por %p99, %p100
      %p102 = scmp.ne.s32.totalorder %s94, %s97
      %p103 = scmp.eq.s32.totalorder %s18, 0
      %p104 = por %p102, %p103
      %p105 = scmp.ne.s32.totalorder %s94, %s97
      %p106 = scmp.eq.s32.totalorder %s23, 1
      %p107 = por %p105, %p106
      %p108 = scmp.ne.s32.totalorder %s97, %s98
      %p109 = scmp.eq.s32.totalorder %s23, 0
      %p110 = por %p108, %p109
      %p111 = scmp.ne.s32.totalorder %s97, %s98
      %p112 = scmp.eq.s32.totalorder %s24, 1
      %p113 = por %p111, %p112
      %p115 = scmp.ne.s32.totalorder %s98, %s114
      %p116 = scmp.eq.s32.totalorder %s24, 0
      %p117 = por %p115, %p116
      %s119 = sadd.s32 %s118, 1
      %p122 = scmp.eq.s32.totalorder %s18, 1
      %p123 = scmp.ne.s32.totalorder %s118, %s120
      %p124 = scmp.eq.s32.totalorder %s18, 0
      %p125 = por %p123, %p124
      %p126 = scmp.ne.s32.totalorder %s118, %s120
      %p127 = scmp.eq.s32.totalorder %s23, 1
      %p128 = por %p126, %p127
      %p129 = scmp.ne.s32.totalorder %s120, %s121
      %p130 = scmp.eq.s32.totalorder %s23, 0
      %p131 = por %p129, %p130
      %p132 = scmp.ne.s32.totalorder %s120, %s121
      %p133 = scmp.eq.s32.totalorder %s24, 1
      %p134 = por %p132, %p133
      %p136 = scmp.ne.s32.totalorder %s121, %s135
      %p137 = scmp.eq.s32.totalorder %s24, 0
      %p138 = por %p136, %p137
      %s140 = sadd.s32 %s139, 1
      %p143 = scmp.eq.s32.totalorder %s18, 1
      %p144 = scmp.ne.s32.totalorder %s139, %s141
      %p145 = scmp.eq.s32.totalorder %s18, 0
      %p146 = por %p144, %p145
      %p147 = scmp.ne.s32.totalorder %s139, %s141
      %p148 = scmp.eq.s32.totalorder %s23, 1
      %p149 = por %p147, %p148
      %p150 = scmp.ne.s32.totalorder %s141, %s142
      %p151 = scmp.eq.s32.totalorder %s23, 0
      %p152 = por %p150, %p151
      %p153 = scmp.ne.s32.totalorder %s141, %s142
      %p154 = scmp.eq.s32.totalorder %s24, 1
      %p155 = por %p153, %p154
      %p157 = scmp.ne.s32.totalorder %s142, %s156
      %p158 = scmp.eq.s32.totalorder %s24, 0
      %p159 = por %p157, %p158
      %s161 = sadd.s32 %s160, 1
      %p164 = scmp.eq.s32.totalorder %s18, 1
      %p165 = scmp.ne.s32.totalorder %s160, %s162
      %p166 = scmp.eq.s32.totalorder %s18, 0
      %p167 = por %p165, %p166
      %p168 = scmp.ne.s32.totalorder %s160, %s162
      %p169 = scmp.eq.s32.totalorder %s23, 1
      %p170 = por %p168, %p169
      %p171 = scmp.ne.s32.totalorder %s162, %s163
      %p172 = scmp.eq.s32.totalorder %s23, 0
      %p173 = por %p171, %p172
      %p174 = scmp.ne.s32.totalorder %s162, %s163
      %p175 = scmp.eq.s32.totalorder %s24, 1
      %p176 = por %p174, %p175
      %p178 = scmp.ne.s32.totalorder %s163, %s177
      %p179 = scmp.eq.s32.totalorder %s24, 0
      %p180 = por %p178, %p179
      %s182 = sadd.s32 %s181, 1
      %p185 = scmp.eq.s32.totalorder %s18, 1
      %p186 = scmp.ne.s32.totalorder %s181, %s183
      %p187 = scmp.eq.s32.totalorder %s18, 0
      %p188 = por %p186, %p187
      %p189 = scmp.ne.s32.totalorder %s181, %s183
      %p190 = scmp.eq.s32.totalorder %s23, 1
      %p191 = por %p189, %p190
      %p192 = scmp.ne.s32.totalorder %s183, %s184
      %p193 = scmp.eq.s32.totalorder %s23, 0
      %p194 = por %p192, %p193
      %p195 = scmp.ne.s32.totalorder %s183, %s184
      %p196 = scmp.eq.s32.totalorder %s24, 1
      %p197 = por %p195, %p196
      %p199 = scmp.ne.s32.totalorder %s184, %s198
      %p200 = scmp.eq.s32.totalorder %s24, 0
      %p201 = por %p199, %p200
      %s203 = sadd.s32 %s202, 1
      %p206 = scmp.eq.s32.totalorder %s18, 1
      %p207 = scmp.ne.s32.totalorder %s202, %s204
      %p208 = scmp.eq.s32.totalorder %s18, 0
      %p209 = por %p207, %p208
      %p210 = scmp.ne.s32.totalorder %s202, %s204
      %p211 = scmp.eq.s32.totalorder %s23, 1
      %p212 = por %p210, %p211
      %p213 = scmp.ne.s32.totalorder %s204, %s205
      %p214 = scmp.eq.s32.totalorder %s23, 0
      %p215 = por %p213, %p214
      %p216 = scmp.ne.s32.totalorder %s204, %s205
      %p217 = scmp.eq.s32.totalorder %s24, 1
      %p218 = por %p216, %p217
      %p220 = scmp.ne.s32.totalorder %s205, %s219
      %p221 = scmp.eq.s32.totalorder %s24, 0
      %p222 = por %p220, %p221
      %s224 = sadd.s32 %s223, 1
      %p227 = scmp.eq.s32.totalorder %s18, 1
      %p228 = scmp.ne.s32.totalorder %s223, %s225
      %p229 = scmp.eq.s32.totalorder %s18, 0
      %p230 = por %p228, %p229
      %p231 = scmp.ne.s32.totalorder %s223, %s225
      %p232 = scmp.eq.s32.totalorder %s23, 1
      %p233 = por %p231, %p232
      %p234 = scmp.ne.s32.totalorder %s225, %s226
      %p235 = scmp.eq.s32.totalorder %s23, 0
      %p236 = por %p234, %p235
      %p237 = scmp.ne.s32.totalorder %s225, %s226
      %p238 = scmp.eq.s32.totalorder %s24, 1
      %p239 = por %p237, %p238
      %p241 = scmp.ne.s32.totalorder %s226, %s240
      %p242 = scmp.eq.s32.totalorder %s24, 0
      %p243 = por %p241, %p242
      %s245 = sadd.s32 %s244, 1
      %p248 = scmp.eq.s32.totalorder %s18, 1
      %p249 = scmp.ne.s32.totalorder %s244, %s246
      %p250 = scmp.eq.s32.totalorder %s18, 0
      %p251 = por %p249, %p250
      %p252 = scmp.ne.s32.totalorder %s244, %s246
      %p253 = scmp.eq.s32.totalorder %s23, 1
      %p254 = por %p252, %p253
      %p255 = scmp.ne.s32.totalorder %s246, %s247
      %p256 = scmp.eq.s32.totalorder %s23, 0
      %p257 = por %p255, %p256
      %p258 = scmp.ne.s32.totalorder %s246, %s247
      %p259 = scmp.eq.s32.totalorder %s24, 1
      %p260 = por %p258, %p259
      %p262 = scmp.ne.s32.totalorder %s247, %s261
      %p263 = scmp.eq.s32.totalorder %s24, 0
      %p264 = por %p262, %p263
      %s266 = sadd.s32 %s265, 1
      %p269 = scmp.eq.s32.totalorder %s18, 1
      %p270 = scmp.ne.s32.totalorder %s265, %s267
      %p271 = scmp.eq.s32.totalorder %s18, 0
      %p272 = por %p270, %p271
      %p273 = scmp.ne.s32.totalorder %s265, %s267
      %p274 = scmp.eq.s32.totalorder %s23, 1
      %p275 = por %p273, %p274
      %p276 = scmp.ne.s32.totalorder %s267, %s268
      %p277 = scmp.eq.s32.totalorder %s23, 0
      %p278 = por %p276, %p277
      %p279 = scmp.ne.s32.totalorder %s267, %s268
      %p280 = scmp.eq.s32.totalorder %s24, 1
      %p281 = por %p279, %p280
      %p283 = scmp.ne.s32.totalorder %s268, %s282
      %p284 = scmp.eq.s32.totalorder %s24, 0
      %p285 = por %p283, %p284
      %s286 = ssub.s32 %s25, %s37
      %s287 = ssub.s32 %s26, %s33
      %s288 = sor.u32 %s286, %s287
      %p289 = scmp.eq.s32.totalorder %s288, 0
      %s291 = sadd.s32 %s290, 1
      %s292 = scalar_select %p289, %s290, %s291
      %p295 = pneg %p289
      %p296 = scmp.eq.s32.totalorder %s18, 1
      %p297 = por %p295, %p296
      %p298 = scmp.ne.s32.totalorder %s290, %s293
      %p299 = scmp.eq.s32.totalorder %s18, 0
      %p300 = por %p298, %p299
      %p301 = scmp.ne.s32.totalorder %s290, %s293
      %p302 = scmp.eq.s32.totalorder %s23, 1
      %p303 = por %p301, %p302
      %p304 = scmp.ne.s32.totalorder %s293, %s294
      %p305 = scmp.eq.s32.totalorder %s23, 0
      %p306 = por %p304, %p305
      %p307 = scmp.ne.s32.totalorder %s293, %s294
      %p308 = scmp.eq.s32.totalorder %s24, 1
      %p309 = por %p307, %p308
      %p311 = scmp.ne.s32.totalorder %s294, %s310
      %p312 = scmp.eq.s32.totalorder %s24, 0
      %p313 = por %p311, %p312
      %p314 = scmp.le.s32.totalorder 1, %s18
      %p315 = scmp.lt.s32.totalorder %s18, 3
      %p316 = pnand %p314, %p315
      %p317 = pneg %p316
      // Predicated region
      $region9: #{tpu_custom_call.1} parent=5 // pred_check
        _
      $region10: #{tpu_custom_call.1} parent=5 // pred_check_branch
        %319 = sbr.rel (%p316) target = $region12
      $region11: #{tpu_custom_call.1} parent=5 // pred_region
        %s320 = ssub.s32 %s18, 1
        // Predicated region
        $region13: #{tpu_custom_call.1} parent=11 // pred_check
          %p321 = pneg %p131
        $region14: #{tpu_custom_call.1} parent=11 // pred_check_branch
          %323 = sbr.rel (%p321) target = $region16
        $region15: #{tpu_custom_call.1} parent=11 // pred_region
          _
        $region16: #{tpu_custom_call.1} parent=11 // pred_fallthru
          _
        // Predicated region
        $region17: #{tpu_custom_call.1} parent=11 // pred_check
          %p324 = pneg %p152
        $region18: #{tpu_custom_call.1} parent=11 // pred_check_branch
          %326 = sbr.rel (%p324) target = $region20
        $region19: #{tpu_custom_call.1} parent=11 // pred_region
          _
        $region20: #{tpu_custom_call.1} parent=11 // pred_fallthru
          _
        // Predicated region
        $region21: #{tpu_custom_call.1} parent=11 // pred_check
          %p327 = pneg %p173
        $region22: #{tpu_custom_call.1} parent=11 // pred_check_branch
          %329 = sbr.rel (%p327) target = $region24
        $region23: #{tpu_custom_call.1} parent=11 // pred_region
          %s331 = ssub.s32 20480, 20480
          %332 = vsyncadd [#allocation3], %s331
          %s333 = sshll.u32 [#allocation2], 4
          %s334 = int_to_ptr.vmem [resolvable:$true] %s333
          %339 = dma.hbm_to_vmem [thread:$0]  %s5, 20480, %s334, [#allocation3], 128, 128, 8
        $region24: #{tpu_custom_call.1} parent=11 // pred_fallthru
          _
        // Predicated region
        $region25: #{tpu_custom_call.1} parent=11 // pred_check
          %p340 = pneg %p194
        $region26: #{tpu_custom_call.1} parent=11 // pred_check_branch
          %342 = sbr.rel (%p340) target = $region28
        $region27: #{tpu_custom_call.1} parent=11 // pred_region
          _
        $region28: #{tpu_custom_call.1} parent=11 // pred_fallthru
          _
        // Predicated region
        $region29: #{tpu_custom_call.1} parent=11 // pred_check
          %p343 = pneg %p215
        $region30: #{tpu_custom_call.1} parent=11 // pred_check_branch
          %345 = sbr.rel (%p343) target = $region32
        $region31: #{tpu_custom_call.1} parent=11 // pred_region
          _
        $region32: #{tpu_custom_call.1} parent=11 // pred_fallthru
          _
        // Predicated region
        $region33: #{tpu_custom_call.1} parent=11 // pred_check
          %p346 = pneg %p236
        $region34: #{tpu_custom_call.1} parent=11 // pred_check_branch
          %348 = sbr.rel (%p346) target = $region36
        $region35: #{tpu_custom_call.1} parent=11 // pred_region
          _
        $region36: #{tpu_custom_call.1} parent=11 // pred_fallthru
          _
        // Predicated region
        $region37: #{tpu_custom_call.1} parent=11 // pred_check
          %p349 = pneg %p257
        $region38: #{tpu_custom_call.1} parent=11 // pred_check_branch
          %351 = sbr.rel (%p349) target = $region40
        $region39: #{tpu_custom_call.1} parent=11 // pred_region
          _
        $region40: #{tpu_custom_call.1} parent=11 // pred_fallthru
          _
        // Predicated region
        $region41: #{tpu_custom_call.1} parent=11 // pred_check
          %p352 = pneg %p278
        $region42: #{tpu_custom_call.1} parent=11 // pred_check_branch
          %354 = sbr.rel (%p352) target = $region44
        $region43: #{tpu_custom_call.1} parent=11 // pred_region
          _
        $region44: #{tpu_custom_call.1} parent=11 // pred_fallthru
          _
      $region12: #{tpu_custom_call.1} parent=5 // pred_fallthru
        _
      %p355 = scmp.lt.s32.totalorder %s18, 2
      // Predicated region
      $region45: #{tpu_custom_call.1} parent=5 // pred_check
        %p356 = pneg %p355
      $region46: #{tpu_custom_call.1} parent=5 // pred_check_branch
        %358 = sbr.rel (%p356) target = $region48
      $region47: #{tpu_custom_call.1} parent=5 // pred_region
        // Predicated region
        $region49: #{tpu_custom_call.1} parent=47 // pred_check
          %p359 = pneg %p50
        $region50: #{tpu_custom_call.1} parent=47 // pred_check_branch
          %361 = sbr.rel (%p359) target = $region52
        $region51: #{tpu_custom_call.1} parent=47 // pred_region
          %p362 = scmp.lt.s32.totalorder %s25, 1
          %s363 = scalar_select %p362, %s25, 1
          %s364 = smul.addr %s363, 15
          %s365 = smul.addr %s364, 8
          %s366 = scalar_lea.vmem %s0, %s365
        $region52: #{tpu_custom_call.1} parent=47 // pred_fallthru
          _
        // Predicated region
        $region53: #{tpu_custom_call.1} parent=47 // pred_check
          %p367 = pneg %p76
        $region54: #{tpu_custom_call.1} parent=47 // pred_check_branch
          %369 = sbr.rel (%p367) target = $region56
        $region55: #{tpu_custom_call.1} parent=47 // pred_region
          %p370 = scmp.lt.s32.totalorder %s25, 1
          %s371 = scalar_select %p370, %s25, 1
          %s372 = smul.addr %s371, 15
          %s373 = smul.addr %s372, 8
          %s374 = scalar_lea.vmem %s1, %s373
        $region56: #{tpu_custom_call.1} parent=47 // pred_fallthru
          _
        // Predicated region
        $region57: #{tpu_custom_call.1} parent=47 // pred_check
          %p375 = pneg %p104
        $region58: #{tpu_custom_call.1} parent=47 // pred_check_branch
          %377 = sbr.rel (%p375) target = $region60
        $region59: #{tpu_custom_call.1} parent=47 // pred_region
          %s378 = smul.u32 7, %s26
          %p379 = scmp.lt.s32.totalorder %s25, 1
          %s380 = scalar_select %p379, %s25, 1
          %p381 = scmp.lt.s32.totalorder %s378, 6
          %s382 = scalar_select %p381, %s378, 6
          %s383 = smul.addr %s380, 7
          %s384 = sadd.s32 %s382, %s383
          %s385 = smul.addr %s384, 8
          %s386 = scalar_lea.vmem %s2, %s385
          %s387 = smul.u32 7, %s26
        $region60: #{tpu_custom_call.1} parent=47 // pred_fallthru
          _
      $region48: #{tpu_custom_call.1} parent=5 // pred_fallthru
        _
      %p388 = scmp.le.s32.totalorder 1, %s18
      %p389 = scmp.lt.s32.totalorder %s18, 3
      %p390 = pnand %p388, %p389
      %p391 = pneg %p390
      // Predicated region
      $region61: #{tpu_custom_call.1} parent=5 // pred_check
        _
      $region62: #{tpu_custom_call.1} parent=5 // pred_check_branch
        %393 = sbr.rel (%p390) target = $region64
      $region63: #{tpu_custom_call.1} parent=5 // pred_region
        %s394 = ssub.s32 %s18, 1
        // Predicated region
        $region65: #{tpu_custom_call.1} parent=63 // pred_check
          %p395 = pneg %p173
        $region66: #{tpu_custom_call.1} parent=63 // pred_check_branch
          %397 = sbr.rel (%p395) target = $region68
        $region67: #{tpu_custom_call.1} parent=63 // pred_region
          %398 = dma.done [#allocation3], 20480
        $region68: #{tpu_custom_call.1} parent=63 // pred_fallthru
          _
        %p399 = scmp.lt.s32.totalorder %s27, 1
        %s400 = scalar_select %p399, %s27, 1
        %s401 = smul.addr %s400, 15
        %s402 = smul.addr %s401, 8
        %s403 = scalar_lea.vmem %s0, %s402
        %p404 = pneg %p56
        %p405 = pneg %p53
        %p406 = scmp.lt.s32.totalorder %s27, 1
        %s407 = scalar_select %p406, %s27, 1
        %s408 = smul.addr %s407, 15
        %s409 = smul.addr %s408, 8
        %s410 = scalar_lea.vmem %s1, %s409
        %p411 = pneg %p82
        %p412 = pneg %p79
        %s413 = smul.u32 7, %s28
        %p414 = scmp.lt.s32.totalorder %s27, 1
        %s415 = scalar_select %p414, %s27, 1
        %p416 = scmp.lt.s32.totalorder %s413, 6
        %s417 = scalar_select %p416, %s413, 6
        %s418 = smul.addr %s415, 7
        %s419 = sadd.s32 %s417, %s418
        %s420 = smul.addr %s419, 8
        %s421 = scalar_lea.vmem %s2, %s420
        %p422 = pneg %p110
        %p423 = pneg %p107
        %p424 = pneg %p131
        %p425 = pneg %p128
        %p426 = pneg %p152
        %p427 = pneg %p149
        %p428 = pneg %p173
        %p429 = pneg %p170
        %p430 = pneg %p194
        %p431 = pneg %p191
        %p432 = pneg %p215
        %p433 = pneg %p212
        %p434 = pneg %p236
        %p435 = pneg %p233
        %p436 = pneg %p257
        %p437 = pneg %p254
        %p438 = pneg %p278
        %p439 = pneg %p275
        %p440 = pneg %p306
        %p441 = pneg %p303
        %s442 = smul.u32 7, %s28
        %p443 = scmp.lt.s32.totalorder %s27, 1
        %s444 = scalar_select %p443, %s27, 1
        %p445 = scmp.lt.s32.totalorder %s442, 6
        %s446 = scalar_select %p445, %s442, 6
        %s447 = smul.addr %s444, 7
        %s448 = sadd.s32 %s446, %s447
        %s449 = smul.addr %s448, 8
        %s450 = scalar_lea.vmem %s11, %s449
        %p451 = scmp.lt.s32.totalorder %s27, 1
        %s452 = scalar_select %p451, %s27, 1
        %s453 = smul.addr %s452, 15
        %s454 = smul.addr %s453, 8
        %s455 = scalar_lea.vmem %s0, %s454
        %p456 = scmp.lt.s32.totalorder %s27, 1
        %s457 = scalar_select %p456, %s27, 1
        %s458 = smul.addr %s457, 15
        %s459 = smul.addr %s458, 8
        %s460 = scalar_lea.vmem %s1, %s459
        %s461 = smul.u32 7, %s28
        %p462 = scmp.lt.s32.totalorder %s27, 1
        %s463 = scalar_select %p462, %s27, 1
        %p464 = scmp.lt.s32.totalorder %s461, 6
        %s465 = scalar_select %p464, %s461, 6
        %s466 = smul.addr %s463, 7
        %s467 = sadd.s32 %s465, %s466
        %s468 = smul.addr %s467, 8
        %s469 = scalar_lea.vmem %s2, %s468
        %s470 = smul.u32 7, %s28
        %s471 = smul.u32 7, %s28
        %p472 = scmp.lt.s32.totalorder %s27, 1
        %s473 = scalar_select %p472, %s27, 1
        %p474 = scmp.lt.s32.totalorder %s471, 6
        %s475 = scalar_select %p474, %s471, 6
        %s476 = smul.addr %s473, 7
        %s477 = sadd.s32 %s475, %s476
        %s478 = smul.addr %s477, 8
        %s479 = scalar_lea.vmem %s11, %s478
        %s480 = smul.u32 7, %s28
        %s481 = smul.u32 %s28, 56
        %s482 = scalar_lea.vmem %s455, %s481
        %v483 = vld [vmem:[%s482] sm:$0xff]
        %v484 = vld [vmem:[%s482 + $0x8] sm:$0xff]
        %v485 = vld [vmem:[%s482 + $0x10] sm:$0xff]
        %v486 = vld [vmem:[%s482 + $0x18] sm:$0xff]
        %v487 = vld [vmem:[%s482 + $0x20] sm:$0xff]
        %v488 = vld [vmem:[%s482 + $0x28] sm:$0xff]
        %v489 = vld [vmem:[%s482 + $0x30] sm:$0xff]
        %v490 = vld [vmem:[%s482 + $0x38] sm:$0xff]
        %v491 = vld [vmem:[%s482 + $0x40] sm:$0xff]
        %v492 = vld [vmem:[%s482 + $0x48] sm:$0xff]
        %v493 = vld [vmem:[%s482 + $0x50] sm:$0xff]
        %v494 = vld [vmem:[%s482 + $0x58] sm:$0xff]
        %v495 = vld [vmem:[%s482 + $0x60] sm:$0xff]
        %v496 = vld [vmem:[%s482 + $0x68] sm:$0xff]
        %v497 = vld [vmem:[%s482 + $0x70] sm:$0xf]
        %s498 = scalar_lea.vmem %s460, %s481
        %v499 = vld [vmem:[%s498] sm:$0xff]
        %v500 = vld [vmem:[%s498 + $0x8] sm:$0xff]
        %v501 = vld [vmem:[%s498 + $0x10] sm:$0xff]
        %v502 = vld [vmem:[%s498 + $0x18] sm:$0xff]
        %v503 = vld [vmem:[%s498 + $0x20] sm:$0xff]
        %v504 = vld [vmem:[%s498 + $0x28] sm:$0xff]
        %v505 = vld [vmem:[%s498 + $0x30] sm:$0xff]
        %v506 = vld [vmem:[%s498 + $0x38] sm:$0xff]
        %v507 = vld [vmem:[%s498 + $0x40] sm:$0xff]
        %v508 = vld [vmem:[%s498 + $0x48] sm:$0xff]
        %v509 = vld [vmem:[%s498 + $0x50] sm:$0xff]
        %v510 = vld [vmem:[%s498 + $0x58] sm:$0xff]
        %v511 = vld [vmem:[%s498 + $0x60] sm:$0xff]
        %v512 = vld [vmem:[%s498 + $0x68] sm:$0xff]
        %v513 = vld [vmem:[%s498 + $0x70] sm:$0xf]
        %v514 = vld [vmem:[%s4] sm:$0x1]
        %v516 = vlaneseq
        %v517 = vshrl.u32 %v516, 7
        %v518 = vsub.s32 0, %v517
        %v519 = vrot.slane %v514, %v518
        %v521 = vadd.f32 %v519, 0.0
        %v522 = vld [vmem:[%s3] sm:$0x1]
        %524 = vset.pattern.permute.xlu0 0
        %525 = vperm.xlu0 %524, %v483
        %v526 = vpop.permute.xlu0 %525
        %529 = vset.pattern.permute.xlu0 0
        %530 = vperm.xlu0 %529, %v484
        %v531 = vpop.permute.xlu0 %530
        %534 = vset.pattern.permute.xlu0 0
        %535 = vperm.xlu0 %534, %v485
        %v536 = vpop.permute.xlu0 %535
        %539 = vset.pattern.permute.xlu0 0
        %540 = vperm.xlu0 %539, %v486
        %v541 = vpop.permute.xlu0 %540
        %544 = vset.pattern.permute.xlu0 0
        %545 = vperm.xlu0 %544, %v487
        %v546 = vpop.permute.xlu0 %545
        %549 = vset.pattern.permute.xlu0 0
        %550 = vperm.xlu0 %549, %v488
        %v551 = vpop.permute.xlu0 %550
        %554 = vset.pattern.permute.xlu0 0
        %555 = vperm.xlu0 %554, %v489
        %v556 = vpop.permute.xlu0 %555
        %559 = vset.pattern.permute.xlu0 0
        %560 = vperm.xlu0 %559, %v490
        %v561 = vpop.permute.xlu0 %560
        %564 = vset.pattern.permute.xlu0 0
        %565 = vperm.xlu0 %564, %v491
        %v566 = vpop.permute.xlu0 %565
        %569 = vset.pattern.permute.xlu0 0
        %570 = vperm.xlu0 %569, %v492
        %v571 = vpop.permute.xlu0 %570
        %574 = vset.pattern.permute.xlu0 0
        %575 = vperm.xlu0 %574, %v493
        %v576 = vpop.permute.xlu0 %575
        %579 = vset.pattern.permute.xlu0 0
        %580 = vperm.xlu0 %579, %v494
        %v581 = vpop.permute.xlu0 %580
        %584 = vset.pattern.permute.xlu0 0
        %585 = vperm.xlu0 %584, %v495
        %v586 = vpop.permute.xlu0 %585
        %589 = vset.pattern.permute.xlu0 0
        %590 = vperm.xlu0 %589, %v496
        %v591 = vpop.permute.xlu0 %590
        %594 = vset.pattern.permute.xlu0 0
        %595 = vperm.xlu0 %594, %v497
        %v596 = vpop.permute.xlu0 %595
        %v598 = vlaneseq
        %v599 = vshrl.u32 %v598, 7
        %v600 = vsub.s32 0, %v599
        %v601 = vrot.slane %v522, %v600
        %v602 = vmul.f32 %v526, %v601
        %v603 = vmul.f32 %v531, %v601
        %v604 = vmul.f32 %v536, %v601
        %v605 = vmul.f32 %v541, %v601
        %v606 = vmul.f32 %v546, %v601
        %v607 = vmul.f32 %v551, %v601
        %v608 = vmul.f32 %v556, %v601
        %v609 = vmul.f32 %v561, %v601
        %v610 = vmul.f32 %v566, %v601
        %v611 = vmul.f32 %v571, %v601
        %v612 = vmul.f32 %v576, %v601
        %v613 = vmul.f32 %v581, %v601
        %v614 = vmul.f32 %v586, %v601
        %v615 = vmul.f32 %v591, %v601
        %v616 = vmul.f32 %v596, %v601
        %v617 = vadd.f32 %v521, %v602
        %v618 = vadd.f32 %v521, %v603
        %v619 = vadd.f32 %v521, %v604
        %v620 = vadd.f32 %v521, %v605
        %v621 = vadd.f32 %v521, %v606
        %v622 = vadd.f32 %v521, %v607
        %v623 = vadd.f32 %v521, %v608
        %v624 = vadd.f32 %v521, %v609
        %v625 = vadd.f32 %v521, %v610
        %v626 = vadd.f32 %v521, %v611
        %v627 = vadd.f32 %v521, %v612
        %v628 = vadd.f32 %v521, %v613
        %v629 = vadd.f32 %v521, %v614
        %v630 = vadd.f32 %v521, %v615
        %v631 = vadd.f32 %v521, %v616
        %v632 = vld [vmem:[%s3 + $0x1] sm:$0x1]
        %633 = vset.pattern.permute.xlu0 1
        %634 = vperm.xlu0 %633, %v483
        %v635 = vpop.permute.xlu0 %634
        %637 = vset.pattern.permute.xlu0 1
        %638 = vperm.xlu0 %637, %v484
        %v639 = vpop.permute.xlu0 %638
        %641 = vset.pattern.permute.xlu0 1
        %642 = vperm.xlu0 %641, %v485
        %v643 = vpop.permute.xlu0 %642
        %645 = vset.pattern.permute.xlu0 1
        %646 = vperm.xlu0 %645, %v486
        %v647 = vpop.permute.xlu0 %646
        %649 = vset.pattern.permute.xlu0 1
        %650 = vperm.xlu0 %649, %v487
        %v651 = vpop.permute.xlu0 %650
        %653 = vset.pattern.permute.xlu0 1
        %654 = vperm.xlu0 %653, %v488
        %v655 = vpop.permute.xlu0 %654
        %657 = vset.pattern.permute.xlu0 1
        %658 = vperm.xlu0 %657, %v489
        %v659 = vpop.permute.xlu0 %658
        %661 = vset.pattern.permute.xlu0 1
        %662 = vperm.xlu0 %661, %v490
        %v663 = vpop.permute.xlu0 %662
        %665 = vset.pattern.permute.xlu0 1
        %666 = vperm.xlu0 %665, %v491
        %v667 = vpop.permute.xlu0 %666
        %669 = vset.pattern.permute.xlu0 1
        %670 = vperm.xlu0 %669, %v492
        %v671 = vpop.permute.xlu0 %670
        %673 = vset.pattern.permute.xlu0 1
        %674 = vperm.xlu0 %673, %v493
        %v675 = vpop.permute.xlu0 %674
        %677 = vset.pattern.permute.xlu0 1
        %678 = vperm.xlu0 %677, %v494
        %v679 = vpop.permute.xlu0 %678
        %681 = vset.pattern.permute.xlu0 1
        %682 = vperm.xlu0 %681, %v495
        %v683 = vpop.permute.xlu0 %682
        %685 = vset.pattern.permute.xlu0 1
        %686 = vperm.xlu0 %685, %v496
        %v687 = vpop.permute.xlu0 %686
        %689 = vset.pattern.permute.xlu0 1
        %690 = vperm.xlu0 %689, %v497
        %v691 = vpop.permute.xlu0 %690
        %v693 = vlaneseq
        %v694 = vshrl.u32 %v693, 7
        %v695 = vsub.s32 0, %v694
        %v696 = vrot.slane %v632, %v695
        %v697 = vmul.f32 %v635, %v696
        %v698 = vmul.f32 %v639, %v696
        %v699 = vmul.f32 %v643, %v696
        %v700 = vmul.f32 %v647, %v696
        %v701 = vmul.f32 %v651, %v696
        %v702 = vmul.f32 %v655, %v696
        %v703 = vmul.f32 %v659, %v696
        %v704 = vmul.f32 %v663, %v696
        %v705 = vmul.f32 %v667, %v696
        %v706 = vmul.f32 %v671, %v696
        %v707 = vmul.f32 %v675, %v696
        %v708 = vmul.f32 %v679, %v696
        %v709 = vmul.f32 %v683, %v696
        %v710 = vmul.f32 %v687, %v696
        %v711 = vmul.f32 %v691, %v696
        %v712 = vadd.f32 %v617, %v697
        %v713 = vadd.f32 %v618, %v698
        %v714 = vadd.f32 %v619, %v699
        %v715 = vadd.f32 %v620, %v700
        %v716 = vadd.f32 %v621, %v701
        %v717 = vadd.f32 %v622, %v702
        %v718 = vadd.f32 %v623, %v703
        %v719 = vadd.f32 %v624, %v704
        %v720 = vadd.f32 %v625, %v705
        %v721 = vadd.f32 %v626, %v706
        %v722 = vadd.f32 %v627, %v707
        %v723 = vadd.f32 %v628, %v708
        %v724 = vadd.f32 %v629, %v709
        %v725 = vadd.f32 %v630, %v710
        %v726 = vadd.f32 %v631, %v711
        %v727 = vld [vmem:[%s3 + $0x2] sm:$0x1]
        %728 = vset.pattern.permute.xlu0 2
        %729 = vperm.xlu0 %728, %v483
        %v730 = vpop.permute.xlu0 %729
        %732 = vset.pattern.permute.xlu0 2
        %733 = vperm.xlu0 %732, %v484
        %v734 = vpop.permute.xlu0 %733
        %736 = vset.pattern.permute.xlu0 2
        %737 = vperm.xlu0 %736, %v485
        %v738 = vpop.permute.xlu0 %737
        %740 = vset.pattern.permute.xlu0 2
        %741 = vperm.xlu0 %740, %v486
        %v742 = vpop.permute.xlu0 %741
        %744 = vset.pattern.permute.xlu0 2
        %745 = vperm.xlu0 %744, %v487
        %v746 = vpop.permute.xlu0 %745
        %748 = vset.pattern.permute.xlu0 2
        %749 = vperm.xlu0 %748, %v488
        %v750 = vpop.permute.xlu0 %749
        %752 = vset.pattern.permute.xlu0 2
        %753 = vperm.xlu0 %752, %v489
        %v754 = vpop.permute.xlu0 %753
        %756 = vset.pattern.permute.xlu0 2
        %757 = vperm.xlu0 %756, %v490
        %v758 = vpop.permute.xlu0 %757
        %760 = vset.pattern.permute.xlu0 2
        %761 = vperm.xlu0 %760, %v491
        %v762 = vpop.permute.xlu0 %761
        %764 = vset.pattern.permute.xlu0 2
        %765 = vperm.xlu0 %764, %v492
        %v766 = vpop.permute.xlu0 %765
        %768 = vset.pattern.permute.xlu0 2
        %769 = vperm.xlu0 %768, %v493
        %v770 = vpop.permute.xlu0 %769
        %772 = vset.pattern.permute.xlu0 2
        %773 = vperm.xlu0 %772, %v494
        %v774 = vpop.permute.xlu0 %773
        %776 = vset.pattern.permute.xlu0 2
        %777 = vperm.xlu0 %776, %v495
        %v778 = vpop.permute.xlu0 %777
        %780 = vset.pattern.permute.xlu0 2
        %781 = vperm.xlu0 %780, %v496
        %v782 = vpop.permute.xlu0 %781
        %784 = vset.pattern.permute.xlu0 2
        %785 = vperm.xlu0 %784, %v497
        %v786 = vpop.permute.xlu0 %785
        %v788 = vlaneseq
        %v789 = vshrl.u32 %v788, 7
        %v790 = vsub.s32 0, %v789
        %v791 = vrot.slane %v727, %v790
        %v792 = vmul.f32 %v730, %v791
        %v793 = vmul.f32 %v734, %v791
        %v794 = vmul.f32 %v738, %v791
        %v795 = vmul.f32 %v742, %v791
        %v796 = vmul.f32 %v746, %v791
        %v797 = vmul.f32 %v750, %v791
        %v798 = vmul.f32 %v754, %v791
        %v799 = vmul.f32 %v758, %v791
        %v800 = vmul.f32 %v762, %v791
        %v801 = vmul.f32 %v766, %v791
        %v802 = vmul.f32 %v770, %v791
        %v803 = vmul.f32 %v774, %v791
        %v804 = vmul.f32 %v778, %v791
        %v805 = vmul.f32 %v782, %v791
        %v806 = vmul.f32 %v786, %v791
        %v807 = vadd.f32 %v712, %v792
        %v808 = vadd.f32 %v713, %v793
        %v809 = vadd.f32 %v714, %v794
        %v810 = vadd.f32 %v715, %v795
        %v811 = vadd.f32 %v716, %v796
        %v812 = vadd.f32 %v717, %v797
        %v813 = vadd.f32 %v718, %v798
        %v814 = vadd.f32 %v719, %v799
        %v815 = vadd.f32 %v720, %v800
        %v816 = vadd.f32 %v721, %v801
        %v817 = vadd.f32 %v722, %v802
        %v818 = vadd.f32 %v723, %v803
        %v819 = vadd.f32 %v724, %v804
        %v820 = vadd.f32 %v725, %v805
        %v821 = vadd.f32 %v726, %v806
        %v822 = vld [vmem:[%s3 + $0x3] sm:$0x1]
        %823 = vset.pattern.permute.xlu0 3
        %824 = vperm.xlu0 %823, %v483
        %v825 = vpop.permute.xlu0 %824
        %827 = vset.pattern.permute.xlu0 3
        %828 = vperm.xlu0 %827, %v484
        %v829 = vpop.permute.xlu0 %828
        %831 = vset.pattern.permute.xlu0 3
        %832 = vperm.xlu0 %831, %v485
        %v833 = vpop.permute.xlu0 %832
        %835 = vset.pattern.permute.xlu0 3
        %836 = vperm.xlu0 %835, %v486
        %v837 = vpop.permute.xlu0 %836
        %839 = vset.pattern.permute.xlu0 3
        %840 = vperm.xlu0 %839, %v487
        %v841 = vpop.permute.xlu0 %840
        %843 = vset.pattern.permute.xlu0 3
        %844 = vperm.xlu0 %843, %v488
        %v845 = vpop.permute.xlu0 %844
        %847 = vset.pattern.permute.xlu0 3
        %848 = vperm.xlu0 %847, %v489
        %v849 = vpop.permute.xlu0 %848
        %851 = vset.pattern.permute.xlu0 3
        %852 = vperm.xlu0 %851, %v490
        %v853 = vpop.permute.xlu0 %852
        %855 = vset.pattern.permute.xlu0 3
        %856 = vperm.xlu0 %855, %v491
        %v857 = vpop.permute.xlu0 %856
        %859 = vset.pattern.permute.xlu0 3
        %860 = vperm.xlu0 %859, %v492
        %v861 = vpop.permute.xlu0 %860
        %863 = vset.pattern.permute.xlu0 3
        %864 = vperm.xlu0 %863, %v493
        %v865 = vpop.permute.xlu0 %864
        %867 = vset.pattern.permute.xlu0 3
        %868 = vperm.xlu0 %867, %v494
        %v869 = vpop.permute.xlu0 %868
        %871 = vset.pattern.permute.xlu0 3
        %872 = vperm.xlu0 %871, %v495
        %v873 = vpop.permute.xlu0 %872
        %875 = vset.pattern.permute.xlu0 3
        %876 = vperm.xlu0 %875, %v496
        %v877 = vpop.permute.xlu0 %876
        %879 = vset.pattern.permute.xlu0 3
        %880 = vperm.xlu0 %879, %v497
        %v881 = vpop.permute.xlu0 %880
        %v883 = vlaneseq
        %v884 = vshrl.u32 %v883, 7
        %v885 = vsub.s32 0, %v884
        %v886 = vrot.slane %v822, %v885
        %v887 = vmul.f32 %v825, %v886
        %v888 = vmul.f32 %v829, %v886
        %v889 = vmul.f32 %v833, %v886
        %v890 = vmul.f32 %v837, %v886
        %v891 = vmul.f32 %v841, %v886
        %v892 = vmul.f32 %v845, %v886
        %v893 = vmul.f32 %v849, %v886
        %v894 = vmul.f32 %v853, %v886
        %v895 = vmul.f32 %v857, %v886
        %v896 = vmul.f32 %v861, %v886
        %v897 = vmul.f32 %v865, %v886
        %v898 = vmul.f32 %v869, %v886
        %v899 = vmul.f32 %v873, %v886
        %v900 = vmul.f32 %v877, %v886
        %v901 = vmul.f32 %v881, %v886
        %v902 = vadd.f32 %v807, %v887
        %v903 = vadd.f32 %v808, %v888
        %v904 = vadd.f32 %v809, %v889
        %v905 = vadd.f32 %v810, %v890
        %v906 = vadd.f32 %v811, %v891
        %v907 = vadd.f32 %v812, %v892
        %v908 = vadd.f32 %v813, %v893
        %v909 = vadd.f32 %v814, %v894
        %v910 = vadd.f32 %v815, %v895
        %v911 = vadd.f32 %v816, %v896
        %v912 = vadd.f32 %v817, %v897
        %v913 = vadd.f32 %v818, %v898
        %v914 = vadd.f32 %v819, %v899
        %v915 = vadd.f32 %v820, %v900
        %v916 = vadd.f32 %v821, %v901
        %918 = vset.pattern.permute.xlu0 0
        %919 = vperm.xlu0 %918, %v499
        %v920 = vpop.permute.xlu0 %919
        %923 = vset.pattern.permute.xlu0 0
        %924 = vperm.xlu0 %923, %v500
        %v925 = vpop.permute.xlu0 %924
        %928 = vset.pattern.permute.xlu0 0
        %929 = vperm.xlu0 %928, %v501
        %v930 = vpop.permute.xlu0 %929
        %933 = vset.pattern.permute.xlu0 0
        %934 = vperm.xlu0 %933, %v502
        %v935 = vpop.permute.xlu0 %934
        %938 = vset.pattern.permute.xlu0 0
        %939 = vperm.xlu0 %938, %v503
        %v940 = vpop.permute.xlu0 %939
        %943 = vset.pattern.permute.xlu0 0
        %944 = vperm.xlu0 %943, %v504
        %v945 = vpop.permute.xlu0 %944
        %948 = vset.pattern.permute.xlu0 0
        %949 = vperm.xlu0 %948, %v505
        %v950 = vpop.permute.xlu0 %949
        %953 = vset.pattern.permute.xlu0 0
        %954 = vperm.xlu0 %953, %v506
        %v955 = vpop.permute.xlu0 %954
        %958 = vset.pattern.permute.xlu0 0
        %959 = vperm.xlu0 %958, %v507
        %v960 = vpop.permute.xlu0 %959
        %963 = vset.pattern.permute.xlu0 0
        %964 = vperm.xlu0 %963, %v508
        %v965 = vpop.permute.xlu0 %964
        %968 = vset.pattern.permute.xlu0 0
        %969 = vperm.xlu0 %968, %v509
        %v970 = vpop.permute.xlu0 %969
        %973 = vset.pattern.permute.xlu0 0
        %974 = vperm.xlu0 %973, %v510
        %v975 = vpop.permute.xlu0 %974
        %978 = vset.pattern.permute.xlu0 0
        %979 = vperm.xlu0 %978, %v511
        %v980 = vpop.permute.xlu0 %979
        %983 = vset.pattern.permute.xlu0 0
        %984 = vperm.xlu0 %983, %v512
        %v985 = vpop.permute.xlu0 %984
        %988 = vset.pattern.permute.xlu0 0
        %989 = vperm.xlu0 %988, %v513
        %v990 = vpop.permute.xlu0 %989
        %v992 = vmul.f32 %v902, %v920
        %v993 = vmul.f32 %v903, %v925
        %v994 = vmul.f32 %v904, %v930
        %v995 = vmul.f32 %v905, %v935
        %v996 = vmul.f32 %v906, %v940
        %v997 = vmul.f32 %v907, %v945
        %v998 = vmul.f32 %v908, %v950
        %v999 = vmul.f32 %v909, %v955
        %v1000 = vmul.f32 %v910, %v960
        %v1001 = vmul.f32 %v911, %v965
        %v1002 = vmul.f32 %v912, %v970
        %v1003 = vmul.f32 %v913, %v975
        %v1004 = vmul.f32 %v914, %v980
        %v1005 = vmul.f32 %v915, %v985
        %v1006 = vmul.f32 %v916, %v990
        %v1007 = vld [vmem:[#allocation2] sm:$0xff]
        %v1008 = vld [vmem:[#allocation2 + $0x8] sm:$0xff]
        %v1009 = vld [vmem:[#allocation2 + $0x10] sm:$0xff]
        %v1010 = vld [vmem:[#allocation2 + $0x18] sm:$0xff]
        %v1011 = vld [vmem:[#allocation2 + $0x20] sm:$0xff]
        %v1012 = vld [vmem:[#allocation2 + $0x28] sm:$0xff]
        %v1013 = vld [vmem:[#allocation2 + $0x30] sm:$0xff]
        %v1014 = vld [vmem:[#allocation2 + $0x38] sm:$0xff]
        %s1015 = scalar_lea.vmem [#allocation2], 64
        %v1016 = vld [vmem:[%s1015] sm:$0xff]
        %v1017 = vld [vmem:[%s1015 + $0x8] sm:$0xff]
        %v1018 = vld [vmem:[%s1015 + $0x10] sm:$0xff]
        %v1019 = vld [vmem:[%s1015 + $0x18] sm:$0xff]
        %v1020 = vld [vmem:[%s1015 + $0x20] sm:$0xff]
        %v1021 = vld [vmem:[%s1015 + $0x28] sm:$0xff]
        %v1022 = vld [vmem:[%s1015 + $0x30] sm:$0xff]
        %v1023 = vld [vmem:[%s1015 + $0x38] sm:$0xff]
        %vm1039 = vcmask 1046528
        %v1040 = vrot.slane %v992, 1
        %v1041 = vrot.slane %v993, 1
        %v1042 = vsel %vm1039, %v1040, %v1041
        %v1043 = vrot.slane %v994, 1
        %v1044 = vsel %vm1039, %v1041, %v1043
        %v1045 = vrot.slane %v995, 1
        %v1046 = vsel %vm1039, %v1043, %v1045
        %v1047 = vrot.slane %v996, 1
        %v1048 = vsel %vm1039, %v1045, %v1047
        %v1049 = vrot.slane %v997, 1
        %v1050 = vsel %vm1039, %v1047, %v1049
        %v1051 = vrot.slane %v998, 1
        %v1052 = vsel %vm1039, %v1049, %v1051
        %v1053 = vrot.slane %v999, 1
        %v1054 = vsel %vm1039, %v1051, %v1053
        %v1055 = vrot.slane %v1000, 1
        %v1056 = vsel %vm1039, %v1053, %v1055
        %v1057 = vrot.slane %v1001, 1
        %v1058 = vsel %vm1039, %v1055, %v1057
        %v1059 = vrot.slane %v1002, 1
        %v1060 = vsel %vm1039, %v1057, %v1059
        %v1061 = vrot.slane %v1003, 1
        %v1062 = vsel %vm1039, %v1059, %v1061
        %v1063 = vrot.slane %v1004, 1
        %v1064 = vsel %vm1039, %v1061, %v1063
        %v1065 = vrot.slane %v1005, 1
        %v1066 = vsel %vm1039, %v1063, %v1065
        %v1067 = vrot.slane %v1006, 1
        %v1068 = vsel %vm1039, %v1065, %v1067
        %vm1069 = vcmask 523264
        %v1070 = vsel %vm1069, %v1042, 0
        %v1072 = vsel %vm1069, %v1044, 0
        %v1074 = vsel %vm1069, %v1046, 0
        %v1076 = vsel %vm1069, %v1048, 0
        %v1078 = vsel %vm1069, %v1050, 0
        %v1080 = vsel %vm1069, %v1052, 0
        %v1082 = vsel %vm1069, %v1054, 0
        %v1084 = vsel %vm1069, %v1056, 0
        %v1086 = vsel %vm1069, %v1058, 0
        %v1088 = vsel %vm1069, %v1060, 0
        %v1090 = vsel %vm1069, %v1062, 0
        %v1092 = vsel %vm1069, %v1064, 0
        %v1094 = vsel %vm1069, %v1066, 0
        %v1096 = vsel %vm1069, %v1068, 0
        %1098 = vmatprep.subr.mxu0 0.0
        %1099 = vmatpush1.msra.mxu0 %v1016
        %1100 = vmatprep.subr.mxu0 0.0
        %1101 = vmatpush1.msra.mxu0 %v1017
        %1102 = vmatprep.subr.mxu0 0.0
        %1103 = vmatpush1.msra.mxu0 %v1018
        %1104 = vmatprep.subr.mxu0 0.0
        %1105 = vmatpush1.msra.mxu0 %v1019
        %1106 = vmatprep.subr.mxu0 0.0
        %1107 = vmatpush1.msra.mxu0 %v1020
        %1108 = vmatprep.subr.mxu0 0.0
        %1109 = vmatpush1.msra.mxu0 %v1021
        %1110 = vmatprep.subr.mxu0 0.0
        %1111 = vmatpush1.msra.mxu0 %v1022
        %1112 = vmatprep.subr.mxu0 0.0
        %1113 = vmatpush1.msra.mxu0 %v1023
        %1114 = vmatprep.subr.mxu0 0.0
        %1115 = vmatpush1.msra.mxu0 0.0
        %1116 = vmatprep.subr.mxu0 0.0
        %1117 = vmatpush1.msra.mxu0 0.0
        %1118 = vmatprep.subr.mxu0 0.0
        %1119 = vmatpush1.msra.mxu0 0.0
        %1120 = vmatprep.subr.mxu0 0.0
        %1121 = vmatpush1.msra.mxu0 0.0
        %1122 = vmatprep.subr.mxu0 0.0
        %1123 = vmatpush1.msra.mxu0 0.0
        %1124 = vmatprep.subr.mxu0 0.0
        %1125 = vmatpush1.msra.mxu0 0.0
        %1126 = vmatprep.subr.mxu0 0.0
        %1127 = vmatpush1.msra.mxu0 0.0
        %1128 = vmatprep.subr.mxu0 0.0
        %1129 = vmatpush1.msra.mxu0 0.0
        %1130 = vmatprep.subr.mxu0 0.0
        %1131 = vmatpush1.msra.mxu0 0.0
        %1132 = vmatprep.subr.mxu0 0.0
        %1133 = vmatpush1.msra.mxu0 0.0
        %1134 = vmatprep.subr.mxu0 0.0
        %1135 = vmatpush1.msra.mxu0 0.0
        %1136 = vmatprep.subr.mxu0 0.0
        %1137 = vmatpush1.msra.mxu0 0.0
        %1138 = vmatprep.subr.mxu0 0.0
        %1139 = vmatpush1.msra.mxu0 0.0
        %1140 = vmatprep.subr.mxu0 0.0
        %1141 = vmatpush1.msra.mxu0 0.0
        %1142 = vmatprep.subr.mxu0 0.0
        %1143 = vmatpush1.msra.mxu0 0.0
        %1144 = vmatprep.subr.mxu0 0.0
        %1145 = vmatpush1.msra.mxu0 0.0
        %1146 = vmatprep.subr.mxu0 0.0
        %1147 = vmatpush1.msra.mxu0 0.0
        %1148 = vmatprep.subr.mxu0 0.0
        %1149 = vmatpush1.msra.mxu0 0.0
        %1150 = vmatprep.subr.mxu0 0.0
        %1151 = vmatpush1.msra.mxu0 0.0
        %1152 = vmatprep.subr.mxu0 0.0
        %1153 = vmatpush1.msra.mxu0 0.0
        %1154 = vmatprep.subr.mxu0 0.0
        %1155 = vmatpush1.msra.mxu0 0.0
        %1156 = vmatprep.subr.mxu0 0.0
        %1157 = vmatpush1.msra.mxu0 0.0
        %1158 = vmatprep.subr.mxu0 0.0
        %1159 = vmatpush1.msra.mxu0 0.0
        %1160 = vmatprep.subr.mxu0 0.0
        %1161 = vmatpush1.msra.mxu0 0.0
        %1162 = vmatprep.mubr.f32.mxu0 0.0
        %1163 = vmatmul.mubr.f32.gmra.mrb[0].mxu0 %v1070
        %v1164 = vpop.f32.mrb[0].mxu0
        %v1165 = vadd.f32 0.0, %v1164
        %v1166 = vpop.f32.mrb[0].mxu0
        %1167 = vmatprep.mubr.f32.mxu0 0.0
        %1168 = vmatmul.mubr.f32.gmra.mrb[0].mxu0 %v1072
        %v1169 = vpop.f32.mrb[0].mxu0
        %v1170 = vadd.f32 0.0, %v1169
        %v1171 = vpop.f32.mrb[0].mxu0
        %1172 = vmatprep.mubr.f32.mxu0 0.0
        %1173 = vmatmul.mubr.f32.gmra.mrb[0].mxu0 %v1074
        %v1174 = vpop.f32.mrb[0].mxu0
        %v1175 = vadd.f32 0.0, %v1174
        %v1176 = vpop.f32.mrb[0].mxu0
        %1177 = vmatprep.mubr.f32.mxu0 0.0
        %1178 = vmatmul.mubr.f32.gmra.mrb[0].mxu0 %v1076
        %v1179 = vpop.f32.mrb[0].mxu0
        %v1180 = vadd.f32 0.0, %v1179
        %v1181 = vpop.f32.mrb[0].mxu0
        %1182 = vmatprep.mubr.f32.mxu0 0.0
        %1183 = vmatmul.mubr.f32.gmra.mrb[0].mxu0 %v1078
        %v1184 = vpop.f32.mrb[0].mxu0
        %v1185 = vadd.f32 0.0, %v1184
        %v1186 = vpop.f32.mrb[0].mxu0
        %1187 = vmatprep.mubr.f32.mxu0 0.0
        %1188 = vmatmul.mubr.f32.gmra.mrb[0].mxu0 %v1080
        %v1189 = vpop.f32.mrb[0].mxu0
        %v1190 = vadd.f32 0.0, %v1189
        %v1191 = vpop.f32.mrb[0].mxu0
        %1192 = vmatprep.mubr.f32.mxu0 0.0
        %1193 = vmatmul.mubr.f32.gmra.mrb[0].mxu0 %v1082
        %v1194 = vpop.f32.mrb[0].mxu0
        %v1195 = vadd.f32 0.0, %v1194
        %v1196 = vpop.f32.mrb[0].mxu0
        %1197 = vmatprep.mubr.f32.mxu0 0.0
        %1198 = vmatmul.mubr.f32.gmra.mrb[0].mxu0 %v1084
        %v1199 = vpop.f32.mrb[0].mxu0
        %v1200 = vadd.f32 0.0, %v1199
        %v1201 = vpop.f32.mrb[0].mxu0
        %1202 = vmatprep.mubr.f32.mxu0 0.0
        %1203 = vmatmul.mubr.f32.gmra.mrb[0].mxu0 %v1086
        %v1204 = vpop.f32.mrb[0].mxu0
        %v1205 = vadd.f32 0.0, %v1204
        %v1206 = vpop.f32.mrb[0].mxu0
        %1207 = vmatprep.mubr.f32.mxu0 0.0
        %1208 = vmatmul.mubr.f32.gmra.mrb[0].mxu0 %v1088
        %v1209 = vpop.f32.mrb[0].mxu0
        %v1210 = vadd.f32 0.0, %v1209
        %v1211 = vpop.f32.mrb[0].mxu0
        %1212 = vmatprep.mubr.f32.mxu0 0.0
        %1213 = vmatmul.mubr.f32.gmra.mrb[0].mxu0 %v1090
        %v1214 = vpop.f32.mrb[0].mxu0
        %v1215 = vadd.f32 0.0, %v1214
        %v1216 = vpop.f32.mrb[0].mxu0
        %1217 = vmatprep.mubr.f32.mxu0 0.0
        %1218 = vmatmul.mubr.f32.gmra.mrb[0].mxu0 %v1092
        %v1219 = vpop.f32.mrb[0].mxu0
        %v1220 = vadd.f32 0.0, %v1219
        %v1221 = vpop.f32.mrb[0].mxu0
        %1222 = vmatprep.mubr.f32.mxu0 0.0
        %1223 = vmatmul.mubr.f32.gmra.mrb[0].mxu0 %v1094
        %v1224 = vpop.f32.mrb[0].mxu0
        %v1225 = vadd.f32 0.0, %v1224
        %v1226 = vpop.f32.mrb[0].mxu0
        %1227 = vmatprep.mubr.f32.mxu0 0.0
        %1228 = vmatmul.mubr.f32.gmra.mrb[0].mxu0 %v1096
        %v1229 = vpop.f32.mrb[0].mxu0
        %v1230 = vadd.f32 0.0, %v1229
        %v1231 = vpop.f32.mrb[0].mxu0
        %1232 = vdwg.mxu0
        %v1233 = vsel %vm1069, %v992, 0
        %v1235 = vsel %vm1069, %v993, 0
        %v1237 = vsel %vm1069, %v994, 0
        %v1239 = vsel %vm1069, %v995, 0
        %v1241 = vsel %vm1069, %v996, 0
        %v1243 = vsel %vm1069, %v997, 0
        %v1245 = vsel %vm1069, %v998, 0
        %v1247 = vsel %vm1069, %v999, 0
        %v1249 = vsel %vm1069, %v1000, 0
        %v1251 = vsel %vm1069, %v1001, 0
        %v1253 = vsel %vm1069, %v1002, 0
        %v1255 = vsel %vm1069, %v1003, 0
        %v1257 = vsel %vm1069, %v1004, 0
        %v1259 = vsel %vm1069, %v1005, 0
        %1261 = vmatprep.subr.mxu0 0.0
        %1262 = vmatpush1.msra.mxu0 %v1007
        %1263 = vmatprep.subr.mxu0 0.0
        %1264 = vmatpush1.msra.mxu0 %v1008
        %1265 = vmatprep.subr.mxu0 0.0
        %1266 = vmatpush1.msra.mxu0 %v1009
        %1267 = vmatprep.subr.mxu0 0.0
        %1268 = vmatpush1.msra.mxu0 %v1010
        %1269 = vmatprep.subr.mxu0 0.0
        %1270 = vmatpush1.msra.mxu0 %v1011
        %1271 = vmatprep.subr.mxu0 0.0
        %1272 = vmatpush1.msra.mxu0 %v1012
        %1273 = vmatprep.subr.mxu0 0.0
        %1274 = vmatpush1.msra.mxu0 %v1013
        %1275 = vmatprep.subr.mxu0 0.0
        %1276 = vmatpush1.msra.mxu0 %v1014
        %1277 = vmatprep.subr.mxu0 0.0
        %1278 = vmatpush1.msra.mxu0 0.0
        %1279 = vmatprep.subr.mxu0 0.0
        %1280 = vmatpush1.msra.mxu0 0.0
        %1281 = vmatprep.subr.mxu0 0.0
        %1282 = vmatpush1.msra.mxu0 0.0
        %1283 = vmatprep.subr.mxu0 0.0
        %1284 = vmatpush1.msra.mxu0 0.0
        %1285 = vmatprep.subr.mxu0 0.0
        %1286 = vmatpush1.msra.mxu0 0.0
        %1287 = vmatprep.subr.mxu0 0.0
        %1288 = vmatpush1.msra.mxu0 0.0
        %1289 = vmatprep.subr.mxu0 0.0
        %1290 = vmatpush1.msra.mxu0 0.0
        %1291 = vmatprep.subr.mxu0 0.0
        %1292 = vmatpush1.msra.mxu0 0.0
        %1293 = vmatprep.subr.mxu0 0.0
        %1294 = vmatpush1.msra.mxu0 0.0
        %1295 = vmatprep.subr.mxu0 0.0
        %1296 = vmatpush1.msra.mxu0 0.0
        %1297 = vmatprep.subr.mxu0 0.0
        %1298 = vmatpush1.msra.mxu0 0.0
        %1299 = vmatprep.subr.mxu0 0.0
        %1300 = vmatpush1.msra.mxu0 0.0
        %1301 = vmatprep.subr.mxu0 0.0
        %1302 = vmatpush1.msra.mxu0 0.0
        %1303 = vmatprep.subr.mxu0 0.0
        %1304 = vmatpush1.msra.mxu0 0.0
        %1305 = vmatprep.subr.mxu0 0.0
        %1306 = vmatpush1.msra.mxu0 0.0
        %1307 = vmatprep.subr.mxu0 0.0
        %1308 = vmatpush1.msra.mxu0 0.0
        %1309 = vmatprep.subr.mxu0 0.0
        %1310 = vmatpush1.msra.mxu0 0.0
        %1311 = vmatprep.subr.mxu0 0.0
        %1312 = vmatpush1.msra.mxu0 0.0
        %1313 = vmatprep.subr.mxu0 0.0
        %1314 = vmatpush1.msra.mxu0 0.0
        %1315 = vmatprep.subr.mxu0 0.0
        %1316 = vmatpush1.msra.mxu0 0.0
        %1317 = vmatprep.subr.mxu0 0.0
        %1318 = vmatpush1.msra.mxu0 0.0
        %1319 = vmatprep.subr.mxu0 0.0
        %1320 = vmatpush1.msra.mxu0 0.0
        %1321 = vmatprep.subr.mxu0 0.0
        %1322 = vmatpush1.msra.mxu0 0.0
        %1323 = vmatprep.subr.mxu0 0.0
        %1324 = vmatpush1.msra.mxu0 0.0
        %1325 = vmatprep.mubr.f32.mxu0 0.0
        %1326 = vmatmul.mubr.f32.gmra.mrb[0].mxu0 %v1233
        %v1327 = vpop.f32.mrb[0].mxu0
        %v1328 = vadd.f32 %v1165, %v1327
        %v1329 = vpop.f32.mrb[0].mxu0
        %1330 = vmatprep.mubr.f32.mxu0 0.0
        %1331 = vmatmul.mubr.f32.gmra.mrb[0].mxu0 %v1235
        %v1332 = vpop.f32.mrb[0].mxu0
        %v1333 = vadd.f32 %v1170, %v1332
        %v1334 = vpop.f32.mrb[0].mxu0
        %1335 = vmatprep.mubr.f32.mxu0 0.0
        %1336 = vmatmul.mubr.f32.gmra.mrb[0].mxu0 %v1237
        %v1337 = vpop.f32.mrb[0].mxu0
        %v1338 = vadd.f32 %v1175, %v1337
        %v1339 = vpop.f32.mrb[0].mxu0
        %1340 = vmatprep.mubr.f32.mxu0 0.0
        %1341 = vmatmul.mubr.f32.gmra.mrb[0].mxu0 %v1239
        %v1342 = vpop.f32.mrb[0].mxu0
        %v1343 = vadd.f32 %v1180, %v1342
        %v1344 = vpop.f32.mrb[0].mxu0
        %1345 = vmatprep.mubr.f32.mxu0 0.0
        %1346 = vmatmul.mubr.f32.gmra.mrb[0].mxu0 %v1241
        %v1347 = vpop.f32.mrb[0].mxu0
        %v1348 = vadd.f32 %v1185, %v1347
        %v1349 = vpop.f32.mrb[0].mxu0
        %1350 = vmatprep.mubr.f32.mxu0 0.0
        %1351 = vmatmul.mubr.f32.gmra.mrb[0].mxu0 %v1243
        %v1352 = vpop.f32.mrb[0].mxu0
        %v1353 = vadd.f32 %v1190, %v1352
        %v1354 = vpop.f32.mrb[0].mxu0
        %1355 = vmatprep.mubr.f32.mxu0 0.0
        %1356 = vmatmul.mubr.f32.gmra.mrb[0].mxu0 %v1245
        %v1357 = vpop.f32.mrb[0].mxu0
        %v1358 = vadd.f32 %v1195, %v1357
        %v1359 = vpop.f32.mrb[0].mxu0
        %1360 = vmatprep.mubr.f32.mxu0 0.0
        %1361 = vmatmul.mubr.f32.gmra.mrb[0].mxu0 %v1247
        %v1362 = vpop.f32.mrb[0].mxu0
        %v1363 = vadd.f32 %v1200, %v1362
        %v1364 = vpop.f32.mrb[0].mxu0
        %1365 = vmatprep.mubr.f32.mxu0 0.0
        %1366 = vmatmul.mubr.f32.gmra.mrb[0].mxu0 %v1249
        %v1367 = vpop.f32.mrb[0].mxu0
        %v1368 = vadd.f32 %v1205, %v1367
        %v1369 = vpop.f32.mrb[0].mxu0
        %1370 = vmatprep.mubr.f32.mxu0 0.0
        %1371 = vmatmul.mubr.f32.gmra.mrb[0].mxu0 %v1251
        %v1372 = vpop.f32.mrb[0].mxu0
        %v1373 = vadd.f32 %v1210, %v1372
        %v1374 = vpop.f32.mrb[0].mxu0
        %1375 = vmatprep.mubr.f32.mxu0 0.0
        %1376 = vmatmul.mubr.f32.gmra.mrb[0].mxu0 %v1253
        %v1377 = vpop.f32.mrb[0].mxu0
        %v1378 = vadd.f32 %v1215, %v1377
        %v1379 = vpop.f32.mrb[0].mxu0
        %1380 = vmatprep.mubr.f32.mxu0 0.0
        %1381 = vmatmul.mubr.f32.gmra.mrb[0].mxu0 %v1255
        %v1382 = vpop.f32.mrb[0].mxu0
        %v1383 = vadd.f32 %v1220, %v1382
        %v1384 = vpop.f32.mrb[0].mxu0
        %1385 = vmatprep.mubr.f32.mxu0 0.0
        %1386 = vmatmul.mubr.f32.gmra.mrb[0].mxu0 %v1257
        %v1387 = vpop.f32.mrb[0].mxu0
        %v1388 = vadd.f32 %v1225, %v1387
        %v1389 = vpop.f32.mrb[0].mxu0
        %1390 = vmatprep.mubr.f32.mxu0 0.0
        %1391 = vmatmul.mubr.f32.gmra.mrb[0].mxu0 %v1259
        %v1392 = vpop.f32.mrb[0].mxu0
        %v1393 = vadd.f32 %v1230, %v1392
        %v1394 = vpop.f32.mrb[0].mxu0
        %1395 = vdwg.mxu0
        %s1396 = scalar_lea.vmem [#allocation2], 128
        %v1397 = vld [vmem:[%s1396] sm:$0xff]
        %v1398 = vld [vmem:[%s1396 + $0x8] sm:$0xff]
        %v1399 = vld [vmem:[%s1396 + $0x10] sm:$0xff]
        %v1400 = vld [vmem:[%s1396 + $0x18] sm:$0xff]
        %v1401 = vld [vmem:[%s1396 + $0x20] sm:$0xff]
        %v1402 = vld [vmem:[%s1396 + $0x28] sm:$0xff]
        %v1403 = vld [vmem:[%s1396 + $0x30] sm:$0xff]
        %v1404 = vld [vmem:[%s1396 + $0x38] sm:$0xff]
        %vm1405 = vcmask 1045504
        %v1406 = vrot.slane %v992, 2
        %v1407 = vrot.slane %v993, 2
        %v1408 = vsel %vm1405, %v1406, %v1407
        %v1409 = vrot.slane %v994, 2
        %v1410 = vsel %vm1405, %v1407, %v1409
        %v1411 = vrot.slane %v995, 2
        %v1412 = vsel %vm1405, %v1409, %v1411
        %v1413 = vrot.slane %v996, 2
        %v1414 = vsel %vm1405, %v1411, %v1413
        %v1415 = vrot.slane %v997, 2
        %v1416 = vsel %vm1405, %v1413, %v1415
        %v1417 = vrot.slane %v998, 2
        %v1418 = vsel %vm1405, %v1415, %v1417
        %v1419 = vrot.slane %v999, 2
        %v1420 = vsel %vm1405, %v1417, %v1419
        %v1421 = vrot.slane %v1000, 2
        %v1422 = vsel %vm1405, %v1419, %v1421
        %v1423 = vrot.slane %v1001, 2
        %v1424 = vsel %vm1405, %v1421, %v1423
        %v1425 = vrot.slane %v1002, 2
        %v1426 = vsel %vm1405, %v1423, %v1425
        %v1427 = vrot.slane %v1003, 2
        %v1428 = vsel %vm1405, %v1425, %v1427
        %v1429 = vrot.slane %v1004, 2
        %v1430 = vsel %vm1405, %v1427, %v1429
        %v1431 = vrot.slane %v1005, 2
        %v1432 = vsel %vm1405, %v1429, %v1431
        %v1433 = vrot.slane %v1006, 2
        %v1434 = vsel %vm1405, %v1431, %v1433
        %v1435 = vsel %vm1069, %v1408, 0
        %v1437 = vsel %vm1069, %v1410, 0
        %v1439 = vsel %vm1069, %v1412, 0
        %v1441 = vsel %vm1069, %v1414, 0
        %v1443 = vsel %vm1069, %v1416, 0
        %v1445 = vsel %vm1069, %v1418, 0
        %v1447 = vsel %vm1069, %v1420, 0
        %v1449 = vsel %vm1069, %v1422, 0
        %v1451 = vsel %vm1069, %v1424, 0
        %v1453 = vsel %vm1069, %v1426, 0
        %v1455 = vsel %vm1069, %v1428, 0
        %v1457 = vsel %vm1069, %v1430, 0
        %v1459 = vsel %vm1069, %v1432, 0
        %v1461 = vsel %vm1069, %v1434, 0
        %1463 = vmatprep.subr.mxu0 0.0
        %1464 = vmatpush1.msra.mxu0 %v1397
        %1465 = vmatprep.subr.mxu0 0.0
        %1466 = vmatpush1.msra.mxu0 %v1398
        %1467 = vmatprep.subr.mxu0 0.0
        %1468 = vmatpush1.msra.mxu0 %v1399
        %1469 = vmatprep.subr.mxu0 0.0
        %1470 = vmatpush1.msra.mxu0 %v1400
        %1471 = vmatprep.subr.mxu0 0.0
        %1472 = vmatpush1.msra.mxu0 %v1401
        %1473 = vmatprep.subr.mxu0 0.0
        %1474 = vmatpush1.msra.mxu0 %v1402
        %1475 = vmatprep.subr.mxu0 0.0
        %1476 = vmatpush1.msra.mxu0 %v1403
        %1477 = vmatprep.subr.mxu0 0.0
        %1478 = vmatpush1.msra.mxu0 %v1404
        %1479 = vmatprep.subr.mxu0 0.0
        %1480 = vmatpush1.msra.mxu0 0.0
        %1481 = vmatprep.subr.mxu0 0.0
        %1482 = vmatpush1.msra.mxu0 0.0
        %1483 = vmatprep.subr.mxu0 0.0
        %1484 = vmatpush1.msra.mxu0 0.0
        %1485 = vmatprep.subr.mxu0 0.0
        %1486 = vmatpush1.msra.mxu0 0.0
        %1487 = vmatprep.subr.mxu0 0.0
        %1488 = vmatpush1.msra.mxu0 0.0
        %1489 = vmatprep.subr.mxu0 0.0
        %1490 = vmatpush1.msra.mxu0 0.0
        %1491 = vmatprep.subr.mxu0 0.0
        %1492 = vmatpush1.msra.mxu0 0.0
        %1493 = vmatprep.subr.mxu0 0.0
        %1494 = vmatpush1.msra.mxu0 0.0
        %1495 = vmatprep.subr.mxu0 0.0
        %1496 = vmatpush1.msra.mxu0 0.0
        %1497 = vmatprep.subr.mxu0 0.0
        %1498 = vmatpush1.msra.mxu0 0.0
        %1499 = vmatprep.subr.mxu0 0.0
        %1500 = vmatpush1.msra.mxu0 0.0
        %1501 = vmatprep.subr.mxu0 0.0
        %1502 = vmatpush1.msra.mxu0 0.0
        %1503 = vmatprep.subr.mxu0 0.0
        %1504 = vmatpush1.msra.mxu0 0.0
        %1505 = vmatprep.subr.mxu0 0.0
        %1506 = vmatpush1.msra.mxu0 0.0
        %1507 = vmatprep.subr.mxu0 0.0
        %1508 = vmatpush1.msra.mxu0 0.0
        %1509 = vmatprep.subr.mxu0 0.0
        %1510 = vmatpush1.msra.mxu0 0.0
        %1511 = vmatprep.subr.mxu0 0.0
        %1512 = vmatpush1.msra.mxu0 0.0
        %1513 = vmatprep.subr.mxu0 0.0
        %1514 = vmatpush1.msra.mxu0 0.0
        %1515 = vmatprep.subr.mxu0 0.0
        %1516 = vmatpush1.msra.mxu0 0.0
        %1517 = vmatprep.subr.mxu0 0.0
        %1518 = vmatpush1.msra.mxu0 0.0
        %1519 = vmatprep.subr.mxu0 0.0
        %1520 = vmatpush1.msra.mxu0 0.0
        %1521 = vmatprep.subr.mxu0 0.0
        %1522 = vmatpush1.msra.mxu0 0.0
        %1523 = vmatprep.subr.mxu0 0.0
        %1524 = vmatpush1.msra.mxu0 0.0
        %1525 = vmatprep.subr.mxu0 0.0
        %1526 = vmatpush1.msra.mxu0 0.0
        %1527 = vmatprep.mubr.f32.mxu0 0.0
        %1528 = vmatmul.mubr.f32.gmra.mrb[0].mxu0 %v1435
        %v1529 = vpop.f32.mrb[0].mxu0
        %v1530 = vadd.f32 0.0, %v1529
        %v1531 = vpop.f32.mrb[0].mxu0
        %1532 = vmatprep.mubr.f32.mxu0 0.0
        %1533 = vmatmul.mubr.f32.gmra.mrb[0].mxu0 %v1437
        %v1534 = vpop.f32.mrb[0].mxu0
        %v1535 = vadd.f32 0.0, %v1534
        %v1536 = vpop.f32.mrb[0].mxu0
        %1537 = vmatprep.mubr.f32.mxu0 0.0
        %1538 = vmatmul.mubr.f32.gmra.mrb[0].mxu0 %v1439
        %v1539 = vpop.f32.mrb[0].mxu0
        %v1540 = vadd.f32 0.0, %v1539
        %v1541 = vpop.f32.mrb[0].mxu0
        %1542 = vmatprep.mubr.f32.mxu0 0.0
        %1543 = vmatmul.mubr.f32.gmra.mrb[0].mxu0 %v1441
        %v1544 = vpop.f32.mrb[0].mxu0
        %v1545 = vadd.f32 0.0, %v1544
        %v1546 = vpop.f32.mrb[0].mxu0
        %1547 = vmatprep.mubr.f32.mxu0 0.0
        %1548 = vmatmul.mubr.f32.gmra.mrb[0].mxu0 %v1443
        %v1549 = vpop.f32.mrb[0].mxu0
        %v1550 = vadd.f32 0.0, %v1549
        %v1551 = vpop.f32.mrb[0].mxu0
        %1552 = vmatprep.mubr.f32.mxu0 0.0
        %1553 = vmatmul.mubr.f32.gmra.mrb[0].mxu0 %v1445
        %v1554 = vpop.f32.mrb[0].mxu0
        %v1555 = vadd.f32 0.0, %v1554
        %v1556 = vpop.f32.mrb[0].mxu0
        %1557 = vmatprep.mubr.f32.mxu0 0.0
        %1558 = vmatmul.mubr.f32.gmra.mrb[0].mxu0 %v1447
        %v1559 = vpop.f32.mrb[0].mxu0
        %v1560 = vadd.f32 0.0, %v1559
        %v1561 = vpop.f32.mrb[0].mxu0
        %1562 = vmatprep.mubr.f32.mxu0 0.0
        %1563 = vmatmul.mubr.f32.gmra.mrb[0].mxu0 %v1449
        %v1564 = vpop.f32.mrb[0].mxu0
        %v1565 = vadd.f32 0.0, %v1564
        %v1566 = vpop.f32.mrb[0].mxu0
        %1567 = vmatprep.mubr.f32.mxu0 0.0
        %1568 = vmatmul.mubr.f32.gmra.mrb[0].mxu0 %v1451
        %v1569 = vpop.f32.mrb[0].mxu0
        %v1570 = vadd.f32 0.0, %v1569
        %v1571 = vpop.f32.mrb[0].mxu0
        %1572 = vmatprep.mubr.f32.mxu0 0.0
        %1573 = vmatmul.mubr.f32.gmra.mrb[0].mxu0 %v1453
        %v1574 = vpop.f32.mrb[0].mxu0
        %v1575 = vadd.f32 0.0, %v1574
        %v1576 = vpop.f32.mrb[0].mxu0
        %1577 = vmatprep.mubr.f32.mxu0 0.0
        %1578 = vmatmul.mubr.f32.gmra.mrb[0].mxu0 %v1455
        %v1579 = vpop.f32.mrb[0].mxu0
        %v1580 = vadd.f32 0.0, %v1579
        %v1581 = vpop.f32.mrb[0].mxu0
        %1582 = vmatprep.mubr.f32.mxu0 0.0
        %1583 = vmatmul.mubr.f32.gmra.mrb[0].mxu0 %v1457
        %v1584 = vpop.f32.mrb[0].mxu0
        %v1585 = vadd.f32 0.0, %v1584
        %v1586 = vpop.f32.mrb[0].mxu0
        %1587 = vmatprep.mubr.f32.mxu0 0.0
        %1588 = vmatmul.mubr.f32.gmra.mrb[0].mxu0 %v1459
        %v1589 = vpop.f32.mrb[0].mxu0
        %v1590 = vadd.f32 0.0, %v1589
        %v1591 = vpop.f32.mrb[0].mxu0
        %1592 = vmatprep.mubr.f32.mxu0 0.0
        %1593 = vmatmul.mubr.f32.gmra.mrb[0].mxu0 %v1461
        %v1594 = vpop.f32.mrb[0].mxu0
        %v1595 = vadd.f32 0.0, %v1594
        %v1596 = vpop.f32.mrb[0].mxu0
        %1597 = vdwg.mxu0
        %v1598 = vadd.f32 %v1328, %v1530
        %v1599 = vadd.f32 %v1333, %v1535
        %v1600 = vadd.f32 %v1338, %v1540
        %v1601 = vadd.f32 %v1343, %v1545
        %v1602 = vadd.f32 %v1348, %v1550
        %v1603 = vadd.f32 %v1353, %v1555
        %v1604 = vadd.f32 %v1358, %v1560
        %v1605 = vadd.f32 %v1363, %v1565
        %v1606 = vadd.f32 %v1368, %v1570
        %v1607 = vadd.f32 %v1373, %v1575
        %v1608 = vadd.f32 %v1378, %v1580
        %v1609 = vadd.f32 %v1383, %v1585
        %v1610 = vadd.f32 %v1388, %v1590
        %v1611 = vadd.f32 %v1393, %v1595
        %s1612 = scalar_lea.vmem [#allocation2], 192
        %v1613 = vld [vmem:[%s1612] sm:$0xff]
        %v1614 = vld [vmem:[%s1612 + $0x8] sm:$0xff]
        %v1615 = vld [vmem:[%s1612 + $0x10] sm:$0xff]
        %v1616 = vld [vmem:[%s1612 + $0x18] sm:$0xff]
        %v1617 = vld [vmem:[%s1612 + $0x20] sm:$0xff]
        %v1618 = vld [vmem:[%s1612 + $0x28] sm:$0xff]
        %v1619 = vld [vmem:[%s1612 + $0x30] sm:$0xff]
        %v1620 = vld [vmem:[%s1612 + $0x38] sm:$0xff]
        %vm1621 = vcmask 1044480
        %v1622 = vrot.slane %v992, 3
        %v1623 = vrot.slane %v993, 3
        %v1624 = vsel %vm1621, %v1622, %v1623
        %v1625 = vrot.slane %v994, 3
        %v1626 = vsel %vm1621, %v1623, %v1625
        %v1627 = vrot.slane %v995, 3
        %v1628 = vsel %vm1621, %v1625, %v1627
        %v1629 = vrot.slane %v996, 3
        %v1630 = vsel %vm1621, %v1627, %v1629
        %v1631 = vrot.slane %v997, 3
        %v1632 = vsel %vm1621, %v1629, %v1631
        %v1633 = vrot.slane %v998, 3
        %v1634 = vsel %vm1621, %v1631, %v1633
        %v1635 = vrot.slane %v999, 3
        %v1636 = vsel %vm1621, %v1633, %v1635
        %v1637 = vrot.slane %v1000, 3
        %v1638 = vsel %vm1621, %v1635, %v1637
        %v1639 = vrot.slane %v1001, 3
        %v1640 = vsel %vm1621, %v1637, %v1639
        %v1641 = vrot.slane %v1002, 3
        %v1642 = vsel %vm1621, %v1639, %v1641
        %v1643 = vrot.slane %v1003, 3
        %v1644 = vsel %vm1621, %v1641, %v1643
        %v1645 = vrot.slane %v1004, 3
        %v1646 = vsel %vm1621, %v1643, %v1645
        %v1647 = vrot.slane %v1005, 3
        %v1648 = vsel %vm1621, %v1645, %v1647
        %v1649 = vrot.slane %v1006, 3
        %v1650 = vsel %vm1621, %v1647, %v1649
        %v1651 = vsel %vm1069, %v1624, 0
        %v1653 = vsel %vm1069, %v1626, 0
        %v1655 = vsel %vm1069, %v1628, 0
        %v1657 = vsel %vm1069, %v1630, 0
        %v1659 = vsel %vm1069, %v1632, 0
        %v1661 = vsel %vm1069, %v1634, 0
        %v1663 = vsel %vm1069, %v1636, 0
        %v1665 = vsel %vm1069, %v1638, 0
        %v1667 = vsel %vm1069, %v1640, 0
        %v1669 = vsel %vm1069, %v1642, 0
        %v1671 = vsel %vm1069, %v1644, 0
        %v1673 = vsel %vm1069, %v1646, 0
        %v1675 = vsel %vm1069, %v1648, 0
        %v1677 = vsel %vm1069, %v1650, 0
        %1679 = vmatprep.subr.mxu0 0.0
        %1680 = vmatpush1.msra.mxu0 %v1613
        %1681 = vmatprep.subr.mxu0 0.0
        %1682 = vmatpush1.msra.mxu0 %v1614
        %1683 = vmatprep.subr.mxu0 0.0
        %1684 = vmatpush1.msra.mxu0 %v1615
        %1685 = vmatprep.subr.mxu0 0.0
        %1686 = vmatpush1.msra.mxu0 %v1616
        %1687 = vmatprep.subr.mxu0 0.0
        %1688 = vmatpush1.msra.mxu0 %v1617
        %1689 = vmatprep.subr.mxu0 0.0
        %1690 = vmatpush1.msra.mxu0 %v1618
        %1691 = vmatprep.subr.mxu0 0.0
        %1692 = vmatpush1.msra.mxu0 %v1619
        %1693 = vmatprep.subr.mxu0 0.0
        %1694 = vmatpush1.msra.mxu0 %v1620
        %1695 = vmatprep.subr.mxu0 0.0
        %1696 = vmatpush1.msra.mxu0 0.0
        %1697 = vmatprep.subr.mxu0 0.0
        %1698 = vmatpush1.msra.mxu0 0.0
        %1699 = vmatprep.subr.mxu0 0.0
        %1700 = vmatpush1.msra.mxu0 0.0
        %1701 = vmatprep.subr.mxu0 0.0
        %1702 = vmatpush1.msra.mxu0 0.0
        %1703 = vmatprep.subr.mxu0 0.0
        %1704 = vmatpush1.msra.mxu0 0.0
        %1705 = vmatprep.subr.mxu0 0.0
        %1706 = vmatpush1.msra.mxu0 0.0
        %1707 = vmatprep.subr.mxu0 0.0
        %1708 = vmatpush1.msra.mxu0 0.0
        %1709 = vmatprep.subr.mxu0 0.0
        %1710 = vmatpush1.msra.mxu0 0.0
        %1711 = vmatprep.subr.mxu0 0.0
        %1712 = vmatpush1.msra.mxu0 0.0
        %1713 = vmatprep.subr.mxu0 0.0
        %1714 = vmatpush1.msra.mxu0 0.0
        %1715 = vmatprep.subr.mxu0 0.0
        %1716 = vmatpush1.msra.mxu0 0.0
        %1717 = vmatprep.subr.mxu0 0.0
        %1718 = vmatpush1.msra.mxu0 0.0
        %1719 = vmatprep.subr.mxu0 0.0
        %1720 = vmatpush1.msra.mxu0 0.0
        %1721 = vmatprep.subr.mxu0 0.0
        %1722 = vmatpush1.msra.mxu0 0.0
        %1723 = vmatprep.subr.mxu0 0.0
        %1724 = vmatpush1.msra.mxu0 0.0
        %1725 = vmatprep.subr.mxu0 0.0
        %1726 = vmatpush1.msra.mxu0 0.0
        %1727 = vmatprep.subr.mxu0 0.0
        %1728 = vmatpush1.msra.mxu0 0.0
        %1729 = vmatprep.subr.mxu0 0.0
        %1730 = vmatpush1.msra.mxu0 0.0
        %1731 = vmatprep.subr.mxu0 0.0
        %1732 = vmatpush1.msra.mxu0 0.0
        %1733 = vmatprep.subr.mxu0 0.0
        %1734 = vmatpush1.msra.mxu0 0.0
        %1735 = vmatprep.subr.mxu0 0.0
        %1736 = vmatpush1.msra.mxu0 0.0
        %1737 = vmatprep.subr.mxu0 0.0
        %1738 = vmatpush1.msra.mxu0 0.0
        %1739 = vmatprep.subr.mxu0 0.0
        %1740 = vmatpush1.msra.mxu0 0.0
        %1741 = vmatprep.subr.mxu0 0.0
        %1742 = vmatpush1.msra.mxu0 0.0
        %1743 = vmatprep.mubr.f32.mxu0 0.0
        %1744 = vmatmul.mubr.f32.gmra.mrb[0].mxu0 %v1651
        %v1745 = vpop.f32.mrb[0].mxu0
        %v1746 = vadd.f32 0.0, %v1745
        %v1747 = vpop.f32.mrb[0].mxu0
        %1748 = vmatprep.mubr.f32.mxu0 0.0
        %1749 = vmatmul.mubr.f32.gmra.mrb[0].mxu0 %v1653
        %v1750 = vpop.f32.mrb[0].mxu0
        %v1751 = vadd.f32 0.0, %v1750
        %v1752 = vpop.f32.mrb[0].mxu0
        %1753 = vmatprep.mubr.f32.mxu0 0.0
        %1754 = vmatmul.mubr.f32.gmra.mrb[0].mxu0 %v1655
        %v1755 = vpop.f32.mrb[0].mxu0
        %v1756 = vadd.f32 0.0, %v1755
        %v1757 = vpop.f32.mrb[0].mxu0
        %1758 = vmatprep.mubr.f32.mxu0 0.0
        %1759 = vmatmul.mubr.f32.gmra.mrb[0].mxu0 %v1657
        %v1760 = vpop.f32.mrb[0].mxu0
        %v1761 = vadd.f32 0.0, %v1760
        %v1762 = vpop.f32.mrb[0].mxu0
        %1763 = vmatprep.mubr.f32.mxu0 0.0
        %1764 = vmatmul.mubr.f32.gmra.mrb[0].mxu0 %v1659
        %v1765 = vpop.f32.mrb[0].mxu0
        %v1766 = vadd.f32 0.0, %v1765
        %v1767 = vpop.f32.mrb[0].mxu0
        %1768 = vmatprep.mubr.f32.mxu0 0.0
        %1769 = vmatmul.mubr.f32.gmra.mrb[0].mxu0 %v1661
        %v1770 = vpop.f32.mrb[0].mxu0
        %v1771 = vadd.f32 0.0, %v1770
        %v1772 = vpop.f32.mrb[0].mxu0
        %1773 = vmatprep.mubr.f32.mxu0 0.0
        %1774 = vmatmul.mubr.f32.gmra.mrb[0].mxu0 %v1663
        %v1775 = vpop.f32.mrb[0].mxu0
        %v1776 = vadd.f32 0.0, %v1775
        %v1777 = vpop.f32.mrb[0].mxu0
        %1778 = vmatprep.mubr.f32.mxu0 0.0
        %1779 = vmatmul.mubr.f32.gmra.mrb[0].mxu0 %v1665
        %v1780 = vpop.f32.mrb[0].mxu0
        %v1781 = vadd.f32 0.0, %v1780
        %v1782 = vpop.f32.mrb[0].mxu0
        %1783 = vmatprep.mubr.f32.mxu0 0.0
        %1784 = vmatmul.mubr.f32.gmra.mrb[0].mxu0 %v1667
        %v1785 = vpop.f32.mrb[0].mxu0
        %v1786 = vadd.f32 0.0, %v1785
        %v1787 = vpop.f32.mrb[0].mxu0
        %1788 = vmatprep.mubr.f32.mxu0 0.0
        %1789 = vmatmul.mubr.f32.gmra.mrb[0].mxu0 %v1669
        %v1790 = vpop.f32.mrb[0].mxu0
        %v1791 = vadd.f32 0.0, %v1790
        %v1792 = vpop.f32.mrb[0].mxu0
        %1793 = vmatprep.mubr.f32.mxu0 0.0
        %1794 = vmatmul.mubr.f32.gmra.mrb[0].mxu0 %v1671
        %v1795 = vpop.f32.mrb[0].mxu0
        %v1796 = vadd.f32 0.0, %v1795
        %v1797 = vpop.f32.mrb[0].mxu0
        %1798 = vmatprep.mubr.f32.mxu0 0.0
        %1799 = vmatmul.mubr.f32.gmra.mrb[0].mxu0 %v1673
        %v1800 = vpop.f32.mrb[0].mxu0
        %v1801 = vadd.f32 0.0, %v1800
        %v1802 = vpop.f32.mrb[0].mxu0
        %1803 = vmatprep.mubr.f32.mxu0 0.0
        %1804 = vmatmul.mubr.f32.gmra.mrb[0].mxu0 %v1675
        %v1805 = vpop.f32.mrb[0].mxu0
        %v1806 = vadd.f32 0.0, %v1805
        %v1807 = vpop.f32.mrb[0].mxu0
        %1808 = vmatprep.mubr.f32.mxu0 0.0
        %1809 = vmatmul.mubr.f32.gmra.mrb[0].mxu0 %v1677
        %v1810 = vpop.f32.mrb[0].mxu0
        %v1811 = vadd.f32 0.0, %v1810
        %v1812 = vpop.f32.mrb[0].mxu0
        %1813 = vdwg.mxu0
        %v1814 = vadd.f32 %v1598, %v1746
        %v1815 = vadd.f32 %v1599, %v1751
        %v1816 = vadd.f32 %v1600, %v1756
        %v1817 = vadd.f32 %v1601, %v1761
        %v1818 = vadd.f32 %v1602, %v1766
        %v1819 = vadd.f32 %v1603, %v1771
        %v1820 = vadd.f32 %v1604, %v1776
        %v1821 = vadd.f32 %v1605, %v1781
        %v1822 = vadd.f32 %v1606, %v1786
        %v1823 = vadd.f32 %v1607, %v1791
        %v1824 = vadd.f32 %v1608, %v1796
        %v1825 = vadd.f32 %v1609, %v1801
        %v1826 = vadd.f32 %v1610, %v1806
        %v1827 = vadd.f32 %v1611, %v1811
        %s1828 = scalar_lea.vmem [#allocation2], 256
        %v1829 = vld [vmem:[%s1828] sm:$0xff]
        %v1830 = vld [vmem:[%s1828 + $0x8] sm:$0xff]
        %v1831 = vld [vmem:[%s1828 + $0x10] sm:$0xff]
        %v1832 = vld [vmem:[%s1828 + $0x18] sm:$0xff]
        %v1833 = vld [vmem:[%s1828 + $0x20] sm:$0xff]
        %v1834 = vld [vmem:[%s1828 + $0x28] sm:$0xff]
        %v1835 = vld [vmem:[%s1828 + $0x30] sm:$0xff]
        %v1836 = vld [vmem:[%s1828 + $0x38] sm:$0xff]
        %vm1837 = vcmask 1043456
        %v1838 = vrot.slane %v992, 4
        %v1839 = vrot.slane %v993, 4
        %v1840 = vsel %vm1837, %v1838, %v1839
        %v1841 = vrot.slane %v994, 4
        %v1842 = vsel %vm1837, %v1839, %v1841
        %v1843 = vrot.slane %v995, 4
        %v1844 = vsel %vm1837, %v1841, %v1843
        %v1845 = vrot.slane %v996, 4
        %v1846 = vsel %vm1837, %v1843, %v1845
        %v1847 = vrot.slane %v997, 4
        %v1848 = vsel %vm1837, %v1845, %v1847
        %v1849 = vrot.slane %v998, 4
        %v1850 = vsel %vm1837, %v1847, %v1849
        %v1851 = vrot.slane %v999, 4
        %v1852 = vsel %vm1837, %v1849, %v1851
        %v1853 = vrot.slane %v1000, 4
        %v1854 = vsel %vm1837, %v1851, %v1853
        %v1855 = vrot.slane %v1001, 4
        %v1856 = vsel %vm1837, %v1853, %v1855
        %v1857 = vrot.slane %v1002, 4
        %v1858 = vsel %vm1837, %v1855, %v1857
        %v1859 = vrot.slane %v1003, 4
        %v1860 = vsel %vm1837, %v1857, %v1859
        %v1861 = vrot.slane %v1004, 4
        %v1862 = vsel %vm1837, %v1859, %v1861
        %v1863 = vrot.slane %v1005, 4
        %v1864 = vsel %vm1837, %v1861, %v1863
        %v1865 = vrot.slane %v1006, 4
        %v1866 = vsel %vm1837, %v1863, %v1865
        %v1867 = vsel %vm1069, %v1840, 0
        %v1869 = vsel %vm1069, %v1842, 0
        %v1871 = vsel %vm1069, %v1844, 0
        %v1873 = vsel %vm1069, %v1846, 0
        %v1875 = vsel %vm1069, %v1848, 0
        %v1877 = vsel %vm1069, %v1850, 0
        %v1879 = vsel %vm1069, %v1852, 0
        %v1881 = vsel %vm1069, %v1854, 0
        %v1883 = vsel %vm1069, %v1856, 0
        %v1885 = vsel %vm1069, %v1858, 0
        %v1887 = vsel %vm1069, %v1860, 0
        %v1889 = vsel %vm1069, %v1862, 0
        %v1891 = vsel %vm1069, %v1864, 0
        %v1893 = vsel %vm1069, %v1866, 0
        %1895 = vmatprep.subr.mxu0 0.0
        %1896 = vmatpush1.msra.mxu0 %v1829
        %1897 = vmatprep.subr.mxu0 0.0
        %1898 = vmatpush1.msra.mxu0 %v1830
        %1899 = vmatprep.subr.mxu0 0.0
        %1900 = vmatpush1.msra.mxu0 %v1831
        %1901 = vmatprep.subr.mxu0 0.0
        %1902 = vmatpush1.msra.mxu0 %v1832
        %1903 = vmatprep.subr.mxu0 0.0
        %1904 = vmatpush1.msra.mxu0 %v1833
        %1905 = vmatprep.subr.mxu0 0.0
        %1906 = vmatpush1.msra.mxu0 %v1834
        %1907 = vmatprep.subr.mxu0 0.0
        %1908 = vmatpush1.msra.mxu0 %v1835
        %1909 = vmatprep.subr.mxu0 0.0
        %1910 = vmatpush1.msra.mxu0 %v1836
        %1911 = vmatprep.subr.mxu0 0.0
        %1912 = vmatpush1.msra.mxu0 0.0
        %1913 = vmatprep.subr.mxu0 0.0
        %1914 = vmatpush1.msra.mxu0 0.0
        %1915 = vmatprep.subr.mxu0 0.0
        %1916 = vmatpush1.msra.mxu0 0.0
        %1917 = vmatprep.subr.mxu0 0.0
        %1918 = vmatpush1.msra.mxu0 0.0
        %1919 = vmatprep.subr.mxu0 0.0
        %1920 = vmatpush1.msra.mxu0 0.0
        %1921 = vmatprep.subr.mxu0 0.0
        %1922 = vmatpush1.msra.mxu0 0.0
        %1923 = vmatprep.subr.mxu0 0.0
        %1924 = vmatpush1.msra.mxu0 0.0
        %1925 = vmatprep.subr.mxu0 0.0
        %1926 = vmatpush1.msra.mxu0 0.0
        %1927 = vmatprep.subr.mxu0 0.0
        %1928 = vmatpush1.msra.mxu0 0.0
        %1929 = vmatprep.subr.mxu0 0.0
        %1930 = vmatpush1.msra.mxu0 0.0
        %1931 = vmatprep.subr.mxu0 0.0
        %1932 = vmatpush1.msra.mxu0 0.0
        %1933 = vmatprep.subr.mxu0 0.0
        %1934 = vmatpush1.msra.mxu0 0.0
        %1935 = vmatprep.subr.mxu0 0.0
        %1936 = vmatpush1.msra.mxu0 0.0
        %1937 = vmatprep.subr.mxu0 0.0
        %1938 = vmatpush1.msra.mxu0 0.0
        %1939 = vmatprep.subr.mxu0 0.0
        %1940 = vmatpush1.msra.mxu0 0.0
        %1941 = vmatprep.subr.mxu0 0.0
        %1942 = vmatpush1.msra.mxu0 0.0
        %1943 = vmatprep.subr.mxu0 0.0
        %1944 = vmatpush1.msra.mxu0 0.0
        %1945 = vmatprep.subr.mxu0 0.0
        %1946 = vmatpush1.msra.mxu0 0.0
        %1947 = vmatprep.subr.mxu0 0.0
        %1948 = vmatpush1.msra.mxu0 0.0
        %1949 = vmatprep.subr.mxu0 0.0
        %1950 = vmatpush1.msra.mxu0 0.0
        %1951 = vmatprep.subr.mxu0 0.0
        %1952 = vmatpush1.msra.mxu0 0.0
        %1953 = vmatprep.subr.mxu0 0.0
        %1954 = vmatpush1.msra.mxu0 0.0
        %1955 = vmatprep.subr.mxu0 0.0
        %1956 = vmatpush1.msra.mxu0 0.0
        %1957 = vmatprep.subr.mxu0 0.0
        %1958 = vmatpush1.msra.mxu0 0.0
        %1959 = vmatprep.mubr.f32.mxu0 0.0
        %1960 = vmatmul.mubr.f32.gmra.mrb[0].mxu0 %v1867
        %v1961 = vpop.f32.mrb[0].mxu0
        %v1962 = vadd.f32 0.0, %v1961
        %v1963 = vpop.f32.mrb[0].mxu0
        %1964 = vmatprep.mubr.f32.mxu0 0.0
        %1965 = vmatmul.mubr.f32.gmra.mrb[0].mxu0 %v1869
        %v1966 = vpop.f32.mrb[0].mxu0
        %v1967 = vadd.f32 0.0, %v1966
        %v1968 = vpop.f32.mrb[0].mxu0
        %1969 = vmatprep.mubr.f32.mxu0 0.0
        %1970 = vmatmul.mubr.f32.gmra.mrb[0].mxu0 %v1871
        %v1971 = vpop.f32.mrb[0].mxu0
        %v1972 = vadd.f32 0.0, %v1971
        %v1973 = vpop.f32.mrb[0].mxu0
        %1974 = vmatprep.mubr.f32.mxu0 0.0
        %1975 = vmatmul.mubr.f32.gmra.mrb[0].mxu0 %v1873
        %v1976 = vpop.f32.mrb[0].mxu0
        %v1977 = vadd.f32 0.0, %v1976
        %v1978 = vpop.f32.mrb[0].mxu0
        %1979 = vmatprep.mubr.f32.mxu0 0.0
        %1980 = vmatmul.mubr.f32.gmra.mrb[0].mxu0 %v1875
        %v1981 = vpop.f32.mrb[0].mxu0
        %v1982 = vadd.f32 0.0, %v1981
        %v1983 = vpop.f32.mrb[0].mxu0
        %1984 = vmatprep.mubr.f32.mxu0 0.0
        %1985 = vmatmul.mubr.f32.gmra.mrb[0].mxu0 %v1877
        %v1986 = vpop.f32.mrb[0].mxu0
        %v1987 = vadd.f32 0.0, %v1986
        %v1988 = vpop.f32.mrb[0].mxu0
        %1989 = vmatprep.mubr.f32.mxu0 0.0
        %1990 = vmatmul.mubr.f32.gmra.mrb[0].mxu0 %v1879
        %v1991 = vpop.f32.mrb[0].mxu0
        %v1992 = vadd.f32 0.0, %v1991
        %v1993 = vpop.f32.mrb[0].mxu0
        %1994 = vmatprep.mubr.f32.mxu0 0.0
        %1995 = vmatmul.mubr.f32.gmra.mrb[0].mxu0 %v1881
        %v1996 = vpop.f32.mrb[0].mxu0
        %v1997 = vadd.f32 0.0, %v1996
        %v1998 = vpop.f32.mrb[0].mxu0
        %1999 = vmatprep.mubr.f32.mxu0 0.0
        %2000 = vmatmul.mubr.f32.gmra.mrb[0].mxu0 %v1883
        %v2001 = vpop.f32.mrb[0].mxu0
        %v2002 = vadd.f32 0.0, %v2001
        %v2003 = vpop.f32.mrb[0].mxu0
        %2004 = vmatprep.mubr.f32.mxu0 0.0
        %2005 = vmatmul.mubr.f32.gmra.mrb[0].mxu0 %v1885
        %v2006 = vpop.f32.mrb[0].mxu0
        %v2007 = vadd.f32 0.0, %v2006
        %v2008 = vpop.f32.mrb[0].mxu0
        %2009 = vmatprep.mubr.f32.mxu0 0.0
        %2010 = vmatmul.mubr.f32.gmra.mrb[0].mxu0 %v1887
        %v2011 = vpop.f32.mrb[0].mxu0
        %v2012 = vadd.f32 0.0, %v2011
        %v2013 = vpop.f32.mrb[0].mxu0
        %2014 = vmatprep.mubr.f32.mxu0 0.0
        %2015 = vmatmul.mubr.f32.gmra.mrb[0].mxu0 %v1889
        %v2016 = vpop.f32.mrb[0].mxu0
        %v2017 = vadd.f32 0.0, %v2016
        %v2018 = vpop.f32.mrb[0].mxu0
        %2019 = vmatprep.mubr.f32.mxu0 0.0
        %2020 = vmatmul.mubr.f32.gmra.mrb[0].mxu0 %v1891
        %v2021 = vpop.f32.mrb[0].mxu0
        %v2022 = vadd.f32 0.0, %v2021
        %v2023 = vpop.f32.mrb[0].mxu0
        %2024 = vmatprep.mubr.f32.mxu0 0.0
        %2025 = vmatmul.mubr.f32.gmra.mrb[0].mxu0 %v1893
        %v2026 = vpop.f32.mrb[0].mxu0
        %v2027 = vadd.f32 0.0, %v2026
        %v2028 = vpop.f32.mrb[0].mxu0
        %2029 = vdwg.mxu0
        %v2030 = vadd.f32 %v1814, %v1962
        %v2031 = vadd.f32 %v1815, %v1967
        %v2032 = vadd.f32 %v1816, %v1972
        %v2033 = vadd.f32 %v1817, %v1977
        %v2034 = vadd.f32 %v1818, %v1982
        %v2035 = vadd.f32 %v1819, %v1987
        %v2036 = vadd.f32 %v1820, %v1992
        %v2037 = vadd.f32 %v1821, %v1997
        %v2038 = vadd.f32 %v1822, %v2002
        %v2039 = vadd.f32 %v1823, %v2007
        %v2040 = vadd.f32 %v1824, %v2012
        %v2041 = vadd.f32 %v1825, %v2017
        %v2042 = vadd.f32 %v1826, %v2022
        %v2043 = vadd.f32 %v1827, %v2027
        %v2044 = vld [vmem:[%s6] sm:$0x1]
        %v2046 = vlaneseq
        %v2047 = vshrl.u32 %v2046, 7
        %v2048 = vsub.s32 0, %v2047
        %v2049 = vrot.slane %v2044, %v2048
        %v2051 = vadd.f32 %v2030, %v2049
        %v2052 = vadd.f32 %v2031, %v2049
        %v2053 = vadd.f32 %v2032, %v2049
        %v2054 = vadd.f32 %v2033, %v2049
        %v2055 = vadd.f32 %v2034, %v2049
        %v2056 = vadd.f32 %v2035, %v2049
        %v2057 = vadd.f32 %v2036, %v2049
        %v2058 = vadd.f32 %v2037, %v2049
        %v2059 = vadd.f32 %v2038, %v2049
        %v2060 = vadd.f32 %v2039, %v2049
        %v2061 = vadd.f32 %v2040, %v2049
        %v2062 = vadd.f32 %v2041, %v2049
        %v2063 = vadd.f32 %v2042, %v2049
        %v2064 = vadd.f32 %v2043, %v2049
        %v2065 = vtanh.pop %v2051
        %v2066 = vtanh.pop %v2052
        %v2067 = vtanh.pop %v2053
        %v2068 = vtanh.pop %v2054
        %v2069 = vtanh.pop %v2055
        %v2070 = vtanh.pop %v2056
        %v2071 = vtanh.pop %v2057
        %v2072 = vtanh.pop %v2058
        %v2073 = vtanh.pop %v2059
        %v2074 = vtanh.pop %v2060
        %v2075 = vtanh.pop %v2061
        %v2076 = vtanh.pop %v2062
        %v2077 = vtanh.pop %v2063
        %v2078 = vtanh.pop %v2064
        %v2079 = vxor.u32 %v2051, 2147483648
        %v2080 = vxor.u32 %v2052, 2147483648
        %v2081 = vxor.u32 %v2053, 2147483648
        %v2082 = vxor.u32 %v2054, 2147483648
        %v2083 = vxor.u32 %v2055, 2147483648
        %v2084 = vxor.u32 %v2056, 2147483648
        %v2085 = vxor.u32 %v2057, 2147483648
        %v2086 = vxor.u32 %v2058, 2147483648
        %v2087 = vxor.u32 %v2059, 2147483648
        %v2088 = vxor.u32 %v2060, 2147483648
        %v2089 = vxor.u32 %v2061, 2147483648
        %v2090 = vxor.u32 %v2062, 2147483648
        %v2091 = vxor.u32 %v2063, 2147483648
        %v2092 = vxor.u32 %v2064, 2147483648
        %v2093 = vmul.f32 %v2079, 1.442695
        %v2094 = vpow.pop %v2093
        %v2095 = vmul.f32 %v2080, 1.442695
        %v2096 = vpow.pop %v2095
        %v2097 = vmul.f32 %v2081, 1.442695
        %v2098 = vpow.pop %v2097
        %v2099 = vmul.f32 %v2082, 1.442695
        %v2100 = vpow.pop %v2099
        %v2101 = vmul.f32 %v2083, 1.442695
        %v2102 = vpow.pop %v2101
        %v2103 = vmul.f32 %v2084, 1.442695
        %v2104 = vpow.pop %v2103
        %v2105 = vmul.f32 %v2085, 1.442695
        %v2106 = vpow.pop %v2105
        %v2107 = vmul.f32 %v2086, 1.442695
        %v2108 = vpow.pop %v2107
        %v2109 = vmul.f32 %v2087, 1.442695
        %v2110 = vpow.pop %v2109
        %v2111 = vmul.f32 %v2088, 1.442695
        %v2112 = vpow.pop %v2111
        %v2113 = vmul.f32 %v2089, 1.442695
        %v2114 = vpow.pop %v2113
        %v2115 = vmul.f32 %v2090, 1.442695
        %v2116 = vpow.pop %v2115
        %v2117 = vmul.f32 %v2091, 1.442695
        %v2118 = vpow.pop %v2117
        %v2119 = vmul.f32 %v2092, 1.442695
        %v2120 = vpow.pop %v2119
        %v2121 = vadd.f32 %v2094, 1.0
        %v2122 = vadd.f32 %v2096, 1.0
        %v2123 = vadd.f32 %v2098, 1.0
        %v2124 = vadd.f32 %v2100, 1.0
        %v2125 = vadd.f32 %v2102, 1.0
        %v2126 = vadd.f32 %v2104, 1.0
        %v2127 = vadd.f32 %v2106, 1.0
        %v2128 = vadd.f32 %v2108, 1.0
        %v2129 = vadd.f32 %v2110, 1.0
        %v2130 = vadd.f32 %v2112, 1.0
        %v2131 = vadd.f32 %v2114, 1.0
        %v2132 = vadd.f32 %v2116, 1.0
        %v2133 = vadd.f32 %v2118, 1.0
        %v2134 = vadd.f32 %v2120, 1.0
        %v2135 = vrcp.pop %v2121
        %v2136 = vmul.f32 1.0, %v2135
        %v2137 = vrcp.pop %v2122
        %v2138 = vmul.f32 1.0, %v2137
        %v2139 = vrcp.pop %v2123
        %v2140 = vmul.f32 1.0, %v2139
        %v2141 = vrcp.pop %v2124
        %v2142 = vmul.f32 1.0, %v2141
        %v2143 = vrcp.pop %v2125
        %v2144 = vmul.f32 1.0, %v2143
        %v2145 = vrcp.pop %v2126
        %v2146 = vmul.f32 1.0, %v2145
        %v2147 = vrcp.pop %v2127
        %v2148 = vmul.f32 1.0, %v2147
        %v2149 = vrcp.pop %v2128
        %v2150 = vmul.f32 1.0, %v2149
        %v2151 = vrcp.pop %v2129
        %v2152 = vmul.f32 1.0, %v2151
        %v2153 = vrcp.pop %v2130
        %v2154 = vmul.f32 1.0, %v2153
        %v2155 = vrcp.pop %v2131
        %v2156 = vmul.f32 1.0, %v2155
        %v2157 = vrcp.pop %v2132
        %v2158 = vmul.f32 1.0, %v2157
        %v2159 = vrcp.pop %v2133
        %v2160 = vmul.f32 1.0, %v2159
        %v2161 = vrcp.pop %v2134
        %v2162 = vmul.f32 1.0, %v2161
        %2177 = vrot.lane.b32.xlu0 %v2136, 64
        %v2178 = vpop.permute.xlu0 %2177
        %2179 = vrot.lane.b32.xlu0 %v2138, 64
        %v2180 = vpop.permute.xlu0 %2179
        %2181 = vrot.lane.b32.xlu0 %v2140, 64
        %v2182 = vpop.permute.xlu0 %2181
        %2183 = vrot.lane.b32.xlu0 %v2142, 64
        %v2184 = vpop.permute.xlu0 %2183
        %2185 = vrot.lane.b32.xlu0 %v2144, 64
        %v2186 = vpop.permute.xlu0 %2185
        %2187 = vrot.lane.b32.xlu0 %v2146, 64
        %v2188 = vpop.permute.xlu0 %2187
        %2189 = vrot.lane.b32.xlu0 %v2148, 64
        %v2190 = vpop.permute.xlu0 %2189
        %2191 = vrot.lane.b32.xlu0 %v2150, 64
        %v2192 = vpop.permute.xlu0 %2191
        %2193 = vrot.lane.b32.xlu0 %v2152, 64
        %v2194 = vpop.permute.xlu0 %2193
        %2195 = vrot.lane.b32.xlu0 %v2154, 64
        %v2196 = vpop.permute.xlu0 %2195
        %2197 = vrot.lane.b32.xlu0 %v2156, 64
        %v2198 = vpop.permute.xlu0 %2197
        %2199 = vrot.lane.b32.xlu0 %v2158, 64
        %v2200 = vpop.permute.xlu0 %2199
        %2201 = vrot.lane.b32.xlu0 %v2160, 64
        %v2202 = vpop.permute.xlu0 %2201
        %2203 = vrot.lane.b32.xlu0 %v2162, 64
        %v2204 = vpop.permute.xlu0 %2203
        %v2219 = vmul.f32 %v2065, %v2178
        %v2220 = vmul.f32 %v2066, %v2180
        %v2221 = vmul.f32 %v2067, %v2182
        %v2222 = vmul.f32 %v2068, %v2184
        %v2223 = vmul.f32 %v2069, %v2186
        %v2224 = vmul.f32 %v2070, %v2188
        %v2225 = vmul.f32 %v2071, %v2190
        %v2226 = vmul.f32 %v2072, %v2192
        %v2227 = vmul.f32 %v2073, %v2194
        %v2228 = vmul.f32 %v2074, %v2196
        %v2229 = vmul.f32 %v2075, %v2198
        %v2230 = vmul.f32 %v2076, %v2200
        %v2231 = vmul.f32 %v2077, %v2202
        %v2232 = vmul.f32 %v2078, %v2204
        %v2233 = vld [vmem:[%s7] sm:$0xff]
        %v2234 = vld [vmem:[%s7 + $0x8] sm:$0xff]
        %v2235 = vld [vmem:[%s7 + $0x10] sm:$0xff]
        %v2236 = vld [vmem:[%s7 + $0x18] sm:$0xff]
        %v2237 = vld [vmem:[%s7 + $0x20] sm:$0xff]
        %v2238 = vld [vmem:[%s7 + $0x28] sm:$0xff]
        %v2239 = vld [vmem:[%s7 + $0x30] sm:$0xff]
        %v2240 = vld [vmem:[%s7 + $0x38] sm:$0xff]
        %v2241 = vld [vmem:[%s8] sm:$0x1]
        %v2243 = vlaneseq
        %v2244 = vshrl.u32 %v2243, 7
        %v2245 = vsub.s32 0, %v2244
        %v2246 = vrot.slane %v2241, %v2245
        %v2249 = vsel %vm1069, %v2219, 0
        %v2252 = vsel %vm1069, %v2220, 0
        %v2255 = vsel %vm1069, %v2221, 0
        %v2258 = vsel %vm1069, %v2222, 0
        %v2261 = vsel %vm1069, %v2223, 0
        %v2264 = vsel %vm1069, %v2224, 0
        %v2267 = vsel %vm1069, %v2225, 0
        %v2270 = vsel %vm1069, %v2226, 0
        %v2273 = vsel %vm1069, %v2227, 0
        %v2276 = vsel %vm1069, %v2228, 0
        %v2279 = vsel %vm1069, %v2229, 0
        %v2282 = vsel %vm1069, %v2230, 0
        %v2285 = vsel %vm1069, %v2231, 0
        %v2288 = vsel %vm1069, %v2232, 0
        %2290 = vmatprep.subr.mxu0 0.0
        %2291 = vmatpush1.msra.mxu0 %v2233
        %2292 = vmatprep.subr.mxu0 0.0
        %2293 = vmatpush1.msra.mxu0 %v2234
        %2294 = vmatprep.subr.mxu0 0.0
        %2295 = vmatpush1.msra.mxu0 %v2235
        %2296 = vmatprep.subr.mxu0 0.0
        %2297 = vmatpush1.msra.mxu0 %v2236
        %2298 = vmatprep.subr.mxu0 0.0
        %2299 = vmatpush1.msra.mxu0 %v2237
        %2300 = vmatprep.subr.mxu0 0.0
        %2301 = vmatpush1.msra.mxu0 %v2238
        %2302 = vmatprep.subr.mxu0 0.0
        %2303 = vmatpush1.msra.mxu0 %v2239
        %2304 = vmatprep.subr.mxu0 0.0
        %2305 = vmatpush1.msra.mxu0 %v2240
        %2306 = vmatprep.subr.mxu0 0.0
        %2307 = vmatpush1.msra.mxu0 0.0
        %2308 = vmatprep.subr.mxu0 0.0
        %2309 = vmatpush1.msra.mxu0 0.0
        %2310 = vmatprep.subr.mxu0 0.0
        %2311 = vmatpush1.msra.mxu0 0.0
        %2312 = vmatprep.subr.mxu0 0.0
        %2313 = vmatpush1.msra.mxu0 0.0
        %2314 = vmatprep.subr.mxu0 0.0
        %2315 = vmatpush1.msra.mxu0 0.0
        %2316 = vmatprep.subr.mxu0 0.0
        %2317 = vmatpush1.msra.mxu0 0.0
        %2318 = vmatprep.subr.mxu0 0.0
        %2319 = vmatpush1.msra.mxu0 0.0
        %2320 = vmatprep.subr.mxu0 0.0
        %2321 = vmatpush1.msra.mxu0 0.0
        %2322 = vmatprep.subr.mxu0 0.0
        %2323 = vmatpush1.msra.mxu0 0.0
        %2324 = vmatprep.subr.mxu0 0.0
        %2325 = vmatpush1.msra.mxu0 0.0
        %2326 = vmatprep.subr.mxu0 0.0
        %2327 = vmatpush1.msra.mxu0 0.0
        %2328 = vmatprep.subr.mxu0 0.0
        %2329 = vmatpush1.msra.mxu0 0.0
        %2330 = vmatprep.subr.mxu0 0.0
        %2331 = vmatpush1.msra.mxu0 0.0
        %2332 = vmatprep.subr.mxu0 0.0
        %2333 = vmatpush1.msra.mxu0 0.0
        %2334 = vmatprep.subr.mxu0 0.0
        %2335 = vmatpush1.msra.mxu0 0.0
        %2336 = vmatprep.subr.mxu0 0.0
        %2337 = vmatpush1.msra.mxu0 0.0
        %2338 = vmatprep.subr.mxu0 0.0
        %2339 = vmatpush1.msra.mxu0 0.0
        %2340 = vmatprep.subr.mxu0 0.0
        %2341 = vmatpush1.msra.mxu0 0.0
        %2342 = vmatprep.subr.mxu0 0.0
        %2343 = vmatpush1.msra.mxu0 0.0
        %2344 = vmatprep.subr.mxu0 0.0
        %2345 = vmatpush1.msra.mxu0 0.0
        %2346 = vmatprep.subr.mxu0 0.0
        %2347 = vmatpush1.msra.mxu0 0.0
        %2348 = vmatprep.subr.mxu0 0.0
        %2349 = vmatpush1.msra.mxu0 0.0
        %2350 = vmatprep.subr.mxu0 0.0
        %2351 = vmatpush1.msra.mxu0 0.0
        %2352 = vmatprep.subr.mxu0 0.0
        %2353 = vmatpush1.msra.mxu0 0.0
        %2354 = vmatprep.mubr.f32.mxu0 0.0
        %2355 = vmatmul.mubr.f32.gmra.mrb[0].mxu0 %v2249
        %v2356 = vpop.f32.mrb[0].mxu0
        %v2357 = vadd.f32 %v2246, %v2356
        %v2358 = vpop.f32.mrb[0].mxu0
        %2359 = vmatprep.mubr.f32.mxu0 0.0
        %2360 = vmatmul.mubr.f32.gmra.mrb[0].mxu0 %v2252
        %v2361 = vpop.f32.mrb[0].mxu0
        %v2362 = vadd.f32 %v2246, %v2361
        %v2363 = vpop.f32.mrb[0].mxu0
        %2364 = vmatprep.mubr.f32.mxu0 0.0
        %2365 = vmatmul.mubr.f32.gmra.mrb[0].mxu0 %v2255
        %v2366 = vpop.f32.mrb[0].mxu0
        %v2367 = vadd.f32 %v2246, %v2366
        %v2368 = vpop.f32.mrb[0].mxu0
        %2369 = vmatprep.mubr.f32.mxu0 0.0
        %2370 = vmatmul.mubr.f32.gmra.mrb[0].mxu0 %v2258
        %v2371 = vpop.f32.mrb[0].mxu0
        %v2372 = vadd.f32 %v2246, %v2371
        %v2373 = vpop.f32.mrb[0].mxu0
        %2374 = vmatprep.mubr.f32.mxu0 0.0
        %2375 = vmatmul.mubr.f32.gmra.mrb[0].mxu0 %v2261
        %v2376 = vpop.f32.mrb[0].mxu0
        %v2377 = vadd.f32 %v2246, %v2376
        %v2378 = vpop.f32.mrb[0].mxu0
        %2379 = vmatprep.mubr.f32.mxu0 0.0
        %2380 = vmatmul.mubr.f32.gmra.mrb[0].mxu0 %v2264
        %v2381 = vpop.f32.mrb[0].mxu0
        %v2382 = vadd.f32 %v2246, %v2381
        %v2383 = vpop.f32.mrb[0].mxu0
        %2384 = vmatprep.mubr.f32.mxu0 0.0
        %2385 = vmatmul.mubr.f32.gmra.mrb[0].mxu0 %v2267
        %v2386 = vpop.f32.mrb[0].mxu0
        %v2387 = vadd.f32 %v2246, %v2386
        %v2388 = vpop.f32.mrb[0].mxu0
        %2389 = vmatprep.mubr.f32.mxu0 0.0
        %2390 = vmatmul.mubr.f32.gmra.mrb[0].mxu0 %v2270
        %v2391 = vpop.f32.mrb[0].mxu0
        %v2392 = vadd.f32 %v2246, %v2391
        %v2393 = vpop.f32.mrb[0].mxu0
        %2394 = vmatprep.mubr.f32.mxu0 0.0
        %2395 = vmatmul.mubr.f32.gmra.mrb[0].mxu0 %v2273
        %v2396 = vpop.f32.mrb[0].mxu0
        %v2397 = vadd.f32 %v2246, %v2396
        %v2398 = vpop.f32.mrb[0].mxu0
        %2399 = vmatprep.mubr.f32.mxu0 0.0
        %2400 = vmatmul.mubr.f32.gmra.mrb[0].mxu0 %v2276
        %v2401 = vpop.f32.mrb[0].mxu0
        %v2402 = vadd.f32 %v2246, %v2401
        %v2403 = vpop.f32.mrb[0].mxu0
        %2404 = vmatprep.mubr.f32.mxu0 0.0
        %2405 = vmatmul.mubr.f32.gmra.mrb[0].mxu0 %v2279
        %v2406 = vpop.f32.mrb[0].mxu0
        %v2407 = vadd.f32 %v2246, %v2406
        %v2408 = vpop.f32.mrb[0].mxu0
        %2409 = vmatprep.mubr.f32.mxu0 0.0
        %2410 = vmatmul.mubr.f32.gmra.mrb[0].mxu0 %v2282
        %v2411 = vpop.f32.mrb[0].mxu0
        %v2412 = vadd.f32 %v2246, %v2411
        %v2413 = vpop.f32.mrb[0].mxu0
        %2414 = vmatprep.mubr.f32.mxu0 0.0
        %2415 = vmatmul.mubr.f32.gmra.mrb[0].mxu0 %v2285
        %v2416 = vpop.f32.mrb[0].mxu0
        %v2417 = vadd.f32 %v2246, %v2416
        %v2418 = vpop.f32.mrb[0].mxu0
        %2419 = vmatprep.mubr.f32.mxu0 0.0
        %2420 = vmatmul.mubr.f32.gmra.mrb[0].mxu0 %v2288
        %v2421 = vpop.f32.mrb[0].mxu0
        %v2422 = vadd.f32 %v2246, %v2421
        %v2423 = vpop.f32.mrb[0].mxu0
        %2424 = vdwg.mxu0
        %v2425 = vadd.f32 %v2372, 0.0
        %v2426 = vadd.f32 %v2377, 0.0
        %v2427 = vadd.f32 %v2382, 0.0
        %v2428 = vadd.f32 %v2387, 0.0
        %v2429 = vadd.f32 %v2392, 0.0
        %v2430 = vadd.f32 %v2397, 0.0
        %v2431 = vadd.f32 %v2402, 0.0
        %v2432 = vadd.f32 %v2407, 0.0
        %vm2447 = vcmask 1041408
        %v2448 = vrot.slane %v2357, 6
        %v2449 = vrot.slane %v2362, 6
        %v2450 = vsel %vm2447, %v2448, %v2449
        %v2451 = vrot.slane %v2367, 6
        %v2452 = vsel %vm2447, %v2449, %v2451
        %v2453 = vrot.slane %v2372, 6
        %v2454 = vsel %vm2447, %v2451, %v2453
        %v2455 = vrot.slane %v2377, 6
        %v2456 = vsel %vm2447, %v2453, %v2455
        %v2457 = vrot.slane %v2382, 6
        %v2458 = vsel %vm2447, %v2455, %v2457
        %v2459 = vrot.slane %v2387, 6
        %v2460 = vsel %vm2447, %v2457, %v2459
        %v2461 = vrot.slane %v2392, 6
        %v2462 = vsel %vm2447, %v2459, %v2461
        %v2463 = vrot.slane %v2397, 6
        %v2464 = vsel %vm2447, %v2461, %v2463
        %v2465 = vrot.slane %v2402, 6
        %v2466 = vsel %vm2447, %v2463, %v2465
        %v2467 = vrot.slane %v2407, 6
        %v2468 = vsel %vm2447, %v2465, %v2467
        %v2469 = vrot.slane %v2412, 6
        %v2470 = vsel %vm2447, %v2467, %v2469
        %v2471 = vrot.slane %v2417, 6
        %v2472 = vsel %vm2447, %v2469, %v2471
        %v2473 = vrot.slane %v2422, 6
        %v2474 = vsel %vm2447, %v2471, %v2473
        %v2490 = vadd.f32 %v992, %v2448
        %v2491 = vadd.f32 %v993, %v2450
        %v2492 = vadd.f32 %v994, %v2452
        %v2493 = vadd.f32 %v995, %v2454
        %v2494 = vadd.f32 %v996, %v2456
        %v2495 = vadd.f32 %v997, %v2458
        %v2496 = vadd.f32 %v998, %v2460
        %v2497 = vadd.f32 %v999, %v2462
        %v2498 = vadd.f32 %v1000, %v2464
        %v2499 = vadd.f32 %v1001, %v2466
        %v2500 = vadd.f32 %v1002, %v2468
        %v2501 = vadd.f32 %v1003, %v2470
        %v2502 = vadd.f32 %v1004, %v2472
        %v2503 = vadd.f32 %v1005, %v2474
        %v2504 = vadd.f32 %v1006, %v2473
        %v2505 = vmul.f32 %v2490, %v920
        %v2506 = vmul.f32 %v2491, %v925
        %v2507 = vmul.f32 %v2492, %v930
        %v2508 = vmul.f32 %v2493, %v935
        %v2509 = vmul.f32 %v2494, %v940
        %v2510 = vmul.f32 %v2495, %v945
        %v2511 = vmul.f32 %v2496, %v950
        %v2512 = vmul.f32 %v2497, %v955
        %v2513 = vmul.f32 %v2498, %v960
        %v2514 = vmul.f32 %v2499, %v965
        %v2515 = vmul.f32 %v2500, %v970
        %v2516 = vmul.f32 %v2501, %v975
        %v2517 = vmul.f32 %v2502, %v980
        %v2518 = vmul.f32 %v2503, %v985
        %v2519 = vmul.f32 %v2504, %v990
        %s2520 = scalar_lea.vmem [#allocation2], 320
        %v2521 = vld [vmem:[%s2520] sm:$0xff]
        %v2522 = vld [vmem:[%s2520 + $0x8] sm:$0xff]
        %v2523 = vld [vmem:[%s2520 + $0x10] sm:$0xff]
        %v2524 = vld [vmem:[%s2520 + $0x18] sm:$0xff]
        %v2525 = vld [vmem:[%s2520 + $0x20] sm:$0xff]
        %v2526 = vld [vmem:[%s2520 + $0x28] sm:$0xff]
        %v2527 = vld [vmem:[%s2520 + $0x30] sm:$0xff]
        %v2528 = vld [vmem:[%s2520 + $0x38] sm:$0xff]
        %s2529 = scalar_lea.vmem [#allocation2], 384
        %v2530 = vld [vmem:[%s2529] sm:$0xff]
        %v2531 = vld [vmem:[%s2529 + $0x8] sm:$0xff]
        %v2532 = vld [vmem:[%s2529 + $0x10] sm:$0xff]
        %v2533 = vld [vmem:[%s2529 + $0x18] sm:$0xff]
        %v2534 = vld [vmem:[%s2529 + $0x20] sm:$0xff]
        %v2535 = vld [vmem:[%s2529 + $0x28] sm:$0xff]
        %v2536 = vld [vmem:[%s2529 + $0x30] sm:$0xff]
        %v2537 = vld [vmem:[%s2529 + $0x38] sm:$0xff]
        %v2552 = vrot.slane %v2505, 4
        %v2553 = vrot.slane %v2506, 4
        %v2554 = vsel %vm1837, %v2552, %v2553
        %v2555 = vrot.slane %v2507, 4
        %v2556 = vsel %vm1837, %v2553, %v2555
        %v2557 = vrot.slane %v2508, 4
        %v2558 = vsel %vm1837, %v2555, %v2557
        %v2559 = vrot.slane %v2509, 4
        %v2560 = vsel %vm1837, %v2557, %v2559
        %v2561 = vrot.slane %v2510, 4
        %v2562 = vsel %vm1837, %v2559, %v2561
        %v2563 = vrot.slane %v2511, 4
        %v2564 = vsel %vm1837, %v2561, %v2563
        %v2565 = vrot.slane %v2512, 4
        %v2566 = vsel %vm1837, %v2563, %v2565
        %v2567 = vrot.slane %v2513, 4
        %v2568 = vsel %vm1837, %v2565, %v2567
        %v2569 = vrot.slane %v2514, 4
        %v2570 = vsel %vm1837, %v2567, %v2569
        %v2571 = vrot.slane %v2515, 4
        %v2572 = vsel %vm1837, %v2569, %v2571
        %v2573 = vrot.slane %v2516, 4
        %v2574 = vsel %vm1837, %v2571, %v2573
        %v2575 = vrot.slane %v2517, 4
        %v2576 = vsel %vm1837, %v2573, %v2575
        %v2577 = vrot.slane %v2518, 4
        %v2578 = vsel %vm1837, %v2575, %v2577
        %v2579 = vsel %vm1069, %v2554, 0
        %v2581 = vsel %vm1069, %v2556, 0
        %v2583 = vsel %vm1069, %v2558, 0
        %v2585 = vsel %vm1069, %v2560, 0
        %v2587 = vsel %vm1069, %v2562, 0
        %v2589 = vsel %vm1069, %v2564, 0
        %v2591 = vsel %vm1069, %v2566, 0
        %v2593 = vsel %vm1069, %v2568, 0
        %v2595 = vsel %vm1069, %v2570, 0
        %v2597 = vsel %vm1069, %v2572, 0
        %v2599 = vsel %vm1069, %v2574, 0
        %v2601 = vsel %vm1069, %v2576, 0
        %v2603 = vsel %vm1069, %v2578, 0
        %2605 = vmatprep.subr.mxu0 0.0
        %2606 = vmatpush1.msra.mxu0 %v2530
        %2607 = vmatprep.subr.mxu0 0.0
        %2608 = vmatpush1.msra.mxu0 %v2531
        %2609 = vmatprep.subr.mxu0 0.0
        %2610 = vmatpush1.msra.mxu0 %v2532
        %2611 = vmatprep.subr.mxu0 0.0
        %2612 = vmatpush1.msra.mxu0 %v2533
        %2613 = vmatprep.subr.mxu0 0.0
        %2614 = vmatpush1.msra.mxu0 %v2534
        %2615 = vmatprep.subr.mxu0 0.0
        %2616 = vmatpush1.msra.mxu0 %v2535
        %2617 = vmatprep.subr.mxu0 0.0
        %2618 = vmatpush1.msra.mxu0 %v2536
        %2619 = vmatprep.subr.mxu0 0.0
        %2620 = vmatpush1.msra.mxu0 %v2537
        %2621 = vmatprep.subr.mxu0 0.0
        %2622 = vmatpush1.msra.mxu0 0.0
        %2623 = vmatprep.subr.mxu0 0.0
        %2624 = vmatpush1.msra.mxu0 0.0
        %2625 = vmatprep.subr.mxu0 0.0
        %2626 = vmatpush1.msra.mxu0 0.0
        %2627 = vmatprep.subr.mxu0 0.0
        %2628 = vmatpush1.msra.mxu0 0.0
        %2629 = vmatprep.subr.mxu0 0.0
        %2630 = vmatpush1.msra.mxu0 0.0
        %2631 = vmatprep.subr.mxu0 0.0
        %2632 = vmatpush1.msra.mxu0 0.0
        %2633 = vmatprep.subr.mxu0 0.0
        %2634 = vmatpush1.msra.mxu0 0.0
        %2635 = vmatprep.subr.mxu0 0.0
        %2636 = vmatpush1.msra.mxu0 0.0
        %2637 = vmatprep.subr.mxu0 0.0
        %2638 = vmatpush1.msra.mxu0 0.0
        %2639 = vmatprep.subr.mxu0 0.0
        %2640 = vmatpush1.msra.mxu0 0.0
        %2641 = vmatprep.subr.mxu0 0.0
        %2642 = vmatpush1.msra.mxu0 0.0
        %2643 = vmatprep.subr.mxu0 0.0
        %2644 = vmatpush1.msra.mxu0 0.0
        %2645 = vmatprep.subr.mxu0 0.0
        %2646 = vmatpush1.msra.mxu0 0.0
        %2647 = vmatprep.subr.mxu0 0.0
        %2648 = vmatpush1.msra.mxu0 0.0
        %2649 = vmatprep.subr.mxu0 0.0
        %2650 = vmatpush1.msra.mxu0 0.0
        %2651 = vmatprep.subr.mxu0 0.0
        %2652 = vmatpush1.msra.mxu0 0.0
        %2653 = vmatprep.subr.mxu0 0.0
        %2654 = vmatpush1.msra.mxu0 0.0
        %2655 = vmatprep.subr.mxu0 0.0
        %2656 = vmatpush1.msra.mxu0 0.0
        %2657 = vmatprep.subr.mxu0 0.0
        %2658 = vmatpush1.msra.mxu0 0.0
        %2659 = vmatprep.subr.mxu0 0.0
        %2660 = vmatpush1.msra.mxu0 0.0
        %2661 = vmatprep.subr.mxu0 0.0
        %2662 = vmatpush1.msra.mxu0 0.0
        %2663 = vmatprep.subr.mxu0 0.0
        %2664 = vmatpush1.msra.mxu0 0.0
        %2665 = vmatprep.subr.mxu0 0.0
        %2666 = vmatpush1.msra.mxu0 0.0
        %2667 = vmatprep.subr.mxu0 0.0
        %2668 = vmatpush1.msra.mxu0 0.0
        %2669 = vmatprep.mubr.f32.mxu0 0.0
        %2670 = vmatmul.mubr.f32.gmra.mrb[0].mxu0 %v2579
        %v2671 = vpop.f32.mrb[0].mxu0
        %v2672 = vadd.f32 0.0, %v2671
        %v2673 = vpop.f32.mrb[0].mxu0
        %2674 = vmatprep.mubr.f32.mxu0 0.0
        %2675 = vmatmul.mubr.f32.gmra.mrb[0].mxu0 %v2581
        %v2676 = vpop.f32.mrb[0].mxu0
        %v2677 = vadd.f32 0.0, %v2676
        %v2678 = vpop.f32.mrb[0].mxu0
        %2679 = vmatprep.mubr.f32.mxu0 0.0
        %2680 = vmatmul.mubr.f32.gmra.mrb[0].mxu0 %v2583
        %v2681 = vpop.f32.mrb[0].mxu0
        %v2682 = vadd.f32 0.0, %v2681
        %v2683 = vpop.f32.mrb[0].mxu0
        %2684 = vmatprep.mubr.f32.mxu0 0.0
        %2685 = vmatmul.mubr.f32.gmra.mrb[0].mxu0 %v2585
        %v2686 = vpop.f32.mrb[0].mxu0
        %v2687 = vadd.f32 0.0, %v2686
        %v2688 = vpop.f32.mrb[0].mxu0
        %2689 = vmatprep.mubr.f32.mxu0 0.0
        %2690 = vmatmul.mubr.f32.gmra.mrb[0].mxu0 %v2587
        %v2691 = vpop.f32.mrb[0].mxu0
        %v2692 = vadd.f32 0.0, %v2691
        %v2693 = vpop.f32.mrb[0].mxu0
        %2694 = vmatprep.mubr.f32.mxu0 0.0
        %2695 = vmatmul.mubr.f32.gmra.mrb[0].mxu0 %v2589
        %v2696 = vpop.f32.mrb[0].mxu0
        %v2697 = vadd.f32 0.0, %v2696
        %v2698 = vpop.f32.mrb[0].mxu0
        %2699 = vmatprep.mubr.f32.mxu0 0.0
        %2700 = vmatmul.mubr.f32.gmra.mrb[0].mxu0 %v2591
        %v2701 = vpop.f32.mrb[0].mxu0
        %v2702 = vadd.f32 0.0, %v2701
        %v2703 = vpop.f32.mrb[0].mxu0
        %2704 = vmatprep.mubr.f32.mxu0 0.0
        %2705 = vmatmul.mubr.f32.gmra.mrb[0].mxu0 %v2593
        %v2706 = vpop.f32.mrb[0].mxu0
        %v2707 = vadd.f32 0.0, %v2706
        %v2708 = vpop.f32.mrb[0].mxu0
        %2709 = vmatprep.mubr.f32.mxu0 0.0
        %2710 = vmatmul.mubr.f32.gmra.mrb[0].mxu0 %v2595
        %v2711 = vpop.f32.mrb[0].mxu0
        %v2712 = vadd.f32 0.0, %v2711
        %v2713 = vpop.f32.mrb[0].mxu0
        %2714 = vmatprep.mubr.f32.mxu0 0.0
        %2715 = vmatmul.mubr.f32.gmra.mrb[0].mxu0 %v2597
        %v2716 = vpop.f32.mrb[0].mxu0
        %v2717 = vadd.f32 0.0, %v2716
        %v2718 = vpop.f32.mrb[0].mxu0
        %2719 = vmatprep.mubr.f32.mxu0 0.0
        %2720 = vmatmul.mubr.f32.gmra.mrb[0].mxu0 %v2599
        %v2721 = vpop.f32.mrb[0].mxu0
        %v2722 = vadd.f32 0.0, %v2721
        %v2723 = vpop.f32.mrb[0].mxu0
        %2724 = vmatprep.mubr.f32.mxu0 0.0
        %2725 = vmatmul.mubr.f32.gmra.mrb[0].mxu0 %v2601
        %v2726 = vpop.f32.mrb[0].mxu0
        %v2727 = vadd.f32 0.0, %v2726
        %v2728 = vpop.f32.mrb[0].mxu0
        %2729 = vmatprep.mubr.f32.mxu0 0.0
        %2730 = vmatmul.mubr.f32.gmra.mrb[0].mxu0 %v2603
        %v2731 = vpop.f32.mrb[0].mxu0
        %v2732 = vadd.f32 0.0, %v2731
        %v2733 = vpop.f32.mrb[0].mxu0
        %2734 = vdwg.mxu0
        %v2735 = vrot.slane %v2505, 2
        %v2736 = vrot.slane %v2506, 2
        %v2737 = vsel %vm1405, %v2735, %v2736
        %v2738 = vrot.slane %v2507, 2
        %v2739 = vsel %vm1405, %v2736, %v2738
        %v2740 = vrot.slane %v2508, 2
        %v2741 = vsel %vm1405, %v2738, %v2740
        %v2742 = vrot.slane %v2509, 2
        %v2743 = vsel %vm1405, %v2740, %v2742
        %v2744 = vrot.slane %v2510, 2
        %v2745 = vsel %vm1405, %v2742, %v2744
        %v2746 = vrot.slane %v2511, 2
        %v2747 = vsel %vm1405, %v2744, %v2746
        %v2748 = vrot.slane %v2512, 2
        %v2749 = vsel %vm1405, %v2746, %v2748
        %v2750 = vrot.slane %v2513, 2
        %v2751 = vsel %vm1405, %v2748, %v2750
        %v2752 = vrot.slane %v2514, 2
        %v2753 = vsel %vm1405, %v2750, %v2752
        %v2754 = vrot.slane %v2515, 2
        %v2755 = vsel %vm1405, %v2752, %v2754
        %v2756 = vrot.slane %v2516, 2
        %v2757 = vsel %vm1405, %v2754, %v2756
        %v2758 = vrot.slane %v2517, 2
        %v2759 = vsel %vm1405, %v2756, %v2758
        %v2760 = vrot.slane %v2518, 2
        %v2761 = vsel %vm1405, %v2758, %v2760
        %v2762 = vsel %vm1069, %v2737, 0
        %v2764 = vsel %vm1069, %v2739, 0
        %v2766 = vsel %vm1069, %v2741, 0
        %v2768 = vsel %vm1069, %v2743, 0
        %v2770 = vsel %vm1069, %v2745, 0
        %v2772 = vsel %vm1069, %v2747, 0
        %v2774 = vsel %vm1069, %v2749, 0
        %v2776 = vsel %vm1069, %v2751, 0
        %v2778 = vsel %vm1069, %v2753, 0
        %v2780 = vsel %vm1069, %v2755, 0
        %v2782 = vsel %vm1069, %v2757, 0
        %v2784 = vsel %vm1069, %v2759, 0
        %v2786 = vsel %vm1069, %v2761, 0
        %2788 = vmatprep.subr.mxu0 0.0
        %2789 = vmatpush1.msra.mxu0 %v2521
        %2790 = vmatprep.subr.mxu0 0.0
        %2791 = vmatpush1.msra.mxu0 %v2522
        %2792 = vmatprep.subr.mxu0 0.0
        %2793 = vmatpush1.msra.mxu0 %v2523
        %2794 = vmatprep.subr.mxu0 0.0
        %2795 = vmatpush1.msra.mxu0 %v2524
        %2796 = vmatprep.subr.mxu0 0.0
        %2797 = vmatpush1.msra.mxu0 %v2525
        %2798 = vmatprep.subr.mxu0 0.0
        %2799 = vmatpush1.msra.mxu0 %v2526
        %2800 = vmatprep.subr.mxu0 0.0
        %2801 = vmatpush1.msra.mxu0 %v2527
        %2802 = vmatprep.subr.mxu0 0.0
        %2803 = vmatpush1.msra.mxu0 %v2528
        %2804 = vmatprep.subr.mxu0 0.0
        %2805 = vmatpush1.msra.mxu0 0.0
        %2806 = vmatprep.subr.mxu0 0.0
        %2807 = vmatpush1.msra.mxu0 0.0
        %2808 = vmatprep.subr.mxu0 0.0
        %2809 = vmatpush1.msra.mxu0 0.0
        %2810 = vmatprep.subr.mxu0 0.0
        %2811 = vmatpush1.msra.mxu0 0.0
        %2812 = vmatprep.subr.mxu0 0.0
        %2813 = vmatpush1.msra.mxu0 0.0
        %2814 = vmatprep.subr.mxu0 0.0
        %2815 = vmatpush1.msra.mxu0 0.0
        %2816 = vmatprep.subr.mxu0 0.0
        %2817 = vmatpush1.msra.mxu0 0.0
        %2818 = vmatprep.subr.mxu0 0.0
        %2819 = vmatpush1.msra.mxu0 0.0
        %2820 = vmatprep.subr.mxu0 0.0
        %2821 = vmatpush1.msra.mxu0 0.0
        %2822 = vmatprep.subr.mxu0 0.0
        %2823 = vmatpush1.msra.mxu0 0.0
        %2824 = vmatprep.subr.mxu0 0.0
        %2825 = vmatpush1.msra.mxu0 0.0
        %2826 = vmatprep.subr.mxu0 0.0
        %2827 = vmatpush1.msra.mxu0 0.0
        %2828 = vmatprep.subr.mxu0 0.0
        %2829 = vmatpush1.msra.mxu0 0.0
        %2830 = vmatprep.subr.mxu0 0.0
        %2831 = vmatpush1.msra.mxu0 0.0
        %2832 = vmatprep.subr.mxu0 0.0
        %2833 = vmatpush1.msra.mxu0 0.0
        %2834 = vmatprep.subr.mxu0 0.0
        %2835 = vmatpush1.msra.mxu0 0.0
        %2836 = vmatprep.subr.mxu0 0.0
        %2837 = vmatpush1.msra.mxu0 0.0
        %2838 = vmatprep.subr.mxu0 0.0
        %2839 = vmatpush1.msra.mxu0 0.0
        %2840 = vmatprep.subr.mxu0 0.0
        %2841 = vmatpush1.msra.mxu0 0.0
        %2842 = vmatprep.subr.mxu0 0.0
        %2843 = vmatpush1.msra.mxu0 0.0
        %2844 = vmatprep.subr.mxu0 0.0
        %2845 = vmatpush1.msra.mxu0 0.0
        %2846 = vmatprep.subr.mxu0 0.0
        %2847 = vmatpush1.msra.mxu0 0.0
        %2848 = vmatprep.subr.mxu0 0.0
        %2849 = vmatpush1.msra.mxu0 0.0
        %2850 = vmatprep.subr.mxu0 0.0
        %2851 = vmatpush1.msra.mxu0 0.0
        %2852 = vmatprep.mubr.f32.mxu0 0.0
        %2853 = vmatmul.mubr.f32.gmra.mrb[0].mxu0 %v2762
        %v2854 = vpop.f32.mrb[0].mxu0
        %v2855 = vadd.f32 %v2672, %v2854
        %v2856 = vpop.f32.mrb[0].mxu0
        %2857 = vmatprep.mubr.f32.mxu0 0.0
        %2858 = vmatmul.mubr.f32.gmra.mrb[0].mxu0 %v2764
        %v2859 = vpop.f32.mrb[0].mxu0
        %v2860 = vadd.f32 %v2677, %v2859
        %v2861 = vpop.f32.mrb[0].mxu0
        %2862 = vmatprep.mubr.f32.mxu0 0.0
        %2863 = vmatmul.mubr.f32.gmra.mrb[0].mxu0 %v2766
        %v2864 = vpop.f32.mrb[0].mxu0
        %v2865 = vadd.f32 %v2682, %v2864
        %v2866 = vpop.f32.mrb[0].mxu0
        %2867 = vmatprep.mubr.f32.mxu0 0.0
        %2868 = vmatmul.mubr.f32.gmra.mrb[0].mxu0 %v2768
        %v2869 = vpop.f32.mrb[0].mxu0
        %v2870 = vadd.f32 %v2687, %v2869
        %v2871 = vpop.f32.mrb[0].mxu0
        %2872 = vmatprep.mubr.f32.mxu0 0.0
        %2873 = vmatmul.mubr.f32.gmra.mrb[0].mxu0 %v2770
        %v2874 = vpop.f32.mrb[0].mxu0
        %v2875 = vadd.f32 %v2692, %v2874
        %v2876 = vpop.f32.mrb[0].mxu0
        %2877 = vmatprep.mubr.f32.mxu0 0.0
        %2878 = vmatmul.mubr.f32.gmra.mrb[0].mxu0 %v2772
        %v2879 = vpop.f32.mrb[0].mxu0
        %v2880 = vadd.f32 %v2697, %v2879
        %v2881 = vpop.f32.mrb[0].mxu0
        %2882 = vmatprep.mubr.f32.mxu0 0.0
        %2883 = vmatmul.mubr.f32.gmra.mrb[0].mxu0 %v2774
        %v2884 = vpop.f32.mrb[0].mxu0
        %v2885 = vadd.f32 %v2702, %v2884
        %v2886 = vpop.f32.mrb[0].mxu0
        %2887 = vmatprep.mubr.f32.mxu0 0.0
        %2888 = vmatmul.mubr.f32.gmra.mrb[0].mxu0 %v2776
        %v2889 = vpop.f32.mrb[0].mxu0
        %v2890 = vadd.f32 %v2707, %v2889
        %v2891 = vpop.f32.mrb[0].mxu0
        %2892 = vmatprep.mubr.f32.mxu0 0.0
        %2893 = vmatmul.mubr.f32.gmra.mrb[0].mxu0 %v2778
        %v2894 = vpop.f32.mrb[0].mxu0
        %v2895 = vadd.f32 %v2712, %v2894
        %v2896 = vpop.f32.mrb[0].mxu0
        %2897 = vmatprep.mubr.f32.mxu0 0.0
        %2898 = vmatmul.mubr.f32.gmra.mrb[0].mxu0 %v2780
        %v2899 = vpop.f32.mrb[0].mxu0
        %v2900 = vadd.f32 %v2717, %v2899
        %v2901 = vpop.f32.mrb[0].mxu0
        %2902 = vmatprep.mubr.f32.mxu0 0.0
        %2903 = vmatmul.mubr.f32.gmra.mrb[0].mxu0 %v2782
        %v2904 = vpop.f32.mrb[0].mxu0
        %v2905 = vadd.f32 %v2722, %v2904
        %v2906 = vpop.f32.mrb[0].mxu0
        %2907 = vmatprep.mubr.f32.mxu0 0.0
        %2908 = vmatmul.mubr.f32.gmra.mrb[0].mxu0 %v2784
        %v2909 = vpop.f32.mrb[0].mxu0
        %v2910 = vadd.f32 %v2727, %v2909
        %v2911 = vpop.f32.mrb[0].mxu0
        %2912 = vmatprep.mubr.f32.mxu0 0.0
        %2913 = vmatmul.mubr.f32.gmra.mrb[0].mxu0 %v2786
        %v2914 = vpop.f32.mrb[0].mxu0
        %v2915 = vadd.f32 %v2732, %v2914
        %v2916 = vpop.f32.mrb[0].mxu0
        %2917 = vdwg.mxu0
        %s2918 = scalar_lea.vmem [#allocation2], 448
        %v2919 = vld [vmem:[%s2918] sm:$0xff]
        %v2920 = vld [vmem:[%s2918 + $0x8] sm:$0xff]
        %v2921 = vld [vmem:[%s2918 + $0x10] sm:$0xff]
        %v2922 = vld [vmem:[%s2918 + $0x18] sm:$0xff]
        %v2923 = vld [vmem:[%s2918 + $0x20] sm:$0xff]
        %v2924 = vld [vmem:[%s2918 + $0x28] sm:$0xff]
        %v2925 = vld [vmem:[%s2918 + $0x30] sm:$0xff]
        %v2926 = vld [vmem:[%s2918 + $0x38] sm:$0xff]
        %v2927 = vrot.slane %v2505, 6
        %v2928 = vrot.slane %v2506, 6
        %v2929 = vsel %vm2447, %v2927, %v2928
        %v2930 = vrot.slane %v2507, 6
        %v2931 = vsel %vm2447, %v2928, %v2930
        %v2932 = vrot.slane %v2508, 6
        %v2933 = vsel %vm2447, %v2930, %v2932
        %v2934 = vrot.slane %v2509, 6
        %v2935 = vsel %vm2447, %v2932, %v2934
        %v2936 = vrot.slane %v2510, 6
        %v2937 = vsel %vm2447, %v2934, %v2936
        %v2938 = vrot.slane %v2511, 6
        %v2939 = vsel %vm2447, %v2936, %v2938
        %v2940 = vrot.slane %v2512, 6
        %v2941 = vsel %vm2447, %v2938, %v2940
        %v2942 = vrot.slane %v2513, 6
        %v2943 = vsel %vm2447, %v2940, %v2942
        %v2944 = vrot.slane %v2514, 6
        %v2945 = vsel %vm2447, %v2942, %v2944
        %v2946 = vrot.slane %v2515, 6
        %v2947 = vsel %vm2447, %v2944, %v2946
        %v2948 = vrot.slane %v2516, 6
        %v2949 = vsel %vm2447, %v2946, %v2948
        %v2950 = vrot.slane %v2517, 6
        %v2951 = vsel %vm2447, %v2948, %v2950
        %v2952 = vrot.slane %v2518, 6
        %v2953 = vsel %vm2447, %v2950, %v2952
        %v2954 = vsel %vm1069, %v2929, 0
        %v2956 = vsel %vm1069, %v2931, 0
        %v2958 = vsel %vm1069, %v2933, 0
        %v2960 = vsel %vm1069, %v2935, 0
        %v2962 = vsel %vm1069, %v2937, 0
        %v2964 = vsel %vm1069, %v2939, 0
        %v2966 = vsel %vm1069, %v2941, 0
        %v2968 = vsel %vm1069, %v2943, 0
        %v2970 = vsel %vm1069, %v2945, 0
        %v2972 = vsel %vm1069, %v2947, 0
        %v2974 = vsel %vm1069, %v2949, 0
        %v2976 = vsel %vm1069, %v2951, 0
        %v2978 = vsel %vm1069, %v2953, 0
        %2980 = vmatprep.subr.mxu0 0.0
        %2981 = vmatpush1.msra.mxu0 %v2919
        %2982 = vmatprep.subr.mxu0 0.0
        %2983 = vmatpush1.msra.mxu0 %v2920
        %2984 = vmatprep.subr.mxu0 0.0
        %2985 = vmatpush1.msra.mxu0 %v2921
        %2986 = vmatprep.subr.mxu0 0.0
        %2987 = vmatpush1.msra.mxu0 %v2922
        %2988 = vmatprep.subr.mxu0 0.0
        %2989 = vmatpush1.msra.mxu0 %v2923
        %2990 = vmatprep.subr.mxu0 0.0
        %2991 = vmatpush1.msra.mxu0 %v2924
        %2992 = vmatprep.subr.mxu0 0.0
        %2993 = vmatpush1.msra.mxu0 %v2925
        %2994 = vmatprep.subr.mxu0 0.0
        %2995 = vmatpush1.msra.mxu0 %v2926
        %2996 = vmatprep.subr.mxu0 0.0
        %2997 = vmatpush1.msra.mxu0 0.0
        %2998 = vmatprep.subr.mxu0 0.0
        %2999 = vmatpush1.msra.mxu0 0.0
        %3000 = vmatprep.subr.mxu0 0.0
        %3001 = vmatpush1.msra.mxu0 0.0
        %3002 = vmatprep.subr.mxu0 0.0
        %3003 = vmatpush1.msra.mxu0 0.0
        %3004 = vmatprep.subr.mxu0 0.0
        %3005 = vmatpush1.msra.mxu0 0.0
        %3006 = vmatprep.subr.mxu0 0.0
        %3007 = vmatpush1.msra.mxu0 0.0
        %3008 = vmatprep.subr.mxu0 0.0
        %3009 = vmatpush1.msra.mxu0 0.0
        %3010 = vmatprep.subr.mxu0 0.0
        %3011 = vmatpush1.msra.mxu0 0.0
        %3012 = vmatprep.subr.mxu0 0.0
        %3013 = vmatpush1.msra.mxu0 0.0
        %3014 = vmatprep.subr.mxu0 0.0
        %3015 = vmatpush1.msra.mxu0 0.0
        %3016 = vmatprep.subr.mxu0 0.0
        %3017 = vmatpush1.msra.mxu0 0.0
        %3018 = vmatprep.subr.mxu0 0.0
        %3019 = vmatpush1.msra.mxu0 0.0
        %3020 = vmatprep.subr.mxu0 0.0
        %3021 = vmatpush1.msra.mxu0 0.0
        %3022 = vmatprep.subr.mxu0 0.0
        %3023 = vmatpush1.msra.mxu0 0.0
        %3024 = vmatprep.subr.mxu0 0.0
        %3025 = vmatpush1.msra.mxu0 0.0
        %3026 = vmatprep.subr.mxu0 0.0
        %3027 = vmatpush1.msra.mxu0 0.0
        %3028 = vmatprep.subr.mxu0 0.0
        %3029 = vmatpush1.msra.mxu0 0.0
        %3030 = vmatprep.subr.mxu0 0.0
        %3031 = vmatpush1.msra.mxu0 0.0
        %3032 = vmatprep.subr.mxu0 0.0
        %3033 = vmatpush1.msra.mxu0 0.0
        %3034 = vmatprep.subr.mxu0 0.0
        %3035 = vmatpush1.msra.mxu0 0.0
        %3036 = vmatprep.subr.mxu0 0.0
        %3037 = vmatpush1.msra.mxu0 0.0
        %3038 = vmatprep.subr.mxu0 0.0
        %3039 = vmatpush1.msra.mxu0 0.0
        %3040 = vmatprep.subr.mxu0 0.0
        %3041 = vmatpush1.msra.mxu0 0.0
        %3042 = vmatprep.subr.mxu0 0.0
        %3043 = vmatpush1.msra.mxu0 0.0
        %3044 = vmatprep.mubr.f32.mxu0 0.0
        %3045 = vmatmul.mubr.f32.gmra.mrb[0].mxu0 %v2954
        %v3046 = vpop.f32.mrb[0].mxu0
        %v3047 = vadd.f32 0.0, %v3046
        %v3048 = vpop.f32.mrb[0].mxu0
        %3049 = vmatprep.mubr.f32.mxu0 0.0
        %3050 = vmatmul.mubr.f32.gmra.mrb[0].mxu0 %v2956
        %v3051 = vpop.f32.mrb[0].mxu0
        %v3052 = vadd.f32 0.0, %v3051
        %v3053 = vpop.f32.mrb[0].mxu0
        %3054 = vmatprep.mubr.f32.mxu0 0.0
        %3055 = vmatmul.mubr.f32.gmra.mrb[0].mxu0 %v2958
        %v3056 = vpop.f32.mrb[0].mxu0
        %v3057 = vadd.f32 0.0, %v3056
        %v3058 = vpop.f32.mrb[0].mxu0
        %3059 = vmatprep.mubr.f32.mxu0 0.0
        %3060 = vmatmul.mubr.f32.gmra.mrb[0].mxu0 %v2960
        %v3061 = vpop.f32.mrb[0].mxu0
        %v3062 = vadd.f32 0.0, %v3061
        %v3063 = vpop.f32.mrb[0].mxu0
        %3064 = vmatprep.mubr.f32.mxu0 0.0
        %3065 = vmatmul.mubr.f32.gmra.mrb[0].mxu0 %v2962
        %v3066 = vpop.f32.mrb[0].mxu0
        %v3067 = vadd.f32 0.0, %v3066
        %v3068 = vpop.f32.mrb[0].mxu0
        %3069 = vmatprep.mubr.f32.mxu0 0.0
        %3070 = vmatmul.mubr.f32.gmra.mrb[0].mxu0 %v2964
        %v3071 = vpop.f32.mrb[0].mxu0
        %v3072 = vadd.f32 0.0, %v3071
        %v3073 = vpop.f32.mrb[0].mxu0
        %3074 = vmatprep.mubr.f32.mxu0 0.0
        %3075 = vmatmul.mubr.f32.gmra.mrb[0].mxu0 %v2966
        %v3076 = vpop.f32.mrb[0].mxu0
        %v3077 = vadd.f32 0.0, %v3076
        %v3078 = vpop.f32.mrb[0].mxu0
        %3079 = vmatprep.mubr.f32.mxu0 0.0
        %3080 = vmatmul.mubr.f32.gmra.mrb[0].mxu0 %v2968
        %v3081 = vpop.f32.mrb[0].mxu0
        %v3082 = vadd.f32 0.0, %v3081
        %v3083 = vpop.f32.mrb[0].mxu0
        %3084 = vmatprep.mubr.f32.mxu0 0.0
        %3085 = vmatmul.mubr.f32.gmra.mrb[0].mxu0 %v2970
        %v3086 = vpop.f32.mrb[0].mxu0
        %v3087 = vadd.f32 0.0, %v3086
        %v3088 = vpop.f32.mrb[0].mxu0
        %3089 = vmatprep.mubr.f32.mxu0 0.0
        %3090 = vmatmul.mubr.f32.gmra.mrb[0].mxu0 %v2972
        %v3091 = vpop.f32.mrb[0].mxu0
        %v3092 = vadd.f32 0.0, %v3091
        %v3093 = vpop.f32.mrb[0].mxu0
        %3094 = vmatprep.mubr.f32.mxu0 0.0
        %3095 = vmatmul.mubr.f32.gmra.mrb[0].mxu0 %v2974
        %v3096 = vpop.f32.mrb[0].mxu0
        %v3097 = vadd.f32 0.0, %v3096
        %v3098 = vpop.f32.mrb[0].mxu0
        %3099 = vmatprep.mubr.f32.mxu0 0.0
        %3100 = vmatmul.mubr.f32.gmra.mrb[0].mxu0 %v2976
        %v3101 = vpop.f32.mrb[0].mxu0
        %v3102 = vadd.f32 0.0, %v3101
        %v3103 = vpop.f32.mrb[0].mxu0
        %3104 = vmatprep.mubr.f32.mxu0 0.0
        %3105 = vmatmul.mubr.f32.gmra.mrb[0].mxu0 %v2978
        %v3106 = vpop.f32.mrb[0].mxu0
        %v3107 = vadd.f32 0.0, %v3106
        %v3108 = vpop.f32.mrb[0].mxu0
        %3109 = vdwg.mxu0
        %v3110 = vadd.f32 %v2855, %v3047
        %v3111 = vadd.f32 %v2860, %v3052
        %v3112 = vadd.f32 %v2865, %v3057
        %v3113 = vadd.f32 %v2870, %v3062
        %v3114 = vadd.f32 %v2875, %v3067
        %v3115 = vadd.f32 %v2880, %v3072
        %v3116 = vadd.f32 %v2885, %v3077
        %v3117 = vadd.f32 %v2890, %v3082
        %v3118 = vadd.f32 %v2895, %v3087
        %v3119 = vadd.f32 %v2900, %v3092
        %v3120 = vadd.f32 %v2905, %v3097
        %v3121 = vadd.f32 %v2910, %v3102
        %v3122 = vadd.f32 %v2915, %v3107
        %s3123 = scalar_lea.vmem [#allocation2], 512
        %v3124 = vld [vmem:[%s3123] sm:$0xff]
        %v3125 = vld [vmem:[%s3123 + $0x8] sm:$0xff]
        %v3126 = vld [vmem:[%s3123 + $0x10] sm:$0xff]
        %v3127 = vld [vmem:[%s3123 + $0x18] sm:$0xff]
        %v3128 = vld [vmem:[%s3123 + $0x20] sm:$0xff]
        %v3129 = vld [vmem:[%s3123 + $0x28] sm:$0xff]
        %v3130 = vld [vmem:[%s3123 + $0x30] sm:$0xff]
        %v3131 = vld [vmem:[%s3123 + $0x38] sm:$0xff]
        %v3132 = vsel %vm1069, %v2506, 0
        %v3134 = vsel %vm1069, %v2507, 0
        %v3136 = vsel %vm1069, %v2508, 0
        %v3138 = vsel %vm1069, %v2509, 0
        %v3140 = vsel %vm1069, %v2510, 0
        %v3142 = vsel %vm1069, %v2511, 0
        %v3144 = vsel %vm1069, %v2512, 0
        %v3146 = vsel %vm1069, %v2513, 0
        %v3148 = vsel %vm1069, %v2514, 0
        %v3150 = vsel %vm1069, %v2515, 0
        %v3152 = vsel %vm1069, %v2516, 0
        %v3154 = vsel %vm1069, %v2517, 0
        %v3156 = vsel %vm1069, %v2518, 0
        %3158 = vmatprep.subr.mxu0 0.0
        %3159 = vmatpush1.msra.mxu0 %v3124
        %3160 = vmatprep.subr.mxu0 0.0
        %3161 = vmatpush1.msra.mxu0 %v3125
        %3162 = vmatprep.subr.mxu0 0.0
        %3163 = vmatpush1.msra.mxu0 %v3126
        %3164 = vmatprep.subr.mxu0 0.0
        %3165 = vmatpush1.msra.mxu0 %v3127
        %3166 = vmatprep.subr.mxu0 0.0
        %3167 = vmatpush1.msra.mxu0 %v3128
        %3168 = vmatprep.subr.mxu0 0.0
        %3169 = vmatpush1.msra.mxu0 %v3129
        %3170 = vmatprep.subr.mxu0 0.0
        %3171 = vmatpush1.msra.mxu0 %v3130
        %3172 = vmatprep.subr.mxu0 0.0
        %3173 = vmatpush1.msra.mxu0 %v3131
        %3174 = vmatprep.subr.mxu0 0.0
        %3175 = vmatpush1.msra.mxu0 0.0
        %3176 = vmatprep.subr.mxu0 0.0
        %3177 = vmatpush1.msra.mxu0 0.0
        %3178 = vmatprep.subr.mxu0 0.0
        %3179 = vmatpush1.msra.mxu0 0.0
        %3180 = vmatprep.subr.mxu0 0.0
        %3181 = vmatpush1.msra.mxu0 0.0
        %3182 = vmatprep.subr.mxu0 0.0
        %3183 = vmatpush1.msra.mxu0 0.0
        %3184 = vmatprep.subr.mxu0 0.0
        %3185 = vmatpush1.msra.mxu0 0.0
        %3186 = vmatprep.subr.mxu0 0.0
        %3187 = vmatpush1.msra.mxu0 0.0
        %3188 = vmatprep.subr.mxu0 0.0
        %3189 = vmatpush1.msra.mxu0 0.0
        %3190 = vmatprep.subr.mxu0 0.0
        %3191 = vmatpush1.msra.mxu0 0.0
        %3192 = vmatprep.subr.mxu0 0.0
        %3193 = vmatpush1.msra.mxu0 0.0
        %3194 = vmatprep.subr.mxu0 0.0
        %3195 = vmatpush1.msra.mxu0 0.0
        %3196 = vmatprep.subr.mxu0 0.0
        %3197 = vmatpush1.msra.mxu0 0.0
        %3198 = vmatprep.subr.mxu0 0.0
        %3199 = vmatpush1.msra.mxu0 0.0
        %3200 = vmatprep.subr.mxu0 0.0
        %3201 = vmatpush1.msra.mxu0 0.0
        %3202 = vmatprep.subr.mxu0 0.0
        %3203 = vmatpush1.msra.mxu0 0.0
        %3204 = vmatprep.subr.mxu0 0.0
        %3205 = vmatpush1.msra.mxu0 0.0
        %3206 = vmatprep.subr.mxu0 0.0
        %3207 = vmatpush1.msra.mxu0 0.0
        %3208 = vmatprep.subr.mxu0 0.0
        %3209 = vmatpush1.msra.mxu0 0.0
        %3210 = vmatprep.subr.mxu0 0.0
        %3211 = vmatpush1.msra.mxu0 0.0
        %3212 = vmatprep.subr.mxu0 0.0
        %3213 = vmatpush1.msra.mxu0 0.0
        %3214 = vmatprep.subr.mxu0 0.0
        %3215 = vmatpush1.msra.mxu0 0.0
        %3216 = vmatprep.subr.mxu0 0.0
        %3217 = vmatpush1.msra.mxu0 0.0
        %3218 = vmatprep.subr.mxu0 0.0
        %3219 = vmatpush1.msra.mxu0 0.0
        %3220 = vmatprep.subr.mxu0 0.0
        %3221 = vmatpush1.msra.mxu0 0.0
        %3222 = vmatprep.mubr.f32.mxu0 0.0
        %3223 = vmatmul.mubr.f32.gmra.mrb[0].mxu0 %v3132
        %v3224 = vpop.f32.mrb[0].mxu0
        %v3225 = vadd.f32 0.0, %v3224
        %v3226 = vpop.f32.mrb[0].mxu0
        %3227 = vmatprep.mubr.f32.mxu0 0.0
        %3228 = vmatmul.mubr.f32.gmra.mrb[0].mxu0 %v3134
        %v3229 = vpop.f32.mrb[0].mxu0
        %v3230 = vadd.f32 0.0, %v3229
        %v3231 = vpop.f32.mrb[0].mxu0
        %3232 = vmatprep.mubr.f32.mxu0 0.0
        %3233 = vmatmul.mubr.f32.gmra.mrb[0].mxu0 %v3136
        %v3234 = vpop.f32.mrb[0].mxu0
        %v3235 = vadd.f32 0.0, %v3234
        %v3236 = vpop.f32.mrb[0].mxu0
        %3237 = vmatprep.mubr.f32.mxu0 0.0
        %3238 = vmatmul.mubr.f32.gmra.mrb[0].mxu0 %v3138
        %v3239 = vpop.f32.mrb[0].mxu0
        %v3240 = vadd.f32 0.0, %v3239
        %v3241 = vpop.f32.mrb[0].mxu0
        %3242 = vmatprep.mubr.f32.mxu0 0.0
        %3243 = vmatmul.mubr.f32.gmra.mrb[0].mxu0 %v3140
        %v3244 = vpop.f32.mrb[0].mxu0
        %v3245 = vadd.f32 0.0, %v3244
        %v3246 = vpop.f32.mrb[0].mxu0
        %3247 = vmatprep.mubr.f32.mxu0 0.0
        %3248 = vmatmul.mubr.f32.gmra.mrb[0].mxu0 %v3142
        %v3249 = vpop.f32.mrb[0].mxu0
        %v3250 = vadd.f32 0.0, %v3249
        %v3251 = vpop.f32.mrb[0].mxu0
        %3252 = vmatprep.mubr.f32.mxu0 0.0
        %3253 = vmatmul.mubr.f32.gmra.mrb[0].mxu0 %v3144
        %v3254 = vpop.f32.mrb[0].mxu0
        %v3255 = vadd.f32 0.0, %v3254
        %v3256 = vpop.f32.mrb[0].mxu0
        %3257 = vmatprep.mubr.f32.mxu0 0.0
        %3258 = vmatmul.mubr.f32.gmra.mrb[0].mxu0 %v3146
        %v3259 = vpop.f32.mrb[0].mxu0
        %v3260 = vadd.f32 0.0, %v3259
        %v3261 = vpop.f32.mrb[0].mxu0
        %3262 = vmatprep.mubr.f32.mxu0 0.0
        %3263 = vmatmul.mubr.f32.gmra.mrb[0].mxu0 %v3148
        %v3264 = vpop.f32.mrb[0].mxu0
        %v3265 = vadd.f32 0.0, %v3264
        %v3266 = vpop.f32.mrb[0].mxu0
        %3267 = vmatprep.mubr.f32.mxu0 0.0
        %3268 = vmatmul.mubr.f32.gmra.mrb[0].mxu0 %v3150
        %v3269 = vpop.f32.mrb[0].mxu0
        %v3270 = vadd.f32 0.0, %v3269
        %v3271 = vpop.f32.mrb[0].mxu0
        %3272 = vmatprep.mubr.f32.mxu0 0.0
        %3273 = vmatmul.mubr.f32.gmra.mrb[0].mxu0 %v3152
        %v3274 = vpop.f32.mrb[0].mxu0
        %v3275 = vadd.f32 0.0, %v3274
        %v3276 = vpop.f32.mrb[0].mxu0
        %3277 = vmatprep.mubr.f32.mxu0 0.0
        %3278 = vmatmul.mubr.f32.gmra.mrb[0].mxu0 %v3154
        %v3279 = vpop.f32.mrb[0].mxu0
        %v3280 = vadd.f32 0.0, %v3279
        %v3281 = vpop.f32.mrb[0].mxu0
        %3282 = vmatprep.mubr.f32.mxu0 0.0
        %3283 = vmatmul.mubr.f32.gmra.mrb[0].mxu0 %v3156
        %v3284 = vpop.f32.mrb[0].mxu0
        %v3285 = vadd.f32 0.0, %v3284
        %v3286 = vpop.f32.mrb[0].mxu0
        %3287 = vdwg.mxu0
        %v3288 = vadd.f32 %v3110, %v3225
        %v3289 = vadd.f32 %v3111, %v3230
        %v3290 = vadd.f32 %v3112, %v3235
        %v3291 = vadd.f32 %v3113, %v3240
        %v3292 = vadd.f32 %v3114, %v3245
        %v3293 = vadd.f32 %v3115, %v3250
        %v3294 = vadd.f32 %v3116, %v3255
        %v3295 = vadd.f32 %v3117, %v3260
        %v3296 = vadd.f32 %v3118, %v3265
        %v3297 = vadd.f32 %v3119, %v3270
        %v3298 = vadd.f32 %v3120, %v3275
        %v3299 = vadd.f32 %v3121, %v3280
        %v3300 = vadd.f32 %v3122, %v3285
        %s3301 = scalar_lea.vmem [#allocation2], 576
        %v3302 = vld [vmem:[%s3301] sm:$0xff]
        %v3303 = vld [vmem:[%s3301 + $0x8] sm:$0xff]
        %v3304 = vld [vmem:[%s3301 + $0x10] sm:$0xff]
        %v3305 = vld [vmem:[%s3301 + $0x18] sm:$0xff]
        %v3306 = vld [vmem:[%s3301 + $0x20] sm:$0xff]
        %v3307 = vld [vmem:[%s3301 + $0x28] sm:$0xff]
        %v3308 = vld [vmem:[%s3301 + $0x30] sm:$0xff]
        %v3309 = vld [vmem:[%s3301 + $0x38] sm:$0xff]
        %v3311 = vrot.slane %v2519, 2
        %v3312 = vsel %vm1405, %v2760, %v3311
        %v3313 = vsel %vm1069, %v3312, 0
        %3315 = vmatprep.subr.mxu0 0.0
        %3316 = vmatpush1.msra.mxu0 %v3302
        %3317 = vmatprep.subr.mxu0 0.0
        %3318 = vmatpush1.msra.mxu0 %v3303
        %3319 = vmatprep.subr.mxu0 0.0
        %3320 = vmatpush1.msra.mxu0 %v3304
        %3321 = vmatprep.subr.mxu0 0.0
        %3322 = vmatpush1.msra.mxu0 %v3305
        %3323 = vmatprep.subr.mxu0 0.0
        %3324 = vmatpush1.msra.mxu0 %v3306
        %3325 = vmatprep.subr.mxu0 0.0
        %3326 = vmatpush1.msra.mxu0 %v3307
        %3327 = vmatprep.subr.mxu0 0.0
        %3328 = vmatpush1.msra.mxu0 %v3308
        %3329 = vmatprep.subr.mxu0 0.0
        %3330 = vmatpush1.msra.mxu0 %v3309
        %3331 = vmatprep.subr.mxu0 0.0
        %3332 = vmatpush1.msra.mxu0 0.0
        %3333 = vmatprep.subr.mxu0 0.0
        %3334 = vmatpush1.msra.mxu0 0.0
        %3335 = vmatprep.subr.mxu0 0.0
        %3336 = vmatpush1.msra.mxu0 0.0
        %3337 = vmatprep.subr.mxu0 0.0
        %3338 = vmatpush1.msra.mxu0 0.0
        %3339 = vmatprep.subr.mxu0 0.0
        %3340 = vmatpush1.msra.mxu0 0.0
        %3341 = vmatprep.subr.mxu0 0.0
        %3342 = vmatpush1.msra.mxu0 0.0
        %3343 = vmatprep.subr.mxu0 0.0
        %3344 = vmatpush1.msra.mxu0 0.0
        %3345 = vmatprep.subr.mxu0 0.0
        %3346 = vmatpush1.msra.mxu0 0.0
        %3347 = vmatprep.subr.mxu0 0.0
        %3348 = vmatpush1.msra.mxu0 0.0
        %3349 = vmatprep.subr.mxu0 0.0
        %3350 = vmatpush1.msra.mxu0 0.0
        %3351 = vmatprep.subr.mxu0 0.0
        %3352 = vmatpush1.msra.mxu0 0.0
        %3353 = vmatprep.subr.mxu0 0.0
        %3354 = vmatpush1.msra.mxu0 0.0
        %3355 = vmatprep.subr.mxu0 0.0
        %3356 = vmatpush1.msra.mxu0 0.0
        %3357 = vmatprep.subr.mxu0 0.0
        %3358 = vmatpush1.msra.mxu0 0.0
        %3359 = vmatprep.subr.mxu0 0.0
        %3360 = vmatpush1.msra.mxu0 0.0
        %3361 = vmatprep.subr.mxu0 0.0
        %3362 = vmatpush1.msra.mxu0 0.0
        %3363 = vmatprep.subr.mxu0 0.0
        %3364 = vmatpush1.msra.mxu0 0.0
        %3365 = vmatprep.subr.mxu0 0.0
        %3366 = vmatpush1.msra.mxu0 0.0
        %3367 = vmatprep.subr.mxu0 0.0
        %3368 = vmatpush1.msra.mxu0 0.0
        %3369 = vmatprep.subr.mxu0 0.0
        %3370 = vmatpush1.msra.mxu0 0.0
        %3371 = vmatprep.subr.mxu0 0.0
        %3372 = vmatpush1.msra.mxu0 0.0
        %3373 = vmatprep.subr.mxu0 0.0
        %3374 = vmatpush1.msra.mxu0 0.0
        %3375 = vmatprep.subr.mxu0 0.0
        %3376 = vmatpush1.msra.mxu0 0.0
        %3377 = vmatprep.subr.mxu0 0.0
        %3378 = vmatpush1.msra.mxu0 0.0
        %3379 = vmatprep.mubr.f32.mxu0 0.0
        %3380 = vmatmul.mubr.f32.gmra.mrb[0].mxu0 %v2764
        %v3381 = vpop.f32.mrb[0].mxu0
        %v3382 = vadd.f32 0.0, %v3381
        %v3383 = vpop.f32.mrb[0].mxu0
        %3384 = vmatprep.mubr.f32.mxu0 0.0
        %3385 = vmatmul.mubr.f32.gmra.mrb[0].mxu0 %v2766
        %v3386 = vpop.f32.mrb[0].mxu0
        %v3387 = vadd.f32 0.0, %v3386
        %v3388 = vpop.f32.mrb[0].mxu0
        %3389 = vmatprep.mubr.f32.mxu0 0.0
        %3390 = vmatmul.mubr.f32.gmra.mrb[0].mxu0 %v2768
        %v3391 = vpop.f32.mrb[0].mxu0
        %v3392 = vadd.f32 0.0, %v3391
        %v3393 = vpop.f32.mrb[0].mxu0
        %3394 = vmatprep.mubr.f32.mxu0 0.0
        %3395 = vmatmul.mubr.f32.gmra.mrb[0].mxu0 %v2770
        %v3396 = vpop.f32.mrb[0].mxu0
        %v3397 = vadd.f32 0.0, %v3396
        %v3398 = vpop.f32.mrb[0].mxu0
        %3399 = vmatprep.mubr.f32.mxu0 0.0
        %3400 = vmatmul.mubr.f32.gmra.mrb[0].mxu0 %v2772
        %v3401 = vpop.f32.mrb[0].mxu0
        %v3402 = vadd.f32 0.0, %v3401
        %v3403 = vpop.f32.mrb[0].mxu0
        %3404 = vmatprep.mubr.f32.mxu0 0.0
        %3405 = vmatmul.mubr.f32.gmra.mrb[0].mxu0 %v2774
        %v3406 = vpop.f32.mrb[0].mxu0
        %v3407 = vadd.f32 0.0, %v3406
        %v3408 = vpop.f32.mrb[0].mxu0
        %3409 = vmatprep.mubr.f32.mxu0 0.0
        %3410 = vmatmul.mubr.f32.gmra.mrb[0].mxu0 %v2776
        %v3411 = vpop.f32.mrb[0].mxu0
        %v3412 = vadd.f32 0.0, %v3411
        %v3413 = vpop.f32.mrb[0].mxu0
        %3414 = vmatprep.mubr.f32.mxu0 0.0
        %3415 = vmatmul.mubr.f32.gmra.mrb[0].mxu0 %v2778
        %v3416 = vpop.f32.mrb[0].mxu0
        %v3417 = vadd.f32 0.0, %v3416
        %v3418 = vpop.f32.mrb[0].mxu0
        %3419 = vmatprep.mubr.f32.mxu0 0.0
        %3420 = vmatmul.mubr.f32.gmra.mrb[0].mxu0 %v2780
        %v3421 = vpop.f32.mrb[0].mxu0
        %v3422 = vadd.f32 0.0, %v3421
        %v3423 = vpop.f32.mrb[0].mxu0
        %3424 = vmatprep.mubr.f32.mxu0 0.0
        %3425 = vmatmul.mubr.f32.gmra.mrb[0].mxu0 %v2782
        %v3426 = vpop.f32.mrb[0].mxu0
        %v3427 = vadd.f32 0.0, %v3426
        %v3428 = vpop.f32.mrb[0].mxu0
        %3429 = vmatprep.mubr.f32.mxu0 0.0
        %3430 = vmatmul.mubr.f32.gmra.mrb[0].mxu0 %v2784
        %v3431 = vpop.f32.mrb[0].mxu0
        %v3432 = vadd.f32 0.0, %v3431
        %v3433 = vpop.f32.mrb[0].mxu0
        %3434 = vmatprep.mubr.f32.mxu0 0.0
        %3435 = vmatmul.mubr.f32.gmra.mrb[0].mxu0 %v2786
        %v3436 = vpop.f32.mrb[0].mxu0
        %v3437 = vadd.f32 0.0, %v3436
        %v3438 = vpop.f32.mrb[0].mxu0
        %3439 = vmatprep.mubr.f32.mxu0 0.0
        %3440 = vmatmul.mubr.f32.gmra.mrb[0].mxu0 %v3313
        %v3441 = vpop.f32.mrb[0].mxu0
        %v3442 = vadd.f32 0.0, %v3441
        %v3443 = vpop.f32.mrb[0].mxu0
        %3444 = vdwg.mxu0
        %v3445 = vadd.f32 %v3288, %v3382
        %v3446 = vadd.f32 %v3289, %v3387
        %v3447 = vadd.f32 %v3290, %v3392
        %v3448 = vadd.f32 %v3291, %v3397
        %v3449 = vadd.f32 %v3292, %v3402
        %v3450 = vadd.f32 %v3293, %v3407
        %v3451 = vadd.f32 %v3294, %v3412
        %v3452 = vadd.f32 %v3295, %v3417
        %v3453 = vadd.f32 %v3296, %v3422
        %v3454 = vadd.f32 %v3297, %v3427
        %v3455 = vadd.f32 %v3298, %v3432
        %v3456 = vadd.f32 %v3299, %v3437
        %v3457 = vadd.f32 %v3300, %v3442
        %s3458 = scalar_lea.vmem %s6, 1
        %v3459 = vld [vmem:[%s3458] sm:$0x1]
        %v3461 = vlaneseq
        %v3462 = vshrl.u32 %v3461, 7
        %v3463 = vsub.s32 0, %v3462
        %v3464 = vrot.slane %v3459, %v3463
        %v3466 = vadd.f32 %v3445, %v3464
        %v3467 = vadd.f32 %v3446, %v3464
        %v3468 = vadd.f32 %v3447, %v3464
        %v3469 = vadd.f32 %v3448, %v3464
        %v3470 = vadd.f32 %v3449, %v3464
        %v3471 = vadd.f32 %v3450, %v3464
        %v3472 = vadd.f32 %v3451, %v3464
        %v3473 = vadd.f32 %v3452, %v3464
        %v3474 = vadd.f32 %v3453, %v3464
        %v3475 = vadd.f32 %v3454, %v3464
        %v3476 = vadd.f32 %v3455, %v3464
        %v3477 = vadd.f32 %v3456, %v3464
        %v3478 = vadd.f32 %v3457, %v3464
        %v3479 = vtanh.pop %v3466
        %v3480 = vtanh.pop %v3467
        %v3481 = vtanh.pop %v3468
        %v3482 = vtanh.pop %v3469
        %v3483 = vtanh.pop %v3470
        %v3484 = vtanh.pop %v3471
        %v3485 = vtanh.pop %v3472
        %v3486 = vtanh.pop %v3473
        %v3487 = vtanh.pop %v3474
        %v3488 = vtanh.pop %v3475
        %v3489 = vtanh.pop %v3476
        %v3490 = vtanh.pop %v3477
        %v3491 = vtanh.pop %v3478
        %v3492 = vxor.u32 %v3466, 2147483648
        %v3493 = vxor.u32 %v3467, 2147483648
        %v3494 = vxor.u32 %v3468, 2147483648
        %v3495 = vxor.u32 %v3469, 2147483648
        %v3496 = vxor.u32 %v3470, 2147483648
        %v3497 = vxor.u32 %v3471, 2147483648
        %v3498 = vxor.u32 %v3472, 2147483648
        %v3499 = vxor.u32 %v3473, 2147483648
        %v3500 = vxor.u32 %v3474, 2147483648
        %v3501 = vxor.u32 %v3475, 2147483648
        %v3502 = vxor.u32 %v3476, 2147483648
        %v3503 = vxor.u32 %v3477, 2147483648
        %v3504 = vxor.u32 %v3478, 2147483648
        %v3505 = vmul.f32 %v3492, 1.442695
        %v3506 = vpow.pop %v3505
        %v3507 = vmul.f32 %v3493, 1.442695
        %v3508 = vpow.pop %v3507
        %v3509 = vmul.f32 %v3494, 1.442695
        %v3510 = vpow.pop %v3509
        %v3511 = vmul.f32 %v3495, 1.442695
        %v3512 = vpow.pop %v3511
        %v3513 = vmul.f32 %v3496, 1.442695
        %v3514 = vpow.pop %v3513
        %v3515 = vmul.f32 %v3497, 1.442695
        %v3516 = vpow.pop %v3515
        %v3517 = vmul.f32 %v3498, 1.442695
        %v3518 = vpow.pop %v3517
        %v3519 = vmul.f32 %v3499, 1.442695
        %v3520 = vpow.pop %v3519
        %v3521 = vmul.f32 %v3500, 1.442695
        %v3522 = vpow.pop %v3521
        %v3523 = vmul.f32 %v3501, 1.442695
        %v3524 = vpow.pop %v3523
        %v3525 = vmul.f32 %v3502, 1.442695
        %v3526 = vpow.pop %v3525
        %v3527 = vmul.f32 %v3503, 1.442695
        %v3528 = vpow.pop %v3527
        %v3529 = vmul.f32 %v3504, 1.442695
        %v3530 = vpow.pop %v3529
        %v3531 = vadd.f32 %v3506, 1.0
        %v3532 = vadd.f32 %v3508, 1.0
        %v3533 = vadd.f32 %v3510, 1.0
        %v3534 = vadd.f32 %v3512, 1.0
        %v3535 = vadd.f32 %v3514, 1.0
        %v3536 = vadd.f32 %v3516, 1.0
        %v3537 = vadd.f32 %v3518, 1.0
        %v3538 = vadd.f32 %v3520, 1.0
        %v3539 = vadd.f32 %v3522, 1.0
        %v3540 = vadd.f32 %v3524, 1.0
        %v3541 = vadd.f32 %v3526, 1.0
        %v3542 = vadd.f32 %v3528, 1.0
        %v3543 = vadd.f32 %v3530, 1.0
        %v3544 = vrcp.pop %v3531
        %v3545 = vmul.f32 1.0, %v3544
        %v3546 = vrcp.pop %v3532
        %v3547 = vmul.f32 1.0, %v3546
        %v3548 = vrcp.pop %v3533
        %v3549 = vmul.f32 1.0, %v3548
        %v3550 = vrcp.pop %v3534
        %v3551 = vmul.f32 1.0, %v3550
        %v3552 = vrcp.pop %v3535
        %v3553 = vmul.f32 1.0, %v3552
        %v3554 = vrcp.pop %v3536
        %v3555 = vmul.f32 1.0, %v3554
        %v3556 = vrcp.pop %v3537
        %v3557 = vmul.f32 1.0, %v3556
        %v3558 = vrcp.pop %v3538
        %v3559 = vmul.f32 1.0, %v3558
        %v3560 = vrcp.pop %v3539
        %v3561 = vmul.f32 1.0, %v3560
        %v3562 = vrcp.pop %v3540
        %v3563 = vmul.f32 1.0, %v3562
        %v3564 = vrcp.pop %v3541
        %v3565 = vmul.f32 1.0, %v3564
        %v3566 = vrcp.pop %v3542
        %v3567 = vmul.f32 1.0, %v3566
        %v3568 = vrcp.pop %v3543
        %v3569 = vmul.f32 1.0, %v3568
        %3583 = vrot.lane.b32.xlu0 %v3545, 64
        %v3584 = vpop.permute.xlu0 %3583
        %3585 = vrot.lane.b32.xlu0 %v3547, 64
        %v3586 = vpop.permute.xlu0 %3585
        %3587 = vrot.lane.b32.xlu0 %v3549, 64
        %v3588 = vpop.permute.xlu0 %3587
        %3589 = vrot.lane.b32.xlu0 %v3551, 64
        %v3590 = vpop.permute.xlu0 %3589
        %3591 = vrot.lane.b32.xlu0 %v3553, 64
        %v3592 = vpop.permute.xlu0 %3591
        %3593 = vrot.lane.b32.xlu0 %v3555, 64
        %v3594 = vpop.permute.xlu0 %3593
        %3595 = vrot.lane.b32.xlu0 %v3557, 64
        %v3596 = vpop.permute.xlu0 %3595
        %3597 = vrot.lane.b32.xlu0 %v3559, 64
        %v3598 = vpop.permute.xlu0 %3597
        %3599 = vrot.lane.b32.xlu0 %v3561, 64
        %v3600 = vpop.permute.xlu0 %3599
        %3601 = vrot.lane.b32.xlu0 %v3563, 64
        %v3602 = vpop.permute.xlu0 %3601
        %3603 = vrot.lane.b32.xlu0 %v3565, 64
        %v3604 = vpop.permute.xlu0 %3603
        %3605 = vrot.lane.b32.xlu0 %v3567, 64
        %v3606 = vpop.permute.xlu0 %3605
        %3607 = vrot.lane.b32.xlu0 %v3569, 64
        %v3608 = vpop.permute.xlu0 %3607
        %v3622 = vmul.f32 %v3479, %v3584
        %v3623 = vmul.f32 %v3480, %v3586
        %v3624 = vmul.f32 %v3481, %v3588
        %v3625 = vmul.f32 %v3482, %v3590
        %v3626 = vmul.f32 %v3483, %v3592
        %v3627 = vmul.f32 %v3484, %v3594
        %v3628 = vmul.f32 %v3485, %v3596
        %v3629 = vmul.f32 %v3486, %v3598
        %v3630 = vmul.f32 %v3487, %v3600
        %v3631 = vmul.f32 %v3488, %v3602
        %v3632 = vmul.f32 %v3489, %v3604
        %v3633 = vmul.f32 %v3490, %v3606
        %v3634 = vmul.f32 %v3491, %v3608
        %s3635 = scalar_lea.vmem %s7, 64
        %v3636 = vld [vmem:[%s3635] sm:$0xff]
        %v3637 = vld [vmem:[%s3635 + $0x8] sm:$0xff]
        %v3638 = vld [vmem:[%s3635 + $0x10] sm:$0xff]
        %v3639 = vld [vmem:[%s3635 + $0x18] sm:$0xff]
        %v3640 = vld [vmem:[%s3635 + $0x20] sm:$0xff]
        %v3641 = vld [vmem:[%s3635 + $0x28] sm:$0xff]
        %v3642 = vld [vmem:[%s3635 + $0x30] sm:$0xff]
        %v3643 = vld [vmem:[%s3635 + $0x38] sm:$0xff]
        %s3644 = scalar_lea.vmem %s8, 1
        %v3645 = vld [vmem:[%s3644] sm:$0x1]
        %v3647 = vlaneseq
        %v3648 = vshrl.u32 %v3647, 7
        %v3649 = vsub.s32 0, %v3648
        %v3650 = vrot.slane %v3645, %v3649
        %v3653 = vsel %vm1069, %v3622, 0
        %v3656 = vsel %vm1069, %v3623, 0
        %v3659 = vsel %vm1069, %v3624, 0
        %v3662 = vsel %vm1069, %v3625, 0
        %v3665 = vsel %vm1069, %v3626, 0
        %v3668 = vsel %vm1069, %v3627, 0
        %v3671 = vsel %vm1069, %v3628, 0
        %v3674 = vsel %vm1069, %v3629, 0
        %v3677 = vsel %vm1069, %v3630, 0
        %v3680 = vsel %vm1069, %v3631, 0
        %v3683 = vsel %vm1069, %v3632, 0
        %v3686 = vsel %vm1069, %v3633, 0
        %v3689 = vsel %vm1069, %v3634, 0
        %3691 = vmatprep.subr.mxu0 0.0
        %3692 = vmatpush1.msra.mxu0 %v3636
        %3693 = vmatprep.subr.mxu0 0.0
        %3694 = vmatpush1.msra.mxu0 %v3637
        %3695 = vmatprep.subr.mxu0 0.0
        %3696 = vmatpush1.msra.mxu0 %v3638
        %3697 = vmatprep.subr.mxu0 0.0
        %3698 = vmatpush1.msra.mxu0 %v3639
        %3699 = vmatprep.subr.mxu0 0.0
        %3700 = vmatpush1.msra.mxu0 %v3640
        %3701 = vmatprep.subr.mxu0 0.0
        %3702 = vmatpush1.msra.mxu0 %v3641
        %3703 = vmatprep.subr.mxu0 0.0
        %3704 = vmatpush1.msra.mxu0 %v3642
        %3705 = vmatprep.subr.mxu0 0.0
        %3706 = vmatpush1.msra.mxu0 %v3643
        %3707 = vmatprep.subr.mxu0 0.0
        %3708 = vmatpush1.msra.mxu0 0.0
        %3709 = vmatprep.subr.mxu0 0.0
        %3710 = vmatpush1.msra.mxu0 0.0
        %3711 = vmatprep.subr.mxu0 0.0
        %3712 = vmatpush1.msra.mxu0 0.0
        %3713 = vmatprep.subr.mxu0 0.0
        %3714 = vmatpush1.msra.mxu0 0.0
        %3715 = vmatprep.subr.mxu0 0.0
        %3716 = vmatpush1.msra.mxu0 0.0
        %3717 = vmatprep.subr.mxu0 0.0
        %3718 = vmatpush1.msra.mxu0 0.0
        %3719 = vmatprep.subr.mxu0 0.0
        %3720 = vmatpush1.msra.mxu0 0.0
        %3721 = vmatprep.subr.mxu0 0.0
        %3722 = vmatpush1.msra.mxu0 0.0
        %3723 = vmatprep.subr.mxu0 0.0
        %3724 = vmatpush1.msra.mxu0 0.0
        %3725 = vmatprep.subr.mxu0 0.0
        %3726 = vmatpush1.msra.mxu0 0.0
        %3727 = vmatprep.subr.mxu0 0.0
        %3728 = vmatpush1.msra.mxu0 0.0
        %3729 = vmatprep.subr.mxu0 0.0
        %3730 = vmatpush1.msra.mxu0 0.0
        %3731 = vmatprep.subr.mxu0 0.0
        %3732 = vmatpush1.msra.mxu0 0.0
        %3733 = vmatprep.subr.mxu0 0.0
        %3734 = vmatpush1.msra.mxu0 0.0
        %3735 = vmatprep.subr.mxu0 0.0
        %3736 = vmatpush1.msra.mxu0 0.0
        %3737 = vmatprep.subr.mxu0 0.0
        %3738 = vmatpush1.msra.mxu0 0.0
        %3739 = vmatprep.subr.mxu0 0.0
        %3740 = vmatpush1.msra.mxu0 0.0
        %3741 = vmatprep.subr.mxu0 0.0
        %3742 = vmatpush1.msra.mxu0 0.0
        %3743 = vmatprep.subr.mxu0 0.0
        %3744 = vmatpush1.msra.mxu0 0.0
        %3745 = vmatprep.subr.mxu0 0.0
        %3746 = vmatpush1.msra.mxu0 0.0
        %3747 = vmatprep.subr.mxu0 0.0
        %3748 = vmatpush1.msra.mxu0 0.0
        %3749 = vmatprep.subr.mxu0 0.0
        %3750 = vmatpush1.msra.mxu0 0.0
        %3751 = vmatprep.subr.mxu0 0.0
        %3752 = vmatpush1.msra.mxu0 0.0
        %3753 = vmatprep.subr.mxu0 0.0
        %3754 = vmatpush1.msra.mxu0 0.0
        %3755 = vmatprep.mubr.f32.mxu0 0.0
        %3756 = vmatmul.mubr.f32.gmra.mrb[0].mxu0 %v3653
        %v3757 = vpop.f32.mrb[0].mxu0
        %v3758 = vadd.f32 %v3650, %v3757
        %v3759 = vpop.f32.mrb[0].mxu0
        %3760 = vmatprep.mubr.f32.mxu0 0.0
        %3761 = vmatmul.mubr.f32.gmra.mrb[0].mxu0 %v3656
        %v3762 = vpop.f32.mrb[0].mxu0
        %v3763 = vadd.f32 %v3650, %v3762
        %v3764 = vpop.f32.mrb[0].mxu0
        %3765 = vmatprep.mubr.f32.mxu0 0.0
        %3766 = vmatmul.mubr.f32.gmra.mrb[0].mxu0 %v3659
        %v3767 = vpop.f32.mrb[0].mxu0
        %v3768 = vadd.f32 %v3650, %v3767
        %v3769 = vpop.f32.mrb[0].mxu0
        %3770 = vmatprep.mubr.f32.mxu0 0.0
        %3771 = vmatmul.mubr.f32.gmra.mrb[0].mxu0 %v3662
        %v3772 = vpop.f32.mrb[0].mxu0
        %v3773 = vadd.f32 %v3650, %v3772
        %v3774 = vpop.f32.mrb[0].mxu0
        %3775 = vmatprep.mubr.f32.mxu0 0.0
        %3776 = vmatmul.mubr.f32.gmra.mrb[0].mxu0 %v3665
        %v3777 = vpop.f32.mrb[0].mxu0
        %v3778 = vadd.f32 %v3650, %v3777
        %v3779 = vpop.f32.mrb[0].mxu0
        %3780 = vmatprep.mubr.f32.mxu0 0.0
        %3781 = vmatmul.mubr.f32.gmra.mrb[0].mxu0 %v3668
        %v3782 = vpop.f32.mrb[0].mxu0
        %v3783 = vadd.f32 %v3650, %v3782
        %v3784 = vpop.f32.mrb[0].mxu0
        %3785 = vmatprep.mubr.f32.mxu0 0.0
        %3786 = vmatmul.mubr.f32.gmra.mrb[0].mxu0 %v3671
        %v3787 = vpop.f32.mrb[0].mxu0
        %v3788 = vadd.f32 %v3650, %v3787
        %v3789 = vpop.f32.mrb[0].mxu0
        %3790 = vmatprep.mubr.f32.mxu0 0.0
        %3791 = vmatmul.mubr.f32.gmra.mrb[0].mxu0 %v3674
        %v3792 = vpop.f32.mrb[0].mxu0
        %v3793 = vadd.f32 %v3650, %v3792
        %v3794 = vpop.f32.mrb[0].mxu0
        %3795 = vmatprep.mubr.f32.mxu0 0.0
        %3796 = vmatmul.mubr.f32.gmra.mrb[0].mxu0 %v3677
        %v3797 = vpop.f32.mrb[0].mxu0
        %v3798 = vadd.f32 %v3650, %v3797
        %v3799 = vpop.f32.mrb[0].mxu0
        %3800 = vmatprep.mubr.f32.mxu0 0.0
        %3801 = vmatmul.mubr.f32.gmra.mrb[0].mxu0 %v3680
        %v3802 = vpop.f32.mrb[0].mxu0
        %v3803 = vadd.f32 %v3650, %v3802
        %v3804 = vpop.f32.mrb[0].mxu0
        %3805 = vmatprep.mubr.f32.mxu0 0.0
        %3806 = vmatmul.mubr.f32.gmra.mrb[0].mxu0 %v3683
        %v3807 = vpop.f32.mrb[0].mxu0
        %v3808 = vadd.f32 %v3650, %v3807
        %v3809 = vpop.f32.mrb[0].mxu0
        %3810 = vmatprep.mubr.f32.mxu0 0.0
        %3811 = vmatmul.mubr.f32.gmra.mrb[0].mxu0 %v3686
        %v3812 = vpop.f32.mrb[0].mxu0
        %v3813 = vadd.f32 %v3650, %v3812
        %v3814 = vpop.f32.mrb[0].mxu0
        %3815 = vmatprep.mubr.f32.mxu0 0.0
        %3816 = vmatmul.mubr.f32.gmra.mrb[0].mxu0 %v3689
        %v3817 = vpop.f32.mrb[0].mxu0
        %v3818 = vadd.f32 %v3650, %v3817
        %v3819 = vpop.f32.mrb[0].mxu0
        %3820 = vdwg.mxu0
        %v3828 = vrot.slane %v3773, 4
        %v3829 = vrot.slane %v3778, 4
        %v3830 = vsel %vm1837, %v3828, %v3829
        %v3831 = vrot.slane %v3783, 4
        %v3832 = vsel %vm1837, %v3829, %v3831
        %v3833 = vrot.slane %v3788, 4
        %v3834 = vsel %vm1837, %v3831, %v3833
        %v3835 = vrot.slane %v3793, 4
        %v3836 = vsel %vm1837, %v3833, %v3835
        %v3837 = vrot.slane %v3798, 4
        %v3838 = vsel %vm1837, %v3835, %v3837
        %v3839 = vrot.slane %v3803, 4
        %v3840 = vsel %vm1837, %v3837, %v3839
        %v3849 = vadd.f32 %v2425, %v3828
        %v3850 = vadd.f32 %v2426, %v3830
        %v3851 = vadd.f32 %v2427, %v3832
        %v3852 = vadd.f32 %v2428, %v3834
        %v3853 = vadd.f32 %v2429, %v3836
        %v3854 = vadd.f32 %v2430, %v3838
        %v3855 = vadd.f32 %v2431, %v3840
        %v3856 = vadd.f32 %v2432, %v3839
        %v3863 = vrot.slane %v3758, 2
        %v3864 = vrot.slane %v3763, 2
        %v3865 = vsel %vm1405, %v3863, %v3864
        %v3866 = vrot.slane %v3768, 2
        %v3867 = vsel %vm1405, %v3864, %v3866
        %v3868 = vrot.slane %v3773, 2
        %v3869 = vsel %vm1405, %v3866, %v3868
        %v3870 = vrot.slane %v3778, 2
        %v3871 = vsel %vm1405, %v3868, %v3870
        %v3872 = vrot.slane %v3783, 2
        %v3873 = vsel %vm1405, %v3870, %v3872
        %v3874 = vrot.slane %v3788, 2
        %v3875 = vsel %vm1405, %v3872, %v3874
        %v3876 = vrot.slane %v3793, 2
        %v3877 = vsel %vm1405, %v3874, %v3876
        %v3878 = vrot.slane %v3798, 2
        %v3879 = vsel %vm1405, %v3876, %v3878
        %v3880 = vrot.slane %v3803, 2
        %v3881 = vsel %vm1405, %v3878, %v3880
        %v3882 = vrot.slane %v3808, 2
        %v3883 = vsel %vm1405, %v3880, %v3882
        %v3884 = vrot.slane %v3813, 2
        %v3885 = vsel %vm1405, %v3882, %v3884
        %v3886 = vrot.slane %v3818, 2
        %v3887 = vsel %vm1405, %v3884, %v3886
        %v3902 = vadd.f32 %v2505, %v3863
        %v3903 = vadd.f32 %v2506, %v3865
        %v3904 = vadd.f32 %v2507, %v3867
        %v3905 = vadd.f32 %v2508, %v3869
        %v3906 = vadd.f32 %v2509, %v3871
        %v3907 = vadd.f32 %v2510, %v3873
        %v3908 = vadd.f32 %v2511, %v3875
        %v3909 = vadd.f32 %v2512, %v3877
        %v3910 = vadd.f32 %v2513, %v3879
        %v3911 = vadd.f32 %v2514, %v3881
        %v3912 = vadd.f32 %v2515, %v3883
        %v3913 = vadd.f32 %v2516, %v3885
        %v3914 = vadd.f32 %v2517, %v3887
        %v3915 = vadd.f32 %v2518, %v3886
        %v3916 = vmul.f32 %v3902, %v920
        %v3917 = vmul.f32 %v3903, %v925
        %v3918 = vmul.f32 %v3904, %v930
        %v3919 = vmul.f32 %v3905, %v935
        %v3920 = vmul.f32 %v3906, %v940
        %v3921 = vmul.f32 %v3907, %v945
        %v3922 = vmul.f32 %v3908, %v950
        %v3923 = vmul.f32 %v3909, %v955
        %v3924 = vmul.f32 %v3910, %v960
        %v3925 = vmul.f32 %v3911, %v965
        %v3926 = vmul.f32 %v3912, %v970
        %v3927 = vmul.f32 %v3913, %v975
        %v3928 = vmul.f32 %v3914, %v980
        %v3929 = vmul.f32 %v3915, %v985
        %s3930 = scalar_lea.vmem [#allocation2], 640
        %v3931 = vld [vmem:[%s3930] sm:$0xff]
        %v3932 = vld [vmem:[%s3930 + $0x8] sm:$0xff]
        %v3933 = vld [vmem:[%s3930 + $0x10] sm:$0xff]
        %v3934 = vld [vmem:[%s3930 + $0x18] sm:$0xff]
        %v3935 = vld [vmem:[%s3930 + $0x20] sm:$0xff]
        %v3936 = vld [vmem:[%s3930 + $0x28] sm:$0xff]
        %v3937 = vld [vmem:[%s3930 + $0x30] sm:$0xff]
        %v3938 = vld [vmem:[%s3930 + $0x38] sm:$0xff]
        %s3939 = scalar_lea.vmem [#allocation2], 704
        %v3940 = vld [vmem:[%s3939] sm:$0xff]
        %v3941 = vld [vmem:[%s3939 + $0x8] sm:$0xff]
        %v3942 = vld [vmem:[%s3939 + $0x10] sm:$0xff]
        %v3943 = vld [vmem:[%s3939 + $0x18] sm:$0xff]
        %v3944 = vld [vmem:[%s3939 + $0x20] sm:$0xff]
        %v3945 = vld [vmem:[%s3939 + $0x28] sm:$0xff]
        %v3946 = vld [vmem:[%s3939 + $0x30] sm:$0xff]
        %v3947 = vld [vmem:[%s3939 + $0x38] sm:$0xff]
        %v3960 = vrot.slane %v3917, 2
        %v3961 = vrot.slane %v3918, 2
        %v3962 = vsel %vm1405, %v3960, %v3961
        %v3963 = vrot.slane %v3919, 2
        %v3964 = vsel %vm1405, %v3961, %v3963
        %v3965 = vrot.slane %v3920, 2
        %v3966 = vsel %vm1405, %v3963, %v3965
        %v3967 = vrot.slane %v3921, 2
        %v3968 = vsel %vm1405, %v3965, %v3967
        %v3969 = vrot.slane %v3922, 2
        %v3970 = vsel %vm1405, %v3967, %v3969
        %v3971 = vrot.slane %v3923, 2
        %v3972 = vsel %vm1405, %v3969, %v3971
        %v3973 = vrot.slane %v3924, 2
        %v3974 = vsel %vm1405, %v3971, %v3973
        %v3975 = vrot.slane %v3925, 2
        %v3976 = vsel %vm1405, %v3973, %v3975
        %v3977 = vrot.slane %v3926, 2
        %v3978 = vsel %vm1405, %v3975, %v3977
        %v3979 = vrot.slane %v3927, 2
        %v3980 = vsel %vm1405, %v3977, %v3979
        %v3981 = vrot.slane %v3928, 2
        %v3982 = vsel %vm1405, %v3979, %v3981
        %v3983 = vsel %vm1069, %v3962, 0
        %v3985 = vsel %vm1069, %v3964, 0
        %v3987 = vsel %vm1069, %v3966, 0
        %v3989 = vsel %vm1069, %v3968, 0
        %v3991 = vsel %vm1069, %v3970, 0
        %v3993 = vsel %vm1069, %v3972, 0
        %v3995 = vsel %vm1069, %v3974, 0
        %v3997 = vsel %vm1069, %v3976, 0
        %v3999 = vsel %vm1069, %v3978, 0
        %v4001 = vsel %vm1069, %v3980, 0
        %v4003 = vsel %vm1069, %v3982, 0
        %4005 = vmatprep.subr.mxu0 0.0
        %4006 = vmatpush1.msra.mxu0 %v3940
        %4007 = vmatprep.subr.mxu0 0.0
        %4008 = vmatpush1.msra.mxu0 %v3941
        %4009 = vmatprep.subr.mxu0 0.0
        %4010 = vmatpush1.msra.mxu0 %v3942
        %4011 = vmatprep.subr.mxu0 0.0
        %4012 = vmatpush1.msra.mxu0 %v3943
        %4013 = vmatprep.subr.mxu0 0.0
        %4014 = vmatpush1.msra.mxu0 %v3944
        %4015 = vmatprep.subr.mxu0 0.0
        %4016 = vmatpush1.msra.mxu0 %v3945
        %4017 = vmatprep.subr.mxu0 0.0
        %4018 = vmatpush1.msra.mxu0 %v3946
        %4019 = vmatprep.subr.mxu0 0.0
        %4020 = vmatpush1.msra.mxu0 %v3947
        %4021 = vmatprep.subr.mxu0 0.0
        %4022 = vmatpush1.msra.mxu0 0.0
        %4023 = vmatprep.subr.mxu0 0.0
        %4024 = vmatpush1.msra.mxu0 0.0
        %4025 = vmatprep.subr.mxu0 0.0
        %4026 = vmatpush1.msra.mxu0 0.0
        %4027 = vmatprep.subr.mxu0 0.0
        %4028 = vmatpush1.msra.mxu0 0.0
        %4029 = vmatprep.subr.mxu0 0.0
        %4030 = vmatpush1.msra.mxu0 0.0
        %4031 = vmatprep.subr.mxu0 0.0
        %4032 = vmatpush1.msra.mxu0 0.0
        %4033 = vmatprep.subr.mxu0 0.0
        %4034 = vmatpush1.msra.mxu0 0.0
        %4035 = vmatprep.subr.mxu0 0.0
        %4036 = vmatpush1.msra.mxu0 0.0
        %4037 = vmatprep.subr.mxu0 0.0
        %4038 = vmatpush1.msra.mxu0 0.0
        %4039 = vmatprep.subr.mxu0 0.0
        %4040 = vmatpush1.msra.mxu0 0.0
        %4041 = vmatprep.subr.mxu0 0.0
        %4042 = vmatpush1.msra.mxu0 0.0
        %4043 = vmatprep.subr.mxu0 0.0
        %4044 = vmatpush1.msra.mxu0 0.0
        %4045 = vmatprep.subr.mxu0 0.0
        %4046 = vmatpush1.msra.mxu0 0.0
        %4047 = vmatprep.subr.mxu0 0.0
        %4048 = vmatpush1.msra.mxu0 0.0
        %4049 = vmatprep.subr.mxu0 0.0
        %4050 = vmatpush1.msra.mxu0 0.0
        %4051 = vmatprep.subr.mxu0 0.0
        %4052 = vmatpush1.msra.mxu0 0.0
        %4053 = vmatprep.subr.mxu0 0.0
        %4054 = vmatpush1.msra.mxu0 0.0
        %4055 = vmatprep.subr.mxu0 0.0
        %4056 = vmatpush1.msra.mxu0 0.0
        %4057 = vmatprep.subr.mxu0 0.0
        %4058 = vmatpush1.msra.mxu0 0.0
        %4059 = vmatprep.subr.mxu0 0.0
        %4060 = vmatpush1.msra.mxu0 0.0
        %4061 = vmatprep.subr.mxu0 0.0
        %4062 = vmatpush1.msra.mxu0 0.0
        %4063 = vmatprep.subr.mxu0 0.0
        %4064 = vmatpush1.msra.mxu0 0.0
        %4065 = vmatprep.subr.mxu0 0.0
        %4066 = vmatpush1.msra.mxu0 0.0
        %4067 = vmatprep.subr.mxu0 0.0
        %4068 = vmatpush1.msra.mxu0 0.0
        %4069 = vmatprep.mubr.f32.mxu0 0.0
        %4070 = vmatmul.mubr.f32.gmra.mrb[0].mxu0 %v3983
        %v4071 = vpop.f32.mrb[0].mxu0
        %v4072 = vadd.f32 0.0, %v4071
        %v4073 = vpop.f32.mrb[0].mxu0
        %4074 = vmatprep.mubr.f32.mxu0 0.0
        %4075 = vmatmul.mubr.f32.gmra.mrb[0].mxu0 %v3985
        %v4076 = vpop.f32.mrb[0].mxu0
        %v4077 = vadd.f32 0.0, %v4076
        %v4078 = vpop.f32.mrb[0].mxu0
        %4079 = vmatprep.mubr.f32.mxu0 0.0
        %4080 = vmatmul.mubr.f32.gmra.mrb[0].mxu0 %v3987
        %v4081 = vpop.f32.mrb[0].mxu0
        %v4082 = vadd.f32 0.0, %v4081
        %v4083 = vpop.f32.mrb[0].mxu0
        %4084 = vmatprep.mubr.f32.mxu0 0.0
        %4085 = vmatmul.mubr.f32.gmra.mrb[0].mxu0 %v3989
        %v4086 = vpop.f32.mrb[0].mxu0
        %v4087 = vadd.f32 0.0, %v4086
        %v4088 = vpop.f32.mrb[0].mxu0
        %4089 = vmatprep.mubr.f32.mxu0 0.0
        %4090 = vmatmul.mubr.f32.gmra.mrb[0].mxu0 %v3991
        %v4091 = vpop.f32.mrb[0].mxu0
        %v4092 = vadd.f32 0.0, %v4091
        %v4093 = vpop.f32.mrb[0].mxu0
        %4094 = vmatprep.mubr.f32.mxu0 0.0
        %4095 = vmatmul.mubr.f32.gmra.mrb[0].mxu0 %v3993
        %v4096 = vpop.f32.mrb[0].mxu0
        %v4097 = vadd.f32 0.0, %v4096
        %v4098 = vpop.f32.mrb[0].mxu0
        %4099 = vmatprep.mubr.f32.mxu0 0.0
        %4100 = vmatmul.mubr.f32.gmra.mrb[0].mxu0 %v3995
        %v4101 = vpop.f32.mrb[0].mxu0
        %v4102 = vadd.f32 0.0, %v4101
        %v4103 = vpop.f32.mrb[0].mxu0
        %4104 = vmatprep.mubr.f32.mxu0 0.0
        %4105 = vmatmul.mubr.f32.gmra.mrb[0].mxu0 %v3997
        %v4106 = vpop.f32.mrb[0].mxu0
        %v4107 = vadd.f32 0.0, %v4106
        %v4108 = vpop.f32.mrb[0].mxu0
        %4109 = vmatprep.mubr.f32.mxu0 0.0
        %4110 = vmatmul.mubr.f32.gmra.mrb[0].mxu0 %v3999
        %v4111 = vpop.f32.mrb[0].mxu0
        %v4112 = vadd.f32 0.0, %v4111
        %v4113 = vpop.f32.mrb[0].mxu0
        %4114 = vmatprep.mubr.f32.mxu0 0.0
        %4115 = vmatmul.mubr.f32.gmra.mrb[0].mxu0 %v4001
        %v4116 = vpop.f32.mrb[0].mxu0
        %v4117 = vadd.f32 0.0, %v4116
        %v4118 = vpop.f32.mrb[0].mxu0
        %4119 = vmatprep.mubr.f32.mxu0 0.0
        %4120 = vmatmul.mubr.f32.gmra.mrb[0].mxu0 %v4003
        %v4121 = vpop.f32.mrb[0].mxu0
        %v4122 = vadd.f32 0.0, %v4121
        %v4123 = vpop.f32.mrb[0].mxu0
        %4124 = vdwg.mxu0
        %v4126 = vrot.slane %v3916, 6
        %v4127 = vrot.slane %v3917, 6
        %v4128 = vsel %vm2447, %v4126, %v4127
        %v4129 = vrot.slane %v3918, 6
        %v4130 = vsel %vm2447, %v4127, %v4129
        %v4131 = vrot.slane %v3919, 6
        %v4132 = vsel %vm2447, %v4129, %v4131
        %v4133 = vrot.slane %v3920, 6
        %v4134 = vsel %vm2447, %v4131, %v4133
        %v4135 = vrot.slane %v3921, 6
        %v4136 = vsel %vm2447, %v4133, %v4135
        %v4137 = vrot.slane %v3922, 6
        %v4138 = vsel %vm2447, %v4135, %v4137
        %v4139 = vrot.slane %v3923, 6
        %v4140 = vsel %vm2447, %v4137, %v4139
        %v4141 = vrot.slane %v3924, 6
        %v4142 = vsel %vm2447, %v4139, %v4141
        %v4143 = vrot.slane %v3925, 6
        %v4144 = vsel %vm2447, %v4141, %v4143
        %v4145 = vrot.slane %v3926, 6
        %v4146 = vsel %vm2447, %v4143, %v4145
        %v4147 = vrot.slane %v3927, 6
        %v4148 = vsel %vm2447, %v4145, %v4147
        %v4149 = vsel %vm1069, %v4128, 0
        %v4151 = vsel %vm1069, %v4130, 0
        %v4153 = vsel %vm1069, %v4132, 0
        %v4155 = vsel %vm1069, %v4134, 0
        %v4157 = vsel %vm1069, %v4136, 0
        %v4159 = vsel %vm1069, %v4138, 0
        %v4161 = vsel %vm1069, %v4140, 0
        %v4163 = vsel %vm1069, %v4142, 0
        %v4165 = vsel %vm1069, %v4144, 0
        %v4167 = vsel %vm1069, %v4146, 0
        %v4169 = vsel %vm1069, %v4148, 0
        %4171 = vmatprep.subr.mxu0 0.0
        %4172 = vmatpush1.msra.mxu0 %v3931
        %4173 = vmatprep.subr.mxu0 0.0
        %4174 = vmatpush1.msra.mxu0 %v3932
        %4175 = vmatprep.subr.mxu0 0.0
        %4176 = vmatpush1.msra.mxu0 %v3933
        %4177 = vmatprep.subr.mxu0 0.0
        %4178 = vmatpush1.msra.mxu0 %v3934
        %4179 = vmatprep.subr.mxu0 0.0
        %4180 = vmatpush1.msra.mxu0 %v3935
        %4181 = vmatprep.subr.mxu0 0.0
        %4182 = vmatpush1.msra.mxu0 %v3936
        %4183 = vmatprep.subr.mxu0 0.0
        %4184 = vmatpush1.msra.mxu0 %v3937
        %4185 = vmatprep.subr.mxu0 0.0
        %4186 = vmatpush1.msra.mxu0 %v3938
        %4187 = vmatprep.subr.mxu0 0.0
        %4188 = vmatpush1.msra.mxu0 0.0
        %4189 = vmatprep.subr.mxu0 0.0
        %4190 = vmatpush1.msra.mxu0 0.0
        %4191 = vmatprep.subr.mxu0 0.0
        %4192 = vmatpush1.msra.mxu0 0.0
        %4193 = vmatprep.subr.mxu0 0.0
        %4194 = vmatpush1.msra.mxu0 0.0
        %4195 = vmatprep.subr.mxu0 0.0
        %4196 = vmatpush1.msra.mxu0 0.0
        %4197 = vmatprep.subr.mxu0 0.0
        %4198 = vmatpush1.msra.mxu0 0.0
        %4199 = vmatprep.subr.mxu0 0.0
        %4200 = vmatpush1.msra.mxu0 0.0
        %4201 = vmatprep.subr.mxu0 0.0
        %4202 = vmatpush1.msra.mxu0 0.0
        %4203 = vmatprep.subr.mxu0 0.0
        %4204 = vmatpush1.msra.mxu0 0.0
        %4205 = vmatprep.subr.mxu0 0.0
        %4206 = vmatpush1.msra.mxu0 0.0
        %4207 = vmatprep.subr.mxu0 0.0
        %4208 = vmatpush1.msra.mxu0 0.0
        %4209 = vmatprep.subr.mxu0 0.0
        %4210 = vmatpush1.msra.mxu0 0.0
        %4211 = vmatprep.subr.mxu0 0.0
        %4212 = vmatpush1.msra.mxu0 0.0
        %4213 = vmatprep.subr.mxu0 0.0
        %4214 = vmatpush1.msra.mxu0 0.0
        %4215 = vmatprep.subr.mxu0 0.0
        %4216 = vmatpush1.msra.mxu0 0.0
        %4217 = vmatprep.subr.mxu0 0.0
        %4218 = vmatpush1.msra.mxu0 0.0
        %4219 = vmatprep.subr.mxu0 0.0
        %4220 = vmatpush1.msra.mxu0 0.0
        %4221 = vmatprep.subr.mxu0 0.0
        %4222 = vmatpush1.msra.mxu0 0.0
        %4223 = vmatprep.subr.mxu0 0.0
        %4224 = vmatpush1.msra.mxu0 0.0
        %4225 = vmatprep.subr.mxu0 0.0
        %4226 = vmatpush1.msra.mxu0 0.0
        %4227 = vmatprep.subr.mxu0 0.0
        %4228 = vmatpush1.msra.mxu0 0.0
        %4229 = vmatprep.subr.mxu0 0.0
        %4230 = vmatpush1.msra.mxu0 0.0
        %4231 = vmatprep.subr.mxu0 0.0
        %4232 = vmatpush1.msra.mxu0 0.0
        %4233 = vmatprep.subr.mxu0 0.0
        %4234 = vmatpush1.msra.mxu0 0.0
        %4235 = vmatprep.mubr.f32.mxu0 0.0
        %4236 = vmatmul.mubr.f32.gmra.mrb[0].mxu0 %v4149
        %v4237 = vpop.f32.mrb[0].mxu0
        %v4238 = vadd.f32 %v4072, %v4237
        %v4239 = vpop.f32.mrb[0].mxu0
        %4240 = vmatprep.mubr.f32.mxu0 0.0
        %4241 = vmatmul.mubr.f32.gmra.mrb[0].mxu0 %v4151
        %v4242 = vpop.f32.mrb[0].mxu0
        %v4243 = vadd.f32 %v4077, %v4242
        %v4244 = vpop.f32.mrb[0].mxu0
        %4245 = vmatprep.mubr.f32.mxu0 0.0
        %4246 = vmatmul.mubr.f32.gmra.mrb[0].mxu0 %v4153
        %v4247 = vpop.f32.mrb[0].mxu0
        %v4248 = vadd.f32 %v4082, %v4247
        %v4249 = vpop.f32.mrb[0].mxu0
        %4250 = vmatprep.mubr.f32.mxu0 0.0
        %4251 = vmatmul.mubr.f32.gmra.mrb[0].mxu0 %v4155
        %v4252 = vpop.f32.mrb[0].mxu0
        %v4253 = vadd.f32 %v4087, %v4252
        %v4254 = vpop.f32.mrb[0].mxu0
        %4255 = vmatprep.mubr.f32.mxu0 0.0
        %4256 = vmatmul.mubr.f32.gmra.mrb[0].mxu0 %v4157
        %v4257 = vpop.f32.mrb[0].mxu0
        %v4258 = vadd.f32 %v4092, %v4257
        %v4259 = vpop.f32.mrb[0].mxu0
        %4260 = vmatprep.mubr.f32.mxu0 0.0
        %4261 = vmatmul.mubr.f32.gmra.mrb[0].mxu0 %v4159
        %v4262 = vpop.f32.mrb[0].mxu0
        %v4263 = vadd.f32 %v4097, %v4262
        %v4264 = vpop.f32.mrb[0].mxu0
        %4265 = vmatprep.mubr.f32.mxu0 0.0
        %4266 = vmatmul.mubr.f32.gmra.mrb[0].mxu0 %v4161
        %v4267 = vpop.f32.mrb[0].mxu0
        %v4268 = vadd.f32 %v4102, %v4267
        %v4269 = vpop.f32.mrb[0].mxu0
        %4270 = vmatprep.mubr.f32.mxu0 0.0
        %4271 = vmatmul.mubr.f32.gmra.mrb[0].mxu0 %v4163
        %v4272 = vpop.f32.mrb[0].mxu0
        %v4273 = vadd.f32 %v4107, %v4272
        %v4274 = vpop.f32.mrb[0].mxu0
        %4275 = vmatprep.mubr.f32.mxu0 0.0
        %4276 = vmatmul.mubr.f32.gmra.mrb[0].mxu0 %v4165
        %v4277 = vpop.f32.mrb[0].mxu0
        %v4278 = vadd.f32 %v4112, %v4277
        %v4279 = vpop.f32.mrb[0].mxu0
        %4280 = vmatprep.mubr.f32.mxu0 0.0
        %4281 = vmatmul.mubr.f32.gmra.mrb[0].mxu0 %v4167
        %v4282 = vpop.f32.mrb[0].mxu0
        %v4283 = vadd.f32 %v4117, %v4282
        %v4284 = vpop.f32.mrb[0].mxu0
        %4285 = vmatprep.mubr.f32.mxu0 0.0
        %4286 = vmatmul.mubr.f32.gmra.mrb[0].mxu0 %v4169
        %v4287 = vpop.f32.mrb[0].mxu0
        %v4288 = vadd.f32 %v4122, %v4287
        %v4289 = vpop.f32.mrb[0].mxu0
        %4290 = vdwg.mxu0
        %s4291 = scalar_lea.vmem [#allocation2], 768
        %v4292 = vld [vmem:[%s4291] sm:$0xff]
        %v4293 = vld [vmem:[%s4291 + $0x8] sm:$0xff]
        %v4294 = vld [vmem:[%s4291 + $0x10] sm:$0xff]
        %v4295 = vld [vmem:[%s4291 + $0x18] sm:$0xff]
        %v4296 = vld [vmem:[%s4291 + $0x20] sm:$0xff]
        %v4297 = vld [vmem:[%s4291 + $0x28] sm:$0xff]
        %v4298 = vld [vmem:[%s4291 + $0x30] sm:$0xff]
        %v4299 = vld [vmem:[%s4291 + $0x38] sm:$0xff]
        %v4300 = vrot.slane %v3928, 6
        %v4301 = vsel %vm2447, %v4147, %v4300
        %v4302 = vsel %vm1069, %v4301, 0
        %4304 = vmatprep.subr.mxu0 0.0
        %4305 = vmatpush1.msra.mxu0 %v4292
        %4306 = vmatprep.subr.mxu0 0.0
        %4307 = vmatpush1.msra.mxu0 %v4293
        %4308 = vmatprep.subr.mxu0 0.0
        %4309 = vmatpush1.msra.mxu0 %v4294
        %4310 = vmatprep.subr.mxu0 0.0
        %4311 = vmatpush1.msra.mxu0 %v4295
        %4312 = vmatprep.subr.mxu0 0.0
        %4313 = vmatpush1.msra.mxu0 %v4296
        %4314 = vmatprep.subr.mxu0 0.0
        %4315 = vmatpush1.msra.mxu0 %v4297
        %4316 = vmatprep.subr.mxu0 0.0
        %4317 = vmatpush1.msra.mxu0 %v4298
        %4318 = vmatprep.subr.mxu0 0.0
        %4319 = vmatpush1.msra.mxu0 %v4299
        %4320 = vmatprep.subr.mxu0 0.0
        %4321 = vmatpush1.msra.mxu0 0.0
        %4322 = vmatprep.subr.mxu0 0.0
        %4323 = vmatpush1.msra.mxu0 0.0
        %4324 = vmatprep.subr.mxu0 0.0
        %4325 = vmatpush1.msra.mxu0 0.0
        %4326 = vmatprep.subr.mxu0 0.0
        %4327 = vmatpush1.msra.mxu0 0.0
        %4328 = vmatprep.subr.mxu0 0.0
        %4329 = vmatpush1.msra.mxu0 0.0
        %4330 = vmatprep.subr.mxu0 0.0
        %4331 = vmatpush1.msra.mxu0 0.0
        %4332 = vmatprep.subr.mxu0 0.0
        %4333 = vmatpush1.msra.mxu0 0.0
        %4334 = vmatprep.subr.mxu0 0.0
        %4335 = vmatpush1.msra.mxu0 0.0
        %4336 = vmatprep.subr.mxu0 0.0
        %4337 = vmatpush1.msra.mxu0 0.0
        %4338 = vmatprep.subr.mxu0 0.0
        %4339 = vmatpush1.msra.mxu0 0.0
        %4340 = vmatprep.subr.mxu0 0.0
        %4341 = vmatpush1.msra.mxu0 0.0
        %4342 = vmatprep.subr.mxu0 0.0
        %4343 = vmatpush1.msra.mxu0 0.0
        %4344 = vmatprep.subr.mxu0 0.0
        %4345 = vmatpush1.msra.mxu0 0.0
        %4346 = vmatprep.subr.mxu0 0.0
        %4347 = vmatpush1.msra.mxu0 0.0
        %4348 = vmatprep.subr.mxu0 0.0
        %4349 = vmatpush1.msra.mxu0 0.0
        %4350 = vmatprep.subr.mxu0 0.0
        %4351 = vmatpush1.msra.mxu0 0.0
        %4352 = vmatprep.subr.mxu0 0.0
        %4353 = vmatpush1.msra.mxu0 0.0
        %4354 = vmatprep.subr.mxu0 0.0
        %4355 = vmatpush1.msra.mxu0 0.0
        %4356 = vmatprep.subr.mxu0 0.0
        %4357 = vmatpush1.msra.mxu0 0.0
        %4358 = vmatprep.subr.mxu0 0.0
        %4359 = vmatpush1.msra.mxu0 0.0
        %4360 = vmatprep.subr.mxu0 0.0
        %4361 = vmatpush1.msra.mxu0 0.0
        %4362 = vmatprep.subr.mxu0 0.0
        %4363 = vmatpush1.msra.mxu0 0.0
        %4364 = vmatprep.subr.mxu0 0.0
        %4365 = vmatpush1.msra.mxu0 0.0
        %4366 = vmatprep.subr.mxu0 0.0
        %4367 = vmatpush1.msra.mxu0 0.0
        %4368 = vmatprep.mubr.f32.mxu0 0.0
        %4369 = vmatmul.mubr.f32.gmra.mrb[0].mxu0 %v4151
        %v4370 = vpop.f32.mrb[0].mxu0
        %v4371 = vadd.f32 0.0, %v4370
        %v4372 = vpop.f32.mrb[0].mxu0
        %4373 = vmatprep.mubr.f32.mxu0 0.0
        %4374 = vmatmul.mubr.f32.gmra.mrb[0].mxu0 %v4153
        %v4375 = vpop.f32.mrb[0].mxu0
        %v4376 = vadd.f32 0.0, %v4375
        %v4377 = vpop.f32.mrb[0].mxu0
        %4378 = vmatprep.mubr.f32.mxu0 0.0
        %4379 = vmatmul.mubr.f32.gmra.mrb[0].mxu0 %v4155
        %v4380 = vpop.f32.mrb[0].mxu0
        %v4381 = vadd.f32 0.0, %v4380
        %v4382 = vpop.f32.mrb[0].mxu0
        %4383 = vmatprep.mubr.f32.mxu0 0.0
        %4384 = vmatmul.mubr.f32.gmra.mrb[0].mxu0 %v4157
        %v4385 = vpop.f32.mrb[0].mxu0
        %v4386 = vadd.f32 0.0, %v4385
        %v4387 = vpop.f32.mrb[0].mxu0
        %4388 = vmatprep.mubr.f32.mxu0 0.0
        %4389 = vmatmul.mubr.f32.gmra.mrb[0].mxu0 %v4159
        %v4390 = vpop.f32.mrb[0].mxu0
        %v4391 = vadd.f32 0.0, %v4390
        %v4392 = vpop.f32.mrb[0].mxu0
        %4393 = vmatprep.mubr.f32.mxu0 0.0
        %4394 = vmatmul.mubr.f32.gmra.mrb[0].mxu0 %v4161
        %v4395 = vpop.f32.mrb[0].mxu0
        %v4396 = vadd.f32 0.0, %v4395
        %v4397 = vpop.f32.mrb[0].mxu0
        %4398 = vmatprep.mubr.f32.mxu0 0.0
        %4399 = vmatmul.mubr.f32.gmra.mrb[0].mxu0 %v4163
        %v4400 = vpop.f32.mrb[0].mxu0
        %v4401 = vadd.f32 0.0, %v4400
        %v4402 = vpop.f32.mrb[0].mxu0
        %4403 = vmatprep.mubr.f32.mxu0 0.0
        %4404 = vmatmul.mubr.f32.gmra.mrb[0].mxu0 %v4165
        %v4405 = vpop.f32.mrb[0].mxu0
        %v4406 = vadd.f32 0.0, %v4405
        %v4407 = vpop.f32.mrb[0].mxu0
        %4408 = vmatprep.mubr.f32.mxu0 0.0
        %4409 = vmatmul.mubr.f32.gmra.mrb[0].mxu0 %v4167
        %v4410 = vpop.f32.mrb[0].mxu0
        %v4411 = vadd.f32 0.0, %v4410
        %v4412 = vpop.f32.mrb[0].mxu0
        %4413 = vmatprep.mubr.f32.mxu0 0.0
        %4414 = vmatmul.mubr.f32.gmra.mrb[0].mxu0 %v4169
        %v4415 = vpop.f32.mrb[0].mxu0
        %v4416 = vadd.f32 0.0, %v4415
        %v4417 = vpop.f32.mrb[0].mxu0
        %4418 = vmatprep.mubr.f32.mxu0 0.0
        %4419 = vmatmul.mubr.f32.gmra.mrb[0].mxu0 %v4302
        %v4420 = vpop.f32.mrb[0].mxu0
        %v4421 = vadd.f32 0.0, %v4420
        %v4422 = vpop.f32.mrb[0].mxu0
        %4423 = vdwg.mxu0
        %v4424 = vadd.f32 %v4238, %v4371
        %v4425 = vadd.f32 %v4243, %v4376
        %v4426 = vadd.f32 %v4248, %v4381
        %v4427 = vadd.f32 %v4253, %v4386
        %v4428 = vadd.f32 %v4258, %v4391
        %v4429 = vadd.f32 %v4263, %v4396
        %v4430 = vadd.f32 %v4268, %v4401
        %v4431 = vadd.f32 %v4273, %v4406
        %v4432 = vadd.f32 %v4278, %v4411
        %v4433 = vadd.f32 %v4283, %v4416
        %v4434 = vadd.f32 %v4288, %v4421
        %s4435 = scalar_lea.vmem [#allocation2], 832
        %v4436 = vld [vmem:[%s4435] sm:$0xff]
        %v4437 = vld [vmem:[%s4435 + $0x8] sm:$0xff]
        %v4438 = vld [vmem:[%s4435 + $0x10] sm:$0xff]
        %v4439 = vld [vmem:[%s4435 + $0x18] sm:$0xff]
        %v4440 = vld [vmem:[%s4435 + $0x20] sm:$0xff]
        %v4441 = vld [vmem:[%s4435 + $0x28] sm:$0xff]
        %v4442 = vld [vmem:[%s4435 + $0x30] sm:$0xff]
        %v4443 = vld [vmem:[%s4435 + $0x38] sm:$0xff]
        %v4445 = vrot.slane %v3929, 2
        %v4446 = vsel %vm1405, %v3981, %v4445
        %v4447 = vsel %vm1069, %v4446, 0
        %4449 = vmatprep.subr.mxu0 0.0
        %4450 = vmatpush1.msra.mxu0 %v4436
        %4451 = vmatprep.subr.mxu0 0.0
        %4452 = vmatpush1.msra.mxu0 %v4437
        %4453 = vmatprep.subr.mxu0 0.0
        %4454 = vmatpush1.msra.mxu0 %v4438
        %4455 = vmatprep.subr.mxu0 0.0
        %4456 = vmatpush1.msra.mxu0 %v4439
        %4457 = vmatprep.subr.mxu0 0.0
        %4458 = vmatpush1.msra.mxu0 %v4440
        %4459 = vmatprep.subr.mxu0 0.0
        %4460 = vmatpush1.msra.mxu0 %v4441
        %4461 = vmatprep.subr.mxu0 0.0
        %4462 = vmatpush1.msra.mxu0 %v4442
        %4463 = vmatprep.subr.mxu0 0.0
        %4464 = vmatpush1.msra.mxu0 %v4443
        %4465 = vmatprep.subr.mxu0 0.0
        %4466 = vmatpush1.msra.mxu0 0.0
        %4467 = vmatprep.subr.mxu0 0.0
        %4468 = vmatpush1.msra.mxu0 0.0
        %4469 = vmatprep.subr.mxu0 0.0
        %4470 = vmatpush1.msra.mxu0 0.0
        %4471 = vmatprep.subr.mxu0 0.0
        %4472 = vmatpush1.msra.mxu0 0.0
        %4473 = vmatprep.subr.mxu0 0.0
        %4474 = vmatpush1.msra.mxu0 0.0
        %4475 = vmatprep.subr.mxu0 0.0
        %4476 = vmatpush1.msra.mxu0 0.0
        %4477 = vmatprep.subr.mxu0 0.0
        %4478 = vmatpush1.msra.mxu0 0.0
        %4479 = vmatprep.subr.mxu0 0.0
        %4480 = vmatpush1.msra.mxu0 0.0
        %4481 = vmatprep.subr.mxu0 0.0
        %4482 = vmatpush1.msra.mxu0 0.0
        %4483 = vmatprep.subr.mxu0 0.0
        %4484 = vmatpush1.msra.mxu0 0.0
        %4485 = vmatprep.subr.mxu0 0.0
        %4486 = vmatpush1.msra.mxu0 0.0
        %4487 = vmatprep.subr.mxu0 0.0
        %4488 = vmatpush1.msra.mxu0 0.0
        %4489 = vmatprep.subr.mxu0 0.0
        %4490 = vmatpush1.msra.mxu0 0.0
        %4491 = vmatprep.subr.mxu0 0.0
        %4492 = vmatpush1.msra.mxu0 0.0
        %4493 = vmatprep.subr.mxu0 0.0
        %4494 = vmatpush1.msra.mxu0 0.0
        %4495 = vmatprep.subr.mxu0 0.0
        %4496 = vmatpush1.msra.mxu0 0.0
        %4497 = vmatprep.subr.mxu0 0.0
        %4498 = vmatpush1.msra.mxu0 0.0
        %4499 = vmatprep.subr.mxu0 0.0
        %4500 = vmatpush1.msra.mxu0 0.0
        %4501 = vmatprep.subr.mxu0 0.0
        %4502 = vmatpush1.msra.mxu0 0.0
        %4503 = vmatprep.subr.mxu0 0.0
        %4504 = vmatpush1.msra.mxu0 0.0
        %4505 = vmatprep.subr.mxu0 0.0
        %4506 = vmatpush1.msra.mxu0 0.0
        %4507 = vmatprep.subr.mxu0 0.0
        %4508 = vmatpush1.msra.mxu0 0.0
        %4509 = vmatprep.subr.mxu0 0.0
        %4510 = vmatpush1.msra.mxu0 0.0
        %4511 = vmatprep.subr.mxu0 0.0
        %4512 = vmatpush1.msra.mxu0 0.0
        %4513 = vmatprep.mubr.f32.mxu0 0.0
        %4514 = vmatmul.mubr.f32.gmra.mrb[0].mxu0 %v3985
        %v4515 = vpop.f32.mrb[0].mxu0
        %v4516 = vadd.f32 0.0, %v4515
        %v4517 = vpop.f32.mrb[0].mxu0
        %4518 = vmatprep.mubr.f32.mxu0 0.0
        %4519 = vmatmul.mubr.f32.gmra.mrb[0].mxu0 %v3987
        %v4520 = vpop.f32.mrb[0].mxu0
        %v4521 = vadd.f32 0.0, %v4520
        %v4522 = vpop.f32.mrb[0].mxu0
        %4523 = vmatprep.mubr.f32.mxu0 0.0
        %4524 = vmatmul.mubr.f32.gmra.mrb[0].mxu0 %v3989
        %v4525 = vpop.f32.mrb[0].mxu0
        %v4526 = vadd.f32 0.0, %v4525
        %v4527 = vpop.f32.mrb[0].mxu0
        %4528 = vmatprep.mubr.f32.mxu0 0.0
        %4529 = vmatmul.mubr.f32.gmra.mrb[0].mxu0 %v3991
        %v4530 = vpop.f32.mrb[0].mxu0
        %v4531 = vadd.f32 0.0, %v4530
        %v4532 = vpop.f32.mrb[0].mxu0
        %4533 = vmatprep.mubr.f32.mxu0 0.0
        %4534 = vmatmul.mubr.f32.gmra.mrb[0].mxu0 %v3993
        %v4535 = vpop.f32.mrb[0].mxu0
        %v4536 = vadd.f32 0.0, %v4535
        %v4537 = vpop.f32.mrb[0].mxu0
        %4538 = vmatprep.mubr.f32.mxu0 0.0
        %4539 = vmatmul.mubr.f32.gmra.mrb[0].mxu0 %v3995
        %v4540 = vpop.f32.mrb[0].mxu0
        %v4541 = vadd.f32 0.0, %v4540
        %v4542 = vpop.f32.mrb[0].mxu0
        %4543 = vmatprep.mubr.f32.mxu0 0.0
        %4544 = vmatmul.mubr.f32.gmra.mrb[0].mxu0 %v3997
        %v4545 = vpop.f32.mrb[0].mxu0
        %v4546 = vadd.f32 0.0, %v4545
        %v4547 = vpop.f32.mrb[0].mxu0
        %4548 = vmatprep.mubr.f32.mxu0 0.0
        %4549 = vmatmul.mubr.f32.gmra.mrb[0].mxu0 %v3999
        %v4550 = vpop.f32.mrb[0].mxu0
        %v4551 = vadd.f32 0.0, %v4550
        %v4552 = vpop.f32.mrb[0].mxu0
        %4553 = vmatprep.mubr.f32.mxu0 0.0
        %4554 = vmatmul.mubr.f32.gmra.mrb[0].mxu0 %v4001
        %v4555 = vpop.f32.mrb[0].mxu0
        %v4556 = vadd.f32 0.0, %v4555
        %v4557 = vpop.f32.mrb[0].mxu0
        %4558 = vmatprep.mubr.f32.mxu0 0.0
        %4559 = vmatmul.mubr.f32.gmra.mrb[0].mxu0 %v4003
        %v4560 = vpop.f32.mrb[0].mxu0
        %v4561 = vadd.f32 0.0, %v4560
        %v4562 = vpop.f32.mrb[0].mxu0
        %4563 = vmatprep.mubr.f32.mxu0 0.0
        %4564 = vmatmul.mubr.f32.gmra.mrb[0].mxu0 %v4447
        %v4565 = vpop.f32.mrb[0].mxu0
        %v4566 = vadd.f32 0.0, %v4565
        %v4567 = vpop.f32.mrb[0].mxu0
        %4568 = vdwg.mxu0
        %v4569 = vadd.f32 %v4424, %v4516
        %v4570 = vadd.f32 %v4425, %v4521
        %v4571 = vadd.f32 %v4426, %v4526
        %v4572 = vadd.f32 %v4427, %v4531
        %v4573 = vadd.f32 %v4428, %v4536
        %v4574 = vadd.f32 %v4429, %v4541
        %v4575 = vadd.f32 %v4430, %v4546
        %v4576 = vadd.f32 %v4431, %v4551
        %v4577 = vadd.f32 %v4432, %v4556
        %v4578 = vadd.f32 %v4433, %v4561
        %v4579 = vadd.f32 %v4434, %v4566
        %s4580 = scalar_lea.vmem [#allocation2], 896
        %v4581 = vld [vmem:[%s4580] sm:$0xff]
        %v4582 = vld [vmem:[%s4580 + $0x8] sm:$0xff]
        %v4583 = vld [vmem:[%s4580 + $0x10] sm:$0xff]
        %v4584 = vld [vmem:[%s4580 + $0x18] sm:$0xff]
        %v4585 = vld [vmem:[%s4580 + $0x20] sm:$0xff]
        %v4586 = vld [vmem:[%s4580 + $0x28] sm:$0xff]
        %v4587 = vld [vmem:[%s4580 + $0x30] sm:$0xff]
        %v4588 = vld [vmem:[%s4580 + $0x38] sm:$0xff]
        %v4589 = vrot.slane %v3929, 6
        %v4590 = vsel %vm2447, %v4300, %v4589
        %v4591 = vsel %vm1069, %v4590, 0
        %4593 = vmatprep.subr.mxu0 0.0
        %4594 = vmatpush1.msra.mxu0 %v4581
        %4595 = vmatprep.subr.mxu0 0.0
        %4596 = vmatpush1.msra.mxu0 %v4582
        %4597 = vmatprep.subr.mxu0 0.0
        %4598 = vmatpush1.msra.mxu0 %v4583
        %4599 = vmatprep.subr.mxu0 0.0
        %4600 = vmatpush1.msra.mxu0 %v4584
        %4601 = vmatprep.subr.mxu0 0.0
        %4602 = vmatpush1.msra.mxu0 %v4585
        %4603 = vmatprep.subr.mxu0 0.0
        %4604 = vmatpush1.msra.mxu0 %v4586
        %4605 = vmatprep.subr.mxu0 0.0
        %4606 = vmatpush1.msra.mxu0 %v4587
        %4607 = vmatprep.subr.mxu0 0.0
        %4608 = vmatpush1.msra.mxu0 %v4588
        %4609 = vmatprep.subr.mxu0 0.0
        %4610 = vmatpush1.msra.mxu0 0.0
        %4611 = vmatprep.subr.mxu0 0.0
        %4612 = vmatpush1.msra.mxu0 0.0
        %4613 = vmatprep.subr.mxu0 0.0
        %4614 = vmatpush1.msra.mxu0 0.0
        %4615 = vmatprep.subr.mxu0 0.0
        %4616 = vmatpush1.msra.mxu0 0.0
        %4617 = vmatprep.subr.mxu0 0.0
        %4618 = vmatpush1.msra.mxu0 0.0
        %4619 = vmatprep.subr.mxu0 0.0
        %4620 = vmatpush1.msra.mxu0 0.0
        %4621 = vmatprep.subr.mxu0 0.0
        %4622 = vmatpush1.msra.mxu0 0.0
        %4623 = vmatprep.subr.mxu0 0.0
        %4624 = vmatpush1.msra.mxu0 0.0
        %4625 = vmatprep.subr.mxu0 0.0
        %4626 = vmatpush1.msra.mxu0 0.0
        %4627 = vmatprep.subr.mxu0 0.0
        %4628 = vmatpush1.msra.mxu0 0.0
        %4629 = vmatprep.subr.mxu0 0.0
        %4630 = vmatpush1.msra.mxu0 0.0
        %4631 = vmatprep.subr.mxu0 0.0
        %4632 = vmatpush1.msra.mxu0 0.0
        %4633 = vmatprep.subr.mxu0 0.0
        %4634 = vmatpush1.msra.mxu0 0.0
        %4635 = vmatprep.subr.mxu0 0.0
        %4636 = vmatpush1.msra.mxu0 0.0
        %4637 = vmatprep.subr.mxu0 0.0
        %4638 = vmatpush1.msra.mxu0 0.0
        %4639 = vmatprep.subr.mxu0 0.0
        %4640 = vmatpush1.msra.mxu0 0.0
        %4641 = vmatprep.subr.mxu0 0.0
        %4642 = vmatpush1.msra.mxu0 0.0
        %4643 = vmatprep.subr.mxu0 0.0
        %4644 = vmatpush1.msra.mxu0 0.0
        %4645 = vmatprep.subr.mxu0 0.0
        %4646 = vmatpush1.msra.mxu0 0.0
        %4647 = vmatprep.subr.mxu0 0.0
        %4648 = vmatpush1.msra.mxu0 0.0
        %4649 = vmatprep.subr.mxu0 0.0
        %4650 = vmatpush1.msra.mxu0 0.0
        %4651 = vmatprep.subr.mxu0 0.0
        %4652 = vmatpush1.msra.mxu0 0.0
        %4653 = vmatprep.subr.mxu0 0.0
        %4654 = vmatpush1.msra.mxu0 0.0
        %4655 = vmatprep.subr.mxu0 0.0
        %4656 = vmatpush1.msra.mxu0 0.0
        %4657 = vmatprep.mubr.f32.mxu0 0.0
        %4658 = vmatmul.mubr.f32.gmra.mrb[0].mxu0 %v4153
        %v4659 = vpop.f32.mrb[0].mxu0
        %v4660 = vadd.f32 0.0, %v4659
        %v4661 = vpop.f32.mrb[0].mxu0
        %4662 = vmatprep.mubr.f32.mxu0 0.0
        %4663 = vmatmul.mubr.f32.gmra.mrb[0].mxu0 %v4155
        %v4664 = vpop.f32.mrb[0].mxu0
        %v4665 = vadd.f32 0.0, %v4664
        %v4666 = vpop.f32.mrb[0].mxu0
        %4667 = vmatprep.mubr.f32.mxu0 0.0
        %4668 = vmatmul.mubr.f32.gmra.mrb[0].mxu0 %v4157
        %v4669 = vpop.f32.mrb[0].mxu0
        %v4670 = vadd.f32 0.0, %v4669
        %v4671 = vpop.f32.mrb[0].mxu0
        %4672 = vmatprep.mubr.f32.mxu0 0.0
        %4673 = vmatmul.mubr.f32.gmra.mrb[0].mxu0 %v4159
        %v4674 = vpop.f32.mrb[0].mxu0
        %v4675 = vadd.f32 0.0, %v4674
        %v4676 = vpop.f32.mrb[0].mxu0
        %4677 = vmatprep.mubr.f32.mxu0 0.0
        %4678 = vmatmul.mubr.f32.gmra.mrb[0].mxu0 %v4161
        %v4679 = vpop.f32.mrb[0].mxu0
        %v4680 = vadd.f32 0.0, %v4679
        %v4681 = vpop.f32.mrb[0].mxu0
        %4682 = vmatprep.mubr.f32.mxu0 0.0
        %4683 = vmatmul.mubr.f32.gmra.mrb[0].mxu0 %v4163
        %v4684 = vpop.f32.mrb[0].mxu0
        %v4685 = vadd.f32 0.0, %v4684
        %v4686 = vpop.f32.mrb[0].mxu0
        %4687 = vmatprep.mubr.f32.mxu0 0.0
        %4688 = vmatmul.mubr.f32.gmra.mrb[0].mxu0 %v4165
        %v4689 = vpop.f32.mrb[0].mxu0
        %v4690 = vadd.f32 0.0, %v4689
        %v4691 = vpop.f32.mrb[0].mxu0
        %4692 = vmatprep.mubr.f32.mxu0 0.0
        %4693 = vmatmul.mubr.f32.gmra.mrb[0].mxu0 %v4167
        %v4694 = vpop.f32.mrb[0].mxu0
        %v4695 = vadd.f32 0.0, %v4694
        %v4696 = vpop.f32.mrb[0].mxu0
        %4697 = vmatprep.mubr.f32.mxu0 0.0
        %4698 = vmatmul.mubr.f32.gmra.mrb[0].mxu0 %v4169
        %v4699 = vpop.f32.mrb[0].mxu0
        %v4700 = vadd.f32 0.0, %v4699
        %v4701 = vpop.f32.mrb[0].mxu0
        %4702 = vmatprep.mubr.f32.mxu0 0.0
        %4703 = vmatmul.mubr.f32.gmra.mrb[0].mxu0 %v4302
        %v4704 = vpop.f32.mrb[0].mxu0
        %v4705 = vadd.f32 0.0, %v4704
        %v4706 = vpop.f32.mrb[0].mxu0
        %4707 = vmatprep.mubr.f32.mxu0 0.0
        %4708 = vmatmul.mubr.f32.gmra.mrb[0].mxu0 %v4591
        %v4709 = vpop.f32.mrb[0].mxu0
        %v4710 = vadd.f32 0.0, %v4709
        %v4711 = vpop.f32.mrb[0].mxu0
        %4712 = vdwg.mxu0
        %v4713 = vadd.f32 %v4569, %v4660
        %v4714 = vadd.f32 %v4570, %v4665
        %v4715 = vadd.f32 %v4571, %v4670
        %v4716 = vadd.f32 %v4572, %v4675
        %v4717 = vadd.f32 %v4573, %v4680
        %v4718 = vadd.f32 %v4574, %v4685
        %v4719 = vadd.f32 %v4575, %v4690
        %v4720 = vadd.f32 %v4576, %v4695
        %v4721 = vadd.f32 %v4577, %v4700
        %v4722 = vadd.f32 %v4578, %v4705
        %v4723 = vadd.f32 %v4579, %v4710
        %s4724 = scalar_lea.vmem %s6, 2
        %v4725 = vld [vmem:[%s4724] sm:$0x1]
        %v4727 = vlaneseq
        %v4728 = vshrl.u32 %v4727, 7
        %v4729 = vsub.s32 0, %v4728
        %v4730 = vrot.slane %v4725, %v4729
        %v4732 = vadd.f32 %v4713, %v4730
        %v4733 = vadd.f32 %v4714, %v4730
        %v4734 = vadd.f32 %v4715, %v4730
        %v4735 = vadd.f32 %v4716, %v4730
        %v4736 = vadd.f32 %v4717, %v4730
        %v4737 = vadd.f32 %v4718, %v4730
        %v4738 = vadd.f32 %v4719, %v4730
        %v4739 = vadd.f32 %v4720, %v4730
        %v4740 = vadd.f32 %v4721, %v4730
        %v4741 = vadd.f32 %v4722, %v4730
        %v4742 = vadd.f32 %v4723, %v4730
        %v4743 = vtanh.pop %v4732
        %v4744 = vtanh.pop %v4733
        %v4745 = vtanh.pop %v4734
        %v4746 = vtanh.pop %v4735
        %v4747 = vtanh.pop %v4736
        %v4748 = vtanh.pop %v4737
        %v4749 = vtanh.pop %v4738
        %v4750 = vtanh.pop %v4739
        %v4751 = vtanh.pop %v4740
        %v4752 = vtanh.pop %v4741
        %v4753 = vtanh.pop %v4742
        %v4754 = vxor.u32 %v4732, 2147483648
        %v4755 = vxor.u32 %v4733, 2147483648
        %v4756 = vxor.u32 %v4734, 2147483648
        %v4757 = vxor.u32 %v4735, 2147483648
        %v4758 = vxor.u32 %v4736, 2147483648
        %v4759 = vxor.u32 %v4737, 2147483648
        %v4760 = vxor.u32 %v4738, 2147483648
        %v4761 = vxor.u32 %v4739, 2147483648
        %v4762 = vxor.u32 %v4740, 2147483648
        %v4763 = vxor.u32 %v4741, 2147483648
        %v4764 = vxor.u32 %v4742, 2147483648
        %v4765 = vmul.f32 %v4754, 1.442695
        %v4766 = vpow.pop %v4765
        %v4767 = vmul.f32 %v4755, 1.442695
        %v4768 = vpow.pop %v4767
        %v4769 = vmul.f32 %v4756, 1.442695
        %v4770 = vpow.pop %v4769
        %v4771 = vmul.f32 %v4757, 1.442695
        %v4772 = vpow.pop %v4771
        %v4773 = vmul.f32 %v4758, 1.442695
        %v4774 = vpow.pop %v4773
        %v4775 = vmul.f32 %v4759, 1.442695
        %v4776 = vpow.pop %v4775
        %v4777 = vmul.f32 %v4760, 1.442695
        %v4778 = vpow.pop %v4777
        %v4779 = vmul.f32 %v4761, 1.442695
        %v4780 = vpow.pop %v4779
        %v4781 = vmul.f32 %v4762, 1.442695
        %v4782 = vpow.pop %v4781
        %v4783 = vmul.f32 %v4763, 1.442695
        %v4784 = vpow.pop %v4783
        %v4785 = vmul.f32 %v4764, 1.442695
        %v4786 = vpow.pop %v4785
        %v4787 = vadd.f32 %v4766, 1.0
        %v4788 = vadd.f32 %v4768, 1.0
        %v4789 = vadd.f32 %v4770, 1.0
        %v4790 = vadd.f32 %v4772, 1.0
        %v4791 = vadd.f32 %v4774, 1.0
        %v4792 = vadd.f32 %v4776, 1.0
        %v4793 = vadd.f32 %v4778, 1.0
        %v4794 = vadd.f32 %v4780, 1.0
        %v4795 = vadd.f32 %v4782, 1.0
        %v4796 = vadd.f32 %v4784, 1.0
        %v4797 = vadd.f32 %v4786, 1.0
        %v4798 = vrcp.pop %v4787
        %v4799 = vmul.f32 1.0, %v4798
        %v4800 = vrcp.pop %v4788
        %v4801 = vmul.f32 1.0, %v4800
        %v4802 = vrcp.pop %v4789
        %v4803 = vmul.f32 1.0, %v4802
        %v4804 = vrcp.pop %v4790
        %v4805 = vmul.f32 1.0, %v4804
        %v4806 = vrcp.pop %v4791
        %v4807 = vmul.f32 1.0, %v4806
        %v4808 = vrcp.pop %v4792
        %v4809 = vmul.f32 1.0, %v4808
        %v4810 = vrcp.pop %v4793
        %v4811 = vmul.f32 1.0, %v4810
        %v4812 = vrcp.pop %v4794
        %v4813 = vmul.f32 1.0, %v4812
        %v4814 = vrcp.pop %v4795
        %v4815 = vmul.f32 1.0, %v4814
        %v4816 = vrcp.pop %v4796
        %v4817 = vmul.f32 1.0, %v4816
        %v4818 = vrcp.pop %v4797
        %v4819 = vmul.f32 1.0, %v4818
        %4831 = vrot.lane.b32.xlu0 %v4799, 64
        %v4832 = vpop.permute.xlu0 %4831
        %4833 = vrot.lane.b32.xlu0 %v4801, 64
        %v4834 = vpop.permute.xlu0 %4833
        %4835 = vrot.lane.b32.xlu0 %v4803, 64
        %v4836 = vpop.permute.xlu0 %4835
        %4837 = vrot.lane.b32.xlu0 %v4805, 64
        %v4838 = vpop.permute.xlu0 %4837
        %4839 = vrot.lane.b32.xlu0 %v4807, 64
        %v4840 = vpop.permute.xlu0 %4839
        %4841 = vrot.lane.b32.xlu0 %v4809, 64
        %v4842 = vpop.permute.xlu0 %4841
        %4843 = vrot.lane.b32.xlu0 %v4811, 64
        %v4844 = vpop.permute.xlu0 %4843
        %4845 = vrot.lane.b32.xlu0 %v4813, 64
        %v4846 = vpop.permute.xlu0 %4845
        %4847 = vrot.lane.b32.xlu0 %v4815, 64
        %v4848 = vpop.permute.xlu0 %4847
        %4849 = vrot.lane.b32.xlu0 %v4817, 64
        %v4850 = vpop.permute.xlu0 %4849
        %4851 = vrot.lane.b32.xlu0 %v4819, 64
        %v4852 = vpop.permute.xlu0 %4851
        %v4864 = vmul.f32 %v4743, %v4832
        %v4865 = vmul.f32 %v4744, %v4834
        %v4866 = vmul.f32 %v4745, %v4836
        %v4867 = vmul.f32 %v4746, %v4838
        %v4868 = vmul.f32 %v4747, %v4840
        %v4869 = vmul.f32 %v4748, %v4842
        %v4870 = vmul.f32 %v4749, %v4844
        %v4871 = vmul.f32 %v4750, %v4846
        %v4872 = vmul.f32 %v4751, %v4848
        %v4873 = vmul.f32 %v4752, %v4850
        %v4874 = vmul.f32 %v4753, %v4852
        %s4875 = scalar_lea.vmem %s7, 128
        %v4876 = vld [vmem:[%s4875] sm:$0xff]
        %v4877 = vld [vmem:[%s4875 + $0x8] sm:$0xff]
        %v4878 = vld [vmem:[%s4875 + $0x10] sm:$0xff]
        %v4879 = vld [vmem:[%s4875 + $0x18] sm:$0xff]
        %v4880 = vld [vmem:[%s4875 + $0x20] sm:$0xff]
        %v4881 = vld [vmem:[%s4875 + $0x28] sm:$0xff]
        %v4882 = vld [vmem:[%s4875 + $0x30] sm:$0xff]
        %v4883 = vld [vmem:[%s4875 + $0x38] sm:$0xff]
        %s4884 = scalar_lea.vmem %s8, 2
        %v4885 = vld [vmem:[%s4884] sm:$0x1]
        %v4887 = vlaneseq
        %v4888 = vshrl.u32 %v4887, 7
        %v4889 = vsub.s32 0, %v4888
        %v4890 = vrot.slane %v4885, %v4889
        %v4893 = vsel %vm1069, %v4864, 0
        %v4896 = vsel %vm1069, %v4865, 0
        %v4899 = vsel %vm1069, %v4866, 0
        %v4902 = vsel %vm1069, %v4867, 0
        %v4905 = vsel %vm1069, %v4868, 0
        %v4908 = vsel %vm1069, %v4869, 0
        %v4911 = vsel %vm1069, %v4870, 0
        %v4914 = vsel %vm1069, %v4871, 0
        %v4917 = vsel %vm1069, %v4872, 0
        %v4920 = vsel %vm1069, %v4873, 0
        %v4923 = vsel %vm1069, %v4874, 0
        %4925 = vmatprep.subr.mxu0 0.0
        %4926 = vmatpush1.msra.mxu0 %v4876
        %4927 = vmatprep.subr.mxu0 0.0
        %4928 = vmatpush1.msra.mxu0 %v4877
        %4929 = vmatprep.subr.mxu0 0.0
        %4930 = vmatpush1.msra.mxu0 %v4878
        %4931 = vmatprep.subr.mxu0 0.0
        %4932 = vmatpush1.msra.mxu0 %v4879
        %4933 = vmatprep.subr.mxu0 0.0
        %4934 = vmatpush1.msra.mxu0 %v4880
        %4935 = vmatprep.subr.mxu0 0.0
        %4936 = vmatpush1.msra.mxu0 %v4881
        %4937 = vmatprep.subr.mxu0 0.0
        %4938 = vmatpush1.msra.mxu0 %v4882
        %4939 = vmatprep.subr.mxu0 0.0
        %4940 = vmatpush1.msra.mxu0 %v4883
        %4941 = vmatprep.subr.mxu0 0.0
        %4942 = vmatpush1.msra.mxu0 0.0
        %4943 = vmatprep.subr.mxu0 0.0
        %4944 = vmatpush1.msra.mxu0 0.0
        %4945 = vmatprep.subr.mxu0 0.0
        %4946 = vmatpush1.msra.mxu0 0.0
        %4947 = vmatprep.subr.mxu0 0.0
        %4948 = vmatpush1.msra.mxu0 0.0
        %4949 = vmatprep.subr.mxu0 0.0
        %4950 = vmatpush1.msra.mxu0 0.0
        %4951 = vmatprep.subr.mxu0 0.0
        %4952 = vmatpush1.msra.mxu0 0.0
        %4953 = vmatprep.subr.mxu0 0.0
        %4954 = vmatpush1.msra.mxu0 0.0
        %4955 = vmatprep.subr.mxu0 0.0
        %4956 = vmatpush1.msra.mxu0 0.0
        %4957 = vmatprep.subr.mxu0 0.0
        %4958 = vmatpush1.msra.mxu0 0.0
        %4959 = vmatprep.subr.mxu0 0.0
        %4960 = vmatpush1.msra.mxu0 0.0
        %4961 = vmatprep.subr.mxu0 0.0
        %4962 = vmatpush1.msra.mxu0 0.0
        %4963 = vmatprep.subr.mxu0 0.0
        %4964 = vmatpush1.msra.mxu0 0.0
        %4965 = vmatprep.subr.mxu0 0.0
        %4966 = vmatpush1.msra.mxu0 0.0
        %4967 = vmatprep.subr.mxu0 0.0
        %4968 = vmatpush1.msra.mxu0 0.0
        %4969 = vmatprep.subr.mxu0 0.0
        %4970 = vmatpush1.msra.mxu0 0.0
        %4971 = vmatprep.subr.mxu0 0.0
        %4972 = vmatpush1.msra.mxu0 0.0
        %4973 = vmatprep.subr.mxu0 0.0
        %4974 = vmatpush1.msra.mxu0 0.0
        %4975 = vmatprep.subr.mxu0 0.0
        %4976 = vmatpush1.msra.mxu0 0.0
        %4977 = vmatprep.subr.mxu0 0.0
        %4978 = vmatpush1.msra.mxu0 0.0
        %4979 = vmatprep.subr.mxu0 0.0
        %4980 = vmatpush1.msra.mxu0 0.0
        %4981 = vmatprep.subr.mxu0 0.0
        %4982 = vmatpush1.msra.mxu0 0.0
        %4983 = vmatprep.subr.mxu0 0.0
        %4984 = vmatpush1.msra.mxu0 0.0
        %4985 = vmatprep.subr.mxu0 0.0
        %4986 = vmatpush1.msra.mxu0 0.0
        %4987 = vmatprep.subr.mxu0 0.0
        %4988 = vmatpush1.msra.mxu0 0.0
        %4989 = vmatprep.mubr.f32.mxu0 0.0
        %4990 = vmatmul.mubr.f32.gmra.mrb[0].mxu0 %v4893
        %v4991 = vpop.f32.mrb[0].mxu0
        %v4992 = vadd.f32 %v4890, %v4991
        %v4993 = vpop.f32.mrb[0].mxu0
        %4994 = vmatprep.mubr.f32.mxu0 0.0
        %4995 = vmatmul.mubr.f32.gmra.mrb[0].mxu0 %v4896
        %v4996 = vpop.f32.mrb[0].mxu0
        %v4997 = vadd.f32 %v4890, %v4996
        %v4998 = vpop.f32.mrb[0].mxu0
        %4999 = vmatprep.mubr.f32.mxu0 0.0
        %5000 = vmatmul.mubr.f32.gmra.mrb[0].mxu0 %v4899
        %v5001 = vpop.f32.mrb[0].mxu0
        %v5002 = vadd.f32 %v4890, %v5001
        %v5003 = vpop.f32.mrb[0].mxu0
        %5004 = vmatprep.mubr.f32.mxu0 0.0
        %5005 = vmatmul.mubr.f32.gmra.mrb[0].mxu0 %v4902
        %v5006 = vpop.f32.mrb[0].mxu0
        %v5007 = vadd.f32 %v4890, %v5006
        %v5008 = vpop.f32.mrb[0].mxu0
        %5009 = vmatprep.mubr.f32.mxu0 0.0
        %5010 = vmatmul.mubr.f32.gmra.mrb[0].mxu0 %v4905
        %v5011 = vpop.f32.mrb[0].mxu0
        %v5012 = vadd.f32 %v4890, %v5011
        %v5013 = vpop.f32.mrb[0].mxu0
        %5014 = vmatprep.mubr.f32.mxu0 0.0
        %5015 = vmatmul.mubr.f32.gmra.mrb[0].mxu0 %v4908
        %v5016 = vpop.f32.mrb[0].mxu0
        %v5017 = vadd.f32 %v4890, %v5016
        %v5018 = vpop.f32.mrb[0].mxu0
        %5019 = vmatprep.mubr.f32.mxu0 0.0
        %5020 = vmatmul.mubr.f32.gmra.mrb[0].mxu0 %v4911
        %v5021 = vpop.f32.mrb[0].mxu0
        %v5022 = vadd.f32 %v4890, %v5021
        %v5023 = vpop.f32.mrb[0].mxu0
        %5024 = vmatprep.mubr.f32.mxu0 0.0
        %5025 = vmatmul.mubr.f32.gmra.mrb[0].mxu0 %v4914
        %v5026 = vpop.f32.mrb[0].mxu0
        %v5027 = vadd.f32 %v4890, %v5026
        %v5028 = vpop.f32.mrb[0].mxu0
        %5029 = vmatprep.mubr.f32.mxu0 0.0
        %5030 = vmatmul.mubr.f32.gmra.mrb[0].mxu0 %v4917
        %v5031 = vpop.f32.mrb[0].mxu0
        %v5032 = vadd.f32 %v4890, %v5031
        %v5033 = vpop.f32.mrb[0].mxu0
        %5034 = vmatprep.mubr.f32.mxu0 0.0
        %5035 = vmatmul.mubr.f32.gmra.mrb[0].mxu0 %v4920
        %v5036 = vpop.f32.mrb[0].mxu0
        %v5037 = vadd.f32 %v4890, %v5036
        %v5038 = vpop.f32.mrb[0].mxu0
        %5039 = vmatprep.mubr.f32.mxu0 0.0
        %5040 = vmatmul.mubr.f32.gmra.mrb[0].mxu0 %v4923
        %v5041 = vpop.f32.mrb[0].mxu0
        %v5042 = vadd.f32 %v4890, %v5041
        %v5043 = vpop.f32.mrb[0].mxu0
        %5044 = vdwg.mxu0
        %v5052 = vrot.slane %v5002, 4
        %v5053 = vrot.slane %v5007, 4
        %v5054 = vsel %vm1837, %v5052, %v5053
        %v5055 = vrot.slane %v5012, 4
        %v5056 = vsel %vm1837, %v5053, %v5055
        %v5057 = vrot.slane %v5017, 4
        %v5058 = vsel %vm1837, %v5055, %v5057
        %v5059 = vrot.slane %v5022, 4
        %v5060 = vsel %vm1837, %v5057, %v5059
        %v5061 = vrot.slane %v5027, 4
        %v5062 = vsel %vm1837, %v5059, %v5061
        %v5063 = vrot.slane %v5032, 4
        %v5064 = vsel %vm1837, %v5061, %v5063
        %v5073 = vadd.f32 %v3849, %v5052
        %v5074 = vadd.f32 %v3850, %v5054
        %v5075 = vadd.f32 %v3851, %v5056
        %v5076 = vadd.f32 %v3852, %v5058
        %v5077 = vadd.f32 %v3853, %v5060
        %v5078 = vadd.f32 %v3854, %v5062
        %v5079 = vadd.f32 %v3855, %v5064
        %v5080 = vadd.f32 %v3856, %v5063
        %v5085 = vrot.slane %v4992, 2
        %v5086 = vrot.slane %v4997, 2
        %v5087 = vsel %vm1405, %v5085, %v5086
        %v5088 = vrot.slane %v5002, 2
        %v5089 = vsel %vm1405, %v5086, %v5088
        %v5090 = vrot.slane %v5007, 2
        %v5091 = vsel %vm1405, %v5088, %v5090
        %v5092 = vrot.slane %v5012, 2
        %v5093 = vsel %vm1405, %v5090, %v5092
        %v5094 = vrot.slane %v5017, 2
        %v5095 = vsel %vm1405, %v5092, %v5094
        %v5096 = vrot.slane %v5022, 2
        %v5097 = vsel %vm1405, %v5094, %v5096
        %v5098 = vrot.slane %v5027, 2
        %v5099 = vsel %vm1405, %v5096, %v5098
        %v5100 = vrot.slane %v5032, 2
        %v5101 = vsel %vm1405, %v5098, %v5100
        %v5102 = vrot.slane %v5037, 2
        %v5103 = vsel %vm1405, %v5100, %v5102
        %v5104 = vrot.slane %v5042, 2
        %v5105 = vsel %vm1405, %v5102, %v5104
        %v5118 = vadd.f32 %v3917, %v5085
        %v5119 = vadd.f32 %v3918, %v5087
        %v5120 = vadd.f32 %v3919, %v5089
        %v5121 = vadd.f32 %v3920, %v5091
        %v5122 = vadd.f32 %v3921, %v5093
        %v5123 = vadd.f32 %v3922, %v5095
        %v5124 = vadd.f32 %v3923, %v5097
        %v5125 = vadd.f32 %v3924, %v5099
        %v5126 = vadd.f32 %v3925, %v5101
        %v5127 = vadd.f32 %v3926, %v5103
        %v5128 = vadd.f32 %v3927, %v5105
        %v5129 = vadd.f32 %v3928, %v5104
        %v5130 = vmul.f32 %v5118, %v925
        %v5131 = vmul.f32 %v5119, %v930
        %v5132 = vmul.f32 %v5120, %v935
        %v5133 = vmul.f32 %v5121, %v940
        %v5134 = vmul.f32 %v5122, %v945
        %v5135 = vmul.f32 %v5123, %v950
        %v5136 = vmul.f32 %v5124, %v955
        %v5137 = vmul.f32 %v5125, %v960
        %v5138 = vmul.f32 %v5126, %v965
        %v5139 = vmul.f32 %v5127, %v970
        %v5140 = vmul.f32 %v5128, %v975
        %v5141 = vmul.f32 %v5129, %v980
        %s5142 = scalar_lea.vmem [#allocation2], 960
        %v5143 = vld [vmem:[%s5142] sm:$0xff]
        %v5144 = vld [vmem:[%s5142 + $0x8] sm:$0xff]
        %v5145 = vld [vmem:[%s5142 + $0x10] sm:$0xff]
        %v5146 = vld [vmem:[%s5142 + $0x18] sm:$0xff]
        %v5147 = vld [vmem:[%s5142 + $0x20] sm:$0xff]
        %v5148 = vld [vmem:[%s5142 + $0x28] sm:$0xff]
        %v5149 = vld [vmem:[%s5142 + $0x30] sm:$0xff]
        %v5150 = vld [vmem:[%s5142 + $0x38] sm:$0xff]
        %s5151 = scalar_lea.vmem [#allocation2], 1024
        %v5152 = vld [vmem:[%s5151] sm:$0xff]
        %v5153 = vld [vmem:[%s5151 + $0x8] sm:$0xff]
        %v5154 = vld [vmem:[%s5151 + $0x10] sm:$0xff]
        %v5155 = vld [vmem:[%s5151 + $0x18] sm:$0xff]
        %v5156 = vld [vmem:[%s5151 + $0x20] sm:$0xff]
        %v5157 = vld [vmem:[%s5151 + $0x28] sm:$0xff]
        %v5158 = vld [vmem:[%s5151 + $0x30] sm:$0xff]
        %v5159 = vld [vmem:[%s5151 + $0x38] sm:$0xff]
        %v5168 = vrot.slane %v5131, 6
        %v5169 = vrot.slane %v5132, 6
        %v5170 = vsel %vm2447, %v5168, %v5169
        %v5171 = vrot.slane %v5133, 6
        %v5172 = vsel %vm2447, %v5169, %v5171
        %v5173 = vrot.slane %v5134, 6
        %v5174 = vsel %vm2447, %v5171, %v5173
        %v5175 = vrot.slane %v5135, 6
        %v5176 = vsel %vm2447, %v5173, %v5175
        %v5177 = vrot.slane %v5136, 6
        %v5178 = vsel %vm2447, %v5175, %v5177
        %v5179 = vrot.slane %v5137, 6
        %v5180 = vsel %vm2447, %v5177, %v5179
        %v5181 = vrot.slane %v5138, 6
        %v5182 = vsel %vm2447, %v5179, %v5181
        %v5183 = vsel %vm1069, %v5170, 0
        %v5185 = vsel %vm1069, %v5172, 0
        %v5187 = vsel %vm1069, %v5174, 0
        %v5189 = vsel %vm1069, %v5176, 0
        %v5191 = vsel %vm1069, %v5178, 0
        %v5193 = vsel %vm1069, %v5180, 0
        %v5195 = vsel %vm1069, %v5182, 0
        %5197 = vmatprep.subr.mxu0 0.0
        %5198 = vmatpush1.msra.mxu0 %v5152
        %5199 = vmatprep.subr.mxu0 0.0
        %5200 = vmatpush1.msra.mxu0 %v5153
        %5201 = vmatprep.subr.mxu0 0.0
        %5202 = vmatpush1.msra.mxu0 %v5154
        %5203 = vmatprep.subr.mxu0 0.0
        %5204 = vmatpush1.msra.mxu0 %v5155
        %5205 = vmatprep.subr.mxu0 0.0
        %5206 = vmatpush1.msra.mxu0 %v5156
        %5207 = vmatprep.subr.mxu0 0.0
        %5208 = vmatpush1.msra.mxu0 %v5157
        %5209 = vmatprep.subr.mxu0 0.0
        %5210 = vmatpush1.msra.mxu0 %v5158
        %5211 = vmatprep.subr.mxu0 0.0
        %5212 = vmatpush1.msra.mxu0 %v5159
        %5213 = vmatprep.subr.mxu0 0.0
        %5214 = vmatpush1.msra.mxu0 0.0
        %5215 = vmatprep.subr.mxu0 0.0
        %5216 = vmatpush1.msra.mxu0 0.0
        %5217 = vmatprep.subr.mxu0 0.0
        %5218 = vmatpush1.msra.mxu0 0.0
        %5219 = vmatprep.subr.mxu0 0.0
        %5220 = vmatpush1.msra.mxu0 0.0
        %5221 = vmatprep.subr.mxu0 0.0
        %5222 = vmatpush1.msra.mxu0 0.0
        %5223 = vmatprep.subr.mxu0 0.0
        %5224 = vmatpush1.msra.mxu0 0.0
        %5225 = vmatprep.subr.mxu0 0.0
        %5226 = vmatpush1.msra.mxu0 0.0
        %5227 = vmatprep.subr.mxu0 0.0
        %5228 = vmatpush1.msra.mxu0 0.0
        %5229 = vmatprep.subr.mxu0 0.0
        %5230 = vmatpush1.msra.mxu0 0.0
        %5231 = vmatprep.subr.mxu0 0.0
        %5232 = vmatpush1.msra.mxu0 0.0
        %5233 = vmatprep.subr.mxu0 0.0
        %5234 = vmatpush1.msra.mxu0 0.0
        %5235 = vmatprep.subr.mxu0 0.0
        %5236 = vmatpush1.msra.mxu0 0.0
        %5237 = vmatprep.subr.mxu0 0.0
        %5238 = vmatpush1.msra.mxu0 0.0
        %5239 = vmatprep.subr.mxu0 0.0
        %5240 = vmatpush1.msra.mxu0 0.0
        %5241 = vmatprep.subr.mxu0 0.0
        %5242 = vmatpush1.msra.mxu0 0.0
        %5243 = vmatprep.subr.mxu0 0.0
        %5244 = vmatpush1.msra.mxu0 0.0
        %5245 = vmatprep.subr.mxu0 0.0
        %5246 = vmatpush1.msra.mxu0 0.0
        %5247 = vmatprep.subr.mxu0 0.0
        %5248 = vmatpush1.msra.mxu0 0.0
        %5249 = vmatprep.subr.mxu0 0.0
        %5250 = vmatpush1.msra.mxu0 0.0
        %5251 = vmatprep.subr.mxu0 0.0
        %5252 = vmatpush1.msra.mxu0 0.0
        %5253 = vmatprep.subr.mxu0 0.0
        %5254 = vmatpush1.msra.mxu0 0.0
        %5255 = vmatprep.subr.mxu0 0.0
        %5256 = vmatpush1.msra.mxu0 0.0
        %5257 = vmatprep.subr.mxu0 0.0
        %5258 = vmatpush1.msra.mxu0 0.0
        %5259 = vmatprep.subr.mxu0 0.0
        %5260 = vmatpush1.msra.mxu0 0.0
        %5261 = vmatprep.mubr.f32.mxu0 0.0
        %5262 = vmatmul.mubr.f32.gmra.mrb[0].mxu0 %v5183
        %v5263 = vpop.f32.mrb[0].mxu0
        %v5264 = vadd.f32 0.0, %v5263
        %v5265 = vpop.f32.mrb[0].mxu0
        %5266 = vmatprep.mubr.f32.mxu0 0.0
        %5267 = vmatmul.mubr.f32.gmra.mrb[0].mxu0 %v5185
        %v5268 = vpop.f32.mrb[0].mxu0
        %v5269 = vadd.f32 0.0, %v5268
        %v5270 = vpop.f32.mrb[0].mxu0
        %5271 = vmatprep.mubr.f32.mxu0 0.0
        %5272 = vmatmul.mubr.f32.gmra.mrb[0].mxu0 %v5187
        %v5273 = vpop.f32.mrb[0].mxu0
        %v5274 = vadd.f32 0.0, %v5273
        %v5275 = vpop.f32.mrb[0].mxu0
        %5276 = vmatprep.mubr.f32.mxu0 0.0
        %5277 = vmatmul.mubr.f32.gmra.mrb[0].mxu0 %v5189
        %v5278 = vpop.f32.mrb[0].mxu0
        %v5279 = vadd.f32 0.0, %v5278
        %v5280 = vpop.f32.mrb[0].mxu0
        %5281 = vmatprep.mubr.f32.mxu0 0.0
        %5282 = vmatmul.mubr.f32.gmra.mrb[0].mxu0 %v5191
        %v5283 = vpop.f32.mrb[0].mxu0
        %v5284 = vadd.f32 0.0, %v5283
        %v5285 = vpop.f32.mrb[0].mxu0
        %5286 = vmatprep.mubr.f32.mxu0 0.0
        %5287 = vmatmul.mubr.f32.gmra.mrb[0].mxu0 %v5193
        %v5288 = vpop.f32.mrb[0].mxu0
        %v5289 = vadd.f32 0.0, %v5288
        %v5290 = vpop.f32.mrb[0].mxu0
        %5291 = vmatprep.mubr.f32.mxu0 0.0
        %5292 = vmatmul.mubr.f32.gmra.mrb[0].mxu0 %v5195
        %v5293 = vpop.f32.mrb[0].mxu0
        %v5294 = vadd.f32 0.0, %v5293
        %v5295 = vpop.f32.mrb[0].mxu0
        %5296 = vdwg.mxu0
        %v5298 = vrot.slane %v5130, 6
        %v5299 = vsel %vm2447, %v5298, %v5168
        %v5300 = vsel %vm1069, %v5299, 0
        %5302 = vmatprep.subr.mxu0 0.0
        %5303 = vmatpush1.msra.mxu0 %v5143
        %5304 = vmatprep.subr.mxu0 0.0
        %5305 = vmatpush1.msra.mxu0 %v5144
        %5306 = vmatprep.subr.mxu0 0.0
        %5307 = vmatpush1.msra.mxu0 %v5145
        %5308 = vmatprep.subr.mxu0 0.0
        %5309 = vmatpush1.msra.mxu0 %v5146
        %5310 = vmatprep.subr.mxu0 0.0
        %5311 = vmatpush1.msra.mxu0 %v5147
        %5312 = vmatprep.subr.mxu0 0.0
        %5313 = vmatpush1.msra.mxu0 %v5148
        %5314 = vmatprep.subr.mxu0 0.0
        %5315 = vmatpush1.msra.mxu0 %v5149
        %5316 = vmatprep.subr.mxu0 0.0
        %5317 = vmatpush1.msra.mxu0 %v5150
        %5318 = vmatprep.subr.mxu0 0.0
        %5319 = vmatpush1.msra.mxu0 0.0
        %5320 = vmatprep.subr.mxu0 0.0
        %5321 = vmatpush1.msra.mxu0 0.0
        %5322 = vmatprep.subr.mxu0 0.0
        %5323 = vmatpush1.msra.mxu0 0.0
        %5324 = vmatprep.subr.mxu0 0.0
        %5325 = vmatpush1.msra.mxu0 0.0
        %5326 = vmatprep.subr.mxu0 0.0
        %5327 = vmatpush1.msra.mxu0 0.0
        %5328 = vmatprep.subr.mxu0 0.0
        %5329 = vmatpush1.msra.mxu0 0.0
        %5330 = vmatprep.subr.mxu0 0.0
        %5331 = vmatpush1.msra.mxu0 0.0
        %5332 = vmatprep.subr.mxu0 0.0
        %5333 = vmatpush1.msra.mxu0 0.0
        %5334 = vmatprep.subr.mxu0 0.0
        %5335 = vmatpush1.msra.mxu0 0.0
        %5336 = vmatprep.subr.mxu0 0.0
        %5337 = vmatpush1.msra.mxu0 0.0
        %5338 = vmatprep.subr.mxu0 0.0
        %5339 = vmatpush1.msra.mxu0 0.0
        %5340 = vmatprep.subr.mxu0 0.0
        %5341 = vmatpush1.msra.mxu0 0.0
        %5342 = vmatprep.subr.mxu0 0.0
        %5343 = vmatpush1.msra.mxu0 0.0
        %5344 = vmatprep.subr.mxu0 0.0
        %5345 = vmatpush1.msra.mxu0 0.0
        %5346 = vmatprep.subr.mxu0 0.0
        %5347 = vmatpush1.msra.mxu0 0.0
        %5348 = vmatprep.subr.mxu0 0.0
        %5349 = vmatpush1.msra.mxu0 0.0
        %5350 = vmatprep.subr.mxu0 0.0
        %5351 = vmatpush1.msra.mxu0 0.0
        %5352 = vmatprep.subr.mxu0 0.0
        %5353 = vmatpush1.msra.mxu0 0.0
        %5354 = vmatprep.subr.mxu0 0.0
        %5355 = vmatpush1.msra.mxu0 0.0
        %5356 = vmatprep.subr.mxu0 0.0
        %5357 = vmatpush1.msra.mxu0 0.0
        %5358 = vmatprep.subr.mxu0 0.0
        %5359 = vmatpush1.msra.mxu0 0.0
        %5360 = vmatprep.subr.mxu0 0.0
        %5361 = vmatpush1.msra.mxu0 0.0
        %5362 = vmatprep.subr.mxu0 0.0
        %5363 = vmatpush1.msra.mxu0 0.0
        %5364 = vmatprep.subr.mxu0 0.0
        %5365 = vmatpush1.msra.mxu0 0.0
        %5366 = vmatprep.mubr.f32.mxu0 0.0
        %5367 = vmatmul.mubr.f32.gmra.mrb[0].mxu0 %v5300
        %v5368 = vpop.f32.mrb[0].mxu0
        %v5369 = vadd.f32 %v5264, %v5368
        %v5370 = vpop.f32.mrb[0].mxu0
        %5371 = vmatprep.mubr.f32.mxu0 0.0
        %5372 = vmatmul.mubr.f32.gmra.mrb[0].mxu0 %v5183
        %v5373 = vpop.f32.mrb[0].mxu0
        %v5374 = vadd.f32 %v5269, %v5373
        %v5375 = vpop.f32.mrb[0].mxu0
        %5376 = vmatprep.mubr.f32.mxu0 0.0
        %5377 = vmatmul.mubr.f32.gmra.mrb[0].mxu0 %v5185
        %v5378 = vpop.f32.mrb[0].mxu0
        %v5379 = vadd.f32 %v5274, %v5378
        %v5380 = vpop.f32.mrb[0].mxu0
        %5381 = vmatprep.mubr.f32.mxu0 0.0
        %5382 = vmatmul.mubr.f32.gmra.mrb[0].mxu0 %v5187
        %v5383 = vpop.f32.mrb[0].mxu0
        %v5384 = vadd.f32 %v5279, %v5383
        %v5385 = vpop.f32.mrb[0].mxu0
        %5386 = vmatprep.mubr.f32.mxu0 0.0
        %5387 = vmatmul.mubr.f32.gmra.mrb[0].mxu0 %v5189
        %v5388 = vpop.f32.mrb[0].mxu0
        %v5389 = vadd.f32 %v5284, %v5388
        %v5390 = vpop.f32.mrb[0].mxu0
        %5391 = vmatprep.mubr.f32.mxu0 0.0
        %5392 = vmatmul.mubr.f32.gmra.mrb[0].mxu0 %v5191
        %v5393 = vpop.f32.mrb[0].mxu0
        %v5394 = vadd.f32 %v5289, %v5393
        %v5395 = vpop.f32.mrb[0].mxu0
        %5396 = vmatprep.mubr.f32.mxu0 0.0
        %5397 = vmatmul.mubr.f32.gmra.mrb[0].mxu0 %v5193
        %v5398 = vpop.f32.mrb[0].mxu0
        %v5399 = vadd.f32 %v5294, %v5398
        %v5400 = vpop.f32.mrb[0].mxu0
        %5401 = vdwg.mxu0
        %s5402 = scalar_lea.vmem [#allocation2], 1088
        %v5403 = vld [vmem:[%s5402] sm:$0xff]
        %v5404 = vld [vmem:[%s5402 + $0x8] sm:$0xff]
        %v5405 = vld [vmem:[%s5402 + $0x10] sm:$0xff]
        %v5406 = vld [vmem:[%s5402 + $0x18] sm:$0xff]
        %v5407 = vld [vmem:[%s5402 + $0x20] sm:$0xff]
        %v5408 = vld [vmem:[%s5402 + $0x28] sm:$0xff]
        %v5409 = vld [vmem:[%s5402 + $0x30] sm:$0xff]
        %v5410 = vld [vmem:[%s5402 + $0x38] sm:$0xff]
        %v5412 = vrot.slane %v5139, 6
        %v5413 = vsel %vm2447, %v5181, %v5412
        %v5414 = vsel %vm1069, %v5413, 0
        %5416 = vmatprep.subr.mxu0 0.0
        %5417 = vmatpush1.msra.mxu0 %v5403
        %5418 = vmatprep.subr.mxu0 0.0
        %5419 = vmatpush1.msra.mxu0 %v5404
        %5420 = vmatprep.subr.mxu0 0.0
        %5421 = vmatpush1.msra.mxu0 %v5405
        %5422 = vmatprep.subr.mxu0 0.0
        %5423 = vmatpush1.msra.mxu0 %v5406
        %5424 = vmatprep.subr.mxu0 0.0
        %5425 = vmatpush1.msra.mxu0 %v5407
        %5426 = vmatprep.subr.mxu0 0.0
        %5427 = vmatpush1.msra.mxu0 %v5408
        %5428 = vmatprep.subr.mxu0 0.0
        %5429 = vmatpush1.msra.mxu0 %v5409
        %5430 = vmatprep.subr.mxu0 0.0
        %5431 = vmatpush1.msra.mxu0 %v5410
        %5432 = vmatprep.subr.mxu0 0.0
        %5433 = vmatpush1.msra.mxu0 0.0
        %5434 = vmatprep.subr.mxu0 0.0
        %5435 = vmatpush1.msra.mxu0 0.0
        %5436 = vmatprep.subr.mxu0 0.0
        %5437 = vmatpush1.msra.mxu0 0.0
        %5438 = vmatprep.subr.mxu0 0.0
        %5439 = vmatpush1.msra.mxu0 0.0
        %5440 = vmatprep.subr.mxu0 0.0
        %5441 = vmatpush1.msra.mxu0 0.0
        %5442 = vmatprep.subr.mxu0 0.0
        %5443 = vmatpush1.msra.mxu0 0.0
        %5444 = vmatprep.subr.mxu0 0.0
        %5445 = vmatpush1.msra.mxu0 0.0
        %5446 = vmatprep.subr.mxu0 0.0
        %5447 = vmatpush1.msra.mxu0 0.0
        %5448 = vmatprep.subr.mxu0 0.0
        %5449 = vmatpush1.msra.mxu0 0.0
        %5450 = vmatprep.subr.mxu0 0.0
        %5451 = vmatpush1.msra.mxu0 0.0
        %5452 = vmatprep.subr.mxu0 0.0
        %5453 = vmatpush1.msra.mxu0 0.0
        %5454 = vmatprep.subr.mxu0 0.0
        %5455 = vmatpush1.msra.mxu0 0.0
        %5456 = vmatprep.subr.mxu0 0.0
        %5457 = vmatpush1.msra.mxu0 0.0
        %5458 = vmatprep.subr.mxu0 0.0
        %5459 = vmatpush1.msra.mxu0 0.0
        %5460 = vmatprep.subr.mxu0 0.0
        %5461 = vmatpush1.msra.mxu0 0.0
        %5462 = vmatprep.subr.mxu0 0.0
        %5463 = vmatpush1.msra.mxu0 0.0
        %5464 = vmatprep.subr.mxu0 0.0
        %5465 = vmatpush1.msra.mxu0 0.0
        %5466 = vmatprep.subr.mxu0 0.0
        %5467 = vmatpush1.msra.mxu0 0.0
        %5468 = vmatprep.subr.mxu0 0.0
        %5469 = vmatpush1.msra.mxu0 0.0
        %5470 = vmatprep.subr.mxu0 0.0
        %5471 = vmatpush1.msra.mxu0 0.0
        %5472 = vmatprep.subr.mxu0 0.0
        %5473 = vmatpush1.msra.mxu0 0.0
        %5474 = vmatprep.subr.mxu0 0.0
        %5475 = vmatpush1.msra.mxu0 0.0
        %5476 = vmatprep.subr.mxu0 0.0
        %5477 = vmatpush1.msra.mxu0 0.0
        %5478 = vmatprep.subr.mxu0 0.0
        %5479 = vmatpush1.msra.mxu0 0.0
        %5480 = vmatprep.mubr.f32.mxu0 0.0
        %5481 = vmatmul.mubr.f32.gmra.mrb[0].mxu0 %v5185
        %v5482 = vpop.f32.mrb[0].mxu0
        %v5483 = vadd.f32 0.0, %v5482
        %v5484 = vpop.f32.mrb[0].mxu0
        %5485 = vmatprep.mubr.f32.mxu0 0.0
        %5486 = vmatmul.mubr.f32.gmra.mrb[0].mxu0 %v5187
        %v5487 = vpop.f32.mrb[0].mxu0
        %v5488 = vadd.f32 0.0, %v5487
        %v5489 = vpop.f32.mrb[0].mxu0
        %5490 = vmatprep.mubr.f32.mxu0 0.0
        %5491 = vmatmul.mubr.f32.gmra.mrb[0].mxu0 %v5189
        %v5492 = vpop.f32.mrb[0].mxu0
        %v5493 = vadd.f32 0.0, %v5492
        %v5494 = vpop.f32.mrb[0].mxu0
        %5495 = vmatprep.mubr.f32.mxu0 0.0
        %5496 = vmatmul.mubr.f32.gmra.mrb[0].mxu0 %v5191
        %v5497 = vpop.f32.mrb[0].mxu0
        %v5498 = vadd.f32 0.0, %v5497
        %v5499 = vpop.f32.mrb[0].mxu0
        %5500 = vmatprep.mubr.f32.mxu0 0.0
        %5501 = vmatmul.mubr.f32.gmra.mrb[0].mxu0 %v5193
        %v5502 = vpop.f32.mrb[0].mxu0
        %v5503 = vadd.f32 0.0, %v5502
        %v5504 = vpop.f32.mrb[0].mxu0
        %5505 = vmatprep.mubr.f32.mxu0 0.0
        %5506 = vmatmul.mubr.f32.gmra.mrb[0].mxu0 %v5195
        %v5507 = vpop.f32.mrb[0].mxu0
        %v5508 = vadd.f32 0.0, %v5507
        %v5509 = vpop.f32.mrb[0].mxu0
        %5510 = vmatprep.mubr.f32.mxu0 0.0
        %5511 = vmatmul.mubr.f32.gmra.mrb[0].mxu0 %v5414
        %v5512 = vpop.f32.mrb[0].mxu0
        %v5513 = vadd.f32 0.0, %v5512
        %v5514 = vpop.f32.mrb[0].mxu0
        %5515 = vdwg.mxu0
        %v5516 = vadd.f32 %v5369, %v5483
        %v5517 = vadd.f32 %v5374, %v5488
        %v5518 = vadd.f32 %v5379, %v5493
        %v5519 = vadd.f32 %v5384, %v5498
        %v5520 = vadd.f32 %v5389, %v5503
        %v5521 = vadd.f32 %v5394, %v5508
        %v5522 = vadd.f32 %v5399, %v5513
        %s5523 = scalar_lea.vmem [#allocation2], 1152
        %v5524 = vld [vmem:[%s5523] sm:$0xff]
        %v5525 = vld [vmem:[%s5523 + $0x8] sm:$0xff]
        %v5526 = vld [vmem:[%s5523 + $0x10] sm:$0xff]
        %v5527 = vld [vmem:[%s5523 + $0x18] sm:$0xff]
        %v5528 = vld [vmem:[%s5523 + $0x20] sm:$0xff]
        %v5529 = vld [vmem:[%s5523 + $0x28] sm:$0xff]
        %v5530 = vld [vmem:[%s5523 + $0x30] sm:$0xff]
        %v5531 = vld [vmem:[%s5523 + $0x38] sm:$0xff]
        %v5533 = vrot.slane %v5140, 6
        %v5534 = vsel %vm2447, %v5412, %v5533
        %v5535 = vsel %vm1069, %v5534, 0
        %5537 = vmatprep.subr.mxu0 0.0
        %5538 = vmatpush1.msra.mxu0 %v5524
        %5539 = vmatprep.subr.mxu0 0.0
        %5540 = vmatpush1.msra.mxu0 %v5525
        %5541 = vmatprep.subr.mxu0 0.0
        %5542 = vmatpush1.msra.mxu0 %v5526
        %5543 = vmatprep.subr.mxu0 0.0
        %5544 = vmatpush1.msra.mxu0 %v5527
        %5545 = vmatprep.subr.mxu0 0.0
        %5546 = vmatpush1.msra.mxu0 %v5528
        %5547 = vmatprep.subr.mxu0 0.0
        %5548 = vmatpush1.msra.mxu0 %v5529
        %5549 = vmatprep.subr.mxu0 0.0
        %5550 = vmatpush1.msra.mxu0 %v5530
        %5551 = vmatprep.subr.mxu0 0.0
        %5552 = vmatpush1.msra.mxu0 %v5531
        %5553 = vmatprep.subr.mxu0 0.0
        %5554 = vmatpush1.msra.mxu0 0.0
        %5555 = vmatprep.subr.mxu0 0.0
        %5556 = vmatpush1.msra.mxu0 0.0
        %5557 = vmatprep.subr.mxu0 0.0
        %5558 = vmatpush1.msra.mxu0 0.0
        %5559 = vmatprep.subr.mxu0 0.0
        %5560 = vmatpush1.msra.mxu0 0.0
        %5561 = vmatprep.subr.mxu0 0.0
        %5562 = vmatpush1.msra.mxu0 0.0
        %5563 = vmatprep.subr.mxu0 0.0
        %5564 = vmatpush1.msra.mxu0 0.0
        %5565 = vmatprep.subr.mxu0 0.0
        %5566 = vmatpush1.msra.mxu0 0.0
        %5567 = vmatprep.subr.mxu0 0.0
        %5568 = vmatpush1.msra.mxu0 0.0
        %5569 = vmatprep.subr.mxu0 0.0
        %5570 = vmatpush1.msra.mxu0 0.0
        %5571 = vmatprep.subr.mxu0 0.0
        %5572 = vmatpush1.msra.mxu0 0.0
        %5573 = vmatprep.subr.mxu0 0.0
        %5574 = vmatpush1.msra.mxu0 0.0
        %5575 = vmatprep.subr.mxu0 0.0
        %5576 = vmatpush1.msra.mxu0 0.0
        %5577 = vmatprep.subr.mxu0 0.0
        %5578 = vmatpush1.msra.mxu0 0.0
        %5579 = vmatprep.subr.mxu0 0.0
        %5580 = vmatpush1.msra.mxu0 0.0
        %5581 = vmatprep.subr.mxu0 0.0
        %5582 = vmatpush1.msra.mxu0 0.0
        %5583 = vmatprep.subr.mxu0 0.0
        %5584 = vmatpush1.msra.mxu0 0.0
        %5585 = vmatprep.subr.mxu0 0.0
        %5586 = vmatpush1.msra.mxu0 0.0
        %5587 = vmatprep.subr.mxu0 0.0
        %5588 = vmatpush1.msra.mxu0 0.0
        %5589 = vmatprep.subr.mxu0 0.0
        %5590 = vmatpush1.msra.mxu0 0.0
        %5591 = vmatprep.subr.mxu0 0.0
        %5592 = vmatpush1.msra.mxu0 0.0
        %5593 = vmatprep.subr.mxu0 0.0
        %5594 = vmatpush1.msra.mxu0 0.0
        %5595 = vmatprep.subr.mxu0 0.0
        %5596 = vmatpush1.msra.mxu0 0.0
        %5597 = vmatprep.subr.mxu0 0.0
        %5598 = vmatpush1.msra.mxu0 0.0
        %5599 = vmatprep.subr.mxu0 0.0
        %5600 = vmatpush1.msra.mxu0 0.0
        %5601 = vmatprep.mubr.f32.mxu0 0.0
        %5602 = vmatmul.mubr.f32.gmra.mrb[0].mxu0 %v5187
        %v5603 = vpop.f32.mrb[0].mxu0
        %v5604 = vadd.f32 0.0, %v5603
        %v5605 = vpop.f32.mrb[0].mxu0
        %5606 = vmatprep.mubr.f32.mxu0 0.0
        %5607 = vmatmul.mubr.f32.gmra.mrb[0].mxu0 %v5189
        %v5608 = vpop.f32.mrb[0].mxu0
        %v5609 = vadd.f32 0.0, %v5608
        %v5610 = vpop.f32.mrb[0].mxu0
        %5611 = vmatprep.mubr.f32.mxu0 0.0
        %5612 = vmatmul.mubr.f32.gmra.mrb[0].mxu0 %v5191
        %v5613 = vpop.f32.mrb[0].mxu0
        %v5614 = vadd.f32 0.0, %v5613
        %v5615 = vpop.f32.mrb[0].mxu0
        %5616 = vmatprep.mubr.f32.mxu0 0.0
        %5617 = vmatmul.mubr.f32.gmra.mrb[0].mxu0 %v5193
        %v5618 = vpop.f32.mrb[0].mxu0
        %v5619 = vadd.f32 0.0, %v5618
        %v5620 = vpop.f32.mrb[0].mxu0
        %5621 = vmatprep.mubr.f32.mxu0 0.0
        %5622 = vmatmul.mubr.f32.gmra.mrb[0].mxu0 %v5195
        %v5623 = vpop.f32.mrb[0].mxu0
        %v5624 = vadd.f32 0.0, %v5623
        %v5625 = vpop.f32.mrb[0].mxu0
        %5626 = vmatprep.mubr.f32.mxu0 0.0
        %5627 = vmatmul.mubr.f32.gmra.mrb[0].mxu0 %v5414
        %v5628 = vpop.f32.mrb[0].mxu0
        %v5629 = vadd.f32 0.0, %v5628
        %v5630 = vpop.f32.mrb[0].mxu0
        %5631 = vmatprep.mubr.f32.mxu0 0.0
        %5632 = vmatmul.mubr.f32.gmra.mrb[0].mxu0 %v5535
        %v5633 = vpop.f32.mrb[0].mxu0
        %v5634 = vadd.f32 0.0, %v5633
        %v5635 = vpop.f32.mrb[0].mxu0
        %5636 = vdwg.mxu0
        %v5637 = vadd.f32 %v5516, %v5604
        %v5638 = vadd.f32 %v5517, %v5609
        %v5639 = vadd.f32 %v5518, %v5614
        %v5640 = vadd.f32 %v5519, %v5619
        %v5641 = vadd.f32 %v5520, %v5624
        %v5642 = vadd.f32 %v5521, %v5629
        %v5643 = vadd.f32 %v5522, %v5634
        %s5644 = scalar_lea.vmem [#allocation2], 1216
        %v5645 = vld [vmem:[%s5644] sm:$0xff]
        %v5646 = vld [vmem:[%s5644 + $0x8] sm:$0xff]
        %v5647 = vld [vmem:[%s5644 + $0x10] sm:$0xff]
        %v5648 = vld [vmem:[%s5644 + $0x18] sm:$0xff]
        %v5649 = vld [vmem:[%s5644 + $0x20] sm:$0xff]
        %v5650 = vld [vmem:[%s5644 + $0x28] sm:$0xff]
        %v5651 = vld [vmem:[%s5644 + $0x30] sm:$0xff]
        %v5652 = vld [vmem:[%s5644 + $0x38] sm:$0xff]
        %v5654 = vrot.slane %v5141, 6
        %v5655 = vsel %vm2447, %v5533, %v5654
        %v5656 = vsel %vm1069, %v5655, 0
        %5658 = vmatprep.subr.mxu0 0.0
        %5659 = vmatpush1.msra.mxu0 %v5645
        %5660 = vmatprep.subr.mxu0 0.0
        %5661 = vmatpush1.msra.mxu0 %v5646
        %5662 = vmatprep.subr.mxu0 0.0
        %5663 = vmatpush1.msra.mxu0 %v5647
        %5664 = vmatprep.subr.mxu0 0.0
        %5665 = vmatpush1.msra.mxu0 %v5648
        %5666 = vmatprep.subr.mxu0 0.0
        %5667 = vmatpush1.msra.mxu0 %v5649
        %5668 = vmatprep.subr.mxu0 0.0
        %5669 = vmatpush1.msra.mxu0 %v5650
        %5670 = vmatprep.subr.mxu0 0.0
        %5671 = vmatpush1.msra.mxu0 %v5651
        %5672 = vmatprep.subr.mxu0 0.0
        %5673 = vmatpush1.msra.mxu0 %v5652
        %5674 = vmatprep.subr.mxu0 0.0
        %5675 = vmatpush1.msra.mxu0 0.0
        %5676 = vmatprep.subr.mxu0 0.0
        %5677 = vmatpush1.msra.mxu0 0.0
        %5678 = vmatprep.subr.mxu0 0.0
        %5679 = vmatpush1.msra.mxu0 0.0
        %5680 = vmatprep.subr.mxu0 0.0
        %5681 = vmatpush1.msra.mxu0 0.0
        %5682 = vmatprep.subr.mxu0 0.0
        %5683 = vmatpush1.msra.mxu0 0.0
        %5684 = vmatprep.subr.mxu0 0.0
        %5685 = vmatpush1.msra.mxu0 0.0
        %5686 = vmatprep.subr.mxu0 0.0
        %5687 = vmatpush1.msra.mxu0 0.0
        %5688 = vmatprep.subr.mxu0 0.0
        %5689 = vmatpush1.msra.mxu0 0.0
        %5690 = vmatprep.subr.mxu0 0.0
        %5691 = vmatpush1.msra.mxu0 0.0
        %5692 = vmatprep.subr.mxu0 0.0
        %5693 = vmatpush1.msra.mxu0 0.0
        %5694 = vmatprep.subr.mxu0 0.0
        %5695 = vmatpush1.msra.mxu0 0.0
        %5696 = vmatprep.subr.mxu0 0.0
        %5697 = vmatpush1.msra.mxu0 0.0
        %5698 = vmatprep.subr.mxu0 0.0
        %5699 = vmatpush1.msra.mxu0 0.0
        %5700 = vmatprep.subr.mxu0 0.0
        %5701 = vmatpush1.msra.mxu0 0.0
        %5702 = vmatprep.subr.mxu0 0.0
        %5703 = vmatpush1.msra.mxu0 0.0
        %5704 = vmatprep.subr.mxu0 0.0
        %5705 = vmatpush1.msra.mxu0 0.0
        %5706 = vmatprep.subr.mxu0 0.0
        %5707 = vmatpush1.msra.mxu0 0.0
        %5708 = vmatprep.subr.mxu0 0.0
        %5709 = vmatpush1.msra.mxu0 0.0
        %5710 = vmatprep.subr.mxu0 0.0
        %5711 = vmatpush1.msra.mxu0 0.0
        %5712 = vmatprep.subr.mxu0 0.0
        %5713 = vmatpush1.msra.mxu0 0.0
        %5714 = vmatprep.subr.mxu0 0.0
        %5715 = vmatpush1.msra.mxu0 0.0
        %5716 = vmatprep.subr.mxu0 0.0
        %5717 = vmatpush1.msra.mxu0 0.0
        %5718 = vmatprep.subr.mxu0 0.0
        %5719 = vmatpush1.msra.mxu0 0.0
        %5720 = vmatprep.subr.mxu0 0.0
        %5721 = vmatpush1.msra.mxu0 0.0
        %5722 = vmatprep.mubr.f32.mxu0 0.0
        %5723 = vmatmul.mubr.f32.gmra.mrb[0].mxu0 %v5189
        %v5724 = vpop.f32.mrb[0].mxu0
        %v5725 = vadd.f32 0.0, %v5724
        %v5726 = vpop.f32.mrb[0].mxu0
        %5727 = vmatprep.mubr.f32.mxu0 0.0
        %5728 = vmatmul.mubr.f32.gmra.mrb[0].mxu0 %v5191
        %v5729 = vpop.f32.mrb[0].mxu0
        %v5730 = vadd.f32 0.0, %v5729
        %v5731 = vpop.f32.mrb[0].mxu0
        %5732 = vmatprep.mubr.f32.mxu0 0.0
        %5733 = vmatmul.mubr.f32.gmra.mrb[0].mxu0 %v5193
        %v5734 = vpop.f32.mrb[0].mxu0
        %v5735 = vadd.f32 0.0, %v5734
        %v5736 = vpop.f32.mrb[0].mxu0
        %5737 = vmatprep.mubr.f32.mxu0 0.0
        %5738 = vmatmul.mubr.f32.gmra.mrb[0].mxu0 %v5195
        %v5739 = vpop.f32.mrb[0].mxu0
        %v5740 = vadd.f32 0.0, %v5739
        %v5741 = vpop.f32.mrb[0].mxu0
        %5742 = vmatprep.mubr.f32.mxu0 0.0
        %5743 = vmatmul.mubr.f32.gmra.mrb[0].mxu0 %v5414
        %v5744 = vpop.f32.mrb[0].mxu0
        %v5745 = vadd.f32 0.0, %v5744
        %v5746 = vpop.f32.mrb[0].mxu0
        %5747 = vmatprep.mubr.f32.mxu0 0.0
        %5748 = vmatmul.mubr.f32.gmra.mrb[0].mxu0 %v5535
        %v5749 = vpop.f32.mrb[0].mxu0
        %v5750 = vadd.f32 0.0, %v5749
        %v5751 = vpop.f32.mrb[0].mxu0
        %5752 = vmatprep.mubr.f32.mxu0 0.0
        %5753 = vmatmul.mubr.f32.gmra.mrb[0].mxu0 %v5656
        %v5754 = vpop.f32.mrb[0].mxu0
        %v5755 = vadd.f32 0.0, %v5754
        %v5756 = vpop.f32.mrb[0].mxu0
        %5757 = vdwg.mxu0
        %v5758 = vadd.f32 %v5637, %v5725
        %v5759 = vadd.f32 %v5638, %v5730
        %v5760 = vadd.f32 %v5639, %v5735
        %v5761 = vadd.f32 %v5640, %v5740
        %v5762 = vadd.f32 %v5641, %v5745
        %v5763 = vadd.f32 %v5642, %v5750
        %v5764 = vadd.f32 %v5643, %v5755
        %s5765 = scalar_lea.vmem %s6, 3
        %v5766 = vld [vmem:[%s5765] sm:$0x1]
        %v5768 = vlaneseq
        %v5769 = vshrl.u32 %v5768, 7
        %v5770 = vsub.s32 0, %v5769
        %v5771 = vrot.slane %v5766, %v5770
        %v5773 = vadd.f32 %v5758, %v5771
        %v5774 = vadd.f32 %v5759, %v5771
        %v5775 = vadd.f32 %v5760, %v5771
        %v5776 = vadd.f32 %v5761, %v5771
        %v5777 = vadd.f32 %v5762, %v5771
        %v5778 = vadd.f32 %v5763, %v5771
        %v5779 = vadd.f32 %v5764, %v5771
        %v5780 = vtanh.pop %v5773
        %v5781 = vtanh.pop %v5774
        %v5782 = vtanh.pop %v5775
        %v5783 = vtanh.pop %v5776
        %v5784 = vtanh.pop %v5777
        %v5785 = vtanh.pop %v5778
        %v5786 = vtanh.pop %v5779
        %v5787 = vxor.u32 %v5773, 2147483648
        %v5788 = vxor.u32 %v5774, 2147483648
        %v5789 = vxor.u32 %v5775, 2147483648
        %v5790 = vxor.u32 %v5776, 2147483648
        %v5791 = vxor.u32 %v5777, 2147483648
        %v5792 = vxor.u32 %v5778, 2147483648
        %v5793 = vxor.u32 %v5779, 2147483648
        %v5794 = vmul.f32 %v5787, 1.442695
        %v5795 = vpow.pop %v5794
        %v5796 = vmul.f32 %v5788, 1.442695
        %v5797 = vpow.pop %v5796
        %v5798 = vmul.f32 %v5789, 1.442695
        %v5799 = vpow.pop %v5798
        %v5800 = vmul.f32 %v5790, 1.442695
        %v5801 = vpow.pop %v5800
        %v5802 = vmul.f32 %v5791, 1.442695
        %v5803 = vpow.pop %v5802
        %v5804 = vmul.f32 %v5792, 1.442695
        %v5805 = vpow.pop %v5804
        %v5806 = vmul.f32 %v5793, 1.442695
        %v5807 = vpow.pop %v5806
        %v5808 = vadd.f32 %v5795, 1.0
        %v5809 = vadd.f32 %v5797, 1.0
        %v5810 = vadd.f32 %v5799, 1.0
        %v5811 = vadd.f32 %v5801, 1.0
        %v5812 = vadd.f32 %v5803, 1.0
        %v5813 = vadd.f32 %v5805, 1.0
        %v5814 = vadd.f32 %v5807, 1.0
        %v5815 = vrcp.pop %v5808
        %v5816 = vmul.f32 1.0, %v5815
        %v5817 = vrcp.pop %v5809
        %v5818 = vmul.f32 1.0, %v5817
        %v5819 = vrcp.pop %v5810
        %v5820 = vmul.f32 1.0, %v5819
        %v5821 = vrcp.pop %v5811
        %v5822 = vmul.f32 1.0, %v5821
        %v5823 = vrcp.pop %v5812
        %v5824 = vmul.f32 1.0, %v5823
        %v5825 = vrcp.pop %v5813
        %v5826 = vmul.f32 1.0, %v5825
        %v5827 = vrcp.pop %v5814
        %v5828 = vmul.f32 1.0, %v5827
        %5836 = vrot.lane.b32.xlu0 %v5816, 64
        %v5837 = vpop.permute.xlu0 %5836
        %5838 = vrot.lane.b32.xlu0 %v5818, 64
        %v5839 = vpop.permute.xlu0 %5838
        %5840 = vrot.lane.b32.xlu0 %v5820, 64
        %v5841 = vpop.permute.xlu0 %5840
        %5842 = vrot.lane.b32.xlu0 %v5822, 64
        %v5843 = vpop.permute.xlu0 %5842
        %5844 = vrot.lane.b32.xlu0 %v5824, 64
        %v5845 = vpop.permute.xlu0 %5844
        %5846 = vrot.lane.b32.xlu0 %v5826, 64
        %v5847 = vpop.permute.xlu0 %5846
        %5848 = vrot.lane.b32.xlu0 %v5828, 64
        %v5849 = vpop.permute.xlu0 %5848
        %v5857 = vmul.f32 %v5780, %v5837
        %v5858 = vmul.f32 %v5781, %v5839
        %v5859 = vmul.f32 %v5782, %v5841
        %v5860 = vmul.f32 %v5783, %v5843
        %v5861 = vmul.f32 %v5784, %v5845
        %v5862 = vmul.f32 %v5785, %v5847
        %v5863 = vmul.f32 %v5786, %v5849
        %s5864 = scalar_lea.vmem %s7, 192
        %v5865 = vld [vmem:[%s5864] sm:$0xff]
        %v5866 = vld [vmem:[%s5864 + $0x8] sm:$0xff]
        %v5867 = vld [vmem:[%s5864 + $0x10] sm:$0xff]
        %v5868 = vld [vmem:[%s5864 + $0x18] sm:$0xff]
        %v5869 = vld [vmem:[%s5864 + $0x20] sm:$0xff]
        %v5870 = vld [vmem:[%s5864 + $0x28] sm:$0xff]
        %v5871 = vld [vmem:[%s5864 + $0x30] sm:$0xff]
        %v5872 = vld [vmem:[%s5864 + $0x38] sm:$0xff]
        %s5873 = scalar_lea.vmem %s8, 3
        %v5874 = vld [vmem:[%s5873] sm:$0x1]
        %v5876 = vlaneseq
        %v5877 = vshrl.u32 %v5876, 7
        %v5878 = vsub.s32 0, %v5877
        %v5879 = vrot.slane %v5874, %v5878
        %v5882 = vsel %vm1069, %v5857, 0
        %v5885 = vsel %vm1069, %v5858, 0
        %v5888 = vsel %vm1069, %v5859, 0
        %v5891 = vsel %vm1069, %v5860, 0
        %v5894 = vsel %vm1069, %v5861, 0
        %v5897 = vsel %vm1069, %v5862, 0
        %v5900 = vsel %vm1069, %v5863, 0
        %5902 = vmatprep.subr.mxu0 0.0
        %5903 = vmatpush1.msra.mxu0 %v5865
        %5904 = vmatprep.subr.mxu0 0.0
        %5905 = vmatpush1.msra.mxu0 %v5866
        %5906 = vmatprep.subr.mxu0 0.0
        %5907 = vmatpush1.msra.mxu0 %v5867
        %5908 = vmatprep.subr.mxu0 0.0
        %5909 = vmatpush1.msra.mxu0 %v5868
        %5910 = vmatprep.subr.mxu0 0.0
        %5911 = vmatpush1.msra.mxu0 %v5869
        %5912 = vmatprep.subr.mxu0 0.0
        %5913 = vmatpush1.msra.mxu0 %v5870
        %5914 = vmatprep.subr.mxu0 0.0
        %5915 = vmatpush1.msra.mxu0 %v5871
        %5916 = vmatprep.subr.mxu0 0.0
        %5917 = vmatpush1.msra.mxu0 %v5872
        %5918 = vmatprep.subr.mxu0 0.0
        %5919 = vmatpush1.msra.mxu0 0.0
        %5920 = vmatprep.subr.mxu0 0.0
        %5921 = vmatpush1.msra.mxu0 0.0
        %5922 = vmatprep.subr.mxu0 0.0
        %5923 = vmatpush1.msra.mxu0 0.0
        %5924 = vmatprep.subr.mxu0 0.0
        %5925 = vmatpush1.msra.mxu0 0.0
        %5926 = vmatprep.subr.mxu0 0.0
        %5927 = vmatpush1.msra.mxu0 0.0
        %5928 = vmatprep.subr.mxu0 0.0
        %5929 = vmatpush1.msra.mxu0 0.0
        %5930 = vmatprep.subr.mxu0 0.0
        %5931 = vmatpush1.msra.mxu0 0.0
        %5932 = vmatprep.subr.mxu0 0.0
        %5933 = vmatpush1.msra.mxu0 0.0
        %5934 = vmatprep.subr.mxu0 0.0
        %5935 = vmatpush1.msra.mxu0 0.0
        %5936 = vmatprep.subr.mxu0 0.0
        %5937 = vmatpush1.msra.mxu0 0.0
        %5938 = vmatprep.subr.mxu0 0.0
        %5939 = vmatpush1.msra.mxu0 0.0
        %5940 = vmatprep.subr.mxu0 0.0
        %5941 = vmatpush1.msra.mxu0 0.0
        %5942 = vmatprep.subr.mxu0 0.0
        %5943 = vmatpush1.msra.mxu0 0.0
        %5944 = vmatprep.subr.mxu0 0.0
        %5945 = vmatpush1.msra.mxu0 0.0
        %5946 = vmatprep.subr.mxu0 0.0
        %5947 = vmatpush1.msra.mxu0 0.0
        %5948 = vmatprep.subr.mxu0 0.0
        %5949 = vmatpush1.msra.mxu0 0.0
        %5950 = vmatprep.subr.mxu0 0.0
        %5951 = vmatpush1.msra.mxu0 0.0
        %5952 = vmatprep.subr.mxu0 0.0
        %5953 = vmatpush1.msra.mxu0 0.0
        %5954 = vmatprep.subr.mxu0 0.0
        %5955 = vmatpush1.msra.mxu0 0.0
        %5956 = vmatprep.subr.mxu0 0.0
        %5957 = vmatpush1.msra.mxu0 0.0
        %5958 = vmatprep.subr.mxu0 0.0
        %5959 = vmatpush1.msra.mxu0 0.0
        %5960 = vmatprep.subr.mxu0 0.0
        %5961 = vmatpush1.msra.mxu0 0.0
        %5962 = vmatprep.subr.mxu0 0.0
        %5963 = vmatpush1.msra.mxu0 0.0
        %5964 = vmatprep.subr.mxu0 0.0
        %5965 = vmatpush1.msra.mxu0 0.0
        %5966 = vmatprep.mubr.f32.mxu0 0.0
        %5967 = vmatmul.mubr.f32.gmra.mrb[0].mxu0 %v5882
        %v5968 = vpop.f32.mrb[0].mxu0
        %v5969 = vadd.f32 %v5879, %v5968
        %v5970 = vpop.f32.mrb[0].mxu0
        %5971 = vmatprep.mubr.f32.mxu0 0.0
        %5972 = vmatmul.mubr.f32.gmra.mrb[0].mxu0 %v5885
        %v5973 = vpop.f32.mrb[0].mxu0
        %v5974 = vadd.f32 %v5879, %v5973
        %v5975 = vpop.f32.mrb[0].mxu0
        %5976 = vmatprep.mubr.f32.mxu0 0.0
        %5977 = vmatmul.mubr.f32.gmra.mrb[0].mxu0 %v5888
        %v5978 = vpop.f32.mrb[0].mxu0
        %v5979 = vadd.f32 %v5879, %v5978
        %v5980 = vpop.f32.mrb[0].mxu0
        %5981 = vmatprep.mubr.f32.mxu0 0.0
        %5982 = vmatmul.mubr.f32.gmra.mrb[0].mxu0 %v5891
        %v5983 = vpop.f32.mrb[0].mxu0
        %v5984 = vadd.f32 %v5879, %v5983
        %v5985 = vpop.f32.mrb[0].mxu0
        %5986 = vmatprep.mubr.f32.mxu0 0.0
        %5987 = vmatmul.mubr.f32.gmra.mrb[0].mxu0 %v5894
        %v5988 = vpop.f32.mrb[0].mxu0
        %v5989 = vadd.f32 %v5879, %v5988
        %v5990 = vpop.f32.mrb[0].mxu0
        %5991 = vmatprep.mubr.f32.mxu0 0.0
        %5992 = vmatmul.mubr.f32.gmra.mrb[0].mxu0 %v5897
        %v5993 = vpop.f32.mrb[0].mxu0
        %v5994 = vadd.f32 %v5879, %v5993
        %v5995 = vpop.f32.mrb[0].mxu0
        %5996 = vmatprep.mubr.f32.mxu0 0.0
        %5997 = vmatmul.mubr.f32.gmra.mrb[0].mxu0 %v5900
        %v5998 = vpop.f32.mrb[0].mxu0
        %v5999 = vadd.f32 %v5879, %v5998
        %v6000 = vpop.f32.mrb[0].mxu0
        %6001 = vdwg.mxu0
        %v6009 = vrot.slane %v5969, 4
        %v6010 = vrot.slane %v5974, 4
        %v6011 = vsel %vm1837, %v6009, %v6010
        %v6012 = vrot.slane %v5979, 4
        %v6013 = vsel %vm1837, %v6010, %v6012
        %v6014 = vrot.slane %v5984, 4
        %v6015 = vsel %vm1837, %v6012, %v6014
        %v6016 = vrot.slane %v5989, 4
        %v6017 = vsel %vm1837, %v6014, %v6016
        %v6018 = vrot.slane %v5994, 4
        %v6019 = vsel %vm1837, %v6016, %v6018
        %v6020 = vrot.slane %v5999, 4
        %v6021 = vsel %vm1837, %v6018, %v6020
        %v6030 = vadd.f32 %v5073, %v6009
        %v6031 = vadd.f32 %v5074, %v6011
        %v6032 = vadd.f32 %v5075, %v6013
        %v6033 = vadd.f32 %v5076, %v6015
        %v6034 = vadd.f32 %v5077, %v6017
        %v6035 = vadd.f32 %v5078, %v6019
        %v6036 = vadd.f32 %v5079, %v6021
        %v6037 = vadd.f32 %v5080, %v6020
        %v6038 = vrot.slane %v935, 2
        %v6039 = vrot.slane %v940, 2
        %v6040 = vsel %vm1405, %v6038, %v6039
        %v6041 = vrot.slane %v945, 2
        %v6042 = vsel %vm1405, %v6039, %v6041
        %v6043 = vrot.slane %v950, 2
        %v6044 = vsel %vm1405, %v6041, %v6043
        %v6045 = vrot.slane %v955, 2
        %v6046 = vsel %vm1405, %v6043, %v6045
        %v6047 = vrot.slane %v960, 2
        %v6048 = vsel %vm1405, %v6045, %v6047
        %v6049 = vrot.slane %v965, 2
        %v6050 = vsel %vm1405, %v6047, %v6049
        %v6051 = vrot.slane %v970, 2
        %v6052 = vsel %vm1405, %v6049, %v6051
        %v6061 = vmul.f32 %v6030, %v6040
        %v6062 = vmul.f32 %v6031, %v6042
        %v6063 = vmul.f32 %v6032, %v6044
        %v6064 = vmul.f32 %v6033, %v6046
        %v6065 = vmul.f32 %v6034, %v6048
        %v6066 = vmul.f32 %v6035, %v6050
        %v6067 = vmul.f32 %v6036, %v6052
        %v6068 = vmul.f32 %v6037, %v6051
        %v6069 = vld [vmem:[%s9] sm:$0xff]
        %v6070 = vld [vmem:[%s9 + $0x8] sm:$0xff]
        %v6071 = vld [vmem:[%s9 + $0x10] sm:$0xff]
        %v6072 = vld [vmem:[%s9 + $0x18] sm:$0xff]
        %v6073 = vld [vmem:[%s9 + $0x20] sm:$0xff]
        %v6074 = vld [vmem:[%s9 + $0x28] sm:$0xff]
        %v6075 = vld [vmem:[%s9 + $0x30] sm:$0xff]
        %v6076 = vld [vmem:[%s9 + $0x38] sm:$0xff]
        %v6077 = vld [vmem:[%s10] sm:$0x1]
        %v6079 = vlaneseq
        %v6080 = vshrl.u32 %v6079, 7
        %v6081 = vsub.s32 0, %v6080
        %v6082 = vrot.slane %v6077, %v6081
        %v6092 = vrot.slane %v6061, 4
        %v6093 = vrot.slane %v6062, 4
        %v6094 = vsel %vm1837, %v6092, %v6093
        %v6095 = vrot.slane %v6063, 4
        %v6096 = vsel %vm1837, %v6093, %v6095
        %v6097 = vrot.slane %v6064, 4
        %v6098 = vsel %vm1837, %v6095, %v6097
        %v6099 = vrot.slane %v6065, 4
        %v6100 = vsel %vm1837, %v6097, %v6099
        %v6101 = vrot.slane %v6066, 4
        %v6102 = vsel %vm1837, %v6099, %v6101
        %v6103 = vrot.slane %v6067, 4
        %v6104 = vsel %vm1837, %v6101, %v6103
        %v6105 = vrot.slane %v6068, 4
        %v6106 = vsel %vm1837, %v6103, %v6105
        %6107 = vrot.lane.b32.xlu0 %v6094, 64
        %v6108 = vpop.permute.xlu0 %6107
        %6109 = vrot.lane.b32.xlu0 %v6096, 64
        %v6110 = vpop.permute.xlu0 %6109
        %6111 = vrot.lane.b32.xlu0 %v6098, 64
        %v6112 = vpop.permute.xlu0 %6111
        %6113 = vrot.lane.b32.xlu0 %v6100, 64
        %v6114 = vpop.permute.xlu0 %6113
        %6115 = vrot.lane.b32.xlu0 %v6102, 64
        %v6116 = vpop.permute.xlu0 %6115
        %6117 = vrot.lane.b32.xlu0 %v6104, 64
        %v6118 = vpop.permute.xlu0 %6117
        %6119 = vrot.lane.b32.xlu0 %v6106, 64
        %v6120 = vpop.permute.xlu0 %6119
        %v6121 = vsel %vm1069, %v6108, 0
        %v6123 = vsel %vm1069, %v6110, 0
        %v6125 = vsel %vm1069, %v6112, 0
        %v6127 = vsel %vm1069, %v6114, 0
        %v6129 = vsel %vm1069, %v6116, 0
        %v6131 = vsel %vm1069, %v6118, 0
        %v6133 = vsel %vm1069, %v6120, 0
        %6135 = vmatprep.subr.mxu0 0.0
        %6136 = vmatpush1.msra.mxu0 %v6069
        %6137 = vmatprep.subr.mxu0 0.0
        %6138 = vmatpush1.msra.mxu0 %v6070
        %6139 = vmatprep.subr.mxu0 0.0
        %6140 = vmatpush1.msra.mxu0 %v6071
        %6141 = vmatprep.subr.mxu0 0.0
        %6142 = vmatpush1.msra.mxu0 %v6072
        %6143 = vmatprep.subr.mxu0 0.0
        %6144 = vmatpush1.msra.mxu0 %v6073
        %6145 = vmatprep.subr.mxu0 0.0
        %6146 = vmatpush1.msra.mxu0 %v6074
        %6147 = vmatprep.subr.mxu0 0.0
        %6148 = vmatpush1.msra.mxu0 %v6075
        %6149 = vmatprep.subr.mxu0 0.0
        %6150 = vmatpush1.msra.mxu0 %v6076
        %6151 = vmatprep.subr.mxu0 0.0
        %6152 = vmatpush1.msra.mxu0 0.0
        %6153 = vmatprep.subr.mxu0 0.0
        %6154 = vmatpush1.msra.mxu0 0.0
        %6155 = vmatprep.subr.mxu0 0.0
        %6156 = vmatpush1.msra.mxu0 0.0
        %6157 = vmatprep.subr.mxu0 0.0
        %6158 = vmatpush1.msra.mxu0 0.0
        %6159 = vmatprep.subr.mxu0 0.0
        %6160 = vmatpush1.msra.mxu0 0.0
        %6161 = vmatprep.subr.mxu0 0.0
        %6162 = vmatpush1.msra.mxu0 0.0
        %6163 = vmatprep.subr.mxu0 0.0
        %6164 = vmatpush1.msra.mxu0 0.0
        %6165 = vmatprep.subr.mxu0 0.0
        %6166 = vmatpush1.msra.mxu0 0.0
        %6167 = vmatprep.subr.mxu0 0.0
        %6168 = vmatpush1.msra.mxu0 0.0
        %6169 = vmatprep.subr.mxu0 0.0
        %6170 = vmatpush1.msra.mxu0 0.0
        %6171 = vmatprep.subr.mxu0 0.0
        %6172 = vmatpush1.msra.mxu0 0.0
        %6173 = vmatprep.subr.mxu0 0.0
        %6174 = vmatpush1.msra.mxu0 0.0
        %6175 = vmatprep.subr.mxu0 0.0
        %6176 = vmatpush1.msra.mxu0 0.0
        %6177 = vmatprep.subr.mxu0 0.0
        %6178 = vmatpush1.msra.mxu0 0.0
        %6179 = vmatprep.subr.mxu0 0.0
        %6180 = vmatpush1.msra.mxu0 0.0
        %6181 = vmatprep.subr.mxu0 0.0
        %6182 = vmatpush1.msra.mxu0 0.0
        %6183 = vmatprep.subr.mxu0 0.0
        %6184 = vmatpush1.msra.mxu0 0.0
        %6185 = vmatprep.subr.mxu0 0.0
        %6186 = vmatpush1.msra.mxu0 0.0
        %6187 = vmatprep.subr.mxu0 0.0
        %6188 = vmatpush1.msra.mxu0 0.0
        %6189 = vmatprep.subr.mxu0 0.0
        %6190 = vmatpush1.msra.mxu0 0.0
        %6191 = vmatprep.subr.mxu0 0.0
        %6192 = vmatpush1.msra.mxu0 0.0
        %6193 = vmatprep.subr.mxu0 0.0
        %6194 = vmatpush1.msra.mxu0 0.0
        %6195 = vmatprep.subr.mxu0 0.0
        %6196 = vmatpush1.msra.mxu0 0.0
        %6197 = vmatprep.subr.mxu0 0.0
        %6198 = vmatpush1.msra.mxu0 0.0
        %6199 = vmatprep.mubr.f32.mxu0 0.0
        %6200 = vmatmul.mubr.f32.gmra.mrb[0].mxu0 %v6121
        %v6201 = vpop.f32.mrb[0].mxu0
        %v6202 = vadd.f32 %v6082, %v6201
        %v6203 = vpop.f32.mrb[0].mxu0
        %6204 = vmatprep.mubr.f32.mxu0 0.0
        %6205 = vmatmul.mubr.f32.gmra.mrb[0].mxu0 %v6123
        %v6206 = vpop.f32.mrb[0].mxu0
        %v6207 = vadd.f32 %v6082, %v6206
        %v6208 = vpop.f32.mrb[0].mxu0
        %6209 = vmatprep.mubr.f32.mxu0 0.0
        %6210 = vmatmul.mubr.f32.gmra.mrb[0].mxu0 %v6125
        %v6211 = vpop.f32.mrb[0].mxu0
        %v6212 = vadd.f32 %v6082, %v6211
        %v6213 = vpop.f32.mrb[0].mxu0
        %6214 = vmatprep.mubr.f32.mxu0 0.0
        %6215 = vmatmul.mubr.f32.gmra.mrb[0].mxu0 %v6127
        %v6216 = vpop.f32.mrb[0].mxu0
        %v6217 = vadd.f32 %v6082, %v6216
        %v6218 = vpop.f32.mrb[0].mxu0
        %6219 = vmatprep.mubr.f32.mxu0 0.0
        %6220 = vmatmul.mubr.f32.gmra.mrb[0].mxu0 %v6129
        %v6221 = vpop.f32.mrb[0].mxu0
        %v6222 = vadd.f32 %v6082, %v6221
        %v6223 = vpop.f32.mrb[0].mxu0
        %6224 = vmatprep.mubr.f32.mxu0 0.0
        %6225 = vmatmul.mubr.f32.gmra.mrb[0].mxu0 %v6131
        %v6226 = vpop.f32.mrb[0].mxu0
        %v6227 = vadd.f32 %v6082, %v6226
        %v6228 = vpop.f32.mrb[0].mxu0
        %6229 = vmatprep.mubr.f32.mxu0 0.0
        %6230 = vmatmul.mubr.f32.gmra.mrb[0].mxu0 %v6133
        %v6231 = vpop.f32.mrb[0].mxu0
        %v6232 = vadd.f32 %v6082, %v6231
        %v6233 = vpop.f32.mrb[0].mxu0
        %6234 = vdwg.mxu0
        %v6235 = vrot.slane %v935, 6
        %v6236 = vrot.slane %v940, 6
        %v6237 = vsel %vm2447, %v6235, %v6236
        %v6238 = vrot.slane %v945, 6
        %v6239 = vsel %vm2447, %v6236, %v6238
        %v6240 = vrot.slane %v950, 6
        %v6241 = vsel %vm2447, %v6238, %v6240
        %v6242 = vrot.slane %v955, 6
        %v6243 = vsel %vm2447, %v6240, %v6242
        %v6244 = vrot.slane %v960, 6
        %v6245 = vsel %vm2447, %v6242, %v6244
        %v6246 = vrot.slane %v965, 6
        %v6247 = vsel %vm2447, %v6244, %v6246
        %v6248 = vrot.slane %v970, 6
        %v6249 = vsel %vm2447, %v6246, %v6248
        %v6257 = vmul.f32 %v6202, %v6237
        %v6258 = vmul.f32 %v6207, %v6239
        %v6259 = vmul.f32 %v6212, %v6241
        %v6260 = vmul.f32 %v6217, %v6243
        %v6261 = vmul.f32 %v6222, %v6245
        %v6262 = vmul.f32 %v6227, %v6247
        %v6263 = vmul.f32 %v6232, %v6249
        %v6264 = vld [vmem:[%s469] sm:$0xff]
        %v6265 = vld [vmem:[%s469 + $0x8] sm:$0xff]
        %v6266 = vld [vmem:[%s469 + $0x10] sm:$0xff]
        %v6267 = vld [vmem:[%s469 + $0x18] sm:$0xff]
        %v6268 = vld [vmem:[%s469 + $0x20] sm:$0xff]
        %v6269 = vld [vmem:[%s469 + $0x28] sm:$0xff]
        %v6270 = vld [vmem:[%s469 + $0x30] sm:$0xff]
        %v6271 = vmul.f32 %v6257, 1.442695
        %v6272 = vpow.pop %v6271
        %v6273 = vmul.f32 %v6258, 1.442695
        %v6274 = vpow.pop %v6273
        %v6275 = vmul.f32 %v6259, 1.442695
        %v6276 = vpow.pop %v6275
        %v6277 = vmul.f32 %v6260, 1.442695
        %v6278 = vpow.pop %v6277
        %v6279 = vmul.f32 %v6261, 1.442695
        %v6280 = vpow.pop %v6279
        %v6281 = vmul.f32 %v6262, 1.442695
        %v6282 = vpow.pop %v6281
        %v6283 = vmul.f32 %v6263, 1.442695
        %v6284 = vpow.pop %v6283
        %6292 = vrot.lane.b32.xlu0 %v6272, 124
        %v6293 = vpop.permute.xlu0 %6292
        %6294 = vrot.lane.b32.xlu0 %v6274, 124
        %v6295 = vpop.permute.xlu0 %6294
        %6296 = vrot.lane.b32.xlu0 %v6276, 124
        %v6297 = vpop.permute.xlu0 %6296
        %6298 = vrot.lane.b32.xlu0 %v6278, 124
        %v6299 = vpop.permute.xlu0 %6298
        %6300 = vrot.lane.b32.xlu0 %v6280, 124
        %v6301 = vpop.permute.xlu0 %6300
        %6302 = vrot.lane.b32.xlu0 %v6282, 124
        %v6303 = vpop.permute.xlu0 %6302
        %6304 = vrot.lane.b32.xlu0 %v6284, 124
        %v6305 = vpop.permute.xlu0 %6304
        %v6313 = vmul.f32 %v6264, %v6293
        %v6314 = vmul.f32 %v6265, %v6295
        %v6315 = vmul.f32 %v6266, %v6297
        %v6316 = vmul.f32 %v6267, %v6299
        %v6317 = vmul.f32 %v6268, %v6301
        %v6318 = vmul.f32 %v6269, %v6303
        %v6319 = vmul.f32 %v6270, %v6305
        %v6320 = vmul.f32 %v6313, %v6237
        %v6321 = vmul.f32 %v6314, %v6239
        %v6322 = vmul.f32 %v6315, %v6241
        %v6323 = vmul.f32 %v6316, %v6243
        %v6324 = vmul.f32 %v6317, %v6245
        %v6325 = vmul.f32 %v6318, %v6247
        %v6326 = vmul.f32 %v6319, %v6249
        %v6327 = vadd.f32 %v6257, %v6320
        %v6328 = vadd.f32 %v6258, %v6321
        %v6329 = vadd.f32 %v6259, %v6322
        %v6330 = vadd.f32 %v6260, %v6323
        %v6331 = vadd.f32 %v6261, %v6324
        %v6332 = vadd.f32 %v6262, %v6325
        %v6333 = vadd.f32 %v6263, %v6326
        %v6341 = vrot.slane %v6327, 2
        %v6342 = vrot.slane %v6328, 2
        %v6343 = vsel %vm1405, %v6341, %v6342
        %v6344 = vrot.slane %v6329, 2
        %v6345 = vsel %vm1405, %v6342, %v6344
        %v6346 = vrot.slane %v6330, 2
        %v6347 = vsel %vm1405, %v6344, %v6346
        %v6348 = vrot.slane %v6331, 2
        %v6349 = vsel %vm1405, %v6346, %v6348
        %v6350 = vrot.slane %v6332, 2
        %v6351 = vsel %vm1405, %v6348, %v6350
        %v6352 = vrot.slane %v6333, 2
        %v6353 = vsel %vm1405, %v6350, %v6352
        %6354 = vrot.lane.b32.xlu0 %v6341, 4
        %v6355 = vpop.permute.xlu0 %6354
        %6356 = vrot.lane.b32.xlu0 %v6343, 4
        %v6357 = vpop.permute.xlu0 %6356
        %6358 = vrot.lane.b32.xlu0 %v6345, 4
        %v6359 = vpop.permute.xlu0 %6358
        %6360 = vrot.lane.b32.xlu0 %v6347, 4
        %v6361 = vpop.permute.xlu0 %6360
        %6362 = vrot.lane.b32.xlu0 %v6349, 4
        %v6363 = vpop.permute.xlu0 %6362
        %6364 = vrot.lane.b32.xlu0 %v6351, 4
        %v6365 = vpop.permute.xlu0 %6364
        %6366 = vrot.lane.b32.xlu0 %v6353, 4
        %v6367 = vpop.permute.xlu0 %6366
        %6368 = vrot.lane.b32.xlu0 %v6352, 4
        %v6369 = vpop.permute.xlu0 %6368
        %v6385 = vrot.slane %v6257, 2
        %v6386 = vrot.slane %v6258, 2
        %v6387 = vsel %vm1405, %v6385, %v6386
        %v6388 = vrot.slane %v6259, 2
        %v6389 = vsel %vm1405, %v6386, %v6388
        %v6390 = vrot.slane %v6260, 2
        %v6391 = vsel %vm1405, %v6388, %v6390
        %v6392 = vrot.slane %v6261, 2
        %v6393 = vsel %vm1405, %v6390, %v6392
        %v6394 = vrot.slane %v6262, 2
        %v6395 = vsel %vm1405, %v6392, %v6394
        %v6396 = vrot.slane %v6263, 2
        %v6397 = vsel %vm1405, %v6394, %v6396
        %6398 = vrot.lane.b32.xlu0 %v6385, 4
        %v6399 = vpop.permute.xlu0 %6398
        %6400 = vrot.lane.b32.xlu0 %v6387, 4
        %v6401 = vpop.permute.xlu0 %6400
        %6402 = vrot.lane.b32.xlu0 %v6389, 4
        %v6403 = vpop.permute.xlu0 %6402
        %6404 = vrot.lane.b32.xlu0 %v6391, 4
        %v6405 = vpop.permute.xlu0 %6404
        %6406 = vrot.lane.b32.xlu0 %v6393, 4
        %v6407 = vpop.permute.xlu0 %6406
        %6408 = vrot.lane.b32.xlu0 %v6395, 4
        %v6409 = vpop.permute.xlu0 %6408
        %6410 = vrot.lane.b32.xlu0 %v6397, 4
        %v6411 = vpop.permute.xlu0 %6410
        %6412 = vrot.lane.b32.xlu0 %v6396, 4
        %v6413 = vpop.permute.xlu0 %6412
        %vm6422 = vcmask 31744
        %v6423 = vsel %vm6422, %v486, %v6355
        %v6424 = vsel %vm6422, %v487, %v6357
        %v6425 = vsel %vm6422, %v488, %v6359
        %v6426 = vsel %vm6422, %v489, %v6361
        %v6427 = vsel %vm6422, %v490, %v6363
        %v6428 = vsel %vm6422, %v491, %v6365
        %v6429 = vsel %vm6422, %v492, %v6367
        %v6430 = vsel %vm6422, %v493, %v6369
        %vm6431 = vcmask 64512
        %v6432 = vsel %vm6431, %v6423, %v6399
        %v6433 = vsel %vm6431, %v6424, %v6401
        %v6434 = vsel %vm6431, %v6425, %v6403
        %v6435 = vsel %vm6431, %v6426, %v6405
        %v6436 = vsel %vm6431, %v6427, %v6407
        %v6437 = vsel %vm6431, %v6428, %v6409
        %v6438 = vsel %vm6431, %v6429, %v6411
        %v6439 = vsel %vm6431, %v6430, %v6413
        %vm6440 = vcmask 97286
        %6441 = vst.msk [vmem:[%s479 - $0x6] sm:$0xc0] %vm6440, %v6432
        %vm6442 = vcmask 97280
        %6443 = vst.msk [vmem:[%s479 + $0x2] sm:$0xff] %vm6442, %v6433
        %6444 = vst.msk [vmem:[%s479 + $0xa] sm:$0xff] %vm6442, %v6434
        %6445 = vst.msk [vmem:[%s479 + $0x12] sm:$0xff] %vm6442, %v6435
        %6446 = vst.msk [vmem:[%s479 + $0x1a] sm:$0xff] %vm6442, %v6436
        %6447 = vst.msk [vmem:[%s479 + $0x22] sm:$0xff] %vm6442, %v6437
        %6448 = vst.msk [vmem:[%s479 + $0x2a] sm:$0xff] %vm6442, %v6438
        %vm6449 = vcmask 95232
        %6450 = vst.msk [vmem:[%s479 + $0x32] sm:$0x3f] %vm6449, %v6439
        %s6451 = smul.u32 7, %s28
        %p6452 = scmp.lt.s32.totalorder %s27, 1
        %s6453 = scalar_select %p6452, %s27, 1
        %p6454 = scmp.lt.s32.totalorder %s6451, 6
        %s6455 = scalar_select %p6454, %s6451, 6
        %s6456 = smul.addr %s6453, 7
        %s6457 = sadd.s32 %s6455, %s6456
        %s6458 = smul.addr %s6457, 8
        %s6459 = scalar_lea.vmem %s11, %s6458
        // Predicated region
        $region69: #{tpu_custom_call.1} parent=63 // pred_check
          %p6460 = pneg %p303
        $region70: #{tpu_custom_call.1} parent=63 // pred_check_branch
          %6462 = sbr.rel (%p6460) target = $region72
        $region71: #{tpu_custom_call.1} parent=63 // pred_region
          %s6463 = smul.u32 7, %s28
        $region72: #{tpu_custom_call.1} parent=63 // pred_fallthru
          _
      $region64: #{tpu_custom_call.1} parent=5 // pred_fallthru
        _
      %p6464 = scmp.le.s32.totalorder 2, %s18
      // Predicated region
      $region73: #{tpu_custom_call.1} parent=5 // pred_check
        %p6465 = pneg %p6464
      $region74: #{tpu_custom_call.1} parent=5 // pred_check_branch
        %6467 = sbr.rel (%p6465) target = $region76
      $region75: #{tpu_custom_call.1} parent=5 // pred_region
        %s6468 = ssub.s32 %s18, 2
        // Predicated region
        $region77: #{tpu_custom_call.1} parent=75 // pred_check
          %p6469 = pneg %p309
        $region78: #{tpu_custom_call.1} parent=75 // pred_check_branch
          %6471 = sbr.rel (%p6469) target = $region80
        $region79: #{tpu_custom_call.1} parent=75 // pred_region
          %s6472 = smul.u32 7, %s30
          %p6473 = scmp.lt.s32.totalorder %s29, 1
          %s6474 = scalar_select %p6473, %s29, 1
          %p6475 = scmp.lt.s32.totalorder %s6472, 6
          %s6476 = scalar_select %p6475, %s6472, 6
          %s6477 = smul.addr %s6474, 7
          %s6478 = sadd.s32 %s6476, %s6477
          %s6479 = smul.addr %s6478, 8
          %s6480 = scalar_lea.vmem %s11, %s6479
        $region80: #{tpu_custom_call.1} parent=75 // pred_fallthru
          _
      $region76: #{tpu_custom_call.1} parent=5 // pred_fallthru
        _
    $region6: #{tpu_custom_call.1} parent=1 // loop_footer
      %s22 = sadd.s32 1, %s18
    $region7: #{tpu_custom_call.1} parent=1 // loop_footer_branch
      %17 = sbr.rel target = $region3
    $region8: #{tpu_custom_call.1} parent=1 // loop_exit
      _
    %6481 = vsyncpa [#allocation3], 1
    %s6482 = scalar_lea.sflag [#allocation3], 1
    %6483 = vsyncpa %s6482, 1

</llo_original>
